<compile_context>
chip_gen: v7x
topology: tpu7x:2x2x1
jax: 0.10.0
libtpu: 0.0.40
codegen_flags: <defaults>
</compile_context>

<pallas_src>
import functools
import math

import numpy as np
import jax
import jax.numpy as jnp
from jax.experimental import pallas as pl
from jax.experimental.pallas import tpu as pltpu

# ----------------------------- model config ---------------------------------
OUTPUT_DIM = 50
HID_DIM = 32
N_LAYERS = 2
N_HEADS = 4
PF_DIM = 64
MAX_LEN = 100
MAX_REL_POS = 4
N_REL = 2 * MAX_REL_POS + 1          # 9 distinct relative positions
HEAD_DIM = HID_DIM // N_HEADS
LN_EPS = 1e-5
INV_SCALE = 1.0 / math.sqrt(HEAD_DIM)   # folded into the Q weights at pack time
MASK_FILL = 1e10                         # masked_fill value magnitude
LOGIT_PAD = 64                           # lane-padded fc_out width (sliced to 50 outside)


# ------------------------- fused whole-decoder kernel ------------------------
def _decoder_kernel(treedef, m_rows, *refs):
    x_ref, enc_ref, bias_self_ref, bias_src_ref = refs[:4]
    logits_ref, attn_ref = refs[-2:]
    p = jax.tree_util.tree_unflatten(treedef, refs[4:-2])

    f32 = jnp.float32

    def mm(a, b):
        return jnp.dot(a, b, preferred_element_type=f32)

    def add_layernorm(x, res, g_ref, b_ref):
        y = x + res
        mu = jnp.mean(y, axis=-1, keepdims=True)
        yc = y - mu
        var = jnp.mean(yc * yc, axis=-1, keepdims=True)
        return yc * jax.lax.rsqrt(var + LN_EPS) * g_ref[...] + b_ref[...]

    def rowsum(z):
        # (N_HEADS*M, H) head-block-masked -> (M, H) lane-dense (only one block per col)
        acc = z[0:m_rows]
        for h in range(1, N_HEADS):
            acc = acc + z[h * m_rows:(h + 1) * m_rows]
        return acc

    def mha(xq, xkv, ap, st, bias_ref, fused_qkv, attn_store_ref):
        # ---- projections (1/sqrt(head_dim) already folded into the Q weights) ----
        if fused_qkv:                       # self-attention: one (H, 3H) matmul
            qkv = mm(xq, ap["w_qkv"][...]) + ap["b_qkv"][...]
            q = qkv[:, :HID_DIM]
            k = qkv[:, HID_DIM:2 * HID_DIM]
            v = qkv[:, 2 * HID_DIM:]
        else:                               # cross-attention: Q from trg, fused KV from enc
            q = mm(xq, ap["w_q"][...]) + ap["b_q"][...]
            kv = mm(xkv, ap["w_kv"][...]) + ap["b_kv"][...]
            k = kv[:, :HID_DIM]
            v = kv[:, HID_DIM:]

        # heads stacked on the sublane axis: row = h*M + m   (one softmax for all heads)
        q_pad = jnp.concatenate([q] * N_HEADS, axis=0) * st["hb"][...]      # (4M, H)

        # energy1 = Qh Kh^T for every head in ONE matmul (single implicit K transpose)
        e1 = jax.lax.dot_general(q_pad, k, (((1,), (1,)), ((), ())),
                                 preferred_element_type=f32)                # (4M, Mk)
        # energy2: relative-position term as single contractions (no 9-bucket loop)
        qr = mm(q_pad, ap["rel_q"][...]) * st["qg_rel"][...]                # (4M, Lq*N_REL)
        e2 = mm(qr, st["p_sel"][...])                                       # (4M, Mk)

        energy = e1 + e2 + bias_ref[...]        # additive -1e10 == masked_fill(mask==0)

        mx = jnp.max(energy, axis=-1, keepdims=True)
        pe = jnp.exp(energy - mx)
        attn = pe * pl.reciprocal(jnp.sum(pe, axis=-1, keepdims=True), approx=True)

        # out1 = softmax @ V   (the tensor the PyTorch module returns as `attention`)
        out1_d = rowsum(mm(attn, v) * st["hb"][...])                        # (M, H)
        # out2 = softmax @ rel_emb[idx(q,k)]  via one gather-matrix contraction
        a_exp = mm(attn, st["tile_k"][...]) * st["qg_att"][...]             # (4M, Lq*Mk)
        out2_d = rowsum(mm(a_exp, ap["rel_v"][...]) * st["hb"][...])        # (M, H)

        if attn_store_ref is not None:          # lane-dense (M, H) attention slab
            attn_store_ref[...] = out1_d.astype(attn_store_ref.dtype)

        return mm(out1_d + out2_d, ap["w_o"][...]) + ap["b_o"][...]

    def ffn(x, fp):
        h = jnp.maximum(mm(x, fp["w1"][...]) + fp["b1"][...], 0.0)
        return mm(h, fp["w2"][...]) + fp["b2"][...]

    trg = x_ref[...]
    enc = enc_ref[...]
    st_self, st_src = p["stat_self"], p["stat_src"]

    n_layers = len(p["layers"])
    for li, lp in enumerate(p["layers"]):
        sa = mha(trg, trg, lp["self_attn"], st_self, bias_self_ref, True, None)
        trg = add_layernorm(sa, trg, lp["ln1_g"], lp["ln1_b"])
        store = attn_ref if li == n_layers - 1 else None
        ea = mha(trg, enc, lp["enc_attn"], st_src, bias_src_ref, False, store)
        trg = add_layernorm(ea, trg, lp["ln2_g"], lp["ln2_b"])
        trg = add_layernorm(ffn(trg, lp["ffn"]), trg, lp["ln3_g"], lp["ln3_b"])

    logits_ref[...] = (mm(trg, p["fc_w"][...]) + p["fc_b"][...]).astype(logits_ref.dtype)


# ------------------------------ kernel wrapper --------------------------------
def _full_spec(arr):
    nd = arr.ndim
    return pl.BlockSpec(tuple(arr.shape), lambda i, _nd=nd: (0,) * _nd)


def _stacked_bias(mask, B, Lq, Lk):
    # mask broadcastable to (B, 1, Lq, Lk) (PyTorch usage) or (B, Lq, Lk); returns the
    # additive bias (0 kept / -1e10 masked) folded block-diagonally over batch and tiled
    # over the stacked-head rows: (N_HEADS*B*Lq, B*Lk)
    m = jnp.asarray(mask, jnp.float32)
    if m.ndim == 4:
        m = jnp.broadcast_to(m, (B, 1, Lq, Lk))[:, 0]
    m = jnp.broadcast_to(m, (B, Lq, Lk))
    eye = jnp.eye(B, dtype=jnp.float32)
    keep = (eye[:, None, :, None] * m[:, :, None, :]).reshape(B * Lq, B * Lk)
    bias = (keep - 1.0) * MASK_FILL
    return jnp.tile(bias, (N_HEADS, 1))


@jax.jit
def decoder_forward(packed, trg_tokens, enc_src, trg_mask, src_mask):
    B, Lt = trg_tokens.shape
    Ls = enc_src.shape[1]
    M = B * Lt

    # embeddings (gathers stay in plain, jitted JAX); dropout = eval-mode identity
    # TODO(synk): dropout layers are eval-mode identity; no RNG path in this kernel.
    tok = packed["tok_emb"][trg_tokens]                         # (B, Lt, H)
    posv = packed["pos_emb"][:Lt][None, :, :]                   # (1, Lt, H)
    x2d = (tok * math.sqrt(HID_DIM) + posv).reshape(M, HID_DIM).astype(jnp.float32)
    enc2d = enc_src.reshape(B * Ls, HID_DIM).astype(jnp.float32)

    bias_self = _stacked_bias(trg_mask, B, Lt, Lt)              # (4M, B*Lt)
    bias_src = _stacked_bias(src_mask, B, Lt, Ls)               # (4M, B*Ls)

    leaves, treedef = jax.tree_util.tree_flatten(packed["kernel"])
    inputs = [x2d, enc2d, bias_self, bias_src] + list(leaves)

    out_shape = (jax.ShapeDtypeStruct((M, LOGIT_PAD), jnp.float32),
                 jax.ShapeDtypeStruct((M, HID_DIM), jnp.float32))
    out_specs = (pl.BlockSpec((M, LOGIT_PAD), lambda i: (0, 0)),
                 pl.BlockSpec((M, HID_DIM), lambda i: (0, 0)))

    # single-step grid: everything VMEM resident.  (If B*L grows, add a leading
    # "parallel" batch axis here so the second TensorCore on v7x gets used.)
    logits_pad, attn_dense = pl.pallas_call(
        functools.partial(_decoder_kernel, treedef, M),
        out_shape=out_shape,
        grid=(1,),
        in_specs=[_full_spec(a) for a in inputs],
        out_specs=out_specs,
        compiler_params=pltpu.CompilerParams(dimension_semantics=("arbitrary",)),
    )(*inputs)

    logits = logits_pad[:, :OUTPUT_DIM].reshape(B, Lt, OUTPUT_DIM)
    # PyTorch returns attention = softmax @ V, shape (B, n_heads, q_len, head_dim)
    attention = attn_dense.reshape(B, Lt, N_HEADS, HEAD_DIM).transpose(0, 2, 1, 3)
    return logits, attention


# --------------------- pack-time constant / weight packing --------------------
def _rel_idx(Lq, Lk):
    q = np.arange(Lq)[:, None]
    k = np.arange(Lk)[None, :]
    return np.clip(q - k, -MAX_REL_POS, MAX_REL_POS) + MAX_REL_POS       # (Lq, Lk)


def _static_mats(B, Lq, Lk):
    # static 0/1 selector matrices for one attention type (query side is always trg)
    M = B * Lq
    R = N_HEADS * M
    Mk = B * Lk
    rows = np.arange(R)
    qpos = (rows % M) % Lq                     # local query position of a stacked row
    hpos = rows // M                           # head of a stacked row

    hb = ((np.arange(HID_DIM) // HEAD_DIM)[None, :] == hpos[:, None])    # (R, H)

    j_rel = np.arange(Lq * N_REL)
    qg_rel = ((j_rel // N_REL)[None, :] == qpos[:, None])                # (R, Lq*N_REL)

    idx = _rel_idx(Lq, Lk)
    p_sel = (idx[(j_rel // N_REL)[:, None], (np.arange(Mk) % Lk)[None, :]]
             == (j_rel % N_REL)[:, None])                                # (Lq*N_REL, Mk)

    j_att = np.arange(Lq * Mk)
    qg_att = ((j_att // Mk)[None, :] == qpos[:, None])                   # (R, Lq*Mk)
    tile_k = ((j_att % Mk)[None, :] == np.arange(Mk)[:, None])           # (Mk, Lq*Mk)

    mats = dict(hb=hb, qg_rel=qg_rel, p_sel=p_sel, qg_att=qg_att, tile_k=tile_k)
    return {k: jnp.asarray(v.astype(np.float32)) for k, v in mats.items()}


def _rel_pack(rel_emb, B, Lq, Lk):
    # rel_q: (H, Lq*N_REL)  rel_q[c, q'*NR+r]     = rel[r, c % head_dim]
    # rel_v: (Lq*Mk, H)     rel_v[q'*Mk+col, c]   = rel[idx(q', col % Lk), c % head_dim]
    rel = np.asarray(rel_emb, np.float32)
    Mk = B * Lk
    c = np.arange(HID_DIM)
    j = np.arange(Lq * N_REL)
    rel_q = rel[(j % N_REL)[None, :], (c % HEAD_DIM)[:, None]]
    idx = _rel_idx(Lq, Lk)
    jj = np.arange(Lq * Mk)
    ridx = idx[jj // Mk, (jj % Mk) % Lk]
    rel_v = rel[ridx][:, c % HEAD_DIM]
    return jnp.asarray(rel_q), jnp.asarray(rel_v)


def _pack_self_attn(m, B, Lt):
    rel_q, rel_v = _rel_pack(m["rel_emb"], B, Lt, Lt)
    return dict(
        w_qkv=jnp.concatenate([m["wq"] * INV_SCALE, m["wk"], m["wv"]], axis=1),
        b_qkv=jnp.concatenate([m["bq"] * INV_SCALE, m["bk"], m["bv"]])[None, :],
        w_o=m["wo"], b_o=m["bo"][None, :], rel_q=rel_q, rel_v=rel_v)


def _pack_cross_attn(m, B, Lt, Ls):
    rel_q, rel_v = _rel_pack(m["rel_emb"], B, Lt, Ls)
    return dict(
        w_q=m["wq"] * INV_SCALE, b_q=(m["bq"] * INV_SCALE)[None, :],
        w_kv=jnp.concatenate([m["wk"], m["wv"]], axis=1),
        b_kv=jnp.concatenate([m["bk"], m["bv"]])[None, :],
        w_o=m["wo"], b_o=m["bo"][None, :], rel_q=rel_q, rel_v=rel_v)


def pack_decoder(params, B, Lt, Ls):
    ones = jnp.ones((1, HID_DIM), jnp.float32)
    zeros = jnp.zeros((1, HID_DIM), jnp.float32)
    layers = []
    for lp in params["layers"]:
        layers.append(dict(
            self_attn=_pack_self_attn(lp["self_attn"], B, Lt),
            enc_attn=_pack_cross_attn(lp["enc_attn"], B, Lt, Ls),
            ffn=dict(w1=lp["ffn"]["w1"], b1=lp["ffn"]["b1"][None, :],
                     w2=lp["ffn"]["w2"], b2=lp["ffn"]["b2"][None, :]),
            ln1_g=ones, ln1_b=zeros, ln2_g=ones, ln2_b=zeros, ln3_g=ones, ln3_b=zeros))
    fc_w = jnp.zeros((HID_DIM, LOGIT_PAD), jnp.float32).at[:, :OUTPUT_DIM].set(params["fc_w"])
    fc_b = jnp.zeros((LOGIT_PAD,), jnp.float32).at[:OUTPUT_DIM].set(params["fc_b"])[None, :]
    kernel = dict(layers=layers, fc_w=fc_w, fc_b=fc_b,
                  stat_self=_static_mats(B, Lt, Lt),
                  stat_src=_static_mats(B, Lt, Ls))
    return dict(tok_emb=params["tok_emb"], pos_emb=params["pos_emb"], kernel=kernel)


# ------------------------------ param init -----------------------------------
def _init_linear(key, fan_in, fan_out):
    k1, k2 = jax.random.split(key)
    w = jax.random.normal(k1, (fan_in, fan_out), jnp.float32) * 0.05
    b = jax.random.normal(k2, (fan_out,), jnp.float32) * 0.05
    return w, b


def _init_mha(key):
    ks = jax.random.split(key, 5)
    wq, bq = _init_linear(ks[0], HID_DIM, HID_DIM)
    wk, bk = _init_linear(ks[1], HID_DIM, HID_DIM)
    wv, bv = _init_linear(ks[2], HID_DIM, HID_DIM)
    wo, bo = _init_linear(ks[3], HID_DIM, HID_DIM)
    rel = jax.random.normal(ks[4], (N_REL, HEAD_DIM), jnp.float32) * 0.05
    return dict(wq=wq, bq=bq, wk=wk, bk=bk, wv=wv, bv=bv, wo=wo, bo=bo, rel_emb=rel)


def _init_layer(key):
    ks = jax.random.split(key, 4)
    w1, b1 = _init_linear(ks[2], HID_DIM, PF_DIM)
    w2, b2 = _init_linear(ks[3], PF_DIM, HID_DIM)
    return dict(self_attn=_init_mha(ks[0]), enc_attn=_init_mha(ks[1]),
                ffn=dict(w1=w1, b1=b1, w2=w2, b2=b2))


def init_decoder(key):
    ks = jax.random.split(key, N_LAYERS + 3)
    fc_w, fc_b = _init_linear(ks[-1], HID_DIM, OUTPUT_DIM)
    return dict(
        tok_emb=jax.random.normal(ks[0], (OUTPUT_DIM, HID_DIM), jnp.float32) * 0.05,
        pos_emb=jax.random.normal(ks[1], (MAX_LEN, HID_DIM), jnp.float32) * 0.05,
        layers=[_init_layer(ks[2 + i]) for i in range(N_LAYERS)],
        fc_w=fc_w, fc_b=fc_b)


# --------------------------------- main ---------------------------------------
if __name__ == "__main__":
    B, Lt, Ls = 2, 8, 8
    root = jax.random.PRNGKey(0)
    k_p, k_trg, k_src = jax.random.split(root, 3)

    raw_params = init_decoder(k_p)
    packed = pack_decoder(raw_params, B, Lt, Ls)

    trg_tokens = jax.random.randint(k_trg, (B, Lt), 0, OUTPUT_DIM, dtype=jnp.int32)
    enc_src = jax.random.normal(k_src, (B, Ls, HID_DIM), jnp.float32)

    # canonical PyTorch-style masks: causal (B,1,Lt,Lt) and pad-style (B,1,1,Ls)
    causal = jnp.tril(jnp.ones((Lt, Lt), jnp.float32))
    trg_mask = jnp.broadcast_to(causal[None, None], (B, 1, Lt, Lt))
    src_keep = jnp.ones((B, Ls), jnp.float32).at[1, Ls - 1].set(0.0)
    src_mask = src_keep[:, None, None, :]

    out, attention = decoder_forward(packed, trg_tokens, enc_src, trg_mask, src_mask)
    jax.block_until_ready((out, attention))

    assert out.shape == (B, Lt, OUTPUT_DIM)
    # PyTorch module returns attention = softmax @ V -> (B, n_heads, q_len, head_dim)
    assert attention.shape == (B, N_HEADS, Lt, HEAD_DIM)
    assert bool(jnp.isfinite(out).all()) and bool(jnp.isfinite(attention).all())
    print("KERNEL_OK")
</pallas_src>

<mosaic_0001>
module attributes {stable_mosaic.version = 11 : i64} {
  func.func @_decoder_kernel(%arg0: i32, %arg1: memref<16x32xf32, #tpu.memory_space<vmem>>, %arg2: memref<16x32xf32, #tpu.memory_space<vmem>>, %arg3: memref<64x16xf32, #tpu.memory_space<vmem>>, %arg4: memref<64x16xf32, #tpu.memory_space<vmem>>, %arg5: memref<1x64xf32, #tpu.memory_space<vmem>>, %arg6: memref<32x64xf32, #tpu.memory_space<vmem>>, %arg7: memref<1x64xf32, #tpu.memory_space<vmem>>, %arg8: memref<1x32xf32, #tpu.memory_space<vmem>>, %arg9: memref<1x32xf32, #tpu.memory_space<vmem>>, %arg10: memref<32x72xf32, #tpu.memory_space<vmem>>, %arg11: memref<128x32xf32, #tpu.memory_space<vmem>>, %arg12: memref<32x64xf32, #tpu.memory_space<vmem>>, %arg13: memref<32x32xf32, #tpu.memory_space<vmem>>, %arg14: memref<32x32xf32, #tpu.memory_space<vmem>>, %arg15: memref<1x64xf32, #tpu.memory_space<vmem>>, %arg16: memref<1x32xf32, #tpu.memory_space<vmem>>, %arg17: memref<32x64xf32, #tpu.memory_space<vmem>>, %arg18: memref<64x32xf32, #tpu.memory_space<vmem>>, %arg19: memref<1x32xf32, #tpu.memory_space<vmem>>, %arg20: memref<1x32xf32, #tpu.memory_space<vmem>>, %arg21: memref<1x32xf32, #tpu.memory_space<vmem>>, %arg22: memref<1x32xf32, #tpu.memory_space<vmem>>, %arg23: memref<1x32xf32, #tpu.memory_space<vmem>>, %arg24: memref<1x32xf32, #tpu.memory_space<vmem>>, %arg25: memref<1x32xf32, #tpu.memory_space<vmem>>, %arg26: memref<1x96xf32, #tpu.memory_space<vmem>>, %arg27: memref<32x72xf32, #tpu.memory_space<vmem>>, %arg28: memref<128x32xf32, #tpu.memory_space<vmem>>, %arg29: memref<32x32xf32, #tpu.memory_space<vmem>>, %arg30: memref<32x96xf32, #tpu.memory_space<vmem>>, %arg31: memref<1x64xf32, #tpu.memory_space<vmem>>, %arg32: memref<1x32xf32, #tpu.memory_space<vmem>>, %arg33: memref<1x32xf32, #tpu.memory_space<vmem>>, %arg34: memref<32x72xf32, #tpu.memory_space<vmem>>, %arg35: memref<128x32xf32, #tpu.memory_space<vmem>>, %arg36: memref<32x64xf32, #tpu.memory_space<vmem>>, %arg37: memref<32x32xf32, #tpu.memory_space<vmem>>, %arg38: memref<32x32xf32, #tpu.memory_space<vmem>>, %arg39: memref<1x64xf32, #tpu.memory_space<vmem>>, %arg40: memref<1x32xf32, #tpu.memory_space<vmem>>, %arg41: memref<32x64xf32, #tpu.memory_space<vmem>>, %arg42: memref<64x32xf32, #tpu.memory_space<vmem>>, %arg43: memref<1x32xf32, #tpu.memory_space<vmem>>, %arg44: memref<1x32xf32, #tpu.memory_space<vmem>>, %arg45: memref<1x32xf32, #tpu.memory_space<vmem>>, %arg46: memref<1x32xf32, #tpu.memory_space<vmem>>, %arg47: memref<1x32xf32, #tpu.memory_space<vmem>>, %arg48: memref<1x32xf32, #tpu.memory_space<vmem>>, %arg49: memref<1x32xf32, #tpu.memory_space<vmem>>, %arg50: memref<1x96xf32, #tpu.memory_space<vmem>>, %arg51: memref<32x72xf32, #tpu.memory_space<vmem>>, %arg52: memref<128x32xf32, #tpu.memory_space<vmem>>, %arg53: memref<32x32xf32, #tpu.memory_space<vmem>>, %arg54: memref<32x96xf32, #tpu.memory_space<vmem>>, %arg55: memref<64x32xf32, #tpu.memory_space<vmem>>, %arg56: memref<72x16xf32, #tpu.memory_space<vmem>>, %arg57: memref<64x128xf32, #tpu.memory_space<vmem>>, %arg58: memref<64x72xf32, #tpu.memory_space<vmem>>, %arg59: memref<16x128xf32, #tpu.memory_space<vmem>>, %arg60: memref<64x32xf32, #tpu.memory_space<vmem>>, %arg61: memref<72x16xf32, #tpu.memory_space<vmem>>, %arg62: memref<64x128xf32, #tpu.memory_space<vmem>>, %arg63: memref<64x72xf32, #tpu.memory_space<vmem>>, %arg64: memref<16x128xf32, #tpu.memory_space<vmem>>, %arg65: memref<16x64xf32, #tpu.memory_space<vmem>>, %arg66: memref<16x32xf32, #tpu.memory_space<vmem>>) attributes {dimension_semantics = [#tpu.dimension_semantics<arbitrary>], iteration_bounds = array<i64: 1>, scalar_prefetch = 0 : i64, scratch_operands = 0 : i64, tpu.core_type = #tpu.core_type<tc>, window_params = [{pipeline_mode = #tpu.pipeline_mode<synchronous>, transform_indices = @transform_0, window_bounds = array<i64: 16, 32>}, {pipeline_mode = #tpu.pipeline_mode<synchronous>, transform_indices = @transform_1, window_bounds = array<i64: 16, 32>}, {pipeline_mode = #tpu.pipeline_mode<synchronous>, transform_indices = @transform_2, window_bounds = array<i64: 64, 16>}, {pipeline_mode = #tpu.pipeline_mode<synchronous>, transform_indices = @transform_3, window_bounds = array<i64: 64, 16>}, {pipeline_mode = #tpu.pipeline_mode<synchronous>, transform_indices = @transform_4, window_bounds = array<i64: 1, 64>}, {pipeline_mode = #tpu.pipeline_mode<synchronous>, transform_indices = @transform_5, window_bounds = array<i64: 32, 64>}, {pipeline_mode = #tpu.pipeline_mode<synchronous>, transform_indices = @transform_6, window_bounds = array<i64: 1, 64>}, {pipeline_mode = #tpu.pipeline_mode<synchronous>, transform_indices = @transform_7, window_bounds = array<i64: 1, 32>}, {pipeline_mode = #tpu.pipeline_mode<synchronous>, transform_indices = @transform_8, window_bounds = array<i64: 1, 32>}, {pipeline_mode = #tpu.pipeline_mode<synchronous>, transform_indices = @transform_9, window_bounds = array<i64: 32, 72>}, {pipeline_mode = #tpu.pipeline_mode<synchronous>, transform_indices = @transform_10, window_bounds = array<i64: 128, 32>}, {pipeline_mode = #tpu.pipeline_mode<synchronous>, transform_indices = @transform_11, window_bounds = array<i64: 32, 64>}, {pipeline_mode = #tpu.pipeline_mode<synchronous>, transform_indices = @transform_12, window_bounds = array<i64: 32, 32>}, {pipeline_mode = #tpu.pipeline_mode<synchronous>, transform_indices = @transform_13, window_bounds = array<i64: 32, 32>}, {pipeline_mode = #tpu.pipeline_mode<synchronous>, transform_indices = @transform_14, window_bounds = array<i64: 1, 64>}, {pipeline_mode = #tpu.pipeline_mode<synchronous>, transform_indices = @transform_15, window_bounds = array<i64: 1, 32>}, {pipeline_mode = #tpu.pipeline_mode<synchronous>, transform_indices = @transform_16, window_bounds = array<i64: 32, 64>}, {pipeline_mode = #tpu.pipeline_mode<synchronous>, transform_indices = @transform_17, window_bounds = array<i64: 64, 32>}, {pipeline_mode = #tpu.pipeline_mode<synchronous>, transform_indices = @transform_18, window_bounds = array<i64: 1, 32>}, {pipeline_mode = #tpu.pipeline_mode<synchronous>, transform_indices = @transform_19, window_bounds = array<i64: 1, 32>}, {pipeline_mode = #tpu.pipeline_mode<synchronous>, transform_indices = @transform_20, window_bounds = array<i64: 1, 32>}, {pipeline_mode = #tpu.pipeline_mode<synchronous>, transform_indices = @transform_21, window_bounds = array<i64: 1, 32>}, {pipeline_mode = #tpu.pipeline_mode<synchronous>, transform_indices = @transform_22, window_bounds = array<i64: 1, 32>}, {pipeline_mode = #tpu.pipeline_mode<synchronous>, transform_indices = @transform_23, window_bounds = array<i64: 1, 32>}, {pipeline_mode = #tpu.pipeline_mode<synchronous>, transform_indices = @transform_24, window_bounds = array<i64: 1, 32>}, {pipeline_mode = #tpu.pipeline_mode<synchronous>, transform_indices = @transform_25, window_bounds = array<i64: 1, 96>}, {pipeline_mode = #tpu.pipeline_mode<synchronous>, transform_indices = @transform_26, window_bounds = array<i64: 32, 72>}, {pipeline_mode = #tpu.pipeline_mode<synchronous>, transform_indices = @transform_27, window_bounds = array<i64: 128, 32>}, {pipeline_mode = #tpu.pipeline_mode<synchronous>, transform_indices = @transform_28, window_bounds = array<i64: 32, 32>}, {pipeline_mode = #tpu.pipeline_mode<synchronous>, transform_indices = @transform_29, window_bounds = array<i64: 32, 96>}, {pipeline_mode = #tpu.pipeline_mode<synchronous>, transform_indices = @transform_30, window_bounds = array<i64: 1, 64>}, {pipeline_mode = #tpu.pipeline_mode<synchronous>, transform_indices = @transform_31, window_bounds = array<i64: 1, 32>}, {pipeline_mode = #tpu.pipeline_mode<synchronous>, transform_indices = @transform_32, window_bounds = array<i64: 1, 32>}, {pipeline_mode = #tpu.pipeline_mode<synchronous>, transform_indices = @transform_33, window_bounds = array<i64: 32, 72>}, {pipeline_mode = #tpu.pipeline_mode<synchronous>, transform_indices = @transform_34, window_bounds = array<i64: 128, 32>}, {pipeline_mode = #tpu.pipeline_mode<synchronous>, transform_indices = @transform_35, window_bounds = array<i64: 32, 64>}, {pipeline_mode = #tpu.pipeline_mode<synchronous>, transform_indices = @transform_36, window_bounds = array<i64: 32, 32>}, {pipeline_mode = #tpu.pipeline_mode<synchronous>, transform_indices = @transform_37, window_bounds = array<i64: 32, 32>}, {pipeline_mode = #tpu.pipeline_mode<synchronous>, transform_indices = @transform_38, window_bounds = array<i64: 1, 64>}, {pipeline_mode = #tpu.pipeline_mode<synchronous>, transform_indices = @transform_39, window_bounds = array<i64: 1, 32>}, {pipeline_mode = #tpu.pipeline_mode<synchronous>, transform_indices = @transform_40, window_bounds = array<i64: 32, 64>}, {pipeline_mode = #tpu.pipeline_mode<synchronous>, transform_indices = @transform_41, window_bounds = array<i64: 64, 32>}, {pipeline_mode = #tpu.pipeline_mode<synchronous>, transform_indices = @transform_42, window_bounds = array<i64: 1, 32>}, {pipeline_mode = #tpu.pipeline_mode<synchronous>, transform_indices = @transform_43, window_bounds = array<i64: 1, 32>}, {pipeline_mode = #tpu.pipeline_mode<synchronous>, transform_indices = @transform_44, window_bounds = array<i64: 1, 32>}, {pipeline_mode = #tpu.pipeline_mode<synchronous>, transform_indices = @transform_45, window_bounds = array<i64: 1, 32>}, {pipeline_mode = #tpu.pipeline_mode<synchronous>, transform_indices = @transform_46, window_bounds = array<i64: 1, 32>}, {pipeline_mode = #tpu.pipeline_mode<synchronous>, transform_indices = @transform_47, window_bounds = array<i64: 1, 32>}, {pipeline_mode = #tpu.pipeline_mode<synchronous>, transform_indices = @transform_48, window_bounds = array<i64: 1, 32>}, {pipeline_mode = #tpu.pipeline_mode<synchronous>, transform_indices = @transform_49, window_bounds = array<i64: 1, 96>}, {pipeline_mode = #tpu.pipeline_mode<synchronous>, transform_indices = @transform_50, window_bounds = array<i64: 32, 72>}, {pipeline_mode = #tpu.pipeline_mode<synchronous>, transform_indices = @transform_51, window_bounds = array<i64: 128, 32>}, {pipeline_mode = #tpu.pipeline_mode<synchronous>, transform_indices = @transform_52, window_bounds = array<i64: 32, 32>}, {pipeline_mode = #tpu.pipeline_mode<synchronous>, transform_indices = @transform_53, window_bounds = array<i64: 32, 96>}, {pipeline_mode = #tpu.pipeline_mode<synchronous>, transform_indices = @transform_54, window_bounds = array<i64: 64, 32>}, {pipeline_mode = #tpu.pipeline_mode<synchronous>, transform_indices = @transform_55, window_bounds = array<i64: 72, 16>}, {pipeline_mode = #tpu.pipeline_mode<synchronous>, transform_indices = @transform_56, window_bounds = array<i64: 64, 128>}, {pipeline_mode = #tpu.pipeline_mode<synchronous>, transform_indices = @transform_57, window_bounds = array<i64: 64, 72>}, {pipeline_mode = #tpu.pipeline_mode<synchronous>, transform_indices = @transform_58, window_bounds = array<i64: 16, 128>}, {pipeline_mode = #tpu.pipeline_mode<synchronous>, transform_indices = @transform_59, window_bounds = array<i64: 64, 32>}, {pipeline_mode = #tpu.pipeline_mode<synchronous>, transform_indices = @transform_60, window_bounds = array<i64: 72, 16>}, {pipeline_mode = #tpu.pipeline_mode<synchronous>, transform_indices = @transform_61, window_bounds = array<i64: 64, 128>}, {pipeline_mode = #tpu.pipeline_mode<synchronous>, transform_indices = @transform_62, window_bounds = array<i64: 64, 72>}, {pipeline_mode = #tpu.pipeline_mode<synchronous>, transform_indices = @transform_63, window_bounds = array<i64: 16, 128>}, {pipeline_mode = #tpu.pipeline_mode<synchronous>, transform_indices = @transform_64, window_bounds = array<i64: 16, 64>}, {pipeline_mode = #tpu.pipeline_mode<synchronous>, transform_indices = @transform_65, window_bounds = array<i64: 16, 32>}]} {
    %c0 = arith.constant 0 : index
    %c0_0 = arith.constant 0 : index
    %0 = vector.load %arg1[%c0, %c0_0] : memref<16x32xf32, #tpu.memory_space<vmem>>, vector<16x32xf32>
    %c0_1 = arith.constant 0 : index
    %c0_2 = arith.constant 0 : index
    %1 = vector.load %arg2[%c0_1, %c0_2] : memref<16x32xf32, #tpu.memory_space<vmem>>, vector<16x32xf32>
    %c0_3 = arith.constant 0 : index
    %c0_4 = arith.constant 0 : index
    %2 = vector.load %arg30[%c0_3, %c0_4] : memref<32x96xf32, #tpu.memory_space<vmem>>, vector<32x96xf32>
    %cst = arith.constant dense<0.000000e+00> : vector<16x96xf32>
    %3 = tpu.matmul %0, %2, %cst {dimension_numbers = #tpu.dot_dimension_numbers<[1], [0], [0], [1], [0, 0, 1, 1], [], []>} : vector<16x32xf32>, vector<32x96xf32>, vector<16x96xf32> -> vector<16x96xf32>
    %c0_5 = arith.constant 0 : index
    %c0_6 = arith.constant 0 : index
    %4 = vector.load %arg26[%c0_5, %c0_6] : memref<1x96xf32, #tpu.memory_space<vmem>>, vector<1x96xf32>
    %5 = vector.broadcast %4 : vector<1x96xf32> to vector<16x96xf32>
    %6 = arith.addf %3, %5 : vector<16x96xf32>
    %7 = vector.extract_strided_slice %6 {offsets = [0, 0], sizes = [16, 32], strides = [1, 1]} : vector<16x96xf32> to vector<16x32xf32>
    %8 = vector.extract_strided_slice %6 {offsets = [0, 32], sizes = [16, 32], strides = [1, 1]} : vector<16x96xf32> to vector<16x32xf32>
    %9 = vector.extract_strided_slice %6 {offsets = [0, 64], sizes = [16, 32], strides = [1, 1]} : vector<16x96xf32> to vector<16x32xf32>
    %10 = tpu.concatenate %7, %7, %7, %7 in 0 : vector<16x32xf32>, vector<16x32xf32>, vector<16x32xf32>, vector<16x32xf32> -> vector<64x32xf32>
    %c0_7 = arith.constant 0 : index
    %c0_8 = arith.constant 0 : index
    %11 = vector.load %arg55[%c0_7, %c0_8] : memref<64x32xf32, #tpu.memory_space<vmem>>, vector<64x32xf32>
    %12 = arith.mulf %10, %11 : vector<64x32xf32>
    %cst_9 = arith.constant dense<0.000000e+00> : vector<64x16xf32>
    %13 = tpu.matmul %12, %8, %cst_9 {dimension_numbers = #tpu.dot_dimension_numbers<[1], [1], [0], [0], [0, 0, 1, 0], [], []>} : vector<64x32xf32>, vector<16x32xf32>, vector<64x16xf32> -> vector<64x16xf32>
    %c0_10 = arith.constant 0 : index
    %c0_11 = arith.constant 0 : index
    %14 = vector.load %arg27[%c0_10, %c0_11] : memref<32x72xf32, #tpu.memory_space<vmem>>, vector<32x72xf32>
    %cst_12 = arith.constant dense<0.000000e+00> : vector<64x72xf32>
    %15 = tpu.matmul %12, %14, %cst_12 {dimension_numbers = #tpu.dot_dimension_numbers<[1], [0], [0], [1], [0, 0, 1, 1], [], []>} : vector<64x32xf32>, vector<32x72xf32>, vector<64x72xf32> -> vector<64x72xf32>
    %c0_13 = arith.constant 0 : index
    %c0_14 = arith.constant 0 : index
    %16 = vector.load %arg58[%c0_13, %c0_14] : memref<64x72xf32, #tpu.memory_space<vmem>>, vector<64x72xf32>
    %17 = arith.mulf %15, %16 : vector<64x72xf32>
    %c0_15 = arith.constant 0 : index
    %c0_16 = arith.constant 0 : index
    %18 = vector.load %arg56[%c0_15, %c0_16] : memref<72x16xf32, #tpu.memory_space<vmem>>, vector<72x16xf32>
    %cst_17 = arith.constant dense<0.000000e+00> : vector<64x16xf32>
    %19 = tpu.matmul %17, %18, %cst_17 {dimension_numbers = #tpu.dot_dimension_numbers<[1], [0], [0], [1], [0, 0, 1, 1], [], []>} : vector<64x72xf32>, vector<72x16xf32>, vector<64x16xf32> -> vector<64x16xf32>
    %20 = arith.addf %13, %19 : vector<64x16xf32>
    %c0_18 = arith.constant 0 : index
    %c0_19 = arith.constant 0 : index
    %21 = vector.load %arg3[%c0_18, %c0_19] : memref<64x16xf32, #tpu.memory_space<vmem>>, vector<64x16xf32>
    %22 = arith.addf %20, %21 : vector<64x16xf32>
    %cst_20 = arith.constant dense<0xFF800000> : vector<64xf32>
    %23 = vector.multi_reduction <maximumf>, %22, %cst_20 [1] : vector<64x16xf32> to vector<64xf32>
    %24 = vector.shape_cast %23 : vector<64xf32> to vector<64x1xf32>
    %25 = vector.broadcast %24 : vector<64x1xf32> to vector<64x16xf32>
    %26 = arith.subf %22, %25 : vector<64x16xf32>
    %27 = math.exp %26 : vector<64x16xf32>
    %cst_21 = arith.constant dense<0.000000e+00> : vector<64xf32>
    %28 = vector.multi_reduction <add>, %27, %cst_21 [1] : vector<64x16xf32> to vector<64xf32>
    %29 = vector.shape_cast %28 : vector<64xf32> to vector<64x1xf32>
    %30 = tpu.reciprocal %29 {approx = true} : vector<64x1xf32> -> vector<64x1xf32>
    %31 = vector.broadcast %30 : vector<64x1xf32> to vector<64x16xf32>
    %32 = arith.mulf %27, %31 : vector<64x16xf32>
    %cst_22 = arith.constant dense<0.000000e+00> : vector<64x32xf32>
    %33 = tpu.matmul %32, %9, %cst_22 {dimension_numbers = #tpu.dot_dimension_numbers<[1], [0], [0], [1], [0, 0, 1, 1], [], []>} : vector<64x16xf32>, vector<16x32xf32>, vector<64x32xf32> -> vector<64x32xf32>
    %c0_23 = arith.constant 0 : index
    %c0_24 = arith.constant 0 : index
    %34 = vector.load %arg55[%c0_23, %c0_24] : memref<64x32xf32, #tpu.memory_space<vmem>>, vector<64x32xf32>
    %35 = arith.mulf %33, %34 : vector<64x32xf32>
    %36 = vector.extract_strided_slice %35 {offsets = [0, 0], sizes = [16, 32], strides = [1, 1]} : vector<64x32xf32> to vector<16x32xf32>
    %37 = vector.extract_strided_slice %35 {offsets = [16, 0], sizes = [16, 32], strides = [1, 1]} : vector<64x32xf32> to vector<16x32xf32>
    %38 = arith.addf %36, %37 : vector<16x32xf32>
    %39 = vector.extract_strided_slice %35 {offsets = [32, 0], sizes = [16, 32], strides = [1, 1]} : vector<64x32xf32> to vector<16x32xf32>
    %40 = arith.addf %38, %39 : vector<16x32xf32>
    %41 = vector.extract_strided_slice %35 {offsets = [48, 0], sizes = [16, 32], strides = [1, 1]} : vector<64x32xf32> to vector<16x32xf32>
    %42 = arith.addf %40, %41 : vector<16x32xf32>
    %c0_25 = arith.constant 0 : index
    %c0_26 = arith.constant 0 : index
    %43 = vector.load %arg59[%c0_25, %c0_26] : memref<16x128xf32, #tpu.memory_space<vmem>>, vector<16x128xf32>
    %cst_27 = arith.constant dense<0.000000e+00> : vector<64x128xf32>
    %44 = tpu.matmul %32, %43, %cst_27 {dimension_numbers = #tpu.dot_dimension_numbers<[1], [0], [0], [1], [0, 0, 1, 1], [], []>} : vector<64x16xf32>, vector<16x128xf32>, vector<64x128xf32> -> vector<64x128xf32>
    %c0_28 = arith.constant 0 : index
    %c0_29 = arith.constant 0 : index
    %45 = vector.load %arg57[%c0_28, %c0_29] : memref<64x128xf32, #tpu.memory_space<vmem>>, vector<64x128xf32>
    %46 = arith.mulf %44, %45 : vector<64x128xf32>
    %c0_30 = arith.constant 0 : index
    %c0_31 = arith.constant 0 : index
    %47 = vector.load %arg28[%c0_30, %c0_31] : memref<128x32xf32, #tpu.memory_space<vmem>>, vector<128x32xf32>
    %cst_32 = arith.constant dense<0.000000e+00> : vector<64x32xf32>
    %48 = tpu.matmul %46, %47, %cst_32 {dimension_numbers = #tpu.dot_dimension_numbers<[1], [0], [0], [1], [0, 0, 1, 1], [], []>} : vector<64x128xf32>, vector<128x32xf32>, vector<64x32xf32> -> vector<64x32xf32>
    %c0_33 = arith.constant 0 : index
    %c0_34 = arith.constant 0 : index
    %49 = vector.load %arg55[%c0_33, %c0_34] : memref<64x32xf32, #tpu.memory_space<vmem>>, vector<64x32xf32>
    %50 = arith.mulf %48, %49 : vector<64x32xf32>
    %51 = vector.extract_strided_slice %50 {offsets = [0, 0], sizes = [16, 32], strides = [1, 1]} : vector<64x32xf32> to vector<16x32xf32>
    %52 = vector.extract_strided_slice %50 {offsets = [16, 0], sizes = [16, 32], strides = [1, 1]} : vector<64x32xf32> to vector<16x32xf32>
    %53 = arith.addf %51, %52 : vector<16x32xf32>
    %54 = vector.extract_strided_slice %50 {offsets = [32, 0], sizes = [16, 32], strides = [1, 1]} : vector<64x32xf32> to vector<16x32xf32>
    %55 = arith.addf %53, %54 : vector<16x32xf32>
    %56 = vector.extract_strided_slice %50 {offsets = [48, 0], sizes = [16, 32], strides = [1, 1]} : vector<64x32xf32> to vector<16x32xf32>
    %57 = arith.addf %55, %56 : vector<16x32xf32>
    %58 = arith.addf %42, %57 : vector<16x32xf32>
    %c0_35 = arith.constant 0 : index
    %c0_36 = arith.constant 0 : index
    %59 = vector.load %arg29[%c0_35, %c0_36] : memref<32x32xf32, #tpu.memory_space<vmem>>, vector<32x32xf32>
    %cst_37 = arith.constant dense<0.000000e+00> : vector<16x32xf32>
    %60 = tpu.matmul %58, %59, %cst_37 {dimension_numbers = #tpu.dot_dimension_numbers<[1], [0], [0], [1], [0, 0, 1, 1], [], []>} : vector<16x32xf32>, vector<32x32xf32>, vector<16x32xf32> -> vector<16x32xf32>
    %c0_38 = arith.constant 0 : index
    %c0_39 = arith.constant 0 : index
    %61 = vector.load %arg25[%c0_38, %c0_39] : memref<1x32xf32, #tpu.memory_space<vmem>>, vector<1x32xf32>
    %62 = vector.broadcast %61 : vector<1x32xf32> to vector<16x32xf32>
    %63 = arith.addf %60, %62 : vector<16x32xf32>
    %64 = arith.addf %63, %0 : vector<16x32xf32>
    %cst_40 = arith.constant dense<0.000000e+00> : vector<16xf32>
    %65 = vector.multi_reduction <add>, %64, %cst_40 [1] : vector<16x32xf32> to vector<16xf32>
    %66 = vector.shape_cast %65 : vector<16xf32> to vector<16x1xf32>
    %cst_41 = arith.constant 3.200000e+01 : f32
    %67 = vector.broadcast %cst_41 : f32 to vector<16x1xf32>
    %68 = arith.divf %66, %67 : vector<16x1xf32>
    %69 = vector.broadcast %68 : vector<16x1xf32> to vector<16x32xf32>
    %70 = arith.subf %64, %69 : vector<16x32xf32>
    %71 = arith.mulf %70, %70 : vector<16x32xf32>
    %cst_42 = arith.constant dense<0.000000e+00> : vector<16xf32>
    %72 = vector.multi_reduction <add>, %71, %cst_42 [1] : vector<16x32xf32> to vector<16xf32>
    %73 = vector.shape_cast %72 : vector<16xf32> to vector<16x1xf32>
    %cst_43 = arith.constant 3.200000e+01 : f32
    %74 = vector.broadcast %cst_43 : f32 to vector<16x1xf32>
    %75 = arith.divf %73, %74 : vector<16x1xf32>
    %cst_44 = arith.constant 9.99999974E-6 : f32
    %76 = vector.broadcast %cst_44 : f32 to vector<16x1xf32>
    %77 = arith.addf %75, %76 : vector<16x1xf32>
    %78 = math.rsqrt %77 : vector<16x1xf32>
    %79 = vector.broadcast %78 : vector<16x1xf32> to vector<16x32xf32>
    %80 = arith.mulf %70, %79 : vector<16x32xf32>
    %c0_45 = arith.constant 0 : index
    %c0_46 = arith.constant 0 : index
    %81 = vector.load %arg20[%c0_45, %c0_46] : memref<1x32xf32, #tpu.memory_space<vmem>>, vector<1x32xf32>
    %82 = vector.broadcast %81 : vector<1x32xf32> to vector<16x32xf32>
    %83 = arith.mulf %80, %82 : vector<16x32xf32>
    %c0_47 = arith.constant 0 : index
    %c0_48 = arith.constant 0 : index
    %84 = vector.load %arg19[%c0_47, %c0_48] : memref<1x32xf32, #tpu.memory_space<vmem>>, vector<1x32xf32>
    %85 = vector.broadcast %84 : vector<1x32xf32> to vector<16x32xf32>
    %86 = arith.addf %83, %85 : vector<16x32xf32>
    %c0_49 = arith.constant 0 : index
    %c0_50 = arith.constant 0 : index
    %87 = vector.load %arg14[%c0_49, %c0_50] : memref<32x32xf32, #tpu.memory_space<vmem>>, vector<32x32xf32>
    %cst_51 = arith.constant dense<0.000000e+00> : vector<16x32xf32>
    %88 = tpu.matmul %86, %87, %cst_51 {dimension_numbers = #tpu.dot_dimension_numbers<[1], [0], [0], [1], [0, 0, 1, 1], [], []>} : vector<16x32xf32>, vector<32x32xf32>, vector<16x32xf32> -> vector<16x32xf32>
    %c0_52 = arith.constant 0 : index
    %c0_53 = arith.constant 0 : index
    %89 = vector.load %arg9[%c0_52, %c0_53] : memref<1x32xf32, #tpu.memory_space<vmem>>, vector<1x32xf32>
    %90 = vector.broadcast %89 : vector<1x32xf32> to vector<16x32xf32>
    %91 = arith.addf %88, %90 : vector<16x32xf32>
    %c0_54 = arith.constant 0 : index
    %c0_55 = arith.constant 0 : index
    %92 = vector.load %arg12[%c0_54, %c0_55] : memref<32x64xf32, #tpu.memory_space<vmem>>, vector<32x64xf32>
    %cst_56 = arith.constant dense<0.000000e+00> : vector<16x64xf32>
    %93 = tpu.matmul %1, %92, %cst_56 {dimension_numbers = #tpu.dot_dimension_numbers<[1], [0], [0], [1], [0, 0, 1, 1], [], []>} : vector<16x32xf32>, vector<32x64xf32>, vector<16x64xf32> -> vector<16x64xf32>
    %c0_57 = arith.constant 0 : index
    %c0_58 = arith.constant 0 : index
    %94 = vector.load %arg7[%c0_57, %c0_58] : memref<1x64xf32, #tpu.memory_space<vmem>>, vector<1x64xf32>
    %95 = vector.broadcast %94 : vector<1x64xf32> to vector<16x64xf32>
    %96 = arith.addf %93, %95 : vector<16x64xf32>
    %97 = vector.extract_strided_slice %96 {offsets = [0, 0], sizes = [16, 32], strides = [1, 1]} : vector<16x64xf32> to vector<16x32xf32>
    %98 = vector.extract_strided_slice %96 {offsets = [0, 32], sizes = [16, 32], strides = [1, 1]} : vector<16x64xf32> to vector<16x32xf32>
    %99 = tpu.concatenate %91, %91, %91, %91 in 0 : vector<16x32xf32>, vector<16x32xf32>, vector<16x32xf32>, vector<16x32xf32> -> vector<64x32xf32>
    %c0_59 = arith.constant 0 : index
    %c0_60 = arith.constant 0 : index
    %100 = vector.load %arg60[%c0_59, %c0_60] : memref<64x32xf32, #tpu.memory_space<vmem>>, vector<64x32xf32>
    %101 = arith.mulf %99, %100 : vector<64x32xf32>
    %cst_61 = arith.constant dense<0.000000e+00> : vector<64x16xf32>
    %102 = tpu.matmul %101, %97, %cst_61 {dimension_numbers = #tpu.dot_dimension_numbers<[1], [1], [0], [0], [0, 0, 1, 0], [], []>} : vector<64x32xf32>, vector<16x32xf32>, vector<64x16xf32> -> vector<64x16xf32>
    %c0_62 = arith.constant 0 : index
    %c0_63 = arith.constant 0 : index
    %103 = vector.load %arg10[%c0_62, %c0_63] : memref<32x72xf32, #tpu.memory_space<vmem>>, vector<32x72xf32>
    %cst_64 = arith.constant dense<0.000000e+00> : vector<64x72xf32>
    %104 = tpu.matmul %101, %103, %cst_64 {dimension_numbers = #tpu.dot_dimension_numbers<[1], [0], [0], [1], [0, 0, 1, 1], [], []>} : vector<64x32xf32>, vector<32x72xf32>, vector<64x72xf32> -> vector<64x72xf32>
    %c0_65 = arith.constant 0 : index
    %c0_66 = arith.constant 0 : index
    %105 = vector.load %arg63[%c0_65, %c0_66] : memref<64x72xf32, #tpu.memory_space<vmem>>, vector<64x72xf32>
    %106 = arith.mulf %104, %105 : vector<64x72xf32>
    %c0_67 = arith.constant 0 : index
    %c0_68 = arith.constant 0 : index
    %107 = vector.load %arg61[%c0_67, %c0_68] : memref<72x16xf32, #tpu.memory_space<vmem>>, vector<72x16xf32>
    %cst_69 = arith.constant dense<0.000000e+00> : vector<64x16xf32>
    %108 = tpu.matmul %106, %107, %cst_69 {dimension_numbers = #tpu.dot_dimension_numbers<[1], [0], [0], [1], [0, 0, 1, 1], [], []>} : vector<64x72xf32>, vector<72x16xf32>, vector<64x16xf32> -> vector<64x16xf32>
    %109 = arith.addf %102, %108 : vector<64x16xf32>
    %c0_70 = arith.constant 0 : index
    %c0_71 = arith.constant 0 : index
    %110 = vector.load %arg4[%c0_70, %c0_71] : memref<64x16xf32, #tpu.memory_space<vmem>>, vector<64x16xf32>
    %111 = arith.addf %109, %110 : vector<64x16xf32>
    %cst_72 = arith.constant dense<0xFF800000> : vector<64xf32>
    %112 = vector.multi_reduction <maximumf>, %111, %cst_72 [1] : vector<64x16xf32> to vector<64xf32>
    %113 = vector.shape_cast %112 : vector<64xf32> to vector<64x1xf32>
    %114 = vector.broadcast %113 : vector<64x1xf32> to vector<64x16xf32>
    %115 = arith.subf %111, %114 : vector<64x16xf32>
    %116 = math.exp %115 : vector<64x16xf32>
    %cst_73 = arith.constant dense<0.000000e+00> : vector<64xf32>
    %117 = vector.multi_reduction <add>, %116, %cst_73 [1] : vector<64x16xf32> to vector<64xf32>
    %118 = vector.shape_cast %117 : vector<64xf32> to vector<64x1xf32>
    %119 = tpu.reciprocal %118 {approx = true} : vector<64x1xf32> -> vector<64x1xf32>
    %120 = vector.broadcast %119 : vector<64x1xf32> to vector<64x16xf32>
    %121 = arith.mulf %116, %120 : vector<64x16xf32>
    %cst_74 = arith.constant dense<0.000000e+00> : vector<64x32xf32>
    %122 = tpu.matmul %121, %98, %cst_74 {dimension_numbers = #tpu.dot_dimension_numbers<[1], [0], [0], [1], [0, 0, 1, 1], [], []>} : vector<64x16xf32>, vector<16x32xf32>, vector<64x32xf32> -> vector<64x32xf32>
    %c0_75 = arith.constant 0 : index
    %c0_76 = arith.constant 0 : index
    %123 = vector.load %arg60[%c0_75, %c0_76] : memref<64x32xf32, #tpu.memory_space<vmem>>, vector<64x32xf32>
    %124 = arith.mulf %122, %123 : vector<64x32xf32>
    %125 = vector.extract_strided_slice %124 {offsets = [0, 0], sizes = [16, 32], strides = [1, 1]} : vector<64x32xf32> to vector<16x32xf32>
    %126 = vector.extract_strided_slice %124 {offsets = [16, 0], sizes = [16, 32], strides = [1, 1]} : vector<64x32xf32> to vector<16x32xf32>
    %127 = arith.addf %125, %126 : vector<16x32xf32>
    %128 = vector.extract_strided_slice %124 {offsets = [32, 0], sizes = [16, 32], strides = [1, 1]} : vector<64x32xf32> to vector<16x32xf32>
    %129 = arith.addf %127, %128 : vector<16x32xf32>
    %130 = vector.extract_strided_slice %124 {offsets = [48, 0], sizes = [16, 32], strides = [1, 1]} : vector<64x32xf32> to vector<16x32xf32>
    %131 = arith.addf %129, %130 : vector<16x32xf32>
    %c0_77 = arith.constant 0 : index
    %c0_78 = arith.constant 0 : index
    %132 = vector.load %arg64[%c0_77, %c0_78] : memref<16x128xf32, #tpu.memory_space<vmem>>, vector<16x128xf32>
    %cst_79 = arith.constant dense<0.000000e+00> : vector<64x128xf32>
    %133 = tpu.matmul %121, %132, %cst_79 {dimension_numbers = #tpu.dot_dimension_numbers<[1], [0], [0], [1], [0, 0, 1, 1], [], []>} : vector<64x16xf32>, vector<16x128xf32>, vector<64x128xf32> -> vector<64x128xf32>
    %c0_80 = arith.constant 0 : index
    %c0_81 = arith.constant 0 : index
    %134 = vector.load %arg62[%c0_80, %c0_81] : memref<64x128xf32, #tpu.memory_space<vmem>>, vector<64x128xf32>
    %135 = arith.mulf %133, %134 : vector<64x128xf32>
    %c0_82 = arith.constant 0 : index
    %c0_83 = arith.constant 0 : index
    %136 = vector.load %arg11[%c0_82, %c0_83] : memref<128x32xf32, #tpu.memory_space<vmem>>, vector<128x32xf32>
    %cst_84 = arith.constant dense<0.000000e+00> : vector<64x32xf32>
    %137 = tpu.matmul %135, %136, %cst_84 {dimension_numbers = #tpu.dot_dimension_numbers<[1], [0], [0], [1], [0, 0, 1, 1], [], []>} : vector<64x128xf32>, vector<128x32xf32>, vector<64x32xf32> -> vector<64x32xf32>
    %c0_85 = arith.constant 0 : index
    %c0_86 = arith.constant 0 : index
    %138 = vector.load %arg60[%c0_85, %c0_86] : memref<64x32xf32, #tpu.memory_space<vmem>>, vector<64x32xf32>
    %139 = arith.mulf %137, %138 : vector<64x32xf32>
    %140 = vector.extract_strided_slice %139 {offsets = [0, 0], sizes = [16, 32], strides = [1, 1]} : vector<64x32xf32> to vector<16x32xf32>
    %141 = vector.extract_strided_slice %139 {offsets = [16, 0], sizes = [16, 32], strides = [1, 1]} : vector<64x32xf32> to vector<16x32xf32>
    %142 = arith.addf %140, %141 : vector<16x32xf32>
    %143 = vector.extract_strided_slice %139 {offsets = [32, 0], sizes = [16, 32], strides = [1, 1]} : vector<64x32xf32> to vector<16x32xf32>
    %144 = arith.addf %142, %143 : vector<16x32xf32>
    %145 = vector.extract_strided_slice %139 {offsets = [48, 0], sizes = [16, 32], strides = [1, 1]} : vector<64x32xf32> to vector<16x32xf32>
    %146 = arith.addf %144, %145 : vector<16x32xf32>
    %147 = arith.addf %131, %146 : vector<16x32xf32>
    %c0_87 = arith.constant 0 : index
    %c0_88 = arith.constant 0 : index
    %148 = vector.load %arg13[%c0_87, %c0_88] : memref<32x32xf32, #tpu.memory_space<vmem>>, vector<32x32xf32>
    %cst_89 = arith.constant dense<0.000000e+00> : vector<16x32xf32>
    %149 = tpu.matmul %147, %148, %cst_89 {dimension_numbers = #tpu.dot_dimension_numbers<[1], [0], [0], [1], [0, 0, 1, 1], [], []>} : vector<16x32xf32>, vector<32x32xf32>, vector<16x32xf32> -> vector<16x32xf32>
    %c0_90 = arith.constant 0 : index
    %c0_91 = arith.constant 0 : index
    %150 = vector.load %arg8[%c0_90, %c0_91] : memref<1x32xf32, #tpu.memory_space<vmem>>, vector<1x32xf32>
    %151 = vector.broadcast %150 : vector<1x32xf32> to vector<16x32xf32>
    %152 = arith.addf %149, %151 : vector<16x32xf32>
    %153 = arith.addf %152, %86 : vector<16x32xf32>
    %cst_92 = arith.constant dense<0.000000e+00> : vector<16xf32>
    %154 = vector.multi_reduction <add>, %153, %cst_92 [1] : vector<16x32xf32> to vector<16xf32>
    %155 = vector.shape_cast %154 : vector<16xf32> to vector<16x1xf32>
    %cst_93 = arith.constant 3.200000e+01 : f32
    %156 = vector.broadcast %cst_93 : f32 to vector<16x1xf32>
    %157 = arith.divf %155, %156 : vector<16x1xf32>
    %158 = vector.broadcast %157 : vector<16x1xf32> to vector<16x32xf32>
    %159 = arith.subf %153, %158 : vector<16x32xf32>
    %160 = arith.mulf %159, %159 : vector<16x32xf32>
    %cst_94 = arith.constant dense<0.000000e+00> : vector<16xf32>
    %161 = vector.multi_reduction <add>, %160, %cst_94 [1] : vector<16x32xf32> to vector<16xf32>
    %162 = vector.shape_cast %161 : vector<16xf32> to vector<16x1xf32>
    %cst_95 = arith.constant 3.200000e+01 : f32
    %163 = vector.broadcast %cst_95 : f32 to vector<16x1xf32>
    %164 = arith.divf %162, %163 : vector<16x1xf32>
    %cst_96 = arith.constant 9.99999974E-6 : f32
    %165 = vector.broadcast %cst_96 : f32 to vector<16x1xf32>
    %166 = arith.addf %164, %165 : vector<16x1xf32>
    %167 = math.rsqrt %166 : vector<16x1xf32>
    %168 = vector.broadcast %167 : vector<16x1xf32> to vector<16x32xf32>
    %169 = arith.mulf %159, %168 : vector<16x32xf32>
    %c0_97 = arith.constant 0 : index
    %c0_98 = arith.constant 0 : index
    %170 = vector.load %arg22[%c0_97, %c0_98] : memref<1x32xf32, #tpu.memory_space<vmem>>, vector<1x32xf32>
    %171 = vector.broadcast %170 : vector<1x32xf32> to vector<16x32xf32>
    %172 = arith.mulf %169, %171 : vector<16x32xf32>
    %c0_99 = arith.constant 0 : index
    %c0_100 = arith.constant 0 : index
    %173 = vector.load %arg21[%c0_99, %c0_100] : memref<1x32xf32, #tpu.memory_space<vmem>>, vector<1x32xf32>
    %174 = vector.broadcast %173 : vector<1x32xf32> to vector<16x32xf32>
    %175 = arith.addf %172, %174 : vector<16x32xf32>
    %c0_101 = arith.constant 0 : index
    %c0_102 = arith.constant 0 : index
    %176 = vector.load %arg17[%c0_101, %c0_102] : memref<32x64xf32, #tpu.memory_space<vmem>>, vector<32x64xf32>
    %cst_103 = arith.constant dense<0.000000e+00> : vector<16x64xf32>
    %177 = tpu.matmul %175, %176, %cst_103 {dimension_numbers = #tpu.dot_dimension_numbers<[1], [0], [0], [1], [0, 0, 1, 1], [], []>} : vector<16x32xf32>, vector<32x64xf32>, vector<16x64xf32> -> vector<16x64xf32>
    %c0_104 = arith.constant 0 : index
    %c0_105 = arith.constant 0 : index
    %178 = vector.load %arg15[%c0_104, %c0_105] : memref<1x64xf32, #tpu.memory_space<vmem>>, vector<1x64xf32>
    %179 = vector.broadcast %178 : vector<1x64xf32> to vector<16x64xf32>
    %180 = arith.addf %177, %179 : vector<16x64xf32>
    %cst_106 = arith.constant 0.000000e+00 : f32
    %181 = vector.broadcast %cst_106 : f32 to vector<16x64xf32>
    %182 = arith.maximumf %180, %181 : vector<16x64xf32>
    %c0_107 = arith.constant 0 : index
    %c0_108 = arith.constant 0 : index
    %183 = vector.load %arg18[%c0_107, %c0_108] : memref<64x32xf32, #tpu.memory_space<vmem>>, vector<64x32xf32>
    %cst_109 = arith.constant dense<0.000000e+00> : vector<16x32xf32>
    %184 = tpu.matmul %182, %183, %cst_109 {dimension_numbers = #tpu.dot_dimension_numbers<[1], [0], [0], [1], [0, 0, 1, 1], [], []>} : vector<16x64xf32>, vector<64x32xf32>, vector<16x32xf32> -> vector<16x32xf32>
    %c0_110 = arith.constant 0 : index
    %c0_111 = arith.constant 0 : index
    %185 = vector.load %arg16[%c0_110, %c0_111] : memref<1x32xf32, #tpu.memory_space<vmem>>, vector<1x32xf32>
    %186 = vector.broadcast %185 : vector<1x32xf32> to vector<16x32xf32>
    %187 = arith.addf %184, %186 : vector<16x32xf32>
    %188 = arith.addf %187, %175 : vector<16x32xf32>
    %cst_112 = arith.constant dense<0.000000e+00> : vector<16xf32>
    %189 = vector.multi_reduction <add>, %188, %cst_112 [1] : vector<16x32xf32> to vector<16xf32>
    %190 = vector.shape_cast %189 : vector<16xf32> to vector<16x1xf32>
    %cst_113 = arith.constant 3.200000e+01 : f32
    %191 = vector.broadcast %cst_113 : f32 to vector<16x1xf32>
    %192 = arith.divf %190, %191 : vector<16x1xf32>
    %193 = vector.broadcast %192 : vector<16x1xf32> to vector<16x32xf32>
    %194 = arith.subf %188, %193 : vector<16x32xf32>
    %195 = arith.mulf %194, %194 : vector<16x32xf32>
    %cst_114 = arith.constant dense<0.000000e+00> : vector<16xf32>
    %196 = vector.multi_reduction <add>, %195, %cst_114 [1] : vector<16x32xf32> to vector<16xf32>
    %197 = vector.shape_cast %196 : vector<16xf32> to vector<16x1xf32>
    %cst_115 = arith.constant 3.200000e+01 : f32
    %198 = vector.broadcast %cst_115 : f32 to vector<16x1xf32>
    %199 = arith.divf %197, %198 : vector<16x1xf32>
    %cst_116 = arith.constant 9.99999974E-6 : f32
    %200 = vector.broadcast %cst_116 : f32 to vector<16x1xf32>
    %201 = arith.addf %199, %200 : vector<16x1xf32>
    %202 = math.rsqrt %201 : vector<16x1xf32>
    %203 = vector.broadcast %202 : vector<16x1xf32> to vector<16x32xf32>
    %204 = arith.mulf %194, %203 : vector<16x32xf32>
    %c0_117 = arith.constant 0 : index
    %c0_118 = arith.constant 0 : index
    %205 = vector.load %arg24[%c0_117, %c0_118] : memref<1x32xf32, #tpu.memory_space<vmem>>, vector<1x32xf32>
    %206 = vector.broadcast %205 : vector<1x32xf32> to vector<16x32xf32>
    %207 = arith.mulf %204, %206 : vector<16x32xf32>
    %c0_119 = arith.constant 0 : index
    %c0_120 = arith.constant 0 : index
    %208 = vector.load %arg23[%c0_119, %c0_120] : memref<1x32xf32, #tpu.memory_space<vmem>>, vector<1x32xf32>
    %209 = vector.broadcast %208 : vector<1x32xf32> to vector<16x32xf32>
    %210 = arith.addf %207, %209 : vector<16x32xf32>
    %c0_121 = arith.constant 0 : index
    %c0_122 = arith.constant 0 : index
    %211 = vector.load %arg54[%c0_121, %c0_122] : memref<32x96xf32, #tpu.memory_space<vmem>>, vector<32x96xf32>
    %cst_123 = arith.constant dense<0.000000e+00> : vector<16x96xf32>
    %212 = tpu.matmul %210, %211, %cst_123 {dimension_numbers = #tpu.dot_dimension_numbers<[1], [0], [0], [1], [0, 0, 1, 1], [], []>} : vector<16x32xf32>, vector<32x96xf32>, vector<16x96xf32> -> vector<16x96xf32>
    %c0_124 = arith.constant 0 : index
    %c0_125 = arith.constant 0 : index
    %213 = vector.load %arg50[%c0_124, %c0_125] : memref<1x96xf32, #tpu.memory_space<vmem>>, vector<1x96xf32>
    %214 = vector.broadcast %213 : vector<1x96xf32> to vector<16x96xf32>
    %215 = arith.addf %212, %214 : vector<16x96xf32>
    %216 = vector.extract_strided_slice %215 {offsets = [0, 0], sizes = [16, 32], strides = [1, 1]} : vector<16x96xf32> to vector<16x32xf32>
    %217 = vector.extract_strided_slice %215 {offsets = [0, 32], sizes = [16, 32], strides = [1, 1]} : vector<16x96xf32> to vector<16x32xf32>
    %218 = vector.extract_strided_slice %215 {offsets = [0, 64], sizes = [16, 32], strides = [1, 1]} : vector<16x96xf32> to vector<16x32xf32>
    %219 = tpu.concatenate %216, %216, %216, %216 in 0 : vector<16x32xf32>, vector<16x32xf32>, vector<16x32xf32>, vector<16x32xf32> -> vector<64x32xf32>
    %c0_126 = arith.constant 0 : index
    %c0_127 = arith.constant 0 : index
    %220 = vector.load %arg55[%c0_126, %c0_127] : memref<64x32xf32, #tpu.memory_space<vmem>>, vector<64x32xf32>
    %221 = arith.mulf %219, %220 : vector<64x32xf32>
    %cst_128 = arith.constant dense<0.000000e+00> : vector<64x16xf32>
    %222 = tpu.matmul %221, %217, %cst_128 {dimension_numbers = #tpu.dot_dimension_numbers<[1], [1], [0], [0], [0, 0, 1, 0], [], []>} : vector<64x32xf32>, vector<16x32xf32>, vector<64x16xf32> -> vector<64x16xf32>
    %c0_129 = arith.constant 0 : index
    %c0_130 = arith.constant 0 : index
    %223 = vector.load %arg51[%c0_129, %c0_130] : memref<32x72xf32, #tpu.memory_space<vmem>>, vector<32x72xf32>
    %cst_131 = arith.constant dense<0.000000e+00> : vector<64x72xf32>
    %224 = tpu.matmul %221, %223, %cst_131 {dimension_numbers = #tpu.dot_dimension_numbers<[1], [0], [0], [1], [0, 0, 1, 1], [], []>} : vector<64x32xf32>, vector<32x72xf32>, vector<64x72xf32> -> vector<64x72xf32>
    %c0_132 = arith.constant 0 : index
    %c0_133 = arith.constant 0 : index
    %225 = vector.load %arg58[%c0_132, %c0_133] : memref<64x72xf32, #tpu.memory_space<vmem>>, vector<64x72xf32>
    %226 = arith.mulf %224, %225 : vector<64x72xf32>
    %c0_134 = arith.constant 0 : index
    %c0_135 = arith.constant 0 : index
    %227 = vector.load %arg56[%c0_134, %c0_135] : memref<72x16xf32, #tpu.memory_space<vmem>>, vector<72x16xf32>
    %cst_136 = arith.constant dense<0.000000e+00> : vector<64x16xf32>
    %228 = tpu.matmul %226, %227, %cst_136 {dimension_numbers = #tpu.dot_dimension_numbers<[1], [0], [0], [1], [0, 0, 1, 1], [], []>} : vector<64x72xf32>, vector<72x16xf32>, vector<64x16xf32> -> vector<64x16xf32>
    %229 = arith.addf %222, %228 : vector<64x16xf32>
    %c0_137 = arith.constant 0 : index
    %c0_138 = arith.constant 0 : index
    %230 = vector.load %arg3[%c0_137, %c0_138] : memref<64x16xf32, #tpu.memory_space<vmem>>, vector<64x16xf32>
    %231 = arith.addf %229, %230 : vector<64x16xf32>
    %cst_139 = arith.constant dense<0xFF800000> : vector<64xf32>
    %232 = vector.multi_reduction <maximumf>, %231, %cst_139 [1] : vector<64x16xf32> to vector<64xf32>
    %233 = vector.shape_cast %232 : vector<64xf32> to vector<64x1xf32>
    %234 = vector.broadcast %233 : vector<64x1xf32> to vector<64x16xf32>
    %235 = arith.subf %231, %234 : vector<64x16xf32>
    %236 = math.exp %235 : vector<64x16xf32>
    %cst_140 = arith.constant dense<0.000000e+00> : vector<64xf32>
    %237 = vector.multi_reduction <add>, %236, %cst_140 [1] : vector<64x16xf32> to vector<64xf32>
    %238 = vector.shape_cast %237 : vector<64xf32> to vector<64x1xf32>
    %239 = tpu.reciprocal %238 {approx = true} : vector<64x1xf32> -> vector<64x1xf32>
    %240 = vector.broadcast %239 : vector<64x1xf32> to vector<64x16xf32>
    %241 = arith.mulf %236, %240 : vector<64x16xf32>
    %cst_141 = arith.constant dense<0.000000e+00> : vector<64x32xf32>
    %242 = tpu.matmul %241, %218, %cst_141 {dimension_numbers = #tpu.dot_dimension_numbers<[1], [0], [0], [1], [0, 0, 1, 1], [], []>} : vector<64x16xf32>, vector<16x32xf32>, vector<64x32xf32> -> vector<64x32xf32>
    %c0_142 = arith.constant 0 : index
    %c0_143 = arith.constant 0 : index
    %243 = vector.load %arg55[%c0_142, %c0_143] : memref<64x32xf32, #tpu.memory_space<vmem>>, vector<64x32xf32>
    %244 = arith.mulf %242, %243 : vector<64x32xf32>
    %245 = vector.extract_strided_slice %244 {offsets = [0, 0], sizes = [16, 32], strides = [1, 1]} : vector<64x32xf32> to vector<16x32xf32>
    %246 = vector.extract_strided_slice %244 {offsets = [16, 0], sizes = [16, 32], strides = [1, 1]} : vector<64x32xf32> to vector<16x32xf32>
    %247 = arith.addf %245, %246 : vector<16x32xf32>
    %248 = vector.extract_strided_slice %244 {offsets = [32, 0], sizes = [16, 32], strides = [1, 1]} : vector<64x32xf32> to vector<16x32xf32>
    %249 = arith.addf %247, %248 : vector<16x32xf32>
    %250 = vector.extract_strided_slice %244 {offsets = [48, 0], sizes = [16, 32], strides = [1, 1]} : vector<64x32xf32> to vector<16x32xf32>
    %251 = arith.addf %249, %250 : vector<16x32xf32>
    %c0_144 = arith.constant 0 : index
    %c0_145 = arith.constant 0 : index
    %252 = vector.load %arg59[%c0_144, %c0_145] : memref<16x128xf32, #tpu.memory_space<vmem>>, vector<16x128xf32>
    %cst_146 = arith.constant dense<0.000000e+00> : vector<64x128xf32>
    %253 = tpu.matmul %241, %252, %cst_146 {dimension_numbers = #tpu.dot_dimension_numbers<[1], [0], [0], [1], [0, 0, 1, 1], [], []>} : vector<64x16xf32>, vector<16x128xf32>, vector<64x128xf32> -> vector<64x128xf32>
    %c0_147 = arith.constant 0 : index
    %c0_148 = arith.constant 0 : index
    %254 = vector.load %arg57[%c0_147, %c0_148] : memref<64x128xf32, #tpu.memory_space<vmem>>, vector<64x128xf32>
    %255 = arith.mulf %253, %254 : vector<64x128xf32>
    %c0_149 = arith.constant 0 : index
    %c0_150 = arith.constant 0 : index
    %256 = vector.load %arg52[%c0_149, %c0_150] : memref<128x32xf32, #tpu.memory_space<vmem>>, vector<128x32xf32>
    %cst_151 = arith.constant dense<0.000000e+00> : vector<64x32xf32>
    %257 = tpu.matmul %255, %256, %cst_151 {dimension_numbers = #tpu.dot_dimension_numbers<[1], [0], [0], [1], [0, 0, 1, 1], [], []>} : vector<64x128xf32>, vector<128x32xf32>, vector<64x32xf32> -> vector<64x32xf32>
    %c0_152 = arith.constant 0 : index
    %c0_153 = arith.constant 0 : index
    %258 = vector.load %arg55[%c0_152, %c0_153] : memref<64x32xf32, #tpu.memory_space<vmem>>, vector<64x32xf32>
    %259 = arith.mulf %257, %258 : vector<64x32xf32>
    %260 = vector.extract_strided_slice %259 {offsets = [0, 0], sizes = [16, 32], strides = [1, 1]} : vector<64x32xf32> to vector<16x32xf32>
    %261 = vector.extract_strided_slice %259 {offsets = [16, 0], sizes = [16, 32], strides = [1, 1]} : vector<64x32xf32> to vector<16x32xf32>
    %262 = arith.addf %260, %261 : vector<16x32xf32>
    %263 = vector.extract_strided_slice %259 {offsets = [32, 0], sizes = [16, 32], strides = [1, 1]} : vector<64x32xf32> to vector<16x32xf32>
    %264 = arith.addf %262, %263 : vector<16x32xf32>
    %265 = vector.extract_strided_slice %259 {offsets = [48, 0], sizes = [16, 32], strides = [1, 1]} : vector<64x32xf32> to vector<16x32xf32>
    %266 = arith.addf %264, %265 : vector<16x32xf32>
    %267 = arith.addf %251, %266 : vector<16x32xf32>
    %c0_154 = arith.constant 0 : index
    %c0_155 = arith.constant 0 : index
    %268 = vector.load %arg53[%c0_154, %c0_155] : memref<32x32xf32, #tpu.memory_space<vmem>>, vector<32x32xf32>
    %cst_156 = arith.constant dense<0.000000e+00> : vector<16x32xf32>
    %269 = tpu.matmul %267, %268, %cst_156 {dimension_numbers = #tpu.dot_dimension_numbers<[1], [0], [0], [1], [0, 0, 1, 1], [], []>} : vector<16x32xf32>, vector<32x32xf32>, vector<16x32xf32> -> vector<16x32xf32>
    %c0_157 = arith.constant 0 : index
    %c0_158 = arith.constant 0 : index
    %270 = vector.load %arg49[%c0_157, %c0_158] : memref<1x32xf32, #tpu.memory_space<vmem>>, vector<1x32xf32>
    %271 = vector.broadcast %270 : vector<1x32xf32> to vector<16x32xf32>
    %272 = arith.addf %269, %271 : vector<16x32xf32>
    %273 = arith.addf %272, %210 : vector<16x32xf32>
    %cst_159 = arith.constant dense<0.000000e+00> : vector<16xf32>
    %274 = vector.multi_reduction <add>, %273, %cst_159 [1] : vector<16x32xf32> to vector<16xf32>
    %275 = vector.shape_cast %274 : vector<16xf32> to vector<16x1xf32>
    %cst_160 = arith.constant 3.200000e+01 : f32
    %276 = vector.broadcast %cst_160 : f32 to vector<16x1xf32>
    %277 = arith.divf %275, %276 : vector<16x1xf32>
    %278 = vector.broadcast %277 : vector<16x1xf32> to vector<16x32xf32>
    %279 = arith.subf %273, %278 : vector<16x32xf32>
    %280 = arith.mulf %279, %279 : vector<16x32xf32>
    %cst_161 = arith.constant dense<0.000000e+00> : vector<16xf32>
    %281 = vector.multi_reduction <add>, %280, %cst_161 [1] : vector<16x32xf32> to vector<16xf32>
    %282 = vector.shape_cast %281 : vector<16xf32> to vector<16x1xf32>
    %cst_162 = arith.constant 3.200000e+01 : f32
    %283 = vector.broadcast %cst_162 : f32 to vector<16x1xf32>
    %284 = arith.divf %282, %283 : vector<16x1xf32>
    %cst_163 = arith.constant 9.99999974E-6 : f32
    %285 = vector.broadcast %cst_163 : f32 to vector<16x1xf32>
    %286 = arith.addf %284, %285 : vector<16x1xf32>
    %287 = math.rsqrt %286 : vector<16x1xf32>
    %288 = vector.broadcast %287 : vector<16x1xf32> to vector<16x32xf32>
    %289 = arith.mulf %279, %288 : vector<16x32xf32>
    %c0_164 = arith.constant 0 : index
    %c0_165 = arith.constant 0 : index
    %290 = vector.load %arg44[%c0_164, %c0_165] : memref<1x32xf32, #tpu.memory_space<vmem>>, vector<1x32xf32>
    %291 = vector.broadcast %290 : vector<1x32xf32> to vector<16x32xf32>
    %292 = arith.mulf %289, %291 : vector<16x32xf32>
    %c0_166 = arith.constant 0 : index
    %c0_167 = arith.constant 0 : index
    %293 = vector.load %arg43[%c0_166, %c0_167] : memref<1x32xf32, #tpu.memory_space<vmem>>, vector<1x32xf32>
    %294 = vector.broadcast %293 : vector<1x32xf32> to vector<16x32xf32>
    %295 = arith.addf %292, %294 : vector<16x32xf32>
    %c0_168 = arith.constant 0 : index
    %c0_169 = arith.constant 0 : index
    %296 = vector.load %arg38[%c0_168, %c0_169] : memref<32x32xf32, #tpu.memory_space<vmem>>, vector<32x32xf32>
    %cst_170 = arith.constant dense<0.000000e+00> : vector<16x32xf32>
    %297 = tpu.matmul %295, %296, %cst_170 {dimension_numbers = #tpu.dot_dimension_numbers<[1], [0], [0], [1], [0, 0, 1, 1], [], []>} : vector<16x32xf32>, vector<32x32xf32>, vector<16x32xf32> -> vector<16x32xf32>
    %c0_171 = arith.constant 0 : index
    %c0_172 = arith.constant 0 : index
    %298 = vector.load %arg33[%c0_171, %c0_172] : memref<1x32xf32, #tpu.memory_space<vmem>>, vector<1x32xf32>
    %299 = vector.broadcast %298 : vector<1x32xf32> to vector<16x32xf32>
    %300 = arith.addf %297, %299 : vector<16x32xf32>
    %c0_173 = arith.constant 0 : index
    %c0_174 = arith.constant 0 : index
    %301 = vector.load %arg36[%c0_173, %c0_174] : memref<32x64xf32, #tpu.memory_space<vmem>>, vector<32x64xf32>
    %cst_175 = arith.constant dense<0.000000e+00> : vector<16x64xf32>
    %302 = tpu.matmul %1, %301, %cst_175 {dimension_numbers = #tpu.dot_dimension_numbers<[1], [0], [0], [1], [0, 0, 1, 1], [], []>} : vector<16x32xf32>, vector<32x64xf32>, vector<16x64xf32> -> vector<16x64xf32>
    %c0_176 = arith.constant 0 : index
    %c0_177 = arith.constant 0 : index
    %303 = vector.load %arg31[%c0_176, %c0_177] : memref<1x64xf32, #tpu.memory_space<vmem>>, vector<1x64xf32>
    %304 = vector.broadcast %303 : vector<1x64xf32> to vector<16x64xf32>
    %305 = arith.addf %302, %304 : vector<16x64xf32>
    %306 = vector.extract_strided_slice %305 {offsets = [0, 0], sizes = [16, 32], strides = [1, 1]} : vector<16x64xf32> to vector<16x32xf32>
    %307 = vector.extract_strided_slice %305 {offsets = [0, 32], sizes = [16, 32], strides = [1, 1]} : vector<16x64xf32> to vector<16x32xf32>
    %308 = tpu.concatenate %300, %300, %300, %300 in 0 : vector<16x32xf32>, vector<16x32xf32>, vector<16x32xf32>, vector<16x32xf32> -> vector<64x32xf32>
    %c0_178 = arith.constant 0 : index
    %c0_179 = arith.constant 0 : index
    %309 = vector.load %arg60[%c0_178, %c0_179] : memref<64x32xf32, #tpu.memory_space<vmem>>, vector<64x32xf32>
    %310 = arith.mulf %308, %309 : vector<64x32xf32>
    %cst_180 = arith.constant dense<0.000000e+00> : vector<64x16xf32>
    %311 = tpu.matmul %310, %306, %cst_180 {dimension_numbers = #tpu.dot_dimension_numbers<[1], [1], [0], [0], [0, 0, 1, 0], [], []>} : vector<64x32xf32>, vector<16x32xf32>, vector<64x16xf32> -> vector<64x16xf32>
    %c0_181 = arith.constant 0 : index
    %c0_182 = arith.constant 0 : index
    %312 = vector.load %arg34[%c0_181, %c0_182] : memref<32x72xf32, #tpu.memory_space<vmem>>, vector<32x72xf32>
    %cst_183 = arith.constant dense<0.000000e+00> : vector<64x72xf32>
    %313 = tpu.matmul %310, %312, %cst_183 {dimension_numbers = #tpu.dot_dimension_numbers<[1], [0], [0], [1], [0, 0, 1, 1], [], []>} : vector<64x32xf32>, vector<32x72xf32>, vector<64x72xf32> -> vector<64x72xf32>
    %c0_184 = arith.constant 0 : index
    %c0_185 = arith.constant 0 : index
    %314 = vector.load %arg63[%c0_184, %c0_185] : memref<64x72xf32, #tpu.memory_space<vmem>>, vector<64x72xf32>
    %315 = arith.mulf %313, %314 : vector<64x72xf32>
    %c0_186 = arith.constant 0 : index
    %c0_187 = arith.constant 0 : index
    %316 = vector.load %arg61[%c0_186, %c0_187] : memref<72x16xf32, #tpu.memory_space<vmem>>, vector<72x16xf32>
    %cst_188 = arith.constant dense<0.000000e+00> : vector<64x16xf32>
    %317 = tpu.matmul %315, %316, %cst_188 {dimension_numbers = #tpu.dot_dimension_numbers<[1], [0], [0], [1], [0, 0, 1, 1], [], []>} : vector<64x72xf32>, vector<72x16xf32>, vector<64x16xf32> -> vector<64x16xf32>
    %318 = arith.addf %311, %317 : vector<64x16xf32>
    %c0_189 = arith.constant 0 : index
    %c0_190 = arith.constant 0 : index
    %319 = vector.load %arg4[%c0_189, %c0_190] : memref<64x16xf32, #tpu.memory_space<vmem>>, vector<64x16xf32>
    %320 = arith.addf %318, %319 : vector<64x16xf32>
    %cst_191 = arith.constant dense<0xFF800000> : vector<64xf32>
    %321 = vector.multi_reduction <maximumf>, %320, %cst_191 [1] : vector<64x16xf32> to vector<64xf32>
    %322 = vector.shape_cast %321 : vector<64xf32> to vector<64x1xf32>
    %323 = vector.broadcast %322 : vector<64x1xf32> to vector<64x16xf32>
    %324 = arith.subf %320, %323 : vector<64x16xf32>
    %325 = math.exp %324 : vector<64x16xf32>
    %cst_192 = arith.constant dense<0.000000e+00> : vector<64xf32>
    %326 = vector.multi_reduction <add>, %325, %cst_192 [1] : vector<64x16xf32> to vector<64xf32>
    %327 = vector.shape_cast %326 : vector<64xf32> to vector<64x1xf32>
    %328 = tpu.reciprocal %327 {approx = true} : vector<64x1xf32> -> vector<64x1xf32>
    %329 = vector.broadcast %328 : vector<64x1xf32> to vector<64x16xf32>
    %330 = arith.mulf %325, %329 : vector<64x16xf32>
    %cst_193 = arith.constant dense<0.000000e+00> : vector<64x32xf32>
    %331 = tpu.matmul %330, %307, %cst_193 {dimension_numbers = #tpu.dot_dimension_numbers<[1], [0], [0], [1], [0, 0, 1, 1], [], []>} : vector<64x16xf32>, vector<16x32xf32>, vector<64x32xf32> -> vector<64x32xf32>
    %c0_194 = arith.constant 0 : index
    %c0_195 = arith.constant 0 : index
    %332 = vector.load %arg60[%c0_194, %c0_195] : memref<64x32xf32, #tpu.memory_space<vmem>>, vector<64x32xf32>
    %333 = arith.mulf %331, %332 : vector<64x32xf32>
    %334 = vector.extract_strided_slice %333 {offsets = [0, 0], sizes = [16, 32], strides = [1, 1]} : vector<64x32xf32> to vector<16x32xf32>
    %335 = vector.extract_strided_slice %333 {offsets = [16, 0], sizes = [16, 32], strides = [1, 1]} : vector<64x32xf32> to vector<16x32xf32>
    %336 = arith.addf %334, %335 : vector<16x32xf32>
    %337 = vector.extract_strided_slice %333 {offsets = [32, 0], sizes = [16, 32], strides = [1, 1]} : vector<64x32xf32> to vector<16x32xf32>
    %338 = arith.addf %336, %337 : vector<16x32xf32>
    %339 = vector.extract_strided_slice %333 {offsets = [48, 0], sizes = [16, 32], strides = [1, 1]} : vector<64x32xf32> to vector<16x32xf32>
    %340 = arith.addf %338, %339 : vector<16x32xf32>
    %c0_196 = arith.constant 0 : index
    %c0_197 = arith.constant 0 : index
    %341 = vector.load %arg64[%c0_196, %c0_197] : memref<16x128xf32, #tpu.memory_space<vmem>>, vector<16x128xf32>
    %cst_198 = arith.constant dense<0.000000e+00> : vector<64x128xf32>
    %342 = tpu.matmul %330, %341, %cst_198 {dimension_numbers = #tpu.dot_dimension_numbers<[1], [0], [0], [1], [0, 0, 1, 1], [], []>} : vector<64x16xf32>, vector<16x128xf32>, vector<64x128xf32> -> vector<64x128xf32>
    %c0_199 = arith.constant 0 : index
    %c0_200 = arith.constant 0 : index
    %343 = vector.load %arg62[%c0_199, %c0_200] : memref<64x128xf32, #tpu.memory_space<vmem>>, vector<64x128xf32>
    %344 = arith.mulf %342, %343 : vector<64x128xf32>
    %c0_201 = arith.constant 0 : index
    %c0_202 = arith.constant 0 : index
    %345 = vector.load %arg35[%c0_201, %c0_202] : memref<128x32xf32, #tpu.memory_space<vmem>>, vector<128x32xf32>
    %cst_203 = arith.constant dense<0.000000e+00> : vector<64x32xf32>
    %346 = tpu.matmul %344, %345, %cst_203 {dimension_numbers = #tpu.dot_dimension_numbers<[1], [0], [0], [1], [0, 0, 1, 1], [], []>} : vector<64x128xf32>, vector<128x32xf32>, vector<64x32xf32> -> vector<64x32xf32>
    %c0_204 = arith.constant 0 : index
    %c0_205 = arith.constant 0 : index
    %347 = vector.load %arg60[%c0_204, %c0_205] : memref<64x32xf32, #tpu.memory_space<vmem>>, vector<64x32xf32>
    %348 = arith.mulf %346, %347 : vector<64x32xf32>
    %349 = vector.extract_strided_slice %348 {offsets = [0, 0], sizes = [16, 32], strides = [1, 1]} : vector<64x32xf32> to vector<16x32xf32>
    %350 = vector.extract_strided_slice %348 {offsets = [16, 0], sizes = [16, 32], strides = [1, 1]} : vector<64x32xf32> to vector<16x32xf32>
    %351 = arith.addf %349, %350 : vector<16x32xf32>
    %352 = vector.extract_strided_slice %348 {offsets = [32, 0], sizes = [16, 32], strides = [1, 1]} : vector<64x32xf32> to vector<16x32xf32>
    %353 = arith.addf %351, %352 : vector<16x32xf32>
    %354 = vector.extract_strided_slice %348 {offsets = [48, 0], sizes = [16, 32], strides = [1, 1]} : vector<64x32xf32> to vector<16x32xf32>
    %355 = arith.addf %353, %354 : vector<16x32xf32>
    %c0_206 = arith.constant 0 : index
    %c0_207 = arith.constant 0 : index
    %356 = vector.load %arg66[%c0_206, %c0_207] : memref<16x32xf32, #tpu.memory_space<vmem>>, vector<16x32xf32>
    tpu.vector_store %arg66[%c0_206, %c0_207], %340 {strides = array<i32>} : memref<16x32xf32, #tpu.memory_space<vmem>>, vector<16x32xf32>,
    %357 = arith.addf %340, %355 : vector<16x32xf32>
    %c0_208 = arith.constant 0 : index
    %c0_209 = arith.constant 0 : index
    %358 = vector.load %arg37[%c0_208, %c0_209] : memref<32x32xf32, #tpu.memory_space<vmem>>, vector<32x32xf32>
    %cst_210 = arith.constant dense<0.000000e+00> : vector<16x32xf32>
    %359 = tpu.matmul %357, %358, %cst_210 {dimension_numbers = #tpu.dot_dimension_numbers<[1], [0], [0], [1], [0, 0, 1, 1], [], []>} : vector<16x32xf32>, vector<32x32xf32>, vector<16x32xf32> -> vector<16x32xf32>
    %c0_211 = arith.constant 0 : index
    %c0_212 = arith.constant 0 : index
    %360 = vector.load %arg32[%c0_211, %c0_212] : memref<1x32xf32, #tpu.memory_space<vmem>>, vector<1x32xf32>
    %361 = vector.broadcast %360 : vector<1x32xf32> to vector<16x32xf32>
    %362 = arith.addf %359, %361 : vector<16x32xf32>
    %363 = arith.addf %362, %295 : vector<16x32xf32>
    %cst_213 = arith.constant dense<0.000000e+00> : vector<16xf32>
    %364 = vector.multi_reduction <add>, %363, %cst_213 [1] : vector<16x32xf32> to vector<16xf32>
    %365 = vector.shape_cast %364 : vector<16xf32> to vector<16x1xf32>
    %cst_214 = arith.constant 3.200000e+01 : f32
    %366 = vector.broadcast %cst_214 : f32 to vector<16x1xf32>
    %367 = arith.divf %365, %366 : vector<16x1xf32>
    %368 = vector.broadcast %367 : vector<16x1xf32> to vector<16x32xf32>
    %369 = arith.subf %363, %368 : vector<16x32xf32>
    %370 = arith.mulf %369, %369 : vector<16x32xf32>
    %cst_215 = arith.constant dense<0.000000e+00> : vector<16xf32>
    %371 = vector.multi_reduction <add>, %370, %cst_215 [1] : vector<16x32xf32> to vector<16xf32>
    %372 = vector.shape_cast %371 : vector<16xf32> to vector<16x1xf32>
    %cst_216 = arith.constant 3.200000e+01 : f32
    %373 = vector.broadcast %cst_216 : f32 to vector<16x1xf32>
    %374 = arith.divf %372, %373 : vector<16x1xf32>
    %cst_217 = arith.constant 9.99999974E-6 : f32
    %375 = vector.broadcast %cst_217 : f32 to vector<16x1xf32>
    %376 = arith.addf %374, %375 : vector<16x1xf32>
    %377 = math.rsqrt %376 : vector<16x1xf32>
    %378 = vector.broadcast %377 : vector<16x1xf32> to vector<16x32xf32>
    %379 = arith.mulf %369, %378 : vector<16x32xf32>
    %c0_218 = arith.constant 0 : index
    %c0_219 = arith.constant 0 : index
    %380 = vector.load %arg46[%c0_218, %c0_219] : memref<1x32xf32, #tpu.memory_space<vmem>>, vector<1x32xf32>
    %381 = vector.broadcast %380 : vector<1x32xf32> to vector<16x32xf32>
    %382 = arith.mulf %379, %381 : vector<16x32xf32>
    %c0_220 = arith.constant 0 : index
    %c0_221 = arith.constant 0 : index
    %383 = vector.load %arg45[%c0_220, %c0_221] : memref<1x32xf32, #tpu.memory_space<vmem>>, vector<1x32xf32>
    %384 = vector.broadcast %383 : vector<1x32xf32> to vector<16x32xf32>
    %385 = arith.addf %382, %384 : vector<16x32xf32>
    %c0_222 = arith.constant 0 : index
    %c0_223 = arith.constant 0 : index
    %386 = vector.load %arg41[%c0_222, %c0_223] : memref<32x64xf32, #tpu.memory_space<vmem>>, vector<32x64xf32>
    %cst_224 = arith.constant dense<0.000000e+00> : vector<16x64xf32>
    %387 = tpu.matmul %385, %386, %cst_224 {dimension_numbers = #tpu.dot_dimension_numbers<[1], [0], [0], [1], [0, 0, 1, 1], [], []>} : vector<16x32xf32>, vector<32x64xf32>, vector<16x64xf32> -> vector<16x64xf32>
    %c0_225 = arith.constant 0 : index
    %c0_226 = arith.constant 0 : index
    %388 = vector.load %arg39[%c0_225, %c0_226] : memref<1x64xf32, #tpu.memory_space<vmem>>, vector<1x64xf32>
    %389 = vector.broadcast %388 : vector<1x64xf32> to vector<16x64xf32>
    %390 = arith.addf %387, %389 : vector<16x64xf32>
    %cst_227 = arith.constant 0.000000e+00 : f32
    %391 = vector.broadcast %cst_227 : f32 to vector<16x64xf32>
    %392 = arith.maximumf %390, %391 : vector<16x64xf32>
    %c0_228 = arith.constant 0 : index
    %c0_229 = arith.constant 0 : index
    %393 = vector.load %arg42[%c0_228, %c0_229] : memref<64x32xf32, #tpu.memory_space<vmem>>, vector<64x32xf32>
    %cst_230 = arith.constant dense<0.000000e+00> : vector<16x32xf32>
    %394 = tpu.matmul %392, %393, %cst_230 {dimension_numbers = #tpu.dot_dimension_numbers<[1], [0], [0], [1], [0, 0, 1, 1], [], []>} : vector<16x64xf32>, vector<64x32xf32>, vector<16x32xf32> -> vector<16x32xf32>
    %c0_231 = arith.constant 0 : index
    %c0_232 = arith.constant 0 : index
    %395 = vector.load %arg40[%c0_231, %c0_232] : memref<1x32xf32, #tpu.memory_space<vmem>>, vector<1x32xf32>
    %396 = vector.broadcast %395 : vector<1x32xf32> to vector<16x32xf32>
    %397 = arith.addf %394, %396 : vector<16x32xf32>
    %398 = arith.addf %397, %385 : vector<16x32xf32>
    %cst_233 = arith.constant dense<0.000000e+00> : vector<16xf32>
    %399 = vector.multi_reduction <add>, %398, %cst_233 [1] : vector<16x32xf32> to vector<16xf32>
    %400 = vector.shape_cast %399 : vector<16xf32> to vector<16x1xf32>
    %cst_234 = arith.constant 3.200000e+01 : f32
    %401 = vector.broadcast %cst_234 : f32 to vector<16x1xf32>
    %402 = arith.divf %400, %401 : vector<16x1xf32>
    %403 = vector.broadcast %402 : vector<16x1xf32> to vector<16x32xf32>
    %404 = arith.subf %398, %403 : vector<16x32xf32>
    %405 = arith.mulf %404, %404 : vector<16x32xf32>
    %cst_235 = arith.constant dense<0.000000e+00> : vector<16xf32>
    %406 = vector.multi_reduction <add>, %405, %cst_235 [1] : vector<16x32xf32> to vector<16xf32>
    %407 = vector.shape_cast %406 : vector<16xf32> to vector<16x1xf32>
    %cst_236 = arith.constant 3.200000e+01 : f32
    %408 = vector.broadcast %cst_236 : f32 to vector<16x1xf32>
    %409 = arith.divf %407, %408 : vector<16x1xf32>
    %cst_237 = arith.constant 9.99999974E-6 : f32
    %410 = vector.broadcast %cst_237 : f32 to vector<16x1xf32>
    %411 = arith.addf %409, %410 : vector<16x1xf32>
    %412 = math.rsqrt %411 : vector<16x1xf32>
    %413 = vector.broadcast %412 : vector<16x1xf32> to vector<16x32xf32>
    %414 = arith.mulf %404, %413 : vector<16x32xf32>
    %c0_238 = arith.constant 0 : index
    %c0_239 = arith.constant 0 : index
    %415 = vector.load %arg48[%c0_238, %c0_239] : memref<1x32xf32, #tpu.memory_space<vmem>>, vector<1x32xf32>
    %416 = vector.broadcast %415 : vector<1x32xf32> to vector<16x32xf32>
    %417 = arith.mulf %414, %416 : vector<16x32xf32>
    %c0_240 = arith.constant 0 : index
    %c0_241 = arith.constant 0 : index
    %418 = vector.load %arg47[%c0_240, %c0_241] : memref<1x32xf32, #tpu.memory_space<vmem>>, vector<1x32xf32>
    %419 = vector.broadcast %418 : vector<1x32xf32> to vector<16x32xf32>
    %420 = arith.addf %417, %419 : vector<16x32xf32>
    %c0_242 = arith.constant 0 : index
    %c0_243 = arith.constant 0 : index
    %421 = vector.load %arg6[%c0_242, %c0_243] : memref<32x64xf32, #tpu.memory_space<vmem>>, vector<32x64xf32>
    %cst_244 = arith.constant dense<0.000000e+00> : vector<16x64xf32>
    %422 = tpu.matmul %420, %421, %cst_244 {dimension_numbers = #tpu.dot_dimension_numbers<[1], [0], [0], [1], [0, 0, 1, 1], [], []>} : vector<16x32xf32>, vector<32x64xf32>, vector<16x64xf32> -> vector<16x64xf32>
    %c0_245 = arith.constant 0 : index
    %c0_246 = arith.constant 0 : index
    %423 = vector.load %arg5[%c0_245, %c0_246] : memref<1x64xf32, #tpu.memory_space<vmem>>, vector<1x64xf32>
    %424 = vector.broadcast %423 : vector<1x64xf32> to vector<16x64xf32>
    %425 = arith.addf %422, %424 : vector<16x64xf32>
    %c0_247 = arith.constant 0 : index
    %c0_248 = arith.constant 0 : index
    %426 = vector.load %arg65[%c0_247, %c0_248] : memref<16x64xf32, #tpu.memory_space<vmem>>, vector<16x64xf32>
    tpu.vector_store %arg65[%c0_247, %c0_248], %425 {strides = array<i32>} : memref<16x64xf32, #tpu.memory_space<vmem>>, vector<16x64xf32>,
    return
  }
  func.func @transform_0(%arg0: i32) -> (i32, i32) {
    %c0_i32 = arith.constant 0 : i32
    %c0_i32_0 = arith.constant 0 : i32
    %c0_i32_1 = arith.constant 0 : i32
    return %c0_i32, %c0_i32_0 : i32, i32
  }
  func.func @transform_1(%arg0: i32) -> (i32, i32) {
    %c0_i32 = arith.constant 0 : i32
    %c0_i32_0 = arith.constant 0 : i32
    %c0_i32_1 = arith.constant 0 : i32
    return %c0_i32, %c0_i32_0 : i32, i32
  }
  func.func @transform_2(%arg0: i32) -> (i32, i32) {
    %c0_i32 = arith.constant 0 : i32
    %c0_i32_0 = arith.constant 0 : i32
    %c0_i32_1 = arith.constant 0 : i32
    return %c0_i32, %c0_i32_0 : i32, i32
  }
  func.func @transform_3(%arg0: i32) -> (i32, i32) {
    %c0_i32 = arith.constant 0 : i32
    %c0_i32_0 = arith.constant 0 : i32
    %c0_i32_1 = arith.constant 0 : i32
    return %c0_i32, %c0_i32_0 : i32, i32
  }
  func.func @transform_4(%arg0: i32) -> (i32, i32) {
    %c0_i32 = arith.constant 0 : i32
    %c0_i32_0 = arith.constant 0 : i32
    %c0_i32_1 = arith.constant 0 : i32
    return %c0_i32, %c0_i32_0 : i32, i32
  }
  func.func @transform_5(%arg0: i32) -> (i32, i32) {
    %c0_i32 = arith.constant 0 : i32
    %c0_i32_0 = arith.constant 0 : i32
    %c0_i32_1 = arith.constant 0 : i32
    return %c0_i32, %c0_i32_0 : i32, i32
  }
  func.func @transform_6(%arg0: i32) -> (i32, i32) {
    %c0_i32 = arith.constant 0 : i32
    %c0_i32_0 = arith.constant 0 : i32
    %c0_i32_1 = arith.constant 0 : i32
    return %c0_i32, %c0_i32_0 : i32, i32
  }
  func.func @transform_7(%arg0: i32) -> (i32, i32) {
    %c0_i32 = arith.constant 0 : i32
    %c0_i32_0 = arith.constant 0 : i32
    %c0_i32_1 = arith.constant 0 : i32
    return %c0_i32, %c0_i32_0 : i32, i32
  }
  func.func @transform_8(%arg0: i32) -> (i32, i32) {
    %c0_i32 = arith.constant 0 : i32
    %c0_i32_0 = arith.constant 0 : i32
    %c0_i32_1 = arith.constant 0 : i32
    return %c0_i32, %c0_i32_0 : i32, i32
  }
  func.func @transform_9(%arg0: i32) -> (i32, i32) {
    %c0_i32 = arith.constant 0 : i32
    %c0_i32_0 = arith.constant 0 : i32
    %c0_i32_1 = arith.constant 0 : i32
    return %c0_i32, %c0_i32_0 : i32, i32
  }
  func.func @transform_10(%arg0: i32) -> (i32, i32) {
    %c0_i32 = arith.constant 0 : i32
    %c0_i32_0 = arith.constant 0 : i32
    %c0_i32_1 = arith.constant 0 : i32
    return %c0_i32, %c0_i32_0 : i32, i32
  }
  func.func @transform_11(%arg0: i32) -> (i32, i32) {
    %c0_i32 = arith.constant 0 : i32
    %c0_i32_0 = arith.constant 0 : i32
    %c0_i32_1 = arith.constant 0 : i32
    return %c0_i32, %c0_i32_0 : i32, i32
  }
  func.func @transform_12(%arg0: i32) -> (i32, i32) {
    %c0_i32 = arith.constant 0 : i32
    %c0_i32_0 = arith.constant 0 : i32
    %c0_i32_1 = arith.constant 0 : i32
    return %c0_i32, %c0_i32_0 : i32, i32
  }
  func.func @transform_13(%arg0: i32) -> (i32, i32) {
    %c0_i32 = arith.constant 0 : i32
    %c0_i32_0 = arith.constant 0 : i32
    %c0_i32_1 = arith.constant 0 : i32
    return %c0_i32, %c0_i32_0 : i32, i32
  }
  func.func @transform_14(%arg0: i32) -> (i32, i32) {
    %c0_i32 = arith.constant 0 : i32
    %c0_i32_0 = arith.constant 0 : i32
    %c0_i32_1 = arith.constant 0 : i32
    return %c0_i32, %c0_i32_0 : i32, i32
  }
  func.func @transform_15(%arg0: i32) -> (i32, i32) {
    %c0_i32 = arith.constant 0 : i32
    %c0_i32_0 = arith.constant 0 : i32
    %c0_i32_1 = arith.constant 0 : i32
    return %c0_i32, %c0_i32_0 : i32, i32
  }
  func.func @transform_16(%arg0: i32) -> (i32, i32) {
    %c0_i32 = arith.constant 0 : i32
    %c0_i32_0 = arith.constant 0 : i32
    %c0_i32_1 = arith.constant 0 : i32
    return %c0_i32, %c0_i32_0 : i32, i32
  }
  func.func @transform_17(%arg0: i32) -> (i32, i32) {
    %c0_i32 = arith.constant 0 : i32
    %c0_i32_0 = arith.constant 0 : i32
    %c0_i32_1 = arith.constant 0 : i32
    return %c0_i32, %c0_i32_0 : i32, i32
  }
  func.func @transform_18(%arg0: i32) -> (i32, i32) {
    %c0_i32 = arith.constant 0 : i32
    %c0_i32_0 = arith.constant 0 : i32
    %c0_i32_1 = arith.constant 0 : i32
    return %c0_i32, %c0_i32_0 : i32, i32
  }
  func.func @transform_19(%arg0: i32) -> (i32, i32) {
    %c0_i32 = arith.constant 0 : i32
    %c0_i32_0 = arith.constant 0 : i32
    %c0_i32_1 = arith.constant 0 : i32
    return %c0_i32, %c0_i32_0 : i32, i32
  }
  func.func @transform_20(%arg0: i32) -> (i32, i32) {
    %c0_i32 = arith.constant 0 : i32
    %c0_i32_0 = arith.constant 0 : i32
    %c0_i32_1 = arith.constant 0 : i32
    return %c0_i32, %c0_i32_0 : i32, i32
  }
  func.func @transform_21(%arg0: i32) -> (i32, i32) {
    %c0_i32 = arith.constant 0 : i32
    %c0_i32_0 = arith.constant 0 : i32
    %c0_i32_1 = arith.constant 0 : i32
    return %c0_i32, %c0_i32_0 : i32, i32
  }
  func.func @transform_22(%arg0: i32) -> (i32, i32) {
    %c0_i32 = arith.constant 0 : i32
    %c0_i32_0 = arith.constant 0 : i32
    %c0_i32_1 = arith.constant 0 : i32
    return %c0_i32, %c0_i32_0 : i32, i32
  }
  func.func @transform_23(%arg0: i32) -> (i32, i32) {
    %c0_i32 = arith.constant 0 : i32
    %c0_i32_0 = arith.constant 0 : i32
    %c0_i32_1 = arith.constant 0 : i32
    return %c0_i32, %c0_i32_0 : i32, i32
  }
  func.func @transform_24(%arg0: i32) -> (i32, i32) {
    %c0_i32 = arith.constant 0 : i32
    %c0_i32_0 = arith.constant 0 : i32
    %c0_i32_1 = arith.constant 0 : i32
    return %c0_i32, %c0_i32_0 : i32, i32
  }
  func.func @transform_25(%arg0: i32) -> (i32, i32) {
    %c0_i32 = arith.constant 0 : i32
    %c0_i32_0 = arith.constant 0 : i32
    %c0_i32_1 = arith.constant 0 : i32
    return %c0_i32, %c0_i32_0 : i32, i32
  }
  func.func @transform_26(%arg0: i32) -> (i32, i32) {
    %c0_i32 = arith.constant 0 : i32
    %c0_i32_0 = arith.constant 0 : i32
    %c0_i32_1 = arith.constant 0 : i32
    return %c0_i32, %c0_i32_0 : i32, i32
  }
  func.func @transform_27(%arg0: i32) -> (i32, i32) {
    %c0_i32 = arith.constant 0 : i32
    %c0_i32_0 = arith.constant 0 : i32
    %c0_i32_1 = arith.constant 0 : i32
    return %c0_i32, %c0_i32_0 : i32, i32
  }
  func.func @transform_28(%arg0: i32) -> (i32, i32) {
    %c0_i32 = arith.constant 0 : i32
    %c0_i32_0 = arith.constant 0 : i32
    %c0_i32_1 = arith.constant 0 : i32
    return %c0_i32, %c0_i32_0 : i32, i32
  }
  func.func @transform_29(%arg0: i32) -> (i32, i32) {
    %c0_i32 = arith.constant 0 : i32
    %c0_i32_0 = arith.constant 0 : i32
    %c0_i32_1 = arith.constant 0 : i32
    return %c0_i32, %c0_i32_0 : i32, i32
  }
  func.func @transform_30(%arg0: i32) -> (i32, i32) {
    %c0_i32 = arith.constant 0 : i32
    %c0_i32_0 = arith.constant 0 : i32
    %c0_i32_1 = arith.constant 0 : i32
    return %c0_i32, %c0_i32_0 : i32, i32
  }
  func.func @transform_31(%arg0: i32) -> (i32, i32) {
    %c0_i32 = arith.constant 0 : i32
    %c0_i32_0 = arith.constant 0 : i32
    %c0_i32_1 = arith.constant 0 : i32
    return %c0_i32, %c0_i32_0 : i32, i32
  }
  func.func @transform_32(%arg0: i32) -> (i32, i32) {
    %c0_i32 = arith.constant 0 : i32
    %c0_i32_0 = arith.constant 0 : i32
    %c0_i32_1 = arith.constant 0 : i32
    return %c0_i32, %c0_i32_0 : i32, i32
  }
  func.func @transform_33(%arg0: i32) -> (i32, i32) {
    %c0_i32 = arith.constant 0 : i32
    %c0_i32_0 = arith.constant 0 : i32
    %c0_i32_1 = arith.constant 0 : i32
    return %c0_i32, %c0_i32_0 : i32, i32
  }
  func.func @transform_34(%arg0: i32) -> (i32, i32) {
    %c0_i32 = arith.constant 0 : i32
    %c0_i32_0 = arith.constant 0 : i32
    %c0_i32_1 = arith.constant 0 : i32
    return %c0_i32, %c0_i32_0 : i32, i32
  }
  func.func @transform_35(%arg0: i32) -> (i32, i32) {
    %c0_i32 = arith.constant 0 : i32
    %c0_i32_0 = arith.constant 0 : i32
    %c0_i32_1 = arith.constant 0 : i32
    return %c0_i32, %c0_i32_0 : i32, i32
  }
  func.func @transform_36(%arg0: i32) -> (i32, i32) {
    %c0_i32 = arith.constant 0 : i32
    %c0_i32_0 = arith.constant 0 : i32
    %c0_i32_1 = arith.constant 0 : i32
    return %c0_i32, %c0_i32_0 : i32, i32
  }
  func.func @transform_37(%arg0: i32) -> (i32, i32) {
    %c0_i32 = arith.constant 0 : i32
    %c0_i32_0 = arith.constant 0 : i32
    %c0_i32_1 = arith.constant 0 : i32
    return %c0_i32, %c0_i32_0 : i32, i32
  }
  func.func @transform_38(%arg0: i32) -> (i32, i32) {
    %c0_i32 = arith.constant 0 : i32
    %c0_i32_0 = arith.constant 0 : i32
    %c0_i32_1 = arith.constant 0 : i32
    return %c0_i32, %c0_i32_0 : i32, i32
  }
  func.func @transform_39(%arg0: i32) -> (i32, i32) {
    %c0_i32 = arith.constant 0 : i32
    %c0_i32_0 = arith.constant 0 : i32
    %c0_i32_1 = arith.constant 0 : i32
    return %c0_i32, %c0_i32_0 : i32, i32
  }
  func.func @transform_40(%arg0: i32) -> (i32, i32) {
    %c0_i32 = arith.constant 0 : i32
    %c0_i32_0 = arith.constant 0 : i32
    %c0_i32_1 = arith.constant 0 : i32
    return %c0_i32, %c0_i32_0 : i32, i32
  }
  func.func @transform_41(%arg0: i32) -> (i32, i32) {
    %c0_i32 = arith.constant 0 : i32
    %c0_i32_0 = arith.constant 0 : i32
    %c0_i32_1 = arith.constant 0 : i32
    return %c0_i32, %c0_i32_0 : i32, i32
  }
  func.func @transform_42(%arg0: i32) -> (i32, i32) {
    %c0_i32 = arith.constant 0 : i32
    %c0_i32_0 = arith.constant 0 : i32
    %c0_i32_1 = arith.constant 0 : i32
    return %c0_i32, %c0_i32_0 : i32, i32
  }
  func.func @transform_43(%arg0: i32) -> (i32, i32) {
    %c0_i32 = arith.constant 0 : i32
    %c0_i32_0 = arith.constant 0 : i32
    %c0_i32_1 = arith.constant 0 : i32
    return %c0_i32, %c0_i32_0 : i32, i32
  }
  func.func @transform_44(%arg0: i32) -> (i32, i32) {
    %c0_i32 = arith.constant 0 : i32
    %c0_i32_0 = arith.constant 0 : i32
    %c0_i32_1 = arith.constant 0 : i32
    return %c0_i32, %c0_i32_0 : i32, i32
  }
  func.func @transform_45(%arg0: i32) -> (i32, i32) {
    %c0_i32 = arith.constant 0 : i32
    %c0_i32_0 = arith.constant 0 : i32
    %c0_i32_1 = arith.constant 0 : i32
    return %c0_i32, %c0_i32_0 : i32, i32
  }
  func.func @transform_46(%arg0: i32) -> (i32, i32) {
    %c0_i32 = arith.constant 0 : i32
    %c0_i32_0 = arith.constant 0 : i32
    %c0_i32_1 = arith.constant 0 : i32
    return %c0_i32, %c0_i32_0 : i32, i32
  }
  func.func @transform_47(%arg0: i32) -> (i32, i32) {
    %c0_i32 = arith.constant 0 : i32
    %c0_i32_0 = arith.constant 0 : i32
    %c0_i32_1 = arith.constant 0 : i32
    return %c0_i32, %c0_i32_0 : i32, i32
  }
  func.func @transform_48(%arg0: i32) -> (i32, i32) {
    %c0_i32 = arith.constant 0 : i32
    %c0_i32_0 = arith.constant 0 : i32
    %c0_i32_1 = arith.constant 0 : i32
    return %c0_i32, %c0_i32_0 : i32, i32
  }
  func.func @transform_49(%arg0: i32) -> (i32, i32) {
    %c0_i32 = arith.constant 0 : i32
    %c0_i32_0 = arith.constant 0 : i32
    %c0_i32_1 = arith.constant 0 : i32
    return %c0_i32, %c0_i32_0 : i32, i32
  }
  func.func @transform_50(%arg0: i32) -> (i32, i32) {
    %c0_i32 = arith.constant 0 : i32
    %c0_i32_0 = arith.constant 0 : i32
    %c0_i32_1 = arith.constant 0 : i32
    return %c0_i32, %c0_i32_0 : i32, i32
  }
  func.func @transform_51(%arg0: i32) -> (i32, i32) {
    %c0_i32 = arith.constant 0 : i32
    %c0_i32_0 = arith.constant 0 : i32
    %c0_i32_1 = arith.constant 0 : i32
    return %c0_i32, %c0_i32_0 : i32, i32
  }
  func.func @transform_52(%arg0: i32) -> (i32, i32) {
    %c0_i32 = arith.constant 0 : i32
    %c0_i32_0 = arith.constant 0 : i32
    %c0_i32_1 = arith.constant 0 : i32
    return %c0_i32, %c0_i32_0 : i32, i32
  }
  func.func @transform_53(%arg0: i32) -> (i32, i32) {
    %c0_i32 = arith.constant 0 : i32
    %c0_i32_0 = arith.constant 0 : i32
    %c0_i32_1 = arith.constant 0 : i32
    return %c0_i32, %c0_i32_0 : i32, i32
  }
  func.func @transform_54(%arg0: i32) -> (i32, i32) {
    %c0_i32 = arith.constant 0 : i32
    %c0_i32_0 = arith.constant 0 : i32
    %c0_i32_1 = arith.constant 0 : i32
    return %c0_i32, %c0_i32_0 : i32, i32
  }
  func.func @transform_55(%arg0: i32) -> (i32, i32) {
    %c0_i32 = arith.constant 0 : i32
    %c0_i32_0 = arith.constant 0 : i32
    %c0_i32_1 = arith.constant 0 : i32
    return %c0_i32, %c0_i32_0 : i32, i32
  }
  func.func @transform_56(%arg0: i32) -> (i32, i32) {
    %c0_i32 = arith.constant 0 : i32
    %c0_i32_0 = arith.constant 0 : i32
    %c0_i32_1 = arith.constant 0 : i32
    return %c0_i32, %c0_i32_0 : i32, i32
  }
  func.func @transform_57(%arg0: i32) -> (i32, i32) {
    %c0_i32 = arith.constant 0 : i32
    %c0_i32_0 = arith.constant 0 : i32
    %c0_i32_1 = arith.constant 0 : i32
    return %c0_i32, %c0_i32_0 : i32, i32
  }
  func.func @transform_58(%arg0: i32) -> (i32, i32) {
    %c0_i32 = arith.constant 0 : i32
    %c0_i32_0 = arith.constant 0 : i32
    %c0_i32_1 = arith.constant 0 : i32
    return %c0_i32, %c0_i32_0 : i32, i32
  }
  func.func @transform_59(%arg0: i32) -> (i32, i32) {
    %c0_i32 = arith.constant 0 : i32
    %c0_i32_0 = arith.constant 0 : i32
    %c0_i32_1 = arith.constant 0 : i32
    return %c0_i32, %c0_i32_0 : i32, i32
  }
  func.func @transform_60(%arg0: i32) -> (i32, i32) {
    %c0_i32 = arith.constant 0 : i32
    %c0_i32_0 = arith.constant 0 : i32
    %c0_i32_1 = arith.constant 0 : i32
    return %c0_i32, %c0_i32_0 : i32, i32
  }
  func.func @transform_61(%arg0: i32) -> (i32, i32) {
    %c0_i32 = arith.constant 0 : i32
    %c0_i32_0 = arith.constant 0 : i32
    %c0_i32_1 = arith.constant 0 : i32
    return %c0_i32, %c0_i32_0 : i32, i32
  }
  func.func @transform_62(%arg0: i32) -> (i32, i32) {
    %c0_i32 = arith.constant 0 : i32
    %c0_i32_0 = arith.constant 0 : i32
    %c0_i32_1 = arith.constant 0 : i32
    return %c0_i32, %c0_i32_0 : i32, i32
  }
  func.func @transform_63(%arg0: i32) -> (i32, i32) {
    %c0_i32 = arith.constant 0 : i32
    %c0_i32_0 = arith.constant 0 : i32
    %c0_i32_1 = arith.constant 0 : i32
    return %c0_i32, %c0_i32_0 : i32, i32
  }
  func.func @transform_64(%arg0: i32) -> (i32, i32) {
    %c0_i32 = arith.constant 0 : i32
    %c0_i32_0 = arith.constant 0 : i32
    %c0_i32_1 = arith.constant 0 : i32
    return %c0_i32, %c0_i32_0 : i32, i32
  }
  func.func @transform_65(%arg0: i32) -> (i32, i32) {
    %c0_i32 = arith.constant 0 : i32
    %c0_i32_0 = arith.constant 0 : i32
    %c0_i32_1 = arith.constant 0 : i32
    return %c0_i32, %c0_i32_0 : i32, i32
  }
}

</mosaic_0001>

<llo_original>
// kernel: decoder_forward.1
$region0: #{decoder_forward.1}
  #allocation0 [shape = 'u32[]', space=smem, size = 0x4, offset = 0x4, fixed_abs, tag = 'smem constant byte address 0x4 - core index']
  #allocation1 [shape = 'u32[144,128]{1,0:T(1,128)}', space=vmem, size = 0x12000, scoped, tag = 'internal scratch']
  %s0 = inlined_call_operand.smem [shape: u32[66], index: -1, kind: input, shape index: {}]
  %s1 = sld [smem:[%s0]]
  %s2 = scalar_lea.smem %s0, 1
  %s3 = sld [smem:[%s2]]
  %s4 = scalar_lea.smem %s0, 2
  %s5 = sld [smem:[%s4]]
  %s6 = scalar_lea.smem %s0, 3
  %s7 = sld [smem:[%s6]]
  %s8 = scalar_lea.smem %s0, 4
  %s9 = sld [smem:[%s8]]
  %s10 = scalar_lea.smem %s0, 5
  %s11 = sld [smem:[%s10]]
  %s12 = scalar_lea.smem %s0, 6
  %s13 = sld [smem:[%s12]]
  %s14 = scalar_lea.smem %s0, 7
  %s15 = sld [smem:[%s14]]
  %s16 = scalar_lea.smem %s0, 8
  %s17 = sld [smem:[%s16]]
  %s18 = scalar_lea.smem %s0, 9
  %s19 = sld [smem:[%s18]]
  %s20 = scalar_lea.smem %s0, 10
  %s21 = sld [smem:[%s20]]
  %s22 = scalar_lea.smem %s0, 11
  %s23 = sld [smem:[%s22]]
  %s24 = scalar_lea.smem %s0, 12
  %s25 = sld [smem:[%s24]]
  %s26 = scalar_lea.smem %s0, 13
  %s27 = sld [smem:[%s26]]
  %s28 = scalar_lea.smem %s0, 14
  %s29 = sld [smem:[%s28]]
  %s30 = scalar_lea.smem %s0, 15
  %s31 = sld [smem:[%s30]]
  %s32 = scalar_lea.smem %s0, 16
  %s33 = sld [smem:[%s32]]
  %s34 = scalar_lea.smem %s0, 17
  %s35 = sld [smem:[%s34]]
  %s36 = scalar_lea.smem %s0, 18
  %s37 = sld [smem:[%s36]]
  %s38 = scalar_lea.smem %s0, 19
  %s39 = sld [smem:[%s38]]
  %s40 = scalar_lea.smem %s0, 20
  %s41 = sld [smem:[%s40]]
  %s42 = scalar_lea.smem %s0, 21
  %s43 = sld [smem:[%s42]]
  %s44 = scalar_lea.smem %s0, 22
  %s45 = sld [smem:[%s44]]
  %s46 = scalar_lea.smem %s0, 23
  %s47 = sld [smem:[%s46]]
  %s48 = scalar_lea.smem %s0, 24
  %s49 = sld [smem:[%s48]]
  %s50 = scalar_lea.smem %s0, 25
  %s51 = sld [smem:[%s50]]
  %s52 = scalar_lea.smem %s0, 26
  %s53 = sld [smem:[%s52]]
  %s54 = scalar_lea.smem %s0, 27
  %s55 = sld [smem:[%s54]]
  %s56 = scalar_lea.smem %s0, 28
  %s57 = sld [smem:[%s56]]
  %s58 = scalar_lea.smem %s0, 29
  %s59 = sld [smem:[%s58]]
  %s60 = scalar_lea.smem %s0, 30
  %s61 = sld [smem:[%s60]]
  %s62 = scalar_lea.smem %s0, 31
  %s63 = sld [smem:[%s62]]
  %s64 = scalar_lea.smem %s0, 32
  %s65 = sld [smem:[%s64]]
  %s66 = scalar_lea.smem %s0, 33
  %s67 = sld [smem:[%s66]]
  %s68 = scalar_lea.smem %s0, 34
  %s69 = sld [smem:[%s68]]
  %s70 = scalar_lea.smem %s0, 35
  %s71 = sld [smem:[%s70]]
  %s72 = scalar_lea.smem %s0, 36
  %s73 = sld [smem:[%s72]]
  %s74 = scalar_lea.smem %s0, 37
  %s75 = sld [smem:[%s74]]
  %s76 = scalar_lea.smem %s0, 38
  %s77 = sld [smem:[%s76]]
  %s78 = scalar_lea.smem %s0, 39
  %s79 = sld [smem:[%s78]]
  %s80 = scalar_lea.smem %s0, 40
  %s81 = sld [smem:[%s80]]
  %s82 = scalar_lea.smem %s0, 41
  %s83 = sld [smem:[%s82]]
  %s84 = scalar_lea.smem %s0, 42
  %s85 = sld [smem:[%s84]]
  %s86 = scalar_lea.smem %s0, 43
  %s87 = sld [smem:[%s86]]
  %s88 = scalar_lea.smem %s0, 44
  %s89 = sld [smem:[%s88]]
  %s90 = scalar_lea.smem %s0, 45
  %s91 = sld [smem:[%s90]]
  %s92 = scalar_lea.smem %s0, 46
  %s93 = sld [smem:[%s92]]
  %s94 = scalar_lea.smem %s0, 47
  %s95 = sld [smem:[%s94]]
  %s96 = scalar_lea.smem %s0, 48
  %s97 = sld [smem:[%s96]]
  %s98 = scalar_lea.smem %s0, 49
  %s99 = sld [smem:[%s98]]
  %s100 = scalar_lea.smem %s0, 50
  %s101 = sld [smem:[%s100]]
  %s102 = scalar_lea.smem %s0, 51
  %s103 = sld [smem:[%s102]]
  %s104 = scalar_lea.smem %s0, 52
  %s105 = sld [smem:[%s104]]
  %s106 = scalar_lea.smem %s0, 53
  %s107 = sld [smem:[%s106]]
  %s108 = scalar_lea.smem %s0, 54
  %s109 = sld [smem:[%s108]]
  %s110 = scalar_lea.smem %s0, 55
  %s111 = sld [smem:[%s110]]
  %s112 = scalar_lea.smem %s0, 56
  %s113 = sld [smem:[%s112]]
  %s114 = scalar_lea.smem %s0, 57
  %s115 = sld [smem:[%s114]]
  %s116 = scalar_lea.smem %s0, 58
  %s117 = sld [smem:[%s116]]
  %s118 = scalar_lea.smem %s0, 59
  %s119 = sld [smem:[%s118]]
  %s120 = scalar_lea.smem %s0, 60
  %s121 = sld [smem:[%s120]]
  %s122 = scalar_lea.smem %s0, 61
  %s123 = sld [smem:[%s122]]
  %s124 = scalar_lea.smem %s0, 62
  %s125 = sld [smem:[%s124]]
  %s126 = scalar_lea.smem %s0, 63
  %s127 = sld [smem:[%s126]]
  %s128 = scalar_lea.smem %s0, 64
  %s129 = sld [smem:[%s128]]
  %s130 = scalar_lea.smem %s0, 65
  %s131 = sld [smem:[%s130]]
  %132 = xla_tuple %s129, %s131
  %s133 = sld [smem:[#allocation0]]
  $region358: #{decoder_forward.1} parent=0
    _
  %s135 = ssub.s32 1, %s133
  %s136 = scalar_select 0, %s135, %s133
  $region1: #{decoder_forward.1} parent=0
    #allocation2 [shape = 'u8[512]{0}', space=vmem, size = 0x400, scoped, tag = 'input window, operand 18, single buffered']
    #allocation3 [shape = 's32[1]{0}', space=sflag, size = 0x4, scoped, tag = 'scoped memory for decoder_forward.1']
    #allocation4 [shape = 'u8[512]{0}', space=vmem, size = 0x400, scoped, tag = 'input window, operand 19, single buffered']
    #allocation5 [shape = 's32[1]{0}', space=sflag, size = 0x4, scoped, tag = 'scoped memory for decoder_forward.1']
    #allocation6 [shape = 'u8[512]{0}', space=vmem, size = 0x400, scoped, tag = 'input window, operand 20, single buffered']
    #allocation7 [shape = 'u8[512]{0}', space=vmem, size = 0x400, scoped, tag = 'input window, operand 21, single buffered']
    #allocation8 [shape = 's32[1]{0}', space=sflag, size = 0x4, scoped, tag = 'scoped memory for decoder_forward.1']
    #allocation9 [shape = 'u8[512]{0}', space=vmem, size = 0x400, scoped, tag = 'input window, operand 22, single buffered']
    #allocation10 [shape = 'u8[512]{0}', space=vmem, size = 0x400, scoped, tag = 'input window, operand 23, single buffered']
    #allocation11 [shape = 's32[1]{0}', space=sflag, size = 0x4, scoped, tag = 'scoped memory for decoder_forward.1']
    #allocation12 [shape = 'u8[512]{0}', space=vmem, size = 0x400, scoped, tag = 'input window, operand 24, single buffered']
    #allocation13 [shape = 'u8[512]{0}', space=vmem, size = 0x400, scoped, tag = 'input window, operand 25, single buffered']
    #allocation14 [shape = 's32[1]{0}', space=sflag, size = 0x4, scoped, tag = 'scoped memory for decoder_forward.1']
    #allocation15 [shape = 'u8[512]{0}', space=vmem, size = 0x400, scoped, tag = 'input window, operand 30, single buffered']
    #allocation16 [shape = 'u8[512]{0}', space=vmem, size = 0x400, scoped, tag = 'input window, operand 31, single buffered']
    #allocation17 [shape = 's32[1]{0}', space=sflag, size = 0x4, scoped, tag = 'scoped memory for decoder_forward.1']
    #allocation18 [shape = 'u8[512]{0}', space=vmem, size = 0x400, scoped, tag = 'input window, operand 32, single buffered']
    #allocation19 [shape = 'u8[512]{0}', space=vmem, size = 0x400, scoped, tag = 'input window, operand 38, single buffered']
    #allocation20 [shape = 's32[1]{0}', space=sflag, size = 0x4, scoped, tag = 'scoped memory for decoder_forward.1']
    #allocation21 [shape = 'u8[512]{0}', space=vmem, size = 0x400, scoped, tag = 'input window, operand 39, single buffered']
    #allocation22 [shape = 'u8[512]{0}', space=vmem, size = 0x400, scoped, tag = 'input window, operand 42, single buffered']
    #allocation23 [shape = 's32[1]{0}', space=sflag, size = 0x4, scoped, tag = 'scoped memory for decoder_forward.1']
    #allocation24 [shape = 'u8[512]{0}', space=vmem, size = 0x400, scoped, tag = 'input window, operand 43, single buffered']
    #allocation25 [shape = 'u8[512]{0}', space=vmem, size = 0x400, scoped, tag = 'input window, operand 44, single buffered']
    #allocation26 [shape = 's32[1]{0}', space=sflag, size = 0x4, scoped, tag = 'scoped memory for decoder_forward.1']
    #allocation27 [shape = 'u8[512]{0}', space=vmem, size = 0x400, scoped, tag = 'input window, operand 45, single buffered']
    #allocation28 [shape = 'u8[512]{0}', space=vmem, size = 0x400, scoped, tag = 'input window, operand 46, single buffered']
    #allocation29 [shape = 's32[1]{0}', space=sflag, size = 0x4, scoped, tag = 'scoped memory for decoder_forward.1']
    #allocation30 [shape = 'u8[512]{0}', space=vmem, size = 0x400, scoped, tag = 'input window, operand 47, single buffered']
    #allocation31 [shape = 'u8[512]{0}', space=vmem, size = 0x400, scoped, tag = 'input window, operand 48, single buffered']
    #allocation32 [shape = 's32[1]{0}', space=sflag, size = 0x4, scoped, tag = 'scoped memory for decoder_forward.1']
    #allocation33 [shape = 'u8[512]{0}', space=vmem, size = 0x400, scoped, tag = 'input window, operand 49, single buffered']
    %137 = vsyncpa [#allocation3], 0
    %138 = vsyncpa [#allocation5], 0
    %139 = vsyncpa [#allocation8], 0
    %140 = vsyncpa [#allocation11], 0
    %141 = vsyncpa [#allocation14], 0
    %142 = vsyncpa [#allocation17], 0
    %143 = vsyncpa [#allocation20], 0
    %144 = vsyncpa [#allocation23], 0
    %145 = vsyncpa [#allocation26], 0
    %146 = vsyncpa [#allocation29], 0
    %147 = vsyncpa [#allocation32], 0
    // Predicated region
    $region2: #{decoder_forward.1} parent=1 // pred_check
      _
    $region3: #{decoder_forward.1} parent=1 // pred_check_branch
      %149 = sbr.rel (0) target = $region5
    $region4: #{decoder_forward.1} parent=1 // pred_region
      _
    $region5: #{decoder_forward.1} parent=1 // pred_fallthru
      _
    // Predicated region
    $region6: #{decoder_forward.1} parent=1 // pred_check
      _
    $region7: #{decoder_forward.1} parent=1 // pred_check_branch
      %151 = sbr.rel (0) target = $region9
    $region8: #{decoder_forward.1} parent=1 // pred_region
      _
    $region9: #{decoder_forward.1} parent=1 // pred_fallthru
      _
    // Predicated region
    $region10: #{decoder_forward.1} parent=1 // pred_check
      _
    $region11: #{decoder_forward.1} parent=1 // pred_check_branch
      %153 = sbr.rel (0) target = $region13
    $region12: #{decoder_forward.1} parent=1 // pred_region
      _
    $region13: #{decoder_forward.1} parent=1 // pred_fallthru
      _
    // Predicated region
    $region14: #{decoder_forward.1} parent=1 // pred_check
      _
    $region15: #{decoder_forward.1} parent=1 // pred_check_branch
      %155 = sbr.rel (0) target = $region17
    $region16: #{decoder_forward.1} parent=1 // pred_region
      _
    $region17: #{decoder_forward.1} parent=1 // pred_fallthru
      _
    // Predicated region
    $region18: #{decoder_forward.1} parent=1 // pred_check
      _
    $region19: #{decoder_forward.1} parent=1 // pred_check_branch
      %157 = sbr.rel (0) target = $region21
    $region20: #{decoder_forward.1} parent=1 // pred_region
      _
    $region21: #{decoder_forward.1} parent=1 // pred_fallthru
      _
    // Predicated region
    $region22: #{decoder_forward.1} parent=1 // pred_check
      _
    $region23: #{decoder_forward.1} parent=1 // pred_check_branch
      %159 = sbr.rel (0) target = $region25
    $region24: #{decoder_forward.1} parent=1 // pred_region
      _
    $region25: #{decoder_forward.1} parent=1 // pred_fallthru
      _
    // Predicated region
    $region26: #{decoder_forward.1} parent=1 // pred_check
      _
    $region27: #{decoder_forward.1} parent=1 // pred_check_branch
      %161 = sbr.rel (0) target = $region29
    $region28: #{decoder_forward.1} parent=1 // pred_region
      _
    $region29: #{decoder_forward.1} parent=1 // pred_fallthru
      _
    // Predicated region
    $region30: #{decoder_forward.1} parent=1 // pred_check
      _
    $region31: #{decoder_forward.1} parent=1 // pred_check_branch
      %163 = sbr.rel (0) target = $region33
    $region32: #{decoder_forward.1} parent=1 // pred_region
      _
    $region33: #{decoder_forward.1} parent=1 // pred_fallthru
      _
    // Predicated region
    $region34: #{decoder_forward.1} parent=1 // pred_check
      _
    $region35: #{decoder_forward.1} parent=1 // pred_check_branch
      %165 = sbr.rel (0) target = $region37
    $region36: #{decoder_forward.1} parent=1 // pred_region
      _
    $region37: #{decoder_forward.1} parent=1 // pred_fallthru
      _
    // Predicated region
    $region38: #{decoder_forward.1} parent=1 // pred_check
      _
    $region39: #{decoder_forward.1} parent=1 // pred_check_branch
      %167 = sbr.rel (0) target = $region41
    $region40: #{decoder_forward.1} parent=1 // pred_region
      _
    $region41: #{decoder_forward.1} parent=1 // pred_fallthru
      _
    // Predicated region
    $region42: #{decoder_forward.1} parent=1 // pred_check
      _
    $region43: #{decoder_forward.1} parent=1 // pred_check_branch
      %169 = sbr.rel (0) target = $region45
    $region44: #{decoder_forward.1} parent=1 // pred_region
      _
    $region45: #{decoder_forward.1} parent=1 // pred_fallthru
      _
    // Predicated region
    $region46: #{decoder_forward.1} parent=1 // pred_check
      _
    $region47: #{decoder_forward.1} parent=1 // pred_check_branch
      %171 = sbr.rel (0) target = $region49
    $region48: #{decoder_forward.1} parent=1 // pred_region
      _
    $region49: #{decoder_forward.1} parent=1 // pred_fallthru
      _
    // Predicated region
    $region50: #{decoder_forward.1} parent=1 // pred_check
      _
    $region51: #{decoder_forward.1} parent=1 // pred_check_branch
      %173 = sbr.rel (0) target = $region53
    $region52: #{decoder_forward.1} parent=1 // pred_region
      _
    $region53: #{decoder_forward.1} parent=1 // pred_fallthru
      _
    // Predicated region
    $region54: #{decoder_forward.1} parent=1 // pred_check
      _
    $region55: #{decoder_forward.1} parent=1 // pred_check_branch
      %175 = sbr.rel (0) target = $region57
    $region56: #{decoder_forward.1} parent=1 // pred_region
      _
    $region57: #{decoder_forward.1} parent=1 // pred_fallthru
      _
    // Predicated region
    $region58: #{decoder_forward.1} parent=1 // pred_check
      _
    $region59: #{decoder_forward.1} parent=1 // pred_check_branch
      %177 = sbr.rel (0) target = $region61
    $region60: #{decoder_forward.1} parent=1 // pred_region
      _
    $region61: #{decoder_forward.1} parent=1 // pred_fallthru
      _
    // Predicated region
    $region62: #{decoder_forward.1} parent=1 // pred_check
      _
    $region63: #{decoder_forward.1} parent=1 // pred_check_branch
      %179 = sbr.rel (0) target = $region65
    $region64: #{decoder_forward.1} parent=1 // pred_region
      _
    $region65: #{decoder_forward.1} parent=1 // pred_fallthru
      _
    // Predicated region
    $region66: #{decoder_forward.1} parent=1 // pred_check
      _
    $region67: #{decoder_forward.1} parent=1 // pred_check_branch
      %181 = sbr.rel (0) target = $region69
    $region68: #{decoder_forward.1} parent=1 // pred_region
      _
    $region69: #{decoder_forward.1} parent=1 // pred_fallthru
      _
    // Predicated region
    $region70: #{decoder_forward.1} parent=1 // pred_check
      _
    $region71: #{decoder_forward.1} parent=1 // pred_check_branch
      %183 = sbr.rel (0) target = $region73
    $region72: #{decoder_forward.1} parent=1 // pred_region
      _
    $region73: #{decoder_forward.1} parent=1 // pred_fallthru
      _
    // Predicated region
    $region74: #{decoder_forward.1} parent=1 // pred_check
      _
    $region75: #{decoder_forward.1} parent=1 // pred_check_branch
      %185 = sbr.rel (0) target = $region77
    $region76: #{decoder_forward.1} parent=1 // pred_region
      %s187 = ssub.s32 16, 16
      %188 = vsyncadd [#allocation3], %s187
      %s190 = sshll.u32 [#allocation2], 4
      %s191 = int_to_ptr.vmem [resolvable:$true] %s190
      %193 = dma.hbm_to_vmem [thread:$0]  %s37, 16, %s191, [#allocation3]
    $region77: #{decoder_forward.1} parent=1 // pred_fallthru
      _
    // Predicated region
    $region78: #{decoder_forward.1} parent=1 // pred_check
      _
    $region79: #{decoder_forward.1} parent=1 // pred_check_branch
      %195 = sbr.rel (0) target = $region81
    $region80: #{decoder_forward.1} parent=1 // pred_region
      %s197 = ssub.s32 16, 16
      %198 = vsyncadd [#allocation5], %s197
      %s200 = sshll.u32 [#allocation4], 4
      %s201 = int_to_ptr.vmem [resolvable:$true] %s200
      %203 = dma.hbm_to_vmem [thread:$0]  %s39, 16, %s201, [#allocation5]
    $region81: #{decoder_forward.1} parent=1 // pred_fallthru
      _
    // Predicated region
    $region82: #{decoder_forward.1} parent=1 // pred_check
      _
    $region83: #{decoder_forward.1} parent=1 // pred_check_branch
      %205 = sbr.rel (0) target = $region85
    $region84: #{decoder_forward.1} parent=1 // pred_region
      %s207 = ssub.s32 16, 16
      %208 = vsyncadd [#allocation5], %s207
      %s210 = sshll.u32 [#allocation6], 4
      %s211 = int_to_ptr.vmem [resolvable:$true] %s210
      %213 = dma.hbm_to_vmem [thread:$0]  %s41, 16, %s211, [#allocation5]
    $region85: #{decoder_forward.1} parent=1 // pred_fallthru
      _
    // Predicated region
    $region86: #{decoder_forward.1} parent=1 // pred_check
      _
    $region87: #{decoder_forward.1} parent=1 // pred_check_branch
      %215 = sbr.rel (0) target = $region89
    $region88: #{decoder_forward.1} parent=1 // pred_region
      %s217 = ssub.s32 16, 16
      %218 = vsyncadd [#allocation8], %s217
      %s220 = sshll.u32 [#allocation7], 4
      %s221 = int_to_ptr.vmem [resolvable:$true] %s220
      %223 = dma.hbm_to_vmem [thread:$0]  %s43, 16, %s221, [#allocation8]
    $region89: #{decoder_forward.1} parent=1 // pred_fallthru
      _
    // Predicated region
    $region90: #{decoder_forward.1} parent=1 // pred_check
      _
    $region91: #{decoder_forward.1} parent=1 // pred_check_branch
      %225 = sbr.rel (0) target = $region93
    $region92: #{decoder_forward.1} parent=1 // pred_region
      %s227 = ssub.s32 16, 16
      %228 = vsyncadd [#allocation8], %s227
      %s230 = sshll.u32 [#allocation9], 4
      %s231 = int_to_ptr.vmem [resolvable:$true] %s230
      %233 = dma.hbm_to_vmem [thread:$0]  %s45, 16, %s231, [#allocation8]
    $region93: #{decoder_forward.1} parent=1 // pred_fallthru
      _
    // Predicated region
    $region94: #{decoder_forward.1} parent=1 // pred_check
      _
    $region95: #{decoder_forward.1} parent=1 // pred_check_branch
      %235 = sbr.rel (0) target = $region97
    $region96: #{decoder_forward.1} parent=1 // pred_region
      %s237 = ssub.s32 16, 16
      %238 = vsyncadd [#allocation11], %s237
      %s240 = sshll.u32 [#allocation10], 4
      %s241 = int_to_ptr.vmem [resolvable:$true] %s240
      %243 = dma.hbm_to_vmem [thread:$0]  %s47, 16, %s241, [#allocation11]
    $region97: #{decoder_forward.1} parent=1 // pred_fallthru
      _
    // Predicated region
    $region98: #{decoder_forward.1} parent=1 // pred_check
      _
    $region99: #{decoder_forward.1} parent=1 // pred_check_branch
      %245 = sbr.rel (0) target = $region101
    $region100: #{decoder_forward.1} parent=1 // pred_region
      %s247 = ssub.s32 16, 16
      %248 = vsyncadd [#allocation11], %s247
      %s250 = sshll.u32 [#allocation12], 4
      %s251 = int_to_ptr.vmem [resolvable:$true] %s250
      %253 = dma.hbm_to_vmem [thread:$0]  %s49, 16, %s251, [#allocation11]
    $region101: #{decoder_forward.1} parent=1 // pred_fallthru
      _
    // Predicated region
    $region102: #{decoder_forward.1} parent=1 // pred_check
      _
    $region103: #{decoder_forward.1} parent=1 // pred_check_branch
      %255 = sbr.rel (0) target = $region105
    $region104: #{decoder_forward.1} parent=1 // pred_region
      %s257 = ssub.s32 16, 16
      %258 = vsyncadd [#allocation14], %s257
      %s260 = sshll.u32 [#allocation13], 4
      %s261 = int_to_ptr.vmem [resolvable:$true] %s260
      %263 = dma.hbm_to_vmem [thread:$0]  %s51, 16, %s261, [#allocation14]
    $region105: #{decoder_forward.1} parent=1 // pred_fallthru
      _
    // Predicated region
    $region106: #{decoder_forward.1} parent=1 // pred_check
      _
    $region107: #{decoder_forward.1} parent=1 // pred_check_branch
      %265 = sbr.rel (0) target = $region109
    $region108: #{decoder_forward.1} parent=1 // pred_region
      _
    $region109: #{decoder_forward.1} parent=1 // pred_fallthru
      _
    // Predicated region
    $region110: #{decoder_forward.1} parent=1 // pred_check
      _
    $region111: #{decoder_forward.1} parent=1 // pred_check_branch
      %267 = sbr.rel (0) target = $region113
    $region112: #{decoder_forward.1} parent=1 // pred_region
      _
    $region113: #{decoder_forward.1} parent=1 // pred_fallthru
      _
    // Predicated region
    $region114: #{decoder_forward.1} parent=1 // pred_check
      _
    $region115: #{decoder_forward.1} parent=1 // pred_check_branch
      %269 = sbr.rel (0) target = $region117
    $region116: #{decoder_forward.1} parent=1 // pred_region
      _
    $region117: #{decoder_forward.1} parent=1 // pred_fallthru
      _
    // Predicated region
    $region118: #{decoder_forward.1} parent=1 // pred_check
      _
    $region119: #{decoder_forward.1} parent=1 // pred_check_branch
      %271 = sbr.rel (0) target = $region121
    $region120: #{decoder_forward.1} parent=1 // pred_region
      _
    $region121: #{decoder_forward.1} parent=1 // pred_fallthru
      _
    // Predicated region
    $region122: #{decoder_forward.1} parent=1 // pred_check
      _
    $region123: #{decoder_forward.1} parent=1 // pred_check_branch
      %273 = sbr.rel (0) target = $region125
    $region124: #{decoder_forward.1} parent=1 // pred_region
      %s275 = ssub.s32 16, 16
      %276 = vsyncadd [#allocation14], %s275
      %s278 = sshll.u32 [#allocation15], 4
      %s279 = int_to_ptr.vmem [resolvable:$true] %s278
      %281 = dma.hbm_to_vmem [thread:$0]  %s61, 16, %s279, [#allocation14]
    $region125: #{decoder_forward.1} parent=1 // pred_fallthru
      _
    // Predicated region
    $region126: #{decoder_forward.1} parent=1 // pred_check
      _
    $region127: #{decoder_forward.1} parent=1 // pred_check_branch
      %283 = sbr.rel (0) target = $region129
    $region128: #{decoder_forward.1} parent=1 // pred_region
      %s285 = ssub.s32 16, 16
      %286 = vsyncadd [#allocation17], %s285
      %s288 = sshll.u32 [#allocation16], 4
      %s289 = int_to_ptr.vmem [resolvable:$true] %s288
      %291 = dma.hbm_to_vmem [thread:$0]  %s63, 16, %s289, [#allocation17]
    $region129: #{decoder_forward.1} parent=1 // pred_fallthru
      _
    // Predicated region
    $region130: #{decoder_forward.1} parent=1 // pred_check
      _
    $region131: #{decoder_forward.1} parent=1 // pred_check_branch
      %293 = sbr.rel (0) target = $region133
    $region132: #{decoder_forward.1} parent=1 // pred_region
      %s295 = ssub.s32 16, 16
      %296 = vsyncadd [#allocation17], %s295
      %s298 = sshll.u32 [#allocation18], 4
      %s299 = int_to_ptr.vmem [resolvable:$true] %s298
      %301 = dma.hbm_to_vmem [thread:$0]  %s65, 16, %s299, [#allocation17]
    $region133: #{decoder_forward.1} parent=1 // pred_fallthru
      _
    // Predicated region
    $region134: #{decoder_forward.1} parent=1 // pred_check
      _
    $region135: #{decoder_forward.1} parent=1 // pred_check_branch
      %303 = sbr.rel (0) target = $region137
    $region136: #{decoder_forward.1} parent=1 // pred_region
      _
    $region137: #{decoder_forward.1} parent=1 // pred_fallthru
      _
    // Predicated region
    $region138: #{decoder_forward.1} parent=1 // pred_check
      _
    $region139: #{decoder_forward.1} parent=1 // pred_check_branch
      %305 = sbr.rel (0) target = $region141
    $region140: #{decoder_forward.1} parent=1 // pred_region
      _
    $region141: #{decoder_forward.1} parent=1 // pred_fallthru
      _
    // Predicated region
    $region142: #{decoder_forward.1} parent=1 // pred_check
      _
    $region143: #{decoder_forward.1} parent=1 // pred_check_branch
      %307 = sbr.rel (0) target = $region145
    $region144: #{decoder_forward.1} parent=1 // pred_region
      _
    $region145: #{decoder_forward.1} parent=1 // pred_fallthru
      _
    // Predicated region
    $region146: #{decoder_forward.1} parent=1 // pred_check
      _
    $region147: #{decoder_forward.1} parent=1 // pred_check_branch
      %309 = sbr.rel (0) target = $region149
    $region148: #{decoder_forward.1} parent=1 // pred_region
      _
    $region149: #{decoder_forward.1} parent=1 // pred_fallthru
      _
    // Predicated region
    $region150: #{decoder_forward.1} parent=1 // pred_check
      _
    $region151: #{decoder_forward.1} parent=1 // pred_check_branch
      %311 = sbr.rel (0) target = $region153
    $region152: #{decoder_forward.1} parent=1 // pred_region
      _
    $region153: #{decoder_forward.1} parent=1 // pred_fallthru
      _
    // Predicated region
    $region154: #{decoder_forward.1} parent=1 // pred_check
      _
    $region155: #{decoder_forward.1} parent=1 // pred_check_branch
      %313 = sbr.rel (0) target = $region157
    $region156: #{decoder_forward.1} parent=1 // pred_region
      %s315 = ssub.s32 16, 16
      %316 = vsyncadd [#allocation20], %s315
      %s318 = sshll.u32 [#allocation19], 4
      %s319 = int_to_ptr.vmem [resolvable:$true] %s318
      %321 = dma.hbm_to_vmem [thread:$0]  %s77, 16, %s319, [#allocation20]
    $region157: #{decoder_forward.1} parent=1 // pred_fallthru
      _
    // Predicated region
    $region158: #{decoder_forward.1} parent=1 // pred_check
      _
    $region159: #{decoder_forward.1} parent=1 // pred_check_branch
      %323 = sbr.rel (0) target = $region161
    $region160: #{decoder_forward.1} parent=1 // pred_region
      %s325 = ssub.s32 16, 16
      %326 = vsyncadd [#allocation20], %s325
      %s328 = sshll.u32 [#allocation21], 4
      %s329 = int_to_ptr.vmem [resolvable:$true] %s328
      %331 = dma.hbm_to_vmem [thread:$0]  %s79, 16, %s329, [#allocation20]
    $region161: #{decoder_forward.1} parent=1 // pred_fallthru
      _
    // Predicated region
    $region162: #{decoder_forward.1} parent=1 // pred_check
      _
    $region163: #{decoder_forward.1} parent=1 // pred_check_branch
      %333 = sbr.rel (0) target = $region165
    $region164: #{decoder_forward.1} parent=1 // pred_region
      _
    $region165: #{decoder_forward.1} parent=1 // pred_fallthru
      _
    // Predicated region
    $region166: #{decoder_forward.1} parent=1 // pred_check
      _
    $region167: #{decoder_forward.1} parent=1 // pred_check_branch
      %335 = sbr.rel (0) target = $region169
    $region168: #{decoder_forward.1} parent=1 // pred_region
      _
    $region169: #{decoder_forward.1} parent=1 // pred_fallthru
      _
    // Predicated region
    $region170: #{decoder_forward.1} parent=1 // pred_check
      _
    $region171: #{decoder_forward.1} parent=1 // pred_check_branch
      %337 = sbr.rel (0) target = $region173
    $region172: #{decoder_forward.1} parent=1 // pred_region
      %s339 = ssub.s32 16, 16
      %340 = vsyncadd [#allocation23], %s339
      %s342 = sshll.u32 [#allocation22], 4
      %s343 = int_to_ptr.vmem [resolvable:$true] %s342
      %345 = dma.hbm_to_vmem [thread:$0]  %s85, 16, %s343, [#allocation23]
    $region173: #{decoder_forward.1} parent=1 // pred_fallthru
      _
    // Predicated region
    $region174: #{decoder_forward.1} parent=1 // pred_check
      _
    $region175: #{decoder_forward.1} parent=1 // pred_check_branch
      %347 = sbr.rel (0) target = $region177
    $region176: #{decoder_forward.1} parent=1 // pred_region
      %s349 = ssub.s32 16, 16
      %350 = vsyncadd [#allocation23], %s349
      %s352 = sshll.u32 [#allocation24], 4
      %s353 = int_to_ptr.vmem [resolvable:$true] %s352
      %355 = dma.hbm_to_vmem [thread:$0]  %s87, 16, %s353, [#allocation23]
    $region177: #{decoder_forward.1} parent=1 // pred_fallthru
      _
    // Predicated region
    $region178: #{decoder_forward.1} parent=1 // pred_check
      _
    $region179: #{decoder_forward.1} parent=1 // pred_check_branch
      %357 = sbr.rel (0) target = $region181
    $region180: #{decoder_forward.1} parent=1 // pred_region
      %s359 = ssub.s32 16, 16
      %360 = vsyncadd [#allocation26], %s359
      %s362 = sshll.u32 [#allocation25], 4
      %s363 = int_to_ptr.vmem [resolvable:$true] %s362
      %365 = dma.hbm_to_vmem [thread:$0]  %s89, 16, %s363, [#allocation26]
    $region181: #{decoder_forward.1} parent=1 // pred_fallthru
      _
    // Predicated region
    $region182: #{decoder_forward.1} parent=1 // pred_check
      _
    $region183: #{decoder_forward.1} parent=1 // pred_check_branch
      %367 = sbr.rel (0) target = $region185
    $region184: #{decoder_forward.1} parent=1 // pred_region
      %s369 = ssub.s32 16, 16
      %370 = vsyncadd [#allocation26], %s369
      %s372 = sshll.u32 [#allocation27], 4
      %s373 = int_to_ptr.vmem [resolvable:$true] %s372
      %375 = dma.hbm_to_vmem [thread:$0]  %s91, 16, %s373, [#allocation26]
    $region185: #{decoder_forward.1} parent=1 // pred_fallthru
      _
    // Predicated region
    $region186: #{decoder_forward.1} parent=1 // pred_check
      _
    $region187: #{decoder_forward.1} parent=1 // pred_check_branch
      %377 = sbr.rel (0) target = $region189
    $region188: #{decoder_forward.1} parent=1 // pred_region
      %s379 = ssub.s32 16, 16
      %380 = vsyncadd [#allocation29], %s379
      %s382 = sshll.u32 [#allocation28], 4
      %s383 = int_to_ptr.vmem [resolvable:$true] %s382
      %385 = dma.hbm_to_vmem [thread:$0]  %s93, 16, %s383, [#allocation29]
    $region189: #{decoder_forward.1} parent=1 // pred_fallthru
      _
    // Predicated region
    $region190: #{decoder_forward.1} parent=1 // pred_check
      _
    $region191: #{decoder_forward.1} parent=1 // pred_check_branch
      %387 = sbr.rel (0) target = $region193
    $region192: #{decoder_forward.1} parent=1 // pred_region
      %s389 = ssub.s32 16, 16
      %390 = vsyncadd [#allocation29], %s389
      %s392 = sshll.u32 [#allocation30], 4
      %s393 = int_to_ptr.vmem [resolvable:$true] %s392
      %395 = dma.hbm_to_vmem [thread:$0]  %s95, 16, %s393, [#allocation29]
    $region193: #{decoder_forward.1} parent=1 // pred_fallthru
      _
    // Predicated region
    $region194: #{decoder_forward.1} parent=1 // pred_check
      _
    $region195: #{decoder_forward.1} parent=1 // pred_check_branch
      %397 = sbr.rel (0) target = $region197
    $region196: #{decoder_forward.1} parent=1 // pred_region
      %s399 = ssub.s32 16, 16
      %400 = vsyncadd [#allocation32], %s399
      %s402 = sshll.u32 [#allocation31], 4
      %s403 = int_to_ptr.vmem [resolvable:$true] %s402
      %405 = dma.hbm_to_vmem [thread:$0]  %s97, 16, %s403, [#allocation32]
    $region197: #{decoder_forward.1} parent=1 // pred_fallthru
      _
    // Predicated region
    $region198: #{decoder_forward.1} parent=1 // pred_check
      _
    $region199: #{decoder_forward.1} parent=1 // pred_check_branch
      %407 = sbr.rel (0) target = $region201
    $region200: #{decoder_forward.1} parent=1 // pred_region
      %s409 = ssub.s32 16, 16
      %410 = vsyncadd [#allocation32], %s409
      %s412 = sshll.u32 [#allocation33], 4
      %s413 = int_to_ptr.vmem [resolvable:$true] %s412
      %415 = dma.hbm_to_vmem [thread:$0]  %s99, 16, %s413, [#allocation32]
    $region201: #{decoder_forward.1} parent=1 // pred_fallthru
      _
    // Predicated region
    $region202: #{decoder_forward.1} parent=1 // pred_check
      _
    $region203: #{decoder_forward.1} parent=1 // pred_check_branch
      %417 = sbr.rel (0) target = $region205
    $region204: #{decoder_forward.1} parent=1 // pred_region
      _
    $region205: #{decoder_forward.1} parent=1 // pred_fallthru
      _
    // Predicated region
    $region206: #{decoder_forward.1} parent=1 // pred_check
      _
    $region207: #{decoder_forward.1} parent=1 // pred_check_branch
      %419 = sbr.rel (0) target = $region209
    $region208: #{decoder_forward.1} parent=1 // pred_region
      _
    $region209: #{decoder_forward.1} parent=1 // pred_fallthru
      _
    // Predicated region
    $region210: #{decoder_forward.1} parent=1 // pred_check
      _
    $region211: #{decoder_forward.1} parent=1 // pred_check_branch
      %421 = sbr.rel (0) target = $region213
    $region212: #{decoder_forward.1} parent=1 // pred_region
      _
    $region213: #{decoder_forward.1} parent=1 // pred_fallthru
      _
    // Predicated region
    $region214: #{decoder_forward.1} parent=1 // pred_check
      _
    $region215: #{decoder_forward.1} parent=1 // pred_check_branch
      %423 = sbr.rel (0) target = $region217
    $region216: #{decoder_forward.1} parent=1 // pred_region
      _
    $region217: #{decoder_forward.1} parent=1 // pred_fallthru
      _
    // Predicated region
    $region218: #{decoder_forward.1} parent=1 // pred_check
      _
    $region219: #{decoder_forward.1} parent=1 // pred_check_branch
      %425 = sbr.rel (0) target = $region221
    $region220: #{decoder_forward.1} parent=1 // pred_region
      _
    $region221: #{decoder_forward.1} parent=1 // pred_fallthru
      _
    // Predicated region
    $region222: #{decoder_forward.1} parent=1 // pred_check
      _
    $region223: #{decoder_forward.1} parent=1 // pred_check_branch
      %427 = sbr.rel (0) target = $region225
    $region224: #{decoder_forward.1} parent=1 // pred_region
      _
    $region225: #{decoder_forward.1} parent=1 // pred_fallthru
      _
    // Predicated region
    $region226: #{decoder_forward.1} parent=1 // pred_check
      _
    $region227: #{decoder_forward.1} parent=1 // pred_check_branch
      %429 = sbr.rel (0) target = $region229
    $region228: #{decoder_forward.1} parent=1 // pred_region
      _
    $region229: #{decoder_forward.1} parent=1 // pred_fallthru
      _
    // Predicated region
    $region230: #{decoder_forward.1} parent=1 // pred_check
      _
    $region231: #{decoder_forward.1} parent=1 // pred_check_branch
      %431 = sbr.rel (0) target = $region233
    $region232: #{decoder_forward.1} parent=1 // pred_region
      _
    $region233: #{decoder_forward.1} parent=1 // pred_fallthru
      _
    // Predicated region
    $region234: #{decoder_forward.1} parent=1 // pred_check
      _
    $region235: #{decoder_forward.1} parent=1 // pred_check_branch
      %433 = sbr.rel (0) target = $region237
    $region236: #{decoder_forward.1} parent=1 // pred_region
      _
    $region237: #{decoder_forward.1} parent=1 // pred_fallthru
      _
    // Predicated region
    $region238: #{decoder_forward.1} parent=1 // pred_check
      _
    $region239: #{decoder_forward.1} parent=1 // pred_check_branch
      %435 = sbr.rel (0) target = $region241
    $region240: #{decoder_forward.1} parent=1 // pred_region
      _
    $region241: #{decoder_forward.1} parent=1 // pred_fallthru
      _
    // Predicated region
    $region242: #{decoder_forward.1} parent=1 // pred_check
      _
    $region243: #{decoder_forward.1} parent=1 // pred_check_branch
      %437 = sbr.rel (0) target = $region245
    $region244: #{decoder_forward.1} parent=1 // pred_region
      _
    $region245: #{decoder_forward.1} parent=1 // pred_fallthru
      _
    // Predicated region
    $region246: #{decoder_forward.1} parent=1 // pred_check
      _
    $region247: #{decoder_forward.1} parent=1 // pred_check_branch
      %439 = sbr.rel (0) target = $region249
    $region248: #{decoder_forward.1} parent=1 // pred_region
      _
    $region249: #{decoder_forward.1} parent=1 // pred_fallthru
      _
    // Predicated region
    $region250: #{decoder_forward.1} parent=1 // pred_check
      _
    $region251: #{decoder_forward.1} parent=1 // pred_check_branch
      %441 = sbr.rel (0) target = $region253
    $region252: #{decoder_forward.1} parent=1 // pred_region
      _
    $region253: #{decoder_forward.1} parent=1 // pred_fallthru
      _
    // Predicated region
    $region254: #{decoder_forward.1} parent=1 // pred_check
      _
    $region255: #{decoder_forward.1} parent=1 // pred_check_branch
      %443 = sbr.rel (0) target = $region257
    $region256: #{decoder_forward.1} parent=1 // pred_region
      _
    $region257: #{decoder_forward.1} parent=1 // pred_fallthru
      _
    // Predicated region
    $region258: #{decoder_forward.1} parent=1 // pred_check
      _
    $region259: #{decoder_forward.1} parent=1 // pred_check_branch
      %445 = sbr.rel (0) target = $region261
    $region260: #{decoder_forward.1} parent=1 // pred_region
      %446 = dma.done [#allocation3], 16
    $region261: #{decoder_forward.1} parent=1 // pred_fallthru
      _
    // Predicated region
    $region262: #{decoder_forward.1} parent=1 // pred_check
      _
    $region263: #{decoder_forward.1} parent=1 // pred_check_branch
      %448 = sbr.rel (0) target = $region265
    $region264: #{decoder_forward.1} parent=1 // pred_region
      %449 = dma.done [#allocation5], 16
    $region265: #{decoder_forward.1} parent=1 // pred_fallthru
      _
    // Predicated region
    $region266: #{decoder_forward.1} parent=1 // pred_check
      _
    $region267: #{decoder_forward.1} parent=1 // pred_check_branch
      %451 = sbr.rel (0) target = $region269
    $region268: #{decoder_forward.1} parent=1 // pred_region
      %452 = dma.done [#allocation5], 16
    $region269: #{decoder_forward.1} parent=1 // pred_fallthru
      _
    // Predicated region
    $region270: #{decoder_forward.1} parent=1 // pred_check
      _
    $region271: #{decoder_forward.1} parent=1 // pred_check_branch
      %454 = sbr.rel (0) target = $region273
    $region272: #{decoder_forward.1} parent=1 // pred_region
      %455 = dma.done [#allocation8], 16
    $region273: #{decoder_forward.1} parent=1 // pred_fallthru
      _
    // Predicated region
    $region274: #{decoder_forward.1} parent=1 // pred_check
      _
    $region275: #{decoder_forward.1} parent=1 // pred_check_branch
      %457 = sbr.rel (0) target = $region277
    $region276: #{decoder_forward.1} parent=1 // pred_region
      %458 = dma.done [#allocation8], 16
    $region277: #{decoder_forward.1} parent=1 // pred_fallthru
      _
    // Predicated region
    $region278: #{decoder_forward.1} parent=1 // pred_check
      _
    $region279: #{decoder_forward.1} parent=1 // pred_check_branch
      %460 = sbr.rel (0) target = $region281
    $region280: #{decoder_forward.1} parent=1 // pred_region
      %461 = dma.done [#allocation11], 16
    $region281: #{decoder_forward.1} parent=1 // pred_fallthru
      _
    // Predicated region
    $region282: #{decoder_forward.1} parent=1 // pred_check
      _
    $region283: #{decoder_forward.1} parent=1 // pred_check_branch
      %463 = sbr.rel (0) target = $region285
    $region284: #{decoder_forward.1} parent=1 // pred_region
      %464 = dma.done [#allocation11], 16
    $region285: #{decoder_forward.1} parent=1 // pred_fallthru
      _
    // Predicated region
    $region286: #{decoder_forward.1} parent=1 // pred_check
      _
    $region287: #{decoder_forward.1} parent=1 // pred_check_branch
      %466 = sbr.rel (0) target = $region289
    $region288: #{decoder_forward.1} parent=1 // pred_region
      %467 = dma.done [#allocation14], 16
    $region289: #{decoder_forward.1} parent=1 // pred_fallthru
      _
    // Predicated region
    $region290: #{decoder_forward.1} parent=1 // pred_check
      _
    $region291: #{decoder_forward.1} parent=1 // pred_check_branch
      %469 = sbr.rel (0) target = $region293
    $region292: #{decoder_forward.1} parent=1 // pred_region
      %470 = dma.done [#allocation14], 16
    $region293: #{decoder_forward.1} parent=1 // pred_fallthru
      _
    // Predicated region
    $region294: #{decoder_forward.1} parent=1 // pred_check
      _
    $region295: #{decoder_forward.1} parent=1 // pred_check_branch
      %472 = sbr.rel (0) target = $region297
    $region296: #{decoder_forward.1} parent=1 // pred_region
      %473 = dma.done [#allocation17], 16
    $region297: #{decoder_forward.1} parent=1 // pred_fallthru
      _
    // Predicated region
    $region298: #{decoder_forward.1} parent=1 // pred_check
      _
    $region299: #{decoder_forward.1} parent=1 // pred_check_branch
      %475 = sbr.rel (0) target = $region301
    $region300: #{decoder_forward.1} parent=1 // pred_region
      %476 = dma.done [#allocation17], 16
    $region301: #{decoder_forward.1} parent=1 // pred_fallthru
      _
    // Predicated region
    $region302: #{decoder_forward.1} parent=1 // pred_check
      _
    $region303: #{decoder_forward.1} parent=1 // pred_check_branch
      %478 = sbr.rel (0) target = $region305
    $region304: #{decoder_forward.1} parent=1 // pred_region
      %479 = dma.done [#allocation20], 16
    $region305: #{decoder_forward.1} parent=1 // pred_fallthru
      _
    // Predicated region
    $region306: #{decoder_forward.1} parent=1 // pred_check
      _
    $region307: #{decoder_forward.1} parent=1 // pred_check_branch
      %481 = sbr.rel (0) target = $region309
    $region308: #{decoder_forward.1} parent=1 // pred_region
      %482 = dma.done [#allocation20], 16
    $region309: #{decoder_forward.1} parent=1 // pred_fallthru
      _
    // Predicated region
    $region310: #{decoder_forward.1} parent=1 // pred_check
      _
    $region311: #{decoder_forward.1} parent=1 // pred_check_branch
      %484 = sbr.rel (0) target = $region313
    $region312: #{decoder_forward.1} parent=1 // pred_region
      %485 = dma.done [#allocation23], 16
    $region313: #{decoder_forward.1} parent=1 // pred_fallthru
      _
    // Predicated region
    $region314: #{decoder_forward.1} parent=1 // pred_check
      _
    $region315: #{decoder_forward.1} parent=1 // pred_check_branch
      %487 = sbr.rel (0) target = $region317
    $region316: #{decoder_forward.1} parent=1 // pred_region
      %488 = dma.done [#allocation23], 16
    $region317: #{decoder_forward.1} parent=1 // pred_fallthru
      _
    // Predicated region
    $region318: #{decoder_forward.1} parent=1 // pred_check
      _
    $region319: #{decoder_forward.1} parent=1 // pred_check_branch
      %490 = sbr.rel (0) target = $region321
    $region320: #{decoder_forward.1} parent=1 // pred_region
      %491 = dma.done [#allocation26], 16
    $region321: #{decoder_forward.1} parent=1 // pred_fallthru
      _
    // Predicated region
    $region322: #{decoder_forward.1} parent=1 // pred_check
      _
    $region323: #{decoder_forward.1} parent=1 // pred_check_branch
      %493 = sbr.rel (0) target = $region325
    $region324: #{decoder_forward.1} parent=1 // pred_region
      %494 = dma.done [#allocation26], 16
    $region325: #{decoder_forward.1} parent=1 // pred_fallthru
      _
    // Predicated region
    $region326: #{decoder_forward.1} parent=1 // pred_check
      _
    $region327: #{decoder_forward.1} parent=1 // pred_check_branch
      %496 = sbr.rel (0) target = $region329
    $region328: #{decoder_forward.1} parent=1 // pred_region
      %497 = dma.done [#allocation29], 16
    $region329: #{decoder_forward.1} parent=1 // pred_fallthru
      _
    // Predicated region
    $region330: #{decoder_forward.1} parent=1 // pred_check
      _
    $region331: #{decoder_forward.1} parent=1 // pred_check_branch
      %499 = sbr.rel (0) target = $region333
    $region332: #{decoder_forward.1} parent=1 // pred_region
      %500 = dma.done [#allocation29], 16
    $region333: #{decoder_forward.1} parent=1 // pred_fallthru
      _
    // Predicated region
    $region334: #{decoder_forward.1} parent=1 // pred_check
      _
    $region335: #{decoder_forward.1} parent=1 // pred_check_branch
      %502 = sbr.rel (0) target = $region337
    $region336: #{decoder_forward.1} parent=1 // pred_region
      %503 = dma.done [#allocation32], 16
    $region337: #{decoder_forward.1} parent=1 // pred_fallthru
      _
    // Predicated region
    $region338: #{decoder_forward.1} parent=1 // pred_check
      _
    $region339: #{decoder_forward.1} parent=1 // pred_check_branch
      %505 = sbr.rel (0) target = $region341
    $region340: #{decoder_forward.1} parent=1 // pred_region
      %506 = dma.done [#allocation32], 16
    $region341: #{decoder_forward.1} parent=1 // pred_fallthru
      _
    %v507 = vld [vmem:[%s1] sm:$0xff]
    %v508 = vld [vmem:[%s1 + $0x8] sm:$0xff]
    %v509 = vld [vmem:[%s3] sm:$0xff]
    %v510 = vld [vmem:[%s3 + $0x8] sm:$0xff]
    %v511 = vld [vmem:[%s59] sm:$0xff]
    %v512 = vld [vmem:[%s59 + $0x8] sm:$0xff]
    %v513 = vld [vmem:[%s59 + $0x10] sm:$0xff]
    %v514 = vld [vmem:[%s59 + $0x18] sm:$0xff]
    %v515 = vld [vmem:[#allocation13] sm:$0x1]
    %v517 = vlaneseq
    %v518 = vshrl.u32 %v517, 7
    %v519 = vsub.s32 0, %v518
    %v520 = vrot.slane %v515, %v519
    %vm522 = vcmask 261120
    %v524 = vsel %vm522, %v507, 0
    %v527 = vsel %vm522, %v508, 0
    %529 = vmatprep.subr.mxu0 0.0
    %530 = vmatpush1.msra.mxu0 %v511
    %531 = vmatprep.subr.mxu0 0.0
    %532 = vmatpush1.msra.mxu0 %v512
    %533 = vmatprep.subr.mxu0 0.0
    %534 = vmatpush1.msra.mxu0 %v513
    %535 = vmatprep.subr.mxu0 0.0
    %536 = vmatpush1.msra.mxu0 %v514
    %537 = vmatprep.subr.mxu0 0.0
    %538 = vmatpush1.msra.mxu0 0.0
    %539 = vmatprep.subr.mxu0 0.0
    %540 = vmatpush1.msra.mxu0 0.0
    %541 = vmatprep.subr.mxu0 0.0
    %542 = vmatpush1.msra.mxu0 0.0
    %543 = vmatprep.subr.mxu0 0.0
    %544 = vmatpush1.msra.mxu0 0.0
    %545 = vmatprep.subr.mxu0 0.0
    %546 = vmatpush1.msra.mxu0 0.0
    %547 = vmatprep.subr.mxu0 0.0
    %548 = vmatpush1.msra.mxu0 0.0
    %549 = vmatprep.subr.mxu0 0.0
    %550 = vmatpush1.msra.mxu0 0.0
    %551 = vmatprep.subr.mxu0 0.0
    %552 = vmatpush1.msra.mxu0 0.0
    %553 = vmatprep.subr.mxu0 0.0
    %554 = vmatpush1.msra.mxu0 0.0
    %555 = vmatprep.subr.mxu0 0.0
    %556 = vmatpush1.msra.mxu0 0.0
    %557 = vmatprep.subr.mxu0 0.0
    %558 = vmatpush1.msra.mxu0 0.0
    %559 = vmatprep.subr.mxu0 0.0
    %560 = vmatpush1.msra.mxu0 0.0
    %561 = vmatprep.subr.mxu0 0.0
    %562 = vmatpush1.msra.mxu0 0.0
    %563 = vmatprep.subr.mxu0 0.0
    %564 = vmatpush1.msra.mxu0 0.0
    %565 = vmatprep.subr.mxu0 0.0
    %566 = vmatpush1.msra.mxu0 0.0
    %567 = vmatprep.subr.mxu0 0.0
    %568 = vmatpush1.msra.mxu0 0.0
    %569 = vmatprep.subr.mxu0 0.0
    %570 = vmatpush1.msra.mxu0 0.0
    %571 = vmatprep.subr.mxu0 0.0
    %572 = vmatpush1.msra.mxu0 0.0
    %573 = vmatprep.subr.mxu0 0.0
    %574 = vmatpush1.msra.mxu0 0.0
    %575 = vmatprep.subr.mxu0 0.0
    %576 = vmatpush1.msra.mxu0 0.0
    %577 = vmatprep.subr.mxu0 0.0
    %578 = vmatpush1.msra.mxu0 0.0
    %579 = vmatprep.subr.mxu0 0.0
    %580 = vmatpush1.msra.mxu0 0.0
    %581 = vmatprep.subr.mxu0 0.0
    %582 = vmatpush1.msra.mxu0 0.0
    %583 = vmatprep.subr.mxu0 0.0
    %584 = vmatpush1.msra.mxu0 0.0
    %585 = vmatprep.subr.mxu0 0.0
    %586 = vmatpush1.msra.mxu0 0.0
    %587 = vmatprep.subr.mxu0 0.0
    %588 = vmatpush1.msra.mxu0 0.0
    %589 = vmatprep.subr.mxu0 0.0
    %590 = vmatpush1.msra.mxu0 0.0
    %591 = vmatprep.subr.mxu0 0.0
    %592 = vmatpush1.msra.mxu0 0.0
    %593 = vmatprep.mubr.f32.mxu0 0.0
    %594 = vmatmul.mubr.f32.gmra.mrb[0].mxu0 %v524
    %v595 = vpop.f32.mrb[0].mxu0
    %v596 = vadd.f32 %v520, %v595
    %v597 = vpop.f32.mrb[0].mxu0
    %598 = vmatprep.mubr.f32.mxu0 0.0
    %599 = vmatmul.mubr.f32.gmra.mrb[0].mxu0 %v527
    %v600 = vpop.f32.mrb[0].mxu0
    %v601 = vadd.f32 %v520, %v600
    %v602 = vpop.f32.mrb[0].mxu0
    %603 = vdwg.mxu0
    %v604 = vld [vmem:[%s109] sm:$0xff]
    %v605 = vld [vmem:[%s109 + $0x8] sm:$0xff]
    %v606 = vld [vmem:[%s109 + $0x10] sm:$0xff]
    %v607 = vld [vmem:[%s109 + $0x18] sm:$0xff]
    %v608 = vld [vmem:[%s109 + $0x20] sm:$0xff]
    %v609 = vld [vmem:[%s109 + $0x28] sm:$0xff]
    %v610 = vld [vmem:[%s109 + $0x30] sm:$0xff]
    %v611 = vld [vmem:[%s109 + $0x38] sm:$0xff]
    %v612 = vmul.f32 %v596, %v604
    %v613 = vmul.f32 %v601, %v605
    %v614 = vmul.f32 %v596, %v606
    %v615 = vmul.f32 %v601, %v607
    %v616 = vmul.f32 %v596, %v608
    %v617 = vmul.f32 %v601, %v609
    %v618 = vmul.f32 %v596, %v610
    %v619 = vmul.f32 %v601, %v611
    %v620 = vld [vmem:[%s53] sm:$0xff]
    %v621 = vld [vmem:[%s53 + $0x8] sm:$0xff]
    %v622 = vld [vmem:[%s53 + $0x10] sm:$0xff]
    %v623 = vld [vmem:[%s53 + $0x18] sm:$0xff]
    %v625 = vsel %vm522, %v612, 0
    %v628 = vsel %vm522, %v613, 0
    %v631 = vsel %vm522, %v614, 0
    %v634 = vsel %vm522, %v615, 0
    %v637 = vsel %vm522, %v616, 0
    %v640 = vsel %vm522, %v617, 0
    %v643 = vsel %vm522, %v618, 0
    %v646 = vsel %vm522, %v619, 0
    %648 = vmatprep.subr.mxu0 0.0
    %649 = vmatpush1.msra.mxu0 %v620
    %650 = vmatprep.subr.mxu0 0.0
    %651 = vmatpush1.msra.mxu0 %v621
    %652 = vmatprep.subr.mxu0 0.0
    %653 = vmatpush1.msra.mxu0 %v622
    %654 = vmatprep.subr.mxu0 0.0
    %655 = vmatpush1.msra.mxu0 %v623
    %656 = vmatprep.subr.mxu0 0.0
    %657 = vmatpush1.msra.mxu0 0.0
    %658 = vmatprep.subr.mxu0 0.0
    %659 = vmatpush1.msra.mxu0 0.0
    %660 = vmatprep.subr.mxu0 0.0
    %661 = vmatpush1.msra.mxu0 0.0
    %662 = vmatprep.subr.mxu0 0.0
    %663 = vmatpush1.msra.mxu0 0.0
    %664 = vmatprep.subr.mxu0 0.0
    %665 = vmatpush1.msra.mxu0 0.0
    %666 = vmatprep.subr.mxu0 0.0
    %667 = vmatpush1.msra.mxu0 0.0
    %668 = vmatprep.subr.mxu0 0.0
    %669 = vmatpush1.msra.mxu0 0.0
    %670 = vmatprep.subr.mxu0 0.0
    %671 = vmatpush1.msra.mxu0 0.0
    %672 = vmatprep.subr.mxu0 0.0
    %673 = vmatpush1.msra.mxu0 0.0
    %674 = vmatprep.subr.mxu0 0.0
    %675 = vmatpush1.msra.mxu0 0.0
    %676 = vmatprep.subr.mxu0 0.0
    %677 = vmatpush1.msra.mxu0 0.0
    %678 = vmatprep.subr.mxu0 0.0
    %679 = vmatpush1.msra.mxu0 0.0
    %680 = vmatprep.subr.mxu0 0.0
    %681 = vmatpush1.msra.mxu0 0.0
    %682 = vmatprep.subr.mxu0 0.0
    %683 = vmatpush1.msra.mxu0 0.0
    %684 = vmatprep.subr.mxu0 0.0
    %685 = vmatpush1.msra.mxu0 0.0
    %686 = vmatprep.subr.mxu0 0.0
    %687 = vmatpush1.msra.mxu0 0.0
    %688 = vmatprep.subr.mxu0 0.0
    %689 = vmatpush1.msra.mxu0 0.0
    %690 = vmatprep.subr.mxu0 0.0
    %691 = vmatpush1.msra.mxu0 0.0
    %692 = vmatprep.subr.mxu0 0.0
    %693 = vmatpush1.msra.mxu0 0.0
    %694 = vmatprep.subr.mxu0 0.0
    %695 = vmatpush1.msra.mxu0 0.0
    %696 = vmatprep.subr.mxu0 0.0
    %697 = vmatpush1.msra.mxu0 0.0
    %698 = vmatprep.subr.mxu0 0.0
    %699 = vmatpush1.msra.mxu0 0.0
    %700 = vmatprep.subr.mxu0 0.0
    %701 = vmatpush1.msra.mxu0 0.0
    %702 = vmatprep.subr.mxu0 0.0
    %703 = vmatpush1.msra.mxu0 0.0
    %704 = vmatprep.subr.mxu0 0.0
    %705 = vmatpush1.msra.mxu0 0.0
    %706 = vmatprep.subr.mxu0 0.0
    %707 = vmatpush1.msra.mxu0 0.0
    %708 = vmatprep.subr.mxu0 0.0
    %709 = vmatpush1.msra.mxu0 0.0
    %710 = vmatprep.subr.mxu0 0.0
    %711 = vmatpush1.msra.mxu0 0.0
    %712 = vmatprep.mubr.f32.mxu0 0.0
    %713 = vmatmul.mubr.f32.gmra.mrb[0].mxu0 %v625
    %v714 = vpop.f32.mrb[0].mxu0
    %v715 = vadd.f32 0.0, %v714
    %v716 = vpop.f32.mrb[0].mxu0
    %717 = vmatprep.mubr.f32.mxu0 0.0
    %718 = vmatmul.mubr.f32.gmra.mrb[0].mxu0 %v628
    %v719 = vpop.f32.mrb[0].mxu0
    %v720 = vadd.f32 0.0, %v719
    %v721 = vpop.f32.mrb[0].mxu0
    %722 = vmatprep.mubr.f32.mxu0 0.0
    %723 = vmatmul.mubr.f32.gmra.mrb[0].mxu0 %v631
    %v724 = vpop.f32.mrb[0].mxu0
    %v725 = vadd.f32 0.0, %v724
    %v726 = vpop.f32.mrb[0].mxu0
    %727 = vmatprep.mubr.f32.mxu0 0.0
    %728 = vmatmul.mubr.f32.gmra.mrb[0].mxu0 %v634
    %v729 = vpop.f32.mrb[0].mxu0
    %v730 = vadd.f32 0.0, %v729
    %v731 = vpop.f32.mrb[0].mxu0
    %732 = vmatprep.mubr.f32.mxu0 0.0
    %733 = vmatmul.mubr.f32.gmra.mrb[0].mxu0 %v637
    %v734 = vpop.f32.mrb[0].mxu0
    %v735 = vadd.f32 0.0, %v734
    %v736 = vpop.f32.mrb[0].mxu0
    %737 = vmatprep.mubr.f32.mxu0 0.0
    %738 = vmatmul.mubr.f32.gmra.mrb[0].mxu0 %v640
    %v739 = vpop.f32.mrb[0].mxu0
    %v740 = vadd.f32 0.0, %v739
    %v741 = vpop.f32.mrb[0].mxu0
    %742 = vmatprep.mubr.f32.mxu0 0.0
    %743 = vmatmul.mubr.f32.gmra.mrb[0].mxu0 %v643
    %v744 = vpop.f32.mrb[0].mxu0
    %v745 = vadd.f32 0.0, %v744
    %v746 = vpop.f32.mrb[0].mxu0
    %747 = vmatprep.mubr.f32.mxu0 0.0
    %748 = vmatmul.mubr.f32.gmra.mrb[0].mxu0 %v646
    %v749 = vpop.f32.mrb[0].mxu0
    %v750 = vadd.f32 0.0, %v749
    %v751 = vpop.f32.mrb[0].mxu0
    %752 = vdwg.mxu0
    %v753 = vld [vmem:[%s115] sm:$0xff]
    %v754 = vld [vmem:[%s115 + $0x8] sm:$0xff]
    %v755 = vld [vmem:[%s115 + $0x10] sm:$0xff]
    %v756 = vld [vmem:[%s115 + $0x18] sm:$0xff]
    %v757 = vld [vmem:[%s115 + $0x20] sm:$0xff]
    %v758 = vld [vmem:[%s115 + $0x28] sm:$0xff]
    %v759 = vld [vmem:[%s115 + $0x30] sm:$0xff]
    %v760 = vld [vmem:[%s115 + $0x38] sm:$0xff]
    %v761 = vmul.f32 %v715, %v753
    %v762 = vmul.f32 %v720, %v754
    %v763 = vmul.f32 %v725, %v755
    %v764 = vmul.f32 %v730, %v756
    %v765 = vmul.f32 %v735, %v757
    %v766 = vmul.f32 %v740, %v758
    %v767 = vmul.f32 %v745, %v759
    %v768 = vmul.f32 %v750, %v760
    %v769 = vld [vmem:[%s111] sm:$0xff]
    %v770 = vld [vmem:[%s111 + $0x8] sm:$0xff]
    %v771 = vld [vmem:[%s111 + $0x10] sm:$0xff]
    %v772 = vld [vmem:[%s111 + $0x18] sm:$0xff]
    %v773 = vld [vmem:[%s111 + $0x20] sm:$0xff]
    %v774 = vld [vmem:[%s111 + $0x28] sm:$0xff]
    %v775 = vld [vmem:[%s111 + $0x30] sm:$0xff]
    %v776 = vld [vmem:[%s111 + $0x38] sm:$0xff]
    %v777 = vld [vmem:[%s111 + $0x40] sm:$0xff]
    %vm778 = vcmask 588800
    %v780 = vsel %vm778, %v761, 0
    %v783 = vsel %vm778, %v762, 0
    %v786 = vsel %vm778, %v763, 0
    %v789 = vsel %vm778, %v764, 0
    %v792 = vsel %vm778, %v765, 0
    %v795 = vsel %vm778, %v766, 0
    %v798 = vsel %vm778, %v767, 0
    %v801 = vsel %vm778, %v768, 0
    %803 = vmatprep.subr.mxu0 0.0
    %804 = vmatpush1.msra.mxu0 %v769
    %805 = vmatprep.subr.mxu0 0.0
    %806 = vmatpush1.msra.mxu0 %v770
    %807 = vmatprep.subr.mxu0 0.0
    %808 = vmatpush1.msra.mxu0 %v771
    %809 = vmatprep.subr.mxu0 0.0
    %810 = vmatpush1.msra.mxu0 %v772
    %811 = vmatprep.subr.mxu0 0.0
    %812 = vmatpush1.msra.mxu0 %v773
    %813 = vmatprep.subr.mxu0 0.0
    %814 = vmatpush1.msra.mxu0 %v774
    %815 = vmatprep.subr.mxu0 0.0
    %816 = vmatpush1.msra.mxu0 %v775
    %817 = vmatprep.subr.mxu0 0.0
    %818 = vmatpush1.msra.mxu0 %v776
    %819 = vmatprep.subr.mxu0 0.0
    %820 = vmatpush1.msra.mxu0 %v777
    %821 = vmatprep.subr.mxu0 0.0
    %822 = vmatpush1.msra.mxu0 0.0
    %823 = vmatprep.subr.mxu0 0.0
    %824 = vmatpush1.msra.mxu0 0.0
    %825 = vmatprep.subr.mxu0 0.0
    %826 = vmatpush1.msra.mxu0 0.0
    %827 = vmatprep.subr.mxu0 0.0
    %828 = vmatpush1.msra.mxu0 0.0
    %829 = vmatprep.subr.mxu0 0.0
    %830 = vmatpush1.msra.mxu0 0.0
    %831 = vmatprep.subr.mxu0 0.0
    %832 = vmatpush1.msra.mxu0 0.0
    %833 = vmatprep.subr.mxu0 0.0
    %834 = vmatpush1.msra.mxu0 0.0
    %835 = vmatprep.subr.mxu0 0.0
    %836 = vmatpush1.msra.mxu0 0.0
    %837 = vmatprep.subr.mxu0 0.0
    %838 = vmatpush1.msra.mxu0 0.0
    %839 = vmatprep.subr.mxu0 0.0
    %840 = vmatpush1.msra.mxu0 0.0
    %841 = vmatprep.subr.mxu0 0.0
    %842 = vmatpush1.msra.mxu0 0.0
    %843 = vmatprep.subr.mxu0 0.0
    %844 = vmatpush1.msra.mxu0 0.0
    %845 = vmatprep.subr.mxu0 0.0
    %846 = vmatpush1.msra.mxu0 0.0
    %847 = vmatprep.subr.mxu0 0.0
    %848 = vmatpush1.msra.mxu0 0.0
    %849 = vmatprep.subr.mxu0 0.0
    %850 = vmatpush1.msra.mxu0 0.0
    %851 = vmatprep.subr.mxu0 0.0
    %852 = vmatpush1.msra.mxu0 0.0
    %853 = vmatprep.subr.mxu0 0.0
    %854 = vmatpush1.msra.mxu0 0.0
    %855 = vmatprep.subr.mxu0 0.0
    %856 = vmatpush1.msra.mxu0 0.0
    %857 = vmatprep.subr.mxu0 0.0
    %858 = vmatpush1.msra.mxu0 0.0
    %859 = vmatprep.subr.mxu0 0.0
    %860 = vmatpush1.msra.mxu0 0.0
    %861 = vmatprep.subr.mxu0 0.0
    %862 = vmatpush1.msra.mxu0 0.0
    %863 = vmatprep.subr.mxu0 0.0
    %864 = vmatpush1.msra.mxu0 0.0
    %865 = vmatprep.subr.mxu0 0.0
    %866 = vmatpush1.msra.mxu0 0.0
    %867 = vmatprep.mubr.f32.mxu0 0.0
    %868 = vmatmul.mubr.f32.gmra.mrb[0].mxu0 %v780
    %v869 = vpop.f32.mrb[0].mxu0
    %v870 = vadd.f32 0.0, %v869
    %v871 = vpop.f32.mrb[0].mxu0
    %872 = vmatprep.mubr.f32.mxu0 0.0
    %873 = vmatmul.mubr.f32.gmra.mrb[0].mxu0 %v783
    %v874 = vpop.f32.mrb[0].mxu0
    %v875 = vadd.f32 0.0, %v874
    %v876 = vpop.f32.mrb[0].mxu0
    %877 = vmatprep.mubr.f32.mxu0 0.0
    %878 = vmatmul.mubr.f32.gmra.mrb[0].mxu0 %v786
    %v879 = vpop.f32.mrb[0].mxu0
    %v880 = vadd.f32 0.0, %v879
    %v881 = vpop.f32.mrb[0].mxu0
    %882 = vmatprep.mubr.f32.mxu0 0.0
    %883 = vmatmul.mubr.f32.gmra.mrb[0].mxu0 %v789
    %v884 = vpop.f32.mrb[0].mxu0
    %v885 = vadd.f32 0.0, %v884
    %v886 = vpop.f32.mrb[0].mxu0
    %887 = vmatprep.mubr.f32.mxu0 0.0
    %888 = vmatmul.mubr.f32.gmra.mrb[0].mxu0 %v792
    %v889 = vpop.f32.mrb[0].mxu0
    %v890 = vadd.f32 0.0, %v889
    %v891 = vpop.f32.mrb[0].mxu0
    %892 = vmatprep.mubr.f32.mxu0 0.0
    %893 = vmatmul.mubr.f32.gmra.mrb[0].mxu0 %v795
    %v894 = vpop.f32.mrb[0].mxu0
    %v895 = vadd.f32 0.0, %v894
    %v896 = vpop.f32.mrb[0].mxu0
    %897 = vmatprep.mubr.f32.mxu0 0.0
    %898 = vmatmul.mubr.f32.gmra.mrb[0].mxu0 %v798
    %v899 = vpop.f32.mrb[0].mxu0
    %v900 = vadd.f32 0.0, %v899
    %v901 = vpop.f32.mrb[0].mxu0
    %902 = vmatprep.mubr.f32.mxu0 0.0
    %903 = vmatmul.mubr.f32.gmra.mrb[0].mxu0 %v801
    %v904 = vpop.f32.mrb[0].mxu0
    %v905 = vadd.f32 0.0, %v904
    %v906 = vpop.f32.mrb[0].mxu0
    %907 = vdwg.mxu0
    %910 = vrot.lane.b32.xlu0 %v596, 96
    %v911 = vpop.permute.xlu0 %910
    %912 = vrot.lane.b32.xlu0 %v601, 96
    %v913 = vpop.permute.xlu0 %912
    %v914 = vsel %vm522, %v911, 0
    %v916 = vsel %vm522, %v913, 0
    %918 = vmatprep.subr.mxu0 0.0
    %919 = vmatpush1.xpose.msra.mxu0 %v914
    %920 = vmatprep.subr.mxu0 0.0
    %921 = vmatpush1.xpose.msra.mxu0 %v916
    %922 = vmatprep.subr.mxu0 0.0
    %923 = vmatpush1.xpose.msra.mxu0 0.0
    %924 = vmatprep.subr.mxu0 0.0
    %925 = vmatpush1.xpose.msra.mxu0 0.0
    %926 = vmatprep.subr.mxu0 0.0
    %927 = vmatpush1.xpose.msra.mxu0 0.0
    %928 = vmatprep.subr.mxu0 0.0
    %929 = vmatpush1.xpose.msra.mxu0 0.0
    %930 = vmatprep.subr.mxu0 0.0
    %931 = vmatpush1.xpose.msra.mxu0 0.0
    %932 = vmatprep.subr.mxu0 0.0
    %933 = vmatpush1.xpose.msra.mxu0 0.0
    %934 = vmatprep.subr.mxu0 0.0
    %935 = vmatpush1.xpose.msra.mxu0 0.0
    %936 = vmatprep.subr.mxu0 0.0
    %937 = vmatpush1.xpose.msra.mxu0 0.0
    %938 = vmatprep.subr.mxu0 0.0
    %939 = vmatpush1.xpose.msra.mxu0 0.0
    %940 = vmatprep.subr.mxu0 0.0
    %941 = vmatpush1.xpose.msra.mxu0 0.0
    %942 = vmatprep.subr.mxu0 0.0
    %943 = vmatpush1.xpose.msra.mxu0 0.0
    %944 = vmatprep.subr.mxu0 0.0
    %945 = vmatpush1.xpose.msra.mxu0 0.0
    %946 = vmatprep.subr.mxu0 0.0
    %947 = vmatpush1.xpose.msra.mxu0 0.0
    %948 = vmatprep.subr.mxu0 0.0
    %949 = vmatpush1.xpose.msra.mxu0 0.0
    %950 = vmatprep.subr.mxu0 0.0
    %951 = vmatpush1.xpose.msra.mxu0 0.0
    %952 = vmatprep.subr.mxu0 0.0
    %953 = vmatpush1.xpose.msra.mxu0 0.0
    %954 = vmatprep.subr.mxu0 0.0
    %955 = vmatpush1.xpose.msra.mxu0 0.0
    %956 = vmatprep.subr.mxu0 0.0
    %957 = vmatpush1.xpose.msra.mxu0 0.0
    %958 = vmatprep.subr.mxu0 0.0
    %959 = vmatpush1.xpose.msra.mxu0 0.0
    %960 = vmatprep.subr.mxu0 0.0
    %961 = vmatpush1.xpose.msra.mxu0 0.0
    %962 = vmatprep.subr.mxu0 0.0
    %963 = vmatpush1.xpose.msra.mxu0 0.0
    %964 = vmatprep.subr.mxu0 0.0
    %965 = vmatpush1.xpose.msra.mxu0 0.0
    %966 = vmatprep.subr.mxu0 0.0
    %967 = vmatpush1.xpose.msra.mxu0 0.0
    %968 = vmatprep.subr.mxu0 0.0
    %969 = vmatpush1.xpose.msra.mxu0 0.0
    %970 = vmatprep.subr.mxu0 0.0
    %971 = vmatpush1.xpose.msra.mxu0 0.0
    %972 = vmatprep.subr.mxu0 0.0
    %973 = vmatpush1.xpose.msra.mxu0 0.0
    %974 = vmatprep.subr.mxu0 0.0
    %975 = vmatpush1.xpose.msra.mxu0 0.0
    %976 = vmatprep.subr.mxu0 0.0
    %977 = vmatpush1.xpose.msra.mxu0 0.0
    %978 = vmatprep.subr.mxu0 0.0
    %979 = vmatpush1.xpose.msra.mxu0 0.0
    %980 = vmatprep.subr.mxu0 0.0
    %981 = vmatpush1.xpose.msra.mxu0 0.0
    %982 = vmatprep.mubr.f32.mxu0 0.0
    %983 = vmatmul.mubr.f32.gmra.mrb[0].mxu0 %v625
    %v984 = vpop.f32.mrb[0].mxu0
    %v985 = vadd.f32 %v870, %v984
    %v986 = vpop.f32.mrb[0].mxu0
    %987 = vmatprep.mubr.f32.mxu0 0.0
    %988 = vmatmul.mubr.f32.gmra.mrb[0].mxu0 %v628
    %v989 = vpop.f32.mrb[0].mxu0
    %v990 = vadd.f32 %v875, %v989
    %v991 = vpop.f32.mrb[0].mxu0
    %992 = vmatprep.mubr.f32.mxu0 0.0
    %993 = vmatmul.mubr.f32.gmra.mrb[0].mxu0 %v631
    %v994 = vpop.f32.mrb[0].mxu0
    %v995 = vadd.f32 %v880, %v994
    %v996 = vpop.f32.mrb[0].mxu0
    %997 = vmatprep.mubr.f32.mxu0 0.0
    %998 = vmatmul.mubr.f32.gmra.mrb[0].mxu0 %v634
    %v999 = vpop.f32.mrb[0].mxu0
    %v1000 = vadd.f32 %v885, %v999
    %v1001 = vpop.f32.mrb[0].mxu0
    %1002 = vmatprep.mubr.f32.mxu0 0.0
    %1003 = vmatmul.mubr.f32.gmra.mrb[0].mxu0 %v637
    %v1004 = vpop.f32.mrb[0].mxu0
    %v1005 = vadd.f32 %v890, %v1004
    %v1006 = vpop.f32.mrb[0].mxu0
    %1007 = vmatprep.mubr.f32.mxu0 0.0
    %1008 = vmatmul.mubr.f32.gmra.mrb[0].mxu0 %v640
    %v1009 = vpop.f32.mrb[0].mxu0
    %v1010 = vadd.f32 %v895, %v1009
    %v1011 = vpop.f32.mrb[0].mxu0
    %1012 = vmatprep.mubr.f32.mxu0 0.0
    %1013 = vmatmul.mubr.f32.gmra.mrb[0].mxu0 %v643
    %v1014 = vpop.f32.mrb[0].mxu0
    %v1015 = vadd.f32 %v900, %v1014
    %v1016 = vpop.f32.mrb[0].mxu0
    %1017 = vmatprep.mubr.f32.mxu0 0.0
    %1018 = vmatmul.mubr.f32.gmra.mrb[0].mxu0 %v646
    %v1019 = vpop.f32.mrb[0].mxu0
    %v1020 = vadd.f32 %v905, %v1019
    %v1021 = vpop.f32.mrb[0].mxu0
    %1022 = vdwg.mxu0
    %v1023 = vld [vmem:[%s5] sm:$0xff]
    %v1024 = vld [vmem:[%s5 + $0x8] sm:$0xff]
    %v1025 = vld [vmem:[%s5 + $0x10] sm:$0xff]
    %v1026 = vld [vmem:[%s5 + $0x18] sm:$0xff]
    %v1027 = vld [vmem:[%s5 + $0x20] sm:$0xff]
    %v1028 = vld [vmem:[%s5 + $0x28] sm:$0xff]
    %v1029 = vld [vmem:[%s5 + $0x30] sm:$0xff]
    %v1030 = vld [vmem:[%s5 + $0x38] sm:$0xff]
    %v1031 = vadd.f32 %v985, %v1023
    %v1032 = vadd.f32 %v990, %v1024
    %v1033 = vadd.f32 %v995, %v1025
    %v1034 = vadd.f32 %v1000, %v1026
    %v1035 = vadd.f32 %v1005, %v1027
    %v1036 = vadd.f32 %v1010, %v1028
    %v1037 = vadd.f32 %v1015, %v1029
    %v1038 = vadd.f32 %v1020, %v1030
    %vm1039 = vcmask 130048
    %v1040 = vsel %vm1039, %v1031, -inf
    %1041 = vmax.xlane.f32.xlu0 %v1040
    %v1042 = vpop.xlane.xlu0 %1041
    %v1043 = vsel %vm1039, %v1032, -inf
    %1044 = vmax.xlane.f32.xlu0 %v1043
    %v1045 = vpop.xlane.xlu0 %1044
    %v1046 = vsel %vm1039, %v1033, -inf
    %1047 = vmax.xlane.f32.xlu0 %v1046
    %v1048 = vpop.xlane.xlu0 %1047
    %v1049 = vsel %vm1039, %v1034, -inf
    %1050 = vmax.xlane.f32.xlu0 %v1049
    %v1051 = vpop.xlane.xlu0 %1050
    %v1052 = vsel %vm1039, %v1035, -inf
    %1053 = vmax.xlane.f32.xlu0 %v1052
    %v1054 = vpop.xlane.xlu0 %1053
    %v1055 = vsel %vm1039, %v1036, -inf
    %1056 = vmax.xlane.f32.xlu0 %v1055
    %v1057 = vpop.xlane.xlu0 %1056
    %v1058 = vsel %vm1039, %v1037, -inf
    %1059 = vmax.xlane.f32.xlu0 %v1058
    %v1060 = vpop.xlane.xlu0 %1059
    %v1061 = vsel %vm1039, %v1038, -inf
    %1062 = vmax.xlane.f32.xlu0 %v1061
    %v1063 = vpop.xlane.xlu0 %1062
    %v1064 = vsub.f32 %v1031, %v1042
    %v1065 = vsub.f32 %v1032, %v1045
    %v1066 = vsub.f32 %v1033, %v1048
    %v1067 = vsub.f32 %v1034, %v1051
    %v1068 = vsub.f32 %v1035, %v1054
    %v1069 = vsub.f32 %v1036, %v1057
    %v1070 = vsub.f32 %v1037, %v1060
    %v1071 = vsub.f32 %v1038, %v1063
    %v1072 = vmul.f32 %v1064, 1.442695
    %v1073 = vpow.pop %v1072
    %v1074 = vmul.f32 %v1065, 1.442695
    %v1075 = vpow.pop %v1074
    %v1076 = vmul.f32 %v1066, 1.442695
    %v1077 = vpow.pop %v1076
    %v1078 = vmul.f32 %v1067, 1.442695
    %v1079 = vpow.pop %v1078
    %v1080 = vmul.f32 %v1068, 1.442695
    %v1081 = vpow.pop %v1080
    %v1082 = vmul.f32 %v1069, 1.442695
    %v1083 = vpow.pop %v1082
    %v1084 = vmul.f32 %v1070, 1.442695
    %v1085 = vpow.pop %v1084
    %v1086 = vmul.f32 %v1071, 1.442695
    %v1087 = vpow.pop %v1086
    %v1088 = vsel %vm1039, %v1073, 0.0
    %1089 = vadd.xlane.f32.xlu0 %v1088
    %v1090 = vpop.xlane.xlu0 %1089
    %v1091 = vsel %vm1039, %v1075, 0.0
    %1092 = vadd.xlane.f32.xlu0 %v1091
    %v1093 = vpop.xlane.xlu0 %1092
    %v1094 = vsel %vm1039, %v1077, 0.0
    %1095 = vadd.xlane.f32.xlu0 %v1094
    %v1096 = vpop.xlane.xlu0 %1095
    %v1097 = vsel %vm1039, %v1079, 0.0
    %1098 = vadd.xlane.f32.xlu0 %v1097
    %v1099 = vpop.xlane.xlu0 %1098
    %v1100 = vsel %vm1039, %v1081, 0.0
    %1101 = vadd.xlane.f32.xlu0 %v1100
    %v1102 = vpop.xlane.xlu0 %1101
    %v1103 = vsel %vm1039, %v1083, 0.0
    %1104 = vadd.xlane.f32.xlu0 %v1103
    %v1105 = vpop.xlane.xlu0 %1104
    %v1106 = vsel %vm1039, %v1085, 0.0
    %1107 = vadd.xlane.f32.xlu0 %v1106
    %v1108 = vpop.xlane.xlu0 %1107
    %v1109 = vsel %vm1039, %v1087, 0.0
    %1110 = vadd.xlane.f32.xlu0 %v1109
    %v1111 = vpop.xlane.xlu0 %1110
    %v1112 = vrcp.pop %v1090
    %v1113 = vrcp.pop %v1093
    %v1114 = vrcp.pop %v1096
    %v1115 = vrcp.pop %v1099
    %v1116 = vrcp.pop %v1102
    %v1117 = vrcp.pop %v1105
    %v1118 = vrcp.pop %v1108
    %v1119 = vrcp.pop %v1111
    %v1120 = vmul.f32 %v1073, %v1112
    %v1121 = vmul.f32 %v1075, %v1113
    %v1122 = vmul.f32 %v1077, %v1114
    %v1123 = vmul.f32 %v1079, %v1115
    %v1124 = vmul.f32 %v1081, %v1116
    %v1125 = vmul.f32 %v1083, %v1117
    %v1126 = vmul.f32 %v1085, %v1118
    %v1127 = vmul.f32 %v1087, %v1119
    %1128 = vrot.lane.b32.xlu0 %v596, 64
    %v1129 = vpop.permute.xlu0 %1128
    %1130 = vrot.lane.b32.xlu0 %v601, 64
    %v1131 = vpop.permute.xlu0 %1130
    %v1135 = vsel %vm1039, %v1120, 0
    %v1138 = vsel %vm1039, %v1121, 0
    %v1141 = vsel %vm1039, %v1122, 0
    %v1144 = vsel %vm1039, %v1123, 0
    %v1147 = vsel %vm1039, %v1124, 0
    %v1150 = vsel %vm1039, %v1125, 0
    %v1153 = vsel %vm1039, %v1126, 0
    %v1156 = vsel %vm1039, %v1127, 0
    %1158 = vmatprep.subr.mxu0 0.0
    %1159 = vmatpush1.msra.mxu0 %v1129
    %1160 = vmatprep.subr.mxu0 0.0
    %1161 = vmatpush1.msra.mxu0 %v1131
    %1162 = vmatprep.subr.mxu0 0.0
    %1163 = vmatpush1.msra.mxu0 0.0
    %1164 = vmatprep.subr.mxu0 0.0
    %1165 = vmatpush1.msra.mxu0 0.0
    %1166 = vmatprep.subr.mxu0 0.0
    %1167 = vmatpush1.msra.mxu0 0.0
    %1168 = vmatprep.subr.mxu0 0.0
    %1169 = vmatpush1.msra.mxu0 0.0
    %1170 = vmatprep.subr.mxu0 0.0
    %1171 = vmatpush1.msra.mxu0 0.0
    %1172 = vmatprep.subr.mxu0 0.0
    %1173 = vmatpush1.msra.mxu0 0.0
    %1174 = vmatprep.subr.mxu0 0.0
    %1175 = vmatpush1.msra.mxu0 0.0
    %1176 = vmatprep.subr.mxu0 0.0
    %1177 = vmatpush1.msra.mxu0 0.0
    %1178 = vmatprep.subr.mxu0 0.0
    %1179 = vmatpush1.msra.mxu0 0.0
    %1180 = vmatprep.subr.mxu0 0.0
    %1181 = vmatpush1.msra.mxu0 0.0
    %1182 = vmatprep.subr.mxu0 0.0
    %1183 = vmatpush1.msra.mxu0 0.0
    %1184 = vmatprep.subr.mxu0 0.0
    %1185 = vmatpush1.msra.mxu0 0.0
    %1186 = vmatprep.subr.mxu0 0.0
    %1187 = vmatpush1.msra.mxu0 0.0
    %1188 = vmatprep.subr.mxu0 0.0
    %1189 = vmatpush1.msra.mxu0 0.0
    %1190 = vmatprep.subr.mxu0 0.0
    %1191 = vmatpush1.msra.mxu0 0.0
    %1192 = vmatprep.subr.mxu0 0.0
    %1193 = vmatpush1.msra.mxu0 0.0
    %1194 = vmatprep.subr.mxu0 0.0
    %1195 = vmatpush1.msra.mxu0 0.0
    %1196 = vmatprep.subr.mxu0 0.0
    %1197 = vmatpush1.msra.mxu0 0.0
    %1198 = vmatprep.subr.mxu0 0.0
    %1199 = vmatpush1.msra.mxu0 0.0
    %1200 = vmatprep.subr.mxu0 0.0
    %1201 = vmatpush1.msra.mxu0 0.0
    %1202 = vmatprep.subr.mxu0 0.0
    %1203 = vmatpush1.msra.mxu0 0.0
    %1204 = vmatprep.subr.mxu0 0.0
    %1205 = vmatpush1.msra.mxu0 0.0
    %1206 = vmatprep.subr.mxu0 0.0
    %1207 = vmatpush1.msra.mxu0 0.0
    %1208 = vmatprep.subr.mxu0 0.0
    %1209 = vmatpush1.msra.mxu0 0.0
    %1210 = vmatprep.subr.mxu0 0.0
    %1211 = vmatpush1.msra.mxu0 0.0
    %1212 = vmatprep.subr.mxu0 0.0
    %1213 = vmatpush1.msra.mxu0 0.0
    %1214 = vmatprep.subr.mxu0 0.0
    %1215 = vmatpush1.msra.mxu0 0.0
    %1216 = vmatprep.subr.mxu0 0.0
    %1217 = vmatpush1.msra.mxu0 0.0
    %1218 = vmatprep.subr.mxu0 0.0
    %1219 = vmatpush1.msra.mxu0 0.0
    %1220 = vmatprep.subr.mxu0 0.0
    %1221 = vmatpush1.msra.mxu0 0.0
    %1222 = vmatprep.mubr.f32.mxu0 0.0
    %1223 = vmatmul.mubr.f32.gmra.mrb[0].mxu0 %v1135
    %v1224 = vpop.f32.mrb[0].mxu0
    %v1225 = vadd.f32 0.0, %v1224
    %v1226 = vpop.f32.mrb[0].mxu0
    %1227 = vmatprep.mubr.f32.mxu0 0.0
    %1228 = vmatmul.mubr.f32.gmra.mrb[0].mxu0 %v1138
    %v1229 = vpop.f32.mrb[0].mxu0
    %v1230 = vadd.f32 0.0, %v1229
    %v1231 = vpop.f32.mrb[0].mxu0
    %1232 = vmatprep.mubr.f32.mxu0 0.0
    %1233 = vmatmul.mubr.f32.gmra.mrb[0].mxu0 %v1141
    %v1234 = vpop.f32.mrb[0].mxu0
    %v1235 = vadd.f32 0.0, %v1234
    %v1236 = vpop.f32.mrb[0].mxu0
    %1237 = vmatprep.mubr.f32.mxu0 0.0
    %1238 = vmatmul.mubr.f32.gmra.mrb[0].mxu0 %v1144
    %v1239 = vpop.f32.mrb[0].mxu0
    %v1240 = vadd.f32 0.0, %v1239
    %v1241 = vpop.f32.mrb[0].mxu0
    %1242 = vmatprep.mubr.f32.mxu0 0.0
    %1243 = vmatmul.mubr.f32.gmra.mrb[0].mxu0 %v1147
    %v1244 = vpop.f32.mrb[0].mxu0
    %v1245 = vadd.f32 0.0, %v1244
    %v1246 = vpop.f32.mrb[0].mxu0
    %1247 = vmatprep.mubr.f32.mxu0 0.0
    %1248 = vmatmul.mubr.f32.gmra.mrb[0].mxu0 %v1150
    %v1249 = vpop.f32.mrb[0].mxu0
    %v1250 = vadd.f32 0.0, %v1249
    %v1251 = vpop.f32.mrb[0].mxu0
    %1252 = vmatprep.mubr.f32.mxu0 0.0
    %1253 = vmatmul.mubr.f32.gmra.mrb[0].mxu0 %v1153
    %v1254 = vpop.f32.mrb[0].mxu0
    %v1255 = vadd.f32 0.0, %v1254
    %v1256 = vpop.f32.mrb[0].mxu0
    %1257 = vmatprep.mubr.f32.mxu0 0.0
    %1258 = vmatmul.mubr.f32.gmra.mrb[0].mxu0 %v1156
    %v1259 = vpop.f32.mrb[0].mxu0
    %v1260 = vadd.f32 0.0, %v1259
    %v1261 = vpop.f32.mrb[0].mxu0
    %1262 = vdwg.mxu0
    %v1263 = vmul.f32 %v1225, %v604
    %v1264 = vmul.f32 %v1230, %v605
    %v1265 = vmul.f32 %v1235, %v606
    %v1266 = vmul.f32 %v1240, %v607
    %v1267 = vmul.f32 %v1245, %v608
    %v1268 = vmul.f32 %v1250, %v609
    %v1269 = vmul.f32 %v1255, %v610
    %v1270 = vmul.f32 %v1260, %v611
    %v1271 = vadd.f32 %v1263, %v1265
    %v1272 = vadd.f32 %v1264, %v1266
    %v1273 = vadd.f32 %v1271, %v1267
    %v1274 = vadd.f32 %v1272, %v1268
    %v1275 = vadd.f32 %v1273, %v1269
    %v1276 = vadd.f32 %v1274, %v1270
    %v1277 = vld [vmem:[%s117] sm:$0xff]
    %v1278 = vld [vmem:[%s117 + $0x8] sm:$0xff]
    %1279 = vmatprep.subr.mxu0 0.0
    %1280 = vmatpush1.msra.mxu0 %v1277
    %1281 = vmatprep.subr.mxu0 0.0
    %1282 = vmatpush1.msra.mxu0 %v1278
    %1283 = vmatprep.subr.mxu0 0.0
    %1284 = vmatpush1.msra.mxu0 0.0
    %1285 = vmatprep.subr.mxu0 0.0
    %1286 = vmatpush1.msra.mxu0 0.0
    %1287 = vmatprep.subr.mxu0 0.0
    %1288 = vmatpush1.msra.mxu0 0.0
    %1289 = vmatprep.subr.mxu0 0.0
    %1290 = vmatpush1.msra.mxu0 0.0
    %1291 = vmatprep.subr.mxu0 0.0
    %1292 = vmatpush1.msra.mxu0 0.0
    %1293 = vmatprep.subr.mxu0 0.0
    %1294 = vmatpush1.msra.mxu0 0.0
    %1295 = vmatprep.subr.mxu0 0.0
    %1296 = vmatpush1.msra.mxu0 0.0
    %1297 = vmatprep.subr.mxu0 0.0
    %1298 = vmatpush1.msra.mxu0 0.0
    %1299 = vmatprep.subr.mxu0 0.0
    %1300 = vmatpush1.msra.mxu0 0.0
    %1301 = vmatprep.subr.mxu0 0.0
    %1302 = vmatpush1.msra.mxu0 0.0
    %1303 = vmatprep.subr.mxu0 0.0
    %1304 = vmatpush1.msra.mxu0 0.0
    %1305 = vmatprep.subr.mxu0 0.0
    %1306 = vmatpush1.msra.mxu0 0.0
    %1307 = vmatprep.subr.mxu0 0.0
    %1308 = vmatpush1.msra.mxu0 0.0
    %1309 = vmatprep.subr.mxu0 0.0
    %1310 = vmatpush1.msra.mxu0 0.0
    %1311 = vmatprep.subr.mxu0 0.0
    %1312 = vmatpush1.msra.mxu0 0.0
    %1313 = vmatprep.subr.mxu0 0.0
    %1314 = vmatpush1.msra.mxu0 0.0
    %1315 = vmatprep.subr.mxu0 0.0
    %1316 = vmatpush1.msra.mxu0 0.0
    %1317 = vmatprep.subr.mxu0 0.0
    %1318 = vmatpush1.msra.mxu0 0.0
    %1319 = vmatprep.subr.mxu0 0.0
    %1320 = vmatpush1.msra.mxu0 0.0
    %1321 = vmatprep.subr.mxu0 0.0
    %1322 = vmatpush1.msra.mxu0 0.0
    %1323 = vmatprep.subr.mxu0 0.0
    %1324 = vmatpush1.msra.mxu0 0.0
    %1325 = vmatprep.subr.mxu0 0.0
    %1326 = vmatpush1.msra.mxu0 0.0
    %1327 = vmatprep.subr.mxu0 0.0
    %1328 = vmatpush1.msra.mxu0 0.0
    %1329 = vmatprep.subr.mxu0 0.0
    %1330 = vmatpush1.msra.mxu0 0.0
    %1331 = vmatprep.subr.mxu0 0.0
    %1332 = vmatpush1.msra.mxu0 0.0
    %1333 = vmatprep.subr.mxu0 0.0
    %1334 = vmatpush1.msra.mxu0 0.0
    %1335 = vmatprep.subr.mxu0 0.0
    %1336 = vmatpush1.msra.mxu0 0.0
    %1337 = vmatprep.subr.mxu0 0.0
    %1338 = vmatpush1.msra.mxu0 0.0
    %1339 = vmatprep.subr.mxu0 0.0
    %1340 = vmatpush1.msra.mxu0 0.0
    %1341 = vmatprep.subr.mxu0 0.0
    %1342 = vmatpush1.msra.mxu0 0.0
    %1343 = vmatprep.mubr.f32.mxu0 0.0
    %1344 = vmatmul.mubr.f32.gmra.mrb[0].mxu0 %v1135
    %v1345 = vpop.f32.mrb[0].mxu0
    %v1346 = vadd.f32 0.0, %v1345
    %v1347 = vpop.f32.mrb[0].mxu0
    %1348 = vmatprep.mubr.f32.mxu0 0.0
    %1349 = vmatmul.mubr.f32.gmra.mrb[0].mxu0 %v1138
    %v1350 = vpop.f32.mrb[0].mxu0
    %v1351 = vadd.f32 0.0, %v1350
    %v1352 = vpop.f32.mrb[0].mxu0
    %1353 = vmatprep.mubr.f32.mxu0 0.0
    %1354 = vmatmul.mubr.f32.gmra.mrb[0].mxu0 %v1141
    %v1355 = vpop.f32.mrb[0].mxu0
    %v1356 = vadd.f32 0.0, %v1355
    %v1357 = vpop.f32.mrb[0].mxu0
    %1358 = vmatprep.mubr.f32.mxu0 0.0
    %1359 = vmatmul.mubr.f32.gmra.mrb[0].mxu0 %v1144
    %v1360 = vpop.f32.mrb[0].mxu0
    %v1361 = vadd.f32 0.0, %v1360
    %v1362 = vpop.f32.mrb[0].mxu0
    %1363 = vmatprep.mubr.f32.mxu0 0.0
    %1364 = vmatmul.mubr.f32.gmra.mrb[0].mxu0 %v1147
    %v1365 = vpop.f32.mrb[0].mxu0
    %v1366 = vadd.f32 0.0, %v1365
    %v1367 = vpop.f32.mrb[0].mxu0
    %1368 = vmatprep.mubr.f32.mxu0 0.0
    %1369 = vmatmul.mubr.f32.gmra.mrb[0].mxu0 %v1150
    %v1370 = vpop.f32.mrb[0].mxu0
    %v1371 = vadd.f32 0.0, %v1370
    %v1372 = vpop.f32.mrb[0].mxu0
    %1373 = vmatprep.mubr.f32.mxu0 0.0
    %1374 = vmatmul.mubr.f32.gmra.mrb[0].mxu0 %v1153
    %v1375 = vpop.f32.mrb[0].mxu0
    %v1376 = vadd.f32 0.0, %v1375
    %v1377 = vpop.f32.mrb[0].mxu0
    %1378 = vmatprep.mubr.f32.mxu0 0.0
    %1379 = vmatmul.mubr.f32.gmra.mrb[0].mxu0 %v1156
    %v1380 = vpop.f32.mrb[0].mxu0
    %v1381 = vadd.f32 0.0, %v1380
    %v1382 = vpop.f32.mrb[0].mxu0
    %1383 = vdwg.mxu0
    %v1384 = vld [vmem:[%s113] sm:$0xff]
    %v1385 = vld [vmem:[%s113 + $0x8] sm:$0xff]
    %v1386 = vld [vmem:[%s113 + $0x10] sm:$0xff]
    %v1387 = vld [vmem:[%s113 + $0x18] sm:$0xff]
    %v1388 = vld [vmem:[%s113 + $0x20] sm:$0xff]
    %v1389 = vld [vmem:[%s113 + $0x28] sm:$0xff]
    %v1390 = vld [vmem:[%s113 + $0x30] sm:$0xff]
    %v1391 = vld [vmem:[%s113 + $0x38] sm:$0xff]
    %v1392 = vmul.f32 %v1346, %v1384
    %v1393 = vmul.f32 %v1351, %v1385
    %v1394 = vmul.f32 %v1356, %v1386
    %v1395 = vmul.f32 %v1361, %v1387
    %v1396 = vmul.f32 %v1366, %v1388
    %v1397 = vmul.f32 %v1371, %v1389
    %v1398 = vmul.f32 %v1376, %v1390
    %v1399 = vmul.f32 %v1381, %v1391
    %v1400 = vld [vmem:[%s55] sm:$0xff]
    %v1401 = vld [vmem:[%s55 + $0x8] sm:$0xff]
    %v1402 = vld [vmem:[%s55 + $0x10] sm:$0xff]
    %v1403 = vld [vmem:[%s55 + $0x18] sm:$0xff]
    %v1404 = vld [vmem:[%s55 + $0x20] sm:$0xff]
    %v1405 = vld [vmem:[%s55 + $0x28] sm:$0xff]
    %v1406 = vld [vmem:[%s55 + $0x30] sm:$0xff]
    %v1407 = vld [vmem:[%s55 + $0x38] sm:$0xff]
    %v1408 = vld [vmem:[%s55 + $0x40] sm:$0xff]
    %v1409 = vld [vmem:[%s55 + $0x48] sm:$0xff]
    %v1410 = vld [vmem:[%s55 + $0x50] sm:$0xff]
    %v1411 = vld [vmem:[%s55 + $0x58] sm:$0xff]
    %v1412 = vld [vmem:[%s55 + $0x60] sm:$0xff]
    %v1413 = vld [vmem:[%s55 + $0x68] sm:$0xff]
    %v1414 = vld [vmem:[%s55 + $0x70] sm:$0xff]
    %v1415 = vld [vmem:[%s55 + $0x78] sm:$0xff]
    %1416 = vmatprep.subr.mxu0 0.0
    %1417 = vmatpush1.msra.mxu0 %v1400
    %1418 = vmatprep.subr.mxu0 0.0
    %1419 = vmatpush1.msra.mxu0 %v1401
    %1420 = vmatprep.subr.mxu0 0.0
    %1421 = vmatpush1.msra.mxu0 %v1402
    %1422 = vmatprep.subr.mxu0 0.0
    %1423 = vmatpush1.msra.mxu0 %v1403
    %1424 = vmatprep.subr.mxu0 0.0
    %1425 = vmatpush1.msra.mxu0 %v1404
    %1426 = vmatprep.subr.mxu0 0.0
    %1427 = vmatpush1.msra.mxu0 %v1405
    %1428 = vmatprep.subr.mxu0 0.0
    %1429 = vmatpush1.msra.mxu0 %v1406
    %1430 = vmatprep.subr.mxu0 0.0
    %1431 = vmatpush1.msra.mxu0 %v1407
    %1432 = vmatprep.subr.mxu0 0.0
    %1433 = vmatpush1.msra.mxu0 %v1408
    %1434 = vmatprep.subr.mxu0 0.0
    %1435 = vmatpush1.msra.mxu0 %v1409
    %1436 = vmatprep.subr.mxu0 0.0
    %1437 = vmatpush1.msra.mxu0 %v1410
    %1438 = vmatprep.subr.mxu0 0.0
    %1439 = vmatpush1.msra.mxu0 %v1411
    %1440 = vmatprep.subr.mxu0 0.0
    %1441 = vmatpush1.msra.mxu0 %v1412
    %1442 = vmatprep.subr.mxu0 0.0
    %1443 = vmatpush1.msra.mxu0 %v1413
    %1444 = vmatprep.subr.mxu0 0.0
    %1445 = vmatpush1.msra.mxu0 %v1414
    %1446 = vmatprep.subr.mxu0 0.0
    %1447 = vmatpush1.msra.mxu0 %v1415
    %1448 = vmatprep.subr.mxu0 0.0
    %1449 = vmatpush1.msra.mxu0 0.0
    %1450 = vmatprep.subr.mxu0 0.0
    %1451 = vmatpush1.msra.mxu0 0.0
    %1452 = vmatprep.subr.mxu0 0.0
    %1453 = vmatpush1.msra.mxu0 0.0
    %1454 = vmatprep.subr.mxu0 0.0
    %1455 = vmatpush1.msra.mxu0 0.0
    %1456 = vmatprep.subr.mxu0 0.0
    %1457 = vmatpush1.msra.mxu0 0.0
    %1458 = vmatprep.subr.mxu0 0.0
    %1459 = vmatpush1.msra.mxu0 0.0
    %1460 = vmatprep.subr.mxu0 0.0
    %1461 = vmatpush1.msra.mxu0 0.0
    %1462 = vmatprep.subr.mxu0 0.0
    %1463 = vmatpush1.msra.mxu0 0.0
    %1464 = vmatprep.subr.mxu0 0.0
    %1465 = vmatpush1.msra.mxu0 0.0
    %1466 = vmatprep.subr.mxu0 0.0
    %1467 = vmatpush1.msra.mxu0 0.0
    %1468 = vmatprep.subr.mxu0 0.0
    %1469 = vmatpush1.msra.mxu0 0.0
    %1470 = vmatprep.subr.mxu0 0.0
    %1471 = vmatpush1.msra.mxu0 0.0
    %1472 = vmatprep.subr.mxu0 0.0
    %1473 = vmatpush1.msra.mxu0 0.0
    %1474 = vmatprep.subr.mxu0 0.0
    %1475 = vmatpush1.msra.mxu0 0.0
    %1476 = vmatprep.subr.mxu0 0.0
    %1477 = vmatpush1.msra.mxu0 0.0
    %1478 = vmatprep.subr.mxu0 0.0
    %1479 = vmatpush1.msra.mxu0 0.0
    %1480 = vmatprep.mubr.f32.mxu0 0.0
    %1481 = vmatmul.mubr.f32.gmra.mrb[0].mxu0 %v1392
    %v1482 = vpop.f32.mrb[0].mxu0
    %v1483 = vadd.f32 0.0, %v1482
    %v1484 = vpop.f32.mrb[0].mxu0
    %1485 = vmatprep.mubr.f32.mxu0 0.0
    %1486 = vmatmul.mubr.f32.gmra.mrb[0].mxu0 %v1393
    %v1487 = vpop.f32.mrb[0].mxu0
    %v1488 = vadd.f32 0.0, %v1487
    %v1489 = vpop.f32.mrb[0].mxu0
    %1490 = vmatprep.mubr.f32.mxu0 0.0
    %1491 = vmatmul.mubr.f32.gmra.mrb[0].mxu0 %v1394
    %v1492 = vpop.f32.mrb[0].mxu0
    %v1493 = vadd.f32 0.0, %v1492
    %v1494 = vpop.f32.mrb[0].mxu0
    %1495 = vmatprep.mubr.f32.mxu0 0.0
    %1496 = vmatmul.mubr.f32.gmra.mrb[0].mxu0 %v1395
    %v1497 = vpop.f32.mrb[0].mxu0
    %v1498 = vadd.f32 0.0, %v1497
    %v1499 = vpop.f32.mrb[0].mxu0
    %1500 = vmatprep.mubr.f32.mxu0 0.0
    %1501 = vmatmul.mubr.f32.gmra.mrb[0].mxu0 %v1396
    %v1502 = vpop.f32.mrb[0].mxu0
    %v1503 = vadd.f32 0.0, %v1502
    %v1504 = vpop.f32.mrb[0].mxu0
    %1505 = vmatprep.mubr.f32.mxu0 0.0
    %1506 = vmatmul.mubr.f32.gmra.mrb[0].mxu0 %v1397
    %v1507 = vpop.f32.mrb[0].mxu0
    %v1508 = vadd.f32 0.0, %v1507
    %v1509 = vpop.f32.mrb[0].mxu0
    %1510 = vmatprep.mubr.f32.mxu0 0.0
    %1511 = vmatmul.mubr.f32.gmra.mrb[0].mxu0 %v1398
    %v1512 = vpop.f32.mrb[0].mxu0
    %v1513 = vadd.f32 0.0, %v1512
    %v1514 = vpop.f32.mrb[0].mxu0
    %1515 = vmatprep.mubr.f32.mxu0 0.0
    %1516 = vmatmul.mubr.f32.gmra.mrb[0].mxu0 %v1399
    %v1517 = vpop.f32.mrb[0].mxu0
    %v1518 = vadd.f32 0.0, %v1517
    %v1519 = vpop.f32.mrb[0].mxu0
    %1520 = vdwg.mxu0
    %v1521 = vmul.f32 %v1483, %v604
    %v1522 = vmul.f32 %v1488, %v605
    %v1523 = vmul.f32 %v1493, %v606
    %v1524 = vmul.f32 %v1498, %v607
    %v1525 = vmul.f32 %v1503, %v608
    %v1526 = vmul.f32 %v1508, %v609
    %v1527 = vmul.f32 %v1513, %v610
    %v1528 = vmul.f32 %v1518, %v611
    %v1529 = vadd.f32 %v1521, %v1523
    %v1530 = vadd.f32 %v1522, %v1524
    %v1531 = vadd.f32 %v1529, %v1525
    %v1532 = vadd.f32 %v1530, %v1526
    %v1533 = vadd.f32 %v1531, %v1527
    %v1534 = vadd.f32 %v1532, %v1528
    %v1535 = vadd.f32 %v1275, %v1533
    %v1536 = vadd.f32 %v1276, %v1534
    %v1537 = vld [vmem:[%s57] sm:$0xff]
    %v1538 = vld [vmem:[%s57 + $0x8] sm:$0xff]
    %v1539 = vld [vmem:[%s57 + $0x10] sm:$0xff]
    %v1540 = vld [vmem:[%s57 + $0x18] sm:$0xff]
    %v1541 = vld [vmem:[#allocation12] sm:$0x1]
    %v1543 = vlaneseq
    %v1544 = vshrl.u32 %v1543, 7
    %v1545 = vsub.s32 0, %v1544
    %v1546 = vrot.slane %v1541, %v1545
    %v1549 = vsel %vm522, %v1535, 0
    %v1552 = vsel %vm522, %v1536, 0
    %1554 = vmatprep.subr.mxu0 0.0
    %1555 = vmatpush1.msra.mxu0 %v1537
    %1556 = vmatprep.subr.mxu0 0.0
    %1557 = vmatpush1.msra.mxu0 %v1538
    %1558 = vmatprep.subr.mxu0 0.0
    %1559 = vmatpush1.msra.mxu0 %v1539
    %1560 = vmatprep.subr.mxu0 0.0
    %1561 = vmatpush1.msra.mxu0 %v1540
    %1562 = vmatprep.subr.mxu0 0.0
    %1563 = vmatpush1.msra.mxu0 0.0
    %1564 = vmatprep.subr.mxu0 0.0
    %1565 = vmatpush1.msra.mxu0 0.0
    %1566 = vmatprep.subr.mxu0 0.0
    %1567 = vmatpush1.msra.mxu0 0.0
    %1568 = vmatprep.subr.mxu0 0.0
    %1569 = vmatpush1.msra.mxu0 0.0
    %1570 = vmatprep.subr.mxu0 0.0
    %1571 = vmatpush1.msra.mxu0 0.0
    %1572 = vmatprep.subr.mxu0 0.0
    %1573 = vmatpush1.msra.mxu0 0.0
    %1574 = vmatprep.subr.mxu0 0.0
    %1575 = vmatpush1.msra.mxu0 0.0
    %1576 = vmatprep.subr.mxu0 0.0
    %1577 = vmatpush1.msra.mxu0 0.0
    %1578 = vmatprep.subr.mxu0 0.0
    %1579 = vmatpush1.msra.mxu0 0.0
    %1580 = vmatprep.subr.mxu0 0.0
    %1581 = vmatpush1.msra.mxu0 0.0
    %1582 = vmatprep.subr.mxu0 0.0
    %1583 = vmatpush1.msra.mxu0 0.0
    %1584 = vmatprep.subr.mxu0 0.0
    %1585 = vmatpush1.msra.mxu0 0.0
    %1586 = vmatprep.subr.mxu0 0.0
    %1587 = vmatpush1.msra.mxu0 0.0
    %1588 = vmatprep.subr.mxu0 0.0
    %1589 = vmatpush1.msra.mxu0 0.0
    %1590 = vmatprep.subr.mxu0 0.0
    %1591 = vmatpush1.msra.mxu0 0.0
    %1592 = vmatprep.subr.mxu0 0.0
    %1593 = vmatpush1.msra.mxu0 0.0
    %1594 = vmatprep.subr.mxu0 0.0
    %1595 = vmatpush1.msra.mxu0 0.0
    %1596 = vmatprep.subr.mxu0 0.0
    %1597 = vmatpush1.msra.mxu0 0.0
    %1598 = vmatprep.subr.mxu0 0.0
    %1599 = vmatpush1.msra.mxu0 0.0
    %1600 = vmatprep.subr.mxu0 0.0
    %1601 = vmatpush1.msra.mxu0 0.0
    %1602 = vmatprep.subr.mxu0 0.0
    %1603 = vmatpush1.msra.mxu0 0.0
    %1604 = vmatprep.subr.mxu0 0.0
    %1605 = vmatpush1.msra.mxu0 0.0
    %1606 = vmatprep.subr.mxu0 0.0
    %1607 = vmatpush1.msra.mxu0 0.0
    %1608 = vmatprep.subr.mxu0 0.0
    %1609 = vmatpush1.msra.mxu0 0.0
    %1610 = vmatprep.subr.mxu0 0.0
    %1611 = vmatpush1.msra.mxu0 0.0
    %1612 = vmatprep.subr.mxu0 0.0
    %1613 = vmatpush1.msra.mxu0 0.0
    %1614 = vmatprep.subr.mxu0 0.0
    %1615 = vmatpush1.msra.mxu0 0.0
    %1616 = vmatprep.subr.mxu0 0.0
    %1617 = vmatpush1.msra.mxu0 0.0
    %1618 = vmatprep.mubr.f32.mxu0 0.0
    %1619 = vmatmul.mubr.f32.gmra.mrb[0].mxu0 %v1549
    %v1620 = vpop.f32.mrb[0].mxu0
    %v1621 = vadd.f32 %v1546, %v1620
    %v1622 = vpop.f32.mrb[0].mxu0
    %1623 = vmatprep.mubr.f32.mxu0 0.0
    %1624 = vmatmul.mubr.f32.gmra.mrb[0].mxu0 %v1552
    %v1625 = vpop.f32.mrb[0].mxu0
    %v1626 = vadd.f32 %v1546, %v1625
    %v1627 = vpop.f32.mrb[0].mxu0
    %1628 = vdwg.mxu0
    %v1629 = vadd.f32 %v1621, %v507
    %v1630 = vadd.f32 %v1626, %v508
    %v1631 = vsel %vm522, %v1629, 0.0
    %1632 = vadd.xlane.f32.xlu0 %v1631
    %v1633 = vpop.xlane.xlu0 %1632
    %v1634 = vsel %vm522, %v1630, 0.0
    %1635 = vadd.xlane.f32.xlu0 %v1634
    %v1636 = vpop.xlane.xlu0 %1635
    %v1637 = vrcp.pop 32.0
    %v1638 = vmul.f32 %v1633, %v1637
    %v1639 = vmul.f32 %v1636, %v1637
    %v1640 = vsub.f32 %v1629, %v1638
    %v1641 = vsub.f32 %v1630, %v1639
    %v1642 = vmul.f32 %v1640, %v1640
    %v1643 = vmul.f32 %v1641, %v1641
    %v1644 = vsel %vm522, %v1642, 0.0
    %1645 = vadd.xlane.f32.xlu0 %v1644
    %v1646 = vpop.xlane.xlu0 %1645
    %v1647 = vsel %vm522, %v1643, 0.0
    %1648 = vadd.xlane.f32.xlu0 %v1647
    %v1649 = vpop.xlane.xlu0 %1648
    %v1650 = vmul.f32 %v1646, %v1637
    %v1651 = vmul.f32 %v1649, %v1637
    %v1652 = vadd.f32 %v1650, 1e-05
    %v1653 = vadd.f32 %v1651, 1e-05
    %v1654 = vrsqrt.pop %v1652
    %v1655 = vrsqrt.pop %v1653
    %v1656 = vmul.f32 %v1640, %v1654
    %v1657 = vmul.f32 %v1641, %v1655
    %v1658 = vld [vmem:[#allocation4] sm:$0x1]
    %v1660 = vlaneseq
    %v1661 = vshrl.u32 %v1660, 7
    %v1662 = vsub.s32 0, %v1661
    %v1663 = vrot.slane %v1658, %v1662
    %v1665 = vmul.f32 %v1656, %v1663
    %v1666 = vmul.f32 %v1657, %v1663
    %v1667 = vld [vmem:[#allocation2] sm:$0x1]
    %v1669 = vlaneseq
    %v1670 = vshrl.u32 %v1669, 7
    %v1671 = vsub.s32 0, %v1670
    %v1672 = vrot.slane %v1667, %v1671
    %v1674 = vadd.f32 %v1665, %v1672
    %v1675 = vadd.f32 %v1666, %v1672
    %v1676 = vld [vmem:[%s27] sm:$0xff]
    %v1677 = vld [vmem:[%s27 + $0x8] sm:$0xff]
    %v1678 = vld [vmem:[%s27 + $0x10] sm:$0xff]
    %v1679 = vld [vmem:[%s27 + $0x18] sm:$0xff]
    %v1680 = vld [vmem:[%s17] sm:$0x1]
    %v1682 = vlaneseq
    %v1683 = vshrl.u32 %v1682, 7
    %v1684 = vsub.s32 0, %v1683
    %v1685 = vrot.slane %v1680, %v1684
    %v1688 = vsel %vm522, %v1674, 0
    %v1691 = vsel %vm522, %v1675, 0
    %1693 = vmatprep.subr.mxu0 0.0
    %1694 = vmatpush1.msra.mxu0 %v1676
    %1695 = vmatprep.subr.mxu0 0.0
    %1696 = vmatpush1.msra.mxu0 %v1677
    %1697 = vmatprep.subr.mxu0 0.0
    %1698 = vmatpush1.msra.mxu0 %v1678
    %1699 = vmatprep.subr.mxu0 0.0
    %1700 = vmatpush1.msra.mxu0 %v1679
    %1701 = vmatprep.subr.mxu0 0.0
    %1702 = vmatpush1.msra.mxu0 0.0
    %1703 = vmatprep.subr.mxu0 0.0
    %1704 = vmatpush1.msra.mxu0 0.0
    %1705 = vmatprep.subr.mxu0 0.0
    %1706 = vmatpush1.msra.mxu0 0.0
    %1707 = vmatprep.subr.mxu0 0.0
    %1708 = vmatpush1.msra.mxu0 0.0
    %1709 = vmatprep.subr.mxu0 0.0
    %1710 = vmatpush1.msra.mxu0 0.0
    %1711 = vmatprep.subr.mxu0 0.0
    %1712 = vmatpush1.msra.mxu0 0.0
    %1713 = vmatprep.subr.mxu0 0.0
    %1714 = vmatpush1.msra.mxu0 0.0
    %1715 = vmatprep.subr.mxu0 0.0
    %1716 = vmatpush1.msra.mxu0 0.0
    %1717 = vmatprep.subr.mxu0 0.0
    %1718 = vmatpush1.msra.mxu0 0.0
    %1719 = vmatprep.subr.mxu0 0.0
    %1720 = vmatpush1.msra.mxu0 0.0
    %1721 = vmatprep.subr.mxu0 0.0
    %1722 = vmatpush1.msra.mxu0 0.0
    %1723 = vmatprep.subr.mxu0 0.0
    %1724 = vmatpush1.msra.mxu0 0.0
    %1725 = vmatprep.subr.mxu0 0.0
    %1726 = vmatpush1.msra.mxu0 0.0
    %1727 = vmatprep.subr.mxu0 0.0
    %1728 = vmatpush1.msra.mxu0 0.0
    %1729 = vmatprep.subr.mxu0 0.0
    %1730 = vmatpush1.msra.mxu0 0.0
    %1731 = vmatprep.subr.mxu0 0.0
    %1732 = vmatpush1.msra.mxu0 0.0
    %1733 = vmatprep.subr.mxu0 0.0
    %1734 = vmatpush1.msra.mxu0 0.0
    %1735 = vmatprep.subr.mxu0 0.0
    %1736 = vmatpush1.msra.mxu0 0.0
    %1737 = vmatprep.subr.mxu0 0.0
    %1738 = vmatpush1.msra.mxu0 0.0
    %1739 = vmatprep.subr.mxu0 0.0
    %1740 = vmatpush1.msra.mxu0 0.0
    %1741 = vmatprep.subr.mxu0 0.0
    %1742 = vmatpush1.msra.mxu0 0.0
    %1743 = vmatprep.subr.mxu0 0.0
    %1744 = vmatpush1.msra.mxu0 0.0
    %1745 = vmatprep.subr.mxu0 0.0
    %1746 = vmatpush1.msra.mxu0 0.0
    %1747 = vmatprep.subr.mxu0 0.0
    %1748 = vmatpush1.msra.mxu0 0.0
    %1749 = vmatprep.subr.mxu0 0.0
    %1750 = vmatpush1.msra.mxu0 0.0
    %1751 = vmatprep.subr.mxu0 0.0
    %1752 = vmatpush1.msra.mxu0 0.0
    %1753 = vmatprep.subr.mxu0 0.0
    %1754 = vmatpush1.msra.mxu0 0.0
    %1755 = vmatprep.subr.mxu0 0.0
    %1756 = vmatpush1.msra.mxu0 0.0
    %1757 = vmatprep.mubr.f32.mxu0 0.0
    %1758 = vmatmul.mubr.f32.gmra.mrb[0].mxu0 %v1688
    %v1759 = vpop.f32.mrb[0].mxu0
    %v1760 = vadd.f32 %v1685, %v1759
    %v1761 = vpop.f32.mrb[0].mxu0
    %1762 = vmatprep.mubr.f32.mxu0 0.0
    %1763 = vmatmul.mubr.f32.gmra.mrb[0].mxu0 %v1691
    %v1764 = vpop.f32.mrb[0].mxu0
    %v1765 = vadd.f32 %v1685, %v1764
    %v1766 = vpop.f32.mrb[0].mxu0
    %1767 = vdwg.mxu0
    %v1768 = vld [vmem:[%s23] sm:$0xff]
    %v1769 = vld [vmem:[%s23 + $0x8] sm:$0xff]
    %v1770 = vld [vmem:[%s23 + $0x10] sm:$0xff]
    %v1771 = vld [vmem:[%s23 + $0x18] sm:$0xff]
    %v1772 = vld [vmem:[%s13] sm:$0x1]
    %v1774 = vlaneseq
    %v1775 = vshrl.u32 %v1774, 7
    %v1776 = vsub.s32 0, %v1775
    %v1777 = vrot.slane %v1772, %v1776
    %v1780 = vsel %vm522, %v509, 0
    %v1783 = vsel %vm522, %v510, 0
    %1785 = vmatprep.subr.mxu0 0.0
    %1786 = vmatpush1.msra.mxu0 %v1768
    %1787 = vmatprep.subr.mxu0 0.0
    %1788 = vmatpush1.msra.mxu0 %v1769
    %1789 = vmatprep.subr.mxu0 0.0
    %1790 = vmatpush1.msra.mxu0 %v1770
    %1791 = vmatprep.subr.mxu0 0.0
    %1792 = vmatpush1.msra.mxu0 %v1771
    %1793 = vmatprep.subr.mxu0 0.0
    %1794 = vmatpush1.msra.mxu0 0.0
    %1795 = vmatprep.subr.mxu0 0.0
    %1796 = vmatpush1.msra.mxu0 0.0
    %1797 = vmatprep.subr.mxu0 0.0
    %1798 = vmatpush1.msra.mxu0 0.0
    %1799 = vmatprep.subr.mxu0 0.0
    %1800 = vmatpush1.msra.mxu0 0.0
    %1801 = vmatprep.subr.mxu0 0.0
    %1802 = vmatpush1.msra.mxu0 0.0
    %1803 = vmatprep.subr.mxu0 0.0
    %1804 = vmatpush1.msra.mxu0 0.0
    %1805 = vmatprep.subr.mxu0 0.0
    %1806 = vmatpush1.msra.mxu0 0.0
    %1807 = vmatprep.subr.mxu0 0.0
    %1808 = vmatpush1.msra.mxu0 0.0
    %1809 = vmatprep.subr.mxu0 0.0
    %1810 = vmatpush1.msra.mxu0 0.0
    %1811 = vmatprep.subr.mxu0 0.0
    %1812 = vmatpush1.msra.mxu0 0.0
    %1813 = vmatprep.subr.mxu0 0.0
    %1814 = vmatpush1.msra.mxu0 0.0
    %1815 = vmatprep.subr.mxu0 0.0
    %1816 = vmatpush1.msra.mxu0 0.0
    %1817 = vmatprep.subr.mxu0 0.0
    %1818 = vmatpush1.msra.mxu0 0.0
    %1819 = vmatprep.subr.mxu0 0.0
    %1820 = vmatpush1.msra.mxu0 0.0
    %1821 = vmatprep.subr.mxu0 0.0
    %1822 = vmatpush1.msra.mxu0 0.0
    %1823 = vmatprep.subr.mxu0 0.0
    %1824 = vmatpush1.msra.mxu0 0.0
    %1825 = vmatprep.subr.mxu0 0.0
    %1826 = vmatpush1.msra.mxu0 0.0
    %1827 = vmatprep.subr.mxu0 0.0
    %1828 = vmatpush1.msra.mxu0 0.0
    %1829 = vmatprep.subr.mxu0 0.0
    %1830 = vmatpush1.msra.mxu0 0.0
    %1831 = vmatprep.subr.mxu0 0.0
    %1832 = vmatpush1.msra.mxu0 0.0
    %1833 = vmatprep.subr.mxu0 0.0
    %1834 = vmatpush1.msra.mxu0 0.0
    %1835 = vmatprep.subr.mxu0 0.0
    %1836 = vmatpush1.msra.mxu0 0.0
    %1837 = vmatprep.subr.mxu0 0.0
    %1838 = vmatpush1.msra.mxu0 0.0
    %1839 = vmatprep.subr.mxu0 0.0
    %1840 = vmatpush1.msra.mxu0 0.0
    %1841 = vmatprep.subr.mxu0 0.0
    %1842 = vmatpush1.msra.mxu0 0.0
    %1843 = vmatprep.subr.mxu0 0.0
    %1844 = vmatpush1.msra.mxu0 0.0
    %1845 = vmatprep.subr.mxu0 0.0
    %1846 = vmatpush1.msra.mxu0 0.0
    %1847 = vmatprep.subr.mxu0 0.0
    %1848 = vmatpush1.msra.mxu0 0.0
    %1849 = vmatprep.mubr.f32.mxu0 0.0
    %1850 = vmatmul.mubr.f32.gmra.mrb[0].mxu0 %v1780
    %v1851 = vpop.f32.mrb[0].mxu0
    %v1852 = vadd.f32 %v1777, %v1851
    %v1853 = vpop.f32.mrb[0].mxu0
    %1854 = vmatprep.mubr.f32.mxu0 0.0
    %1855 = vmatmul.mubr.f32.gmra.mrb[0].mxu0 %v1783
    %v1856 = vpop.f32.mrb[0].mxu0
    %v1857 = vadd.f32 %v1777, %v1856
    %v1858 = vpop.f32.mrb[0].mxu0
    %1859 = vdwg.mxu0
    %v1860 = vld [vmem:[%s119] sm:$0xff]
    %v1861 = vld [vmem:[%s119 + $0x8] sm:$0xff]
    %v1862 = vld [vmem:[%s119 + $0x10] sm:$0xff]
    %v1863 = vld [vmem:[%s119 + $0x18] sm:$0xff]
    %v1864 = vld [vmem:[%s119 + $0x20] sm:$0xff]
    %v1865 = vld [vmem:[%s119 + $0x28] sm:$0xff]
    %v1866 = vld [vmem:[%s119 + $0x30] sm:$0xff]
    %v1867 = vld [vmem:[%s119 + $0x38] sm:$0xff]
    %v1868 = vmul.f32 %v1760, %v1860
    %v1869 = vmul.f32 %v1765, %v1861
    %v1870 = vmul.f32 %v1760, %v1862
    %v1871 = vmul.f32 %v1765, %v1863
    %v1872 = vmul.f32 %v1760, %v1864
    %v1873 = vmul.f32 %v1765, %v1865
    %v1874 = vmul.f32 %v1760, %v1866
    %v1875 = vmul.f32 %v1765, %v1867
    %v1876 = vld [vmem:[%s19] sm:$0xff]
    %v1877 = vld [vmem:[%s19 + $0x8] sm:$0xff]
    %v1878 = vld [vmem:[%s19 + $0x10] sm:$0xff]
    %v1879 = vld [vmem:[%s19 + $0x18] sm:$0xff]
    %v1881 = vsel %vm522, %v1868, 0
    %v1884 = vsel %vm522, %v1869, 0
    %v1887 = vsel %vm522, %v1870, 0
    %v1890 = vsel %vm522, %v1871, 0
    %v1893 = vsel %vm522, %v1872, 0
    %v1896 = vsel %vm522, %v1873, 0
    %v1899 = vsel %vm522, %v1874, 0
    %v1902 = vsel %vm522, %v1875, 0
    %1904 = vmatprep.subr.mxu0 0.0
    %1905 = vmatpush1.msra.mxu0 %v1876
    %1906 = vmatprep.subr.mxu0 0.0
    %1907 = vmatpush1.msra.mxu0 %v1877
    %1908 = vmatprep.subr.mxu0 0.0
    %1909 = vmatpush1.msra.mxu0 %v1878
    %1910 = vmatprep.subr.mxu0 0.0
    %1911 = vmatpush1.msra.mxu0 %v1879
    %1912 = vmatprep.subr.mxu0 0.0
    %1913 = vmatpush1.msra.mxu0 0.0
    %1914 = vmatprep.subr.mxu0 0.0
    %1915 = vmatpush1.msra.mxu0 0.0
    %1916 = vmatprep.subr.mxu0 0.0
    %1917 = vmatpush1.msra.mxu0 0.0
    %1918 = vmatprep.subr.mxu0 0.0
    %1919 = vmatpush1.msra.mxu0 0.0
    %1920 = vmatprep.subr.mxu0 0.0
    %1921 = vmatpush1.msra.mxu0 0.0
    %1922 = vmatprep.subr.mxu0 0.0
    %1923 = vmatpush1.msra.mxu0 0.0
    %1924 = vmatprep.subr.mxu0 0.0
    %1925 = vmatpush1.msra.mxu0 0.0
    %1926 = vmatprep.subr.mxu0 0.0
    %1927 = vmatpush1.msra.mxu0 0.0
    %1928 = vmatprep.subr.mxu0 0.0
    %1929 = vmatpush1.msra.mxu0 0.0
    %1930 = vmatprep.subr.mxu0 0.0
    %1931 = vmatpush1.msra.mxu0 0.0
    %1932 = vmatprep.subr.mxu0 0.0
    %1933 = vmatpush1.msra.mxu0 0.0
    %1934 = vmatprep.subr.mxu0 0.0
    %1935 = vmatpush1.msra.mxu0 0.0
    %1936 = vmatprep.subr.mxu0 0.0
    %1937 = vmatpush1.msra.mxu0 0.0
    %1938 = vmatprep.subr.mxu0 0.0
    %1939 = vmatpush1.msra.mxu0 0.0
    %1940 = vmatprep.subr.mxu0 0.0
    %1941 = vmatpush1.msra.mxu0 0.0
    %1942 = vmatprep.subr.mxu0 0.0
    %1943 = vmatpush1.msra.mxu0 0.0
    %1944 = vmatprep.subr.mxu0 0.0
    %1945 = vmatpush1.msra.mxu0 0.0
    %1946 = vmatprep.subr.mxu0 0.0
    %1947 = vmatpush1.msra.mxu0 0.0
    %1948 = vmatprep.subr.mxu0 0.0
    %1949 = vmatpush1.msra.mxu0 0.0
    %1950 = vmatprep.subr.mxu0 0.0
    %1951 = vmatpush1.msra.mxu0 0.0
    %1952 = vmatprep.subr.mxu0 0.0
    %1953 = vmatpush1.msra.mxu0 0.0
    %1954 = vmatprep.subr.mxu0 0.0
    %1955 = vmatpush1.msra.mxu0 0.0
    %1956 = vmatprep.subr.mxu0 0.0
    %1957 = vmatpush1.msra.mxu0 0.0
    %1958 = vmatprep.subr.mxu0 0.0
    %1959 = vmatpush1.msra.mxu0 0.0
    %1960 = vmatprep.subr.mxu0 0.0
    %1961 = vmatpush1.msra.mxu0 0.0
    %1962 = vmatprep.subr.mxu0 0.0
    %1963 = vmatpush1.msra.mxu0 0.0
    %1964 = vmatprep.subr.mxu0 0.0
    %1965 = vmatpush1.msra.mxu0 0.0
    %1966 = vmatprep.subr.mxu0 0.0
    %1967 = vmatpush1.msra.mxu0 0.0
    %1968 = vmatprep.mubr.f32.mxu0 0.0
    %1969 = vmatmul.mubr.f32.gmra.mrb[0].mxu0 %v1881
    %v1970 = vpop.f32.mrb[0].mxu0
    %v1971 = vadd.f32 0.0, %v1970
    %v1972 = vpop.f32.mrb[0].mxu0
    %1973 = vmatprep.mubr.f32.mxu0 0.0
    %1974 = vmatmul.mubr.f32.gmra.mrb[0].mxu0 %v1884
    %v1975 = vpop.f32.mrb[0].mxu0
    %v1976 = vadd.f32 0.0, %v1975
    %v1977 = vpop.f32.mrb[0].mxu0
    %1978 = vmatprep.mubr.f32.mxu0 0.0
    %1979 = vmatmul.mubr.f32.gmra.mrb[0].mxu0 %v1887
    %v1980 = vpop.f32.mrb[0].mxu0
    %v1981 = vadd.f32 0.0, %v1980
    %v1982 = vpop.f32.mrb[0].mxu0
    %1983 = vmatprep.mubr.f32.mxu0 0.0
    %1984 = vmatmul.mubr.f32.gmra.mrb[0].mxu0 %v1890
    %v1985 = vpop.f32.mrb[0].mxu0
    %v1986 = vadd.f32 0.0, %v1985
    %v1987 = vpop.f32.mrb[0].mxu0
    %1988 = vmatprep.mubr.f32.mxu0 0.0
    %1989 = vmatmul.mubr.f32.gmra.mrb[0].mxu0 %v1893
    %v1990 = vpop.f32.mrb[0].mxu0
    %v1991 = vadd.f32 0.0, %v1990
    %v1992 = vpop.f32.mrb[0].mxu0
    %1993 = vmatprep.mubr.f32.mxu0 0.0
    %1994 = vmatmul.mubr.f32.gmra.mrb[0].mxu0 %v1896
    %v1995 = vpop.f32.mrb[0].mxu0
    %v1996 = vadd.f32 0.0, %v1995
    %v1997 = vpop.f32.mrb[0].mxu0
    %1998 = vmatprep.mubr.f32.mxu0 0.0
    %1999 = vmatmul.mubr.f32.gmra.mrb[0].mxu0 %v1899
    %v2000 = vpop.f32.mrb[0].mxu0
    %v2001 = vadd.f32 0.0, %v2000
    %v2002 = vpop.f32.mrb[0].mxu0
    %2003 = vmatprep.mubr.f32.mxu0 0.0
    %2004 = vmatmul.mubr.f32.gmra.mrb[0].mxu0 %v1902
    %v2005 = vpop.f32.mrb[0].mxu0
    %v2006 = vadd.f32 0.0, %v2005
    %v2007 = vpop.f32.mrb[0].mxu0
    %2008 = vdwg.mxu0
    %v2009 = vld [vmem:[%s125] sm:$0xff]
    %v2010 = vld [vmem:[%s125 + $0x8] sm:$0xff]
    %v2011 = vld [vmem:[%s125 + $0x10] sm:$0xff]
    %v2012 = vld [vmem:[%s125 + $0x18] sm:$0xff]
    %v2013 = vld [vmem:[%s125 + $0x20] sm:$0xff]
    %v2014 = vld [vmem:[%s125 + $0x28] sm:$0xff]
    %v2015 = vld [vmem:[%s125 + $0x30] sm:$0xff]
    %v2016 = vld [vmem:[%s125 + $0x38] sm:$0xff]
    %v2017 = vmul.f32 %v1971, %v2009
    %v2018 = vmul.f32 %v1976, %v2010
    %v2019 = vmul.f32 %v1981, %v2011
    %v2020 = vmul.f32 %v1986, %v2012
    %v2021 = vmul.f32 %v1991, %v2013
    %v2022 = vmul.f32 %v1996, %v2014
    %v2023 = vmul.f32 %v2001, %v2015
    %v2024 = vmul.f32 %v2006, %v2016
    %v2025 = vld [vmem:[%s121] sm:$0xff]
    %v2026 = vld [vmem:[%s121 + $0x8] sm:$0xff]
    %v2027 = vld [vmem:[%s121 + $0x10] sm:$0xff]
    %v2028 = vld [vmem:[%s121 + $0x18] sm:$0xff]
    %v2029 = vld [vmem:[%s121 + $0x20] sm:$0xff]
    %v2030 = vld [vmem:[%s121 + $0x28] sm:$0xff]
    %v2031 = vld [vmem:[%s121 + $0x30] sm:$0xff]
    %v2032 = vld [vmem:[%s121 + $0x38] sm:$0xff]
    %v2033 = vld [vmem:[%s121 + $0x40] sm:$0xff]
    %v2035 = vsel %vm778, %v2017, 0
    %v2038 = vsel %vm778, %v2018, 0
    %v2041 = vsel %vm778, %v2019, 0
    %v2044 = vsel %vm778, %v2020, 0
    %v2047 = vsel %vm778, %v2021, 0
    %v2050 = vsel %vm778, %v2022, 0
    %v2053 = vsel %vm778, %v2023, 0
    %v2056 = vsel %vm778, %v2024, 0
    %2058 = vmatprep.subr.mxu0 0.0
    %2059 = vmatpush1.msra.mxu0 %v2025
    %2060 = vmatprep.subr.mxu0 0.0
    %2061 = vmatpush1.msra.mxu0 %v2026
    %2062 = vmatprep.subr.mxu0 0.0
    %2063 = vmatpush1.msra.mxu0 %v2027
    %2064 = vmatprep.subr.mxu0 0.0
    %2065 = vmatpush1.msra.mxu0 %v2028
    %2066 = vmatprep.subr.mxu0 0.0
    %2067 = vmatpush1.msra.mxu0 %v2029
    %2068 = vmatprep.subr.mxu0 0.0
    %2069 = vmatpush1.msra.mxu0 %v2030
    %2070 = vmatprep.subr.mxu0 0.0
    %2071 = vmatpush1.msra.mxu0 %v2031
    %2072 = vmatprep.subr.mxu0 0.0
    %2073 = vmatpush1.msra.mxu0 %v2032
    %2074 = vmatprep.subr.mxu0 0.0
    %2075 = vmatpush1.msra.mxu0 %v2033
    %2076 = vmatprep.subr.mxu0 0.0
    %2077 = vmatpush1.msra.mxu0 0.0
    %2078 = vmatprep.subr.mxu0 0.0
    %2079 = vmatpush1.msra.mxu0 0.0
    %2080 = vmatprep.subr.mxu0 0.0
    %2081 = vmatpush1.msra.mxu0 0.0
    %2082 = vmatprep.subr.mxu0 0.0
    %2083 = vmatpush1.msra.mxu0 0.0
    %2084 = vmatprep.subr.mxu0 0.0
    %2085 = vmatpush1.msra.mxu0 0.0
    %2086 = vmatprep.subr.mxu0 0.0
    %2087 = vmatpush1.msra.mxu0 0.0
    %2088 = vmatprep.subr.mxu0 0.0
    %2089 = vmatpush1.msra.mxu0 0.0
    %2090 = vmatprep.subr.mxu0 0.0
    %2091 = vmatpush1.msra.mxu0 0.0
    %2092 = vmatprep.subr.mxu0 0.0
    %2093 = vmatpush1.msra.mxu0 0.0
    %2094 = vmatprep.subr.mxu0 0.0
    %2095 = vmatpush1.msra.mxu0 0.0
    %2096 = vmatprep.subr.mxu0 0.0
    %2097 = vmatpush1.msra.mxu0 0.0
    %2098 = vmatprep.subr.mxu0 0.0
    %2099 = vmatpush1.msra.mxu0 0.0
    %2100 = vmatprep.subr.mxu0 0.0
    %2101 = vmatpush1.msra.mxu0 0.0
    %2102 = vmatprep.subr.mxu0 0.0
    %2103 = vmatpush1.msra.mxu0 0.0
    %2104 = vmatprep.subr.mxu0 0.0
    %2105 = vmatpush1.msra.mxu0 0.0
    %2106 = vmatprep.subr.mxu0 0.0
    %2107 = vmatpush1.msra.mxu0 0.0
    %2108 = vmatprep.subr.mxu0 0.0
    %2109 = vmatpush1.msra.mxu0 0.0
    %2110 = vmatprep.subr.mxu0 0.0
    %2111 = vmatpush1.msra.mxu0 0.0
    %2112 = vmatprep.subr.mxu0 0.0
    %2113 = vmatpush1.msra.mxu0 0.0
    %2114 = vmatprep.subr.mxu0 0.0
    %2115 = vmatpush1.msra.mxu0 0.0
    %2116 = vmatprep.subr.mxu0 0.0
    %2117 = vmatpush1.msra.mxu0 0.0
    %2118 = vmatprep.subr.mxu0 0.0
    %2119 = vmatpush1.msra.mxu0 0.0
    %2120 = vmatprep.subr.mxu0 0.0
    %2121 = vmatpush1.msra.mxu0 0.0
    %2122 = vmatprep.mubr.f32.mxu0 0.0
    %2123 = vmatmul.mubr.f32.gmra.mrb[0].mxu0 %v2035
    %v2124 = vpop.f32.mrb[0].mxu0
    %v2125 = vadd.f32 0.0, %v2124
    %v2126 = vpop.f32.mrb[0].mxu0
    %2127 = vmatprep.mubr.f32.mxu0 0.0
    %2128 = vmatmul.mubr.f32.gmra.mrb[0].mxu0 %v2038
    %v2129 = vpop.f32.mrb[0].mxu0
    %v2130 = vadd.f32 0.0, %v2129
    %v2131 = vpop.f32.mrb[0].mxu0
    %2132 = vmatprep.mubr.f32.mxu0 0.0
    %2133 = vmatmul.mubr.f32.gmra.mrb[0].mxu0 %v2041
    %v2134 = vpop.f32.mrb[0].mxu0
    %v2135 = vadd.f32 0.0, %v2134
    %v2136 = vpop.f32.mrb[0].mxu0
    %2137 = vmatprep.mubr.f32.mxu0 0.0
    %2138 = vmatmul.mubr.f32.gmra.mrb[0].mxu0 %v2044
    %v2139 = vpop.f32.mrb[0].mxu0
    %v2140 = vadd.f32 0.0, %v2139
    %v2141 = vpop.f32.mrb[0].mxu0
    %2142 = vmatprep.mubr.f32.mxu0 0.0
    %2143 = vmatmul.mubr.f32.gmra.mrb[0].mxu0 %v2047
    %v2144 = vpop.f32.mrb[0].mxu0
    %v2145 = vadd.f32 0.0, %v2144
    %v2146 = vpop.f32.mrb[0].mxu0
    %2147 = vmatprep.mubr.f32.mxu0 0.0
    %2148 = vmatmul.mubr.f32.gmra.mrb[0].mxu0 %v2050
    %v2149 = vpop.f32.mrb[0].mxu0
    %v2150 = vadd.f32 0.0, %v2149
    %v2151 = vpop.f32.mrb[0].mxu0
    %2152 = vmatprep.mubr.f32.mxu0 0.0
    %2153 = vmatmul.mubr.f32.gmra.mrb[0].mxu0 %v2053
    %v2154 = vpop.f32.mrb[0].mxu0
    %v2155 = vadd.f32 0.0, %v2154
    %v2156 = vpop.f32.mrb[0].mxu0
    %2157 = vmatprep.mubr.f32.mxu0 0.0
    %2158 = vmatmul.mubr.f32.gmra.mrb[0].mxu0 %v2056
    %v2159 = vpop.f32.mrb[0].mxu0
    %v2160 = vadd.f32 0.0, %v2159
    %v2161 = vpop.f32.mrb[0].mxu0
    %2162 = vdwg.mxu0
    %v2164 = vsel %vm522, %v1852, 0
    %v2167 = vsel %vm522, %v1857, 0
    %2169 = vmatprep.subr.mxu0 0.0
    %2170 = vmatpush1.xpose.msra.mxu0 %v2164
    %2171 = vmatprep.subr.mxu0 0.0
    %2172 = vmatpush1.xpose.msra.mxu0 %v2167
    %2173 = vmatprep.subr.mxu0 0.0
    %2174 = vmatpush1.xpose.msra.mxu0 0.0
    %2175 = vmatprep.subr.mxu0 0.0
    %2176 = vmatpush1.xpose.msra.mxu0 0.0
    %2177 = vmatprep.subr.mxu0 0.0
    %2178 = vmatpush1.xpose.msra.mxu0 0.0
    %2179 = vmatprep.subr.mxu0 0.0
    %2180 = vmatpush1.xpose.msra.mxu0 0.0
    %2181 = vmatprep.subr.mxu0 0.0
    %2182 = vmatpush1.xpose.msra.mxu0 0.0
    %2183 = vmatprep.subr.mxu0 0.0
    %2184 = vmatpush1.xpose.msra.mxu0 0.0
    %2185 = vmatprep.subr.mxu0 0.0
    %2186 = vmatpush1.xpose.msra.mxu0 0.0
    %2187 = vmatprep.subr.mxu0 0.0
    %2188 = vmatpush1.xpose.msra.mxu0 0.0
    %2189 = vmatprep.subr.mxu0 0.0
    %2190 = vmatpush1.xpose.msra.mxu0 0.0
    %2191 = vmatprep.subr.mxu0 0.0
    %2192 = vmatpush1.xpose.msra.mxu0 0.0
    %2193 = vmatprep.subr.mxu0 0.0
    %2194 = vmatpush1.xpose.msra.mxu0 0.0
    %2195 = vmatprep.subr.mxu0 0.0
    %2196 = vmatpush1.xpose.msra.mxu0 0.0
    %2197 = vmatprep.subr.mxu0 0.0
    %2198 = vmatpush1.xpose.msra.mxu0 0.0
    %2199 = vmatprep.subr.mxu0 0.0
    %2200 = vmatpush1.xpose.msra.mxu0 0.0
    %2201 = vmatprep.subr.mxu0 0.0
    %2202 = vmatpush1.xpose.msra.mxu0 0.0
    %2203 = vmatprep.subr.mxu0 0.0
    %2204 = vmatpush1.xpose.msra.mxu0 0.0
    %2205 = vmatprep.subr.mxu0 0.0
    %2206 = vmatpush1.xpose.msra.mxu0 0.0
    %2207 = vmatprep.subr.mxu0 0.0
    %2208 = vmatpush1.xpose.msra.mxu0 0.0
    %2209 = vmatprep.subr.mxu0 0.0
    %2210 = vmatpush1.xpose.msra.mxu0 0.0
    %2211 = vmatprep.subr.mxu0 0.0
    %2212 = vmatpush1.xpose.msra.mxu0 0.0
    %2213 = vmatprep.subr.mxu0 0.0
    %2214 = vmatpush1.xpose.msra.mxu0 0.0
    %2215 = vmatprep.subr.mxu0 0.0
    %2216 = vmatpush1.xpose.msra.mxu0 0.0
    %2217 = vmatprep.subr.mxu0 0.0
    %2218 = vmatpush1.xpose.msra.mxu0 0.0
    %2219 = vmatprep.subr.mxu0 0.0
    %2220 = vmatpush1.xpose.msra.mxu0 0.0
    %2221 = vmatprep.subr.mxu0 0.0
    %2222 = vmatpush1.xpose.msra.mxu0 0.0
    %2223 = vmatprep.subr.mxu0 0.0
    %2224 = vmatpush1.xpose.msra.mxu0 0.0
    %2225 = vmatprep.subr.mxu0 0.0
    %2226 = vmatpush1.xpose.msra.mxu0 0.0
    %2227 = vmatprep.subr.mxu0 0.0
    %2228 = vmatpush1.xpose.msra.mxu0 0.0
    %2229 = vmatprep.subr.mxu0 0.0
    %2230 = vmatpush1.xpose.msra.mxu0 0.0
    %2231 = vmatprep.subr.mxu0 0.0
    %2232 = vmatpush1.xpose.msra.mxu0 0.0
    %2233 = vmatprep.mubr.f32.mxu0 0.0
    %2234 = vmatmul.mubr.f32.gmra.mrb[0].mxu0 %v1881
    %v2235 = vpop.f32.mrb[0].mxu0
    %v2236 = vadd.f32 %v2125, %v2235
    %v2237 = vpop.f32.mrb[0].mxu0
    %2238 = vmatprep.mubr.f32.mxu0 0.0
    %2239 = vmatmul.mubr.f32.gmra.mrb[0].mxu0 %v1884
    %v2240 = vpop.f32.mrb[0].mxu0
    %v2241 = vadd.f32 %v2130, %v2240
    %v2242 = vpop.f32.mrb[0].mxu0
    %2243 = vmatprep.mubr.f32.mxu0 0.0
    %2244 = vmatmul.mubr.f32.gmra.mrb[0].mxu0 %v1887
    %v2245 = vpop.f32.mrb[0].mxu0
    %v2246 = vadd.f32 %v2135, %v2245
    %v2247 = vpop.f32.mrb[0].mxu0
    %2248 = vmatprep.mubr.f32.mxu0 0.0
    %2249 = vmatmul.mubr.f32.gmra.mrb[0].mxu0 %v1890
    %v2250 = vpop.f32.mrb[0].mxu0
    %v2251 = vadd.f32 %v2140, %v2250
    %v2252 = vpop.f32.mrb[0].mxu0
    %2253 = vmatprep.mubr.f32.mxu0 0.0
    %2254 = vmatmul.mubr.f32.gmra.mrb[0].mxu0 %v1893
    %v2255 = vpop.f32.mrb[0].mxu0
    %v2256 = vadd.f32 %v2145, %v2255
    %v2257 = vpop.f32.mrb[0].mxu0
    %2258 = vmatprep.mubr.f32.mxu0 0.0
    %2259 = vmatmul.mubr.f32.gmra.mrb[0].mxu0 %v1896
    %v2260 = vpop.f32.mrb[0].mxu0
    %v2261 = vadd.f32 %v2150, %v2260
    %v2262 = vpop.f32.mrb[0].mxu0
    %2263 = vmatprep.mubr.f32.mxu0 0.0
    %2264 = vmatmul.mubr.f32.gmra.mrb[0].mxu0 %v1899
    %v2265 = vpop.f32.mrb[0].mxu0
    %v2266 = vadd.f32 %v2155, %v2265
    %v2267 = vpop.f32.mrb[0].mxu0
    %2268 = vmatprep.mubr.f32.mxu0 0.0
    %2269 = vmatmul.mubr.f32.gmra.mrb[0].mxu0 %v1902
    %v2270 = vpop.f32.mrb[0].mxu0
    %v2271 = vadd.f32 %v2160, %v2270
    %v2272 = vpop.f32.mrb[0].mxu0
    %2273 = vdwg.mxu0
    %v2274 = vld [vmem:[%s7] sm:$0xff]
    %v2275 = vld [vmem:[%s7 + $0x8] sm:$0xff]
    %v2276 = vld [vmem:[%s7 + $0x10] sm:$0xff]
    %v2277 = vld [vmem:[%s7 + $0x18] sm:$0xff]
    %v2278 = vld [vmem:[%s7 + $0x20] sm:$0xff]
    %v2279 = vld [vmem:[%s7 + $0x28] sm:$0xff]
    %v2280 = vld [vmem:[%s7 + $0x30] sm:$0xff]
    %v2281 = vld [vmem:[%s7 + $0x38] sm:$0xff]
    %v2282 = vadd.f32 %v2236, %v2274
    %v2283 = vadd.f32 %v2241, %v2275
    %v2284 = vadd.f32 %v2246, %v2276
    %v2285 = vadd.f32 %v2251, %v2277
    %v2286 = vadd.f32 %v2256, %v2278
    %v2287 = vadd.f32 %v2261, %v2279
    %v2288 = vadd.f32 %v2266, %v2280
    %v2289 = vadd.f32 %v2271, %v2281
    %v2290 = vsel %vm1039, %v2282, -inf
    %2291 = vmax.xlane.f32.xlu0 %v2290
    %v2292 = vpop.xlane.xlu0 %2291
    %v2293 = vsel %vm1039, %v2283, -inf
    %2294 = vmax.xlane.f32.xlu0 %v2293
    %v2295 = vpop.xlane.xlu0 %2294
    %v2296 = vsel %vm1039, %v2284, -inf
    %2297 = vmax.xlane.f32.xlu0 %v2296
    %v2298 = vpop.xlane.xlu0 %2297
    %v2299 = vsel %vm1039, %v2285, -inf
    %2300 = vmax.xlane.f32.xlu0 %v2299
    %v2301 = vpop.xlane.xlu0 %2300
    %v2302 = vsel %vm1039, %v2286, -inf
    %2303 = vmax.xlane.f32.xlu0 %v2302
    %v2304 = vpop.xlane.xlu0 %2303
    %v2305 = vsel %vm1039, %v2287, -inf
    %2306 = vmax.xlane.f32.xlu0 %v2305
    %v2307 = vpop.xlane.xlu0 %2306
    %v2308 = vsel %vm1039, %v2288, -inf
    %2309 = vmax.xlane.f32.xlu0 %v2308
    %v2310 = vpop.xlane.xlu0 %2309
    %v2311 = vsel %vm1039, %v2289, -inf
    %2312 = vmax.xlane.f32.xlu0 %v2311
    %v2313 = vpop.xlane.xlu0 %2312
    %v2314 = vsub.f32 %v2282, %v2292
    %v2315 = vsub.f32 %v2283, %v2295
    %v2316 = vsub.f32 %v2284, %v2298
    %v2317 = vsub.f32 %v2285, %v2301
    %v2318 = vsub.f32 %v2286, %v2304
    %v2319 = vsub.f32 %v2287, %v2307
    %v2320 = vsub.f32 %v2288, %v2310
    %v2321 = vsub.f32 %v2289, %v2313
    %v2322 = vmul.f32 %v2314, 1.442695
    %v2323 = vpow.pop %v2322
    %v2324 = vmul.f32 %v2315, 1.442695
    %v2325 = vpow.pop %v2324
    %v2326 = vmul.f32 %v2316, 1.442695
    %v2327 = vpow.pop %v2326
    %v2328 = vmul.f32 %v2317, 1.442695
    %v2329 = vpow.pop %v2328
    %v2330 = vmul.f32 %v2318, 1.442695
    %v2331 = vpow.pop %v2330
    %v2332 = vmul.f32 %v2319, 1.442695
    %v2333 = vpow.pop %v2332
    %v2334 = vmul.f32 %v2320, 1.442695
    %v2335 = vpow.pop %v2334
    %v2336 = vmul.f32 %v2321, 1.442695
    %v2337 = vpow.pop %v2336
    %v2338 = vsel %vm1039, %v2323, 0.0
    %2339 = vadd.xlane.f32.xlu0 %v2338
    %v2340 = vpop.xlane.xlu0 %2339
    %v2341 = vsel %vm1039, %v2325, 0.0
    %2342 = vadd.xlane.f32.xlu0 %v2341
    %v2343 = vpop.xlane.xlu0 %2342
    %v2344 = vsel %vm1039, %v2327, 0.0
    %2345 = vadd.xlane.f32.xlu0 %v2344
    %v2346 = vpop.xlane.xlu0 %2345
    %v2347 = vsel %vm1039, %v2329, 0.0
    %2348 = vadd.xlane.f32.xlu0 %v2347
    %v2349 = vpop.xlane.xlu0 %2348
    %v2350 = vsel %vm1039, %v2331, 0.0
    %2351 = vadd.xlane.f32.xlu0 %v2350
    %v2352 = vpop.xlane.xlu0 %2351
    %v2353 = vsel %vm1039, %v2333, 0.0
    %2354 = vadd.xlane.f32.xlu0 %v2353
    %v2355 = vpop.xlane.xlu0 %2354
    %v2356 = vsel %vm1039, %v2335, 0.0
    %2357 = vadd.xlane.f32.xlu0 %v2356
    %v2358 = vpop.xlane.xlu0 %2357
    %v2359 = vsel %vm1039, %v2337, 0.0
    %2360 = vadd.xlane.f32.xlu0 %v2359
    %v2361 = vpop.xlane.xlu0 %2360
    %v2362 = vrcp.pop %v2340
    %v2363 = vrcp.pop %v2343
    %v2364 = vrcp.pop %v2346
    %v2365 = vrcp.pop %v2349
    %v2366 = vrcp.pop %v2352
    %v2367 = vrcp.pop %v2355
    %v2368 = vrcp.pop %v2358
    %v2369 = vrcp.pop %v2361
    %v2370 = vmul.f32 %v2323, %v2362
    %v2371 = vmul.f32 %v2325, %v2363
    %v2372 = vmul.f32 %v2327, %v2364
    %v2373 = vmul.f32 %v2329, %v2365
    %v2374 = vmul.f32 %v2331, %v2366
    %v2375 = vmul.f32 %v2333, %v2367
    %v2376 = vmul.f32 %v2335, %v2368
    %v2377 = vmul.f32 %v2337, %v2369
    %2378 = vrot.lane.b32.xlu0 %v1852, 96
    %v2379 = vpop.permute.xlu0 %2378
    %2380 = vrot.lane.b32.xlu0 %v1857, 96
    %v2381 = vpop.permute.xlu0 %2380
    %v2385 = vsel %vm1039, %v2370, 0
    %v2388 = vsel %vm1039, %v2371, 0
    %v2391 = vsel %vm1039, %v2372, 0
    %v2394 = vsel %vm1039, %v2373, 0
    %v2397 = vsel %vm1039, %v2374, 0
    %v2400 = vsel %vm1039, %v2375, 0
    %v2403 = vsel %vm1039, %v2376, 0
    %v2406 = vsel %vm1039, %v2377, 0
    %2408 = vmatprep.subr.mxu0 0.0
    %2409 = vmatpush1.msra.mxu0 %v2379
    %2410 = vmatprep.subr.mxu0 0.0
    %2411 = vmatpush1.msra.mxu0 %v2381
    %2412 = vmatprep.subr.mxu0 0.0
    %2413 = vmatpush1.msra.mxu0 0.0
    %2414 = vmatprep.subr.mxu0 0.0
    %2415 = vmatpush1.msra.mxu0 0.0
    %2416 = vmatprep.subr.mxu0 0.0
    %2417 = vmatpush1.msra.mxu0 0.0
    %2418 = vmatprep.subr.mxu0 0.0
    %2419 = vmatpush1.msra.mxu0 0.0
    %2420 = vmatprep.subr.mxu0 0.0
    %2421 = vmatpush1.msra.mxu0 0.0
    %2422 = vmatprep.subr.mxu0 0.0
    %2423 = vmatpush1.msra.mxu0 0.0
    %2424 = vmatprep.subr.mxu0 0.0
    %2425 = vmatpush1.msra.mxu0 0.0
    %2426 = vmatprep.subr.mxu0 0.0
    %2427 = vmatpush1.msra.mxu0 0.0
    %2428 = vmatprep.subr.mxu0 0.0
    %2429 = vmatpush1.msra.mxu0 0.0
    %2430 = vmatprep.subr.mxu0 0.0
    %2431 = vmatpush1.msra.mxu0 0.0
    %2432 = vmatprep.subr.mxu0 0.0
    %2433 = vmatpush1.msra.mxu0 0.0
    %2434 = vmatprep.subr.mxu0 0.0
    %2435 = vmatpush1.msra.mxu0 0.0
    %2436 = vmatprep.subr.mxu0 0.0
    %2437 = vmatpush1.msra.mxu0 0.0
    %2438 = vmatprep.subr.mxu0 0.0
    %2439 = vmatpush1.msra.mxu0 0.0
    %2440 = vmatprep.subr.mxu0 0.0
    %2441 = vmatpush1.msra.mxu0 0.0
    %2442 = vmatprep.subr.mxu0 0.0
    %2443 = vmatpush1.msra.mxu0 0.0
    %2444 = vmatprep.subr.mxu0 0.0
    %2445 = vmatpush1.msra.mxu0 0.0
    %2446 = vmatprep.subr.mxu0 0.0
    %2447 = vmatpush1.msra.mxu0 0.0
    %2448 = vmatprep.subr.mxu0 0.0
    %2449 = vmatpush1.msra.mxu0 0.0
    %2450 = vmatprep.subr.mxu0 0.0
    %2451 = vmatpush1.msra.mxu0 0.0
    %2452 = vmatprep.subr.mxu0 0.0
    %2453 = vmatpush1.msra.mxu0 0.0
    %2454 = vmatprep.subr.mxu0 0.0
    %2455 = vmatpush1.msra.mxu0 0.0
    %2456 = vmatprep.subr.mxu0 0.0
    %2457 = vmatpush1.msra.mxu0 0.0
    %2458 = vmatprep.subr.mxu0 0.0
    %2459 = vmatpush1.msra.mxu0 0.0
    %2460 = vmatprep.subr.mxu0 0.0
    %2461 = vmatpush1.msra.mxu0 0.0
    %2462 = vmatprep.subr.mxu0 0.0
    %2463 = vmatpush1.msra.mxu0 0.0
    %2464 = vmatprep.subr.mxu0 0.0
    %2465 = vmatpush1.msra.mxu0 0.0
    %2466 = vmatprep.subr.mxu0 0.0
    %2467 = vmatpush1.msra.mxu0 0.0
    %2468 = vmatprep.subr.mxu0 0.0
    %2469 = vmatpush1.msra.mxu0 0.0
    %2470 = vmatprep.subr.mxu0 0.0
    %2471 = vmatpush1.msra.mxu0 0.0
    %2472 = vmatprep.mubr.f32.mxu0 0.0
    %2473 = vmatmul.mubr.f32.gmra.mrb[0].mxu0 %v2385
    %v2474 = vpop.f32.mrb[0].mxu0
    %v2475 = vadd.f32 0.0, %v2474
    %v2476 = vpop.f32.mrb[0].mxu0
    %2477 = vmatprep.mubr.f32.mxu0 0.0
    %2478 = vmatmul.mubr.f32.gmra.mrb[0].mxu0 %v2388
    %v2479 = vpop.f32.mrb[0].mxu0
    %v2480 = vadd.f32 0.0, %v2479
    %v2481 = vpop.f32.mrb[0].mxu0
    %2482 = vmatprep.mubr.f32.mxu0 0.0
    %2483 = vmatmul.mubr.f32.gmra.mrb[0].mxu0 %v2391
    %v2484 = vpop.f32.mrb[0].mxu0
    %v2485 = vadd.f32 0.0, %v2484
    %v2486 = vpop.f32.mrb[0].mxu0
    %2487 = vmatprep.mubr.f32.mxu0 0.0
    %2488 = vmatmul.mubr.f32.gmra.mrb[0].mxu0 %v2394
    %v2489 = vpop.f32.mrb[0].mxu0
    %v2490 = vadd.f32 0.0, %v2489
    %v2491 = vpop.f32.mrb[0].mxu0
    %2492 = vmatprep.mubr.f32.mxu0 0.0
    %2493 = vmatmul.mubr.f32.gmra.mrb[0].mxu0 %v2397
    %v2494 = vpop.f32.mrb[0].mxu0
    %v2495 = vadd.f32 0.0, %v2494
    %v2496 = vpop.f32.mrb[0].mxu0
    %2497 = vmatprep.mubr.f32.mxu0 0.0
    %2498 = vmatmul.mubr.f32.gmra.mrb[0].mxu0 %v2400
    %v2499 = vpop.f32.mrb[0].mxu0
    %v2500 = vadd.f32 0.0, %v2499
    %v2501 = vpop.f32.mrb[0].mxu0
    %2502 = vmatprep.mubr.f32.mxu0 0.0
    %2503 = vmatmul.mubr.f32.gmra.mrb[0].mxu0 %v2403
    %v2504 = vpop.f32.mrb[0].mxu0
    %v2505 = vadd.f32 0.0, %v2504
    %v2506 = vpop.f32.mrb[0].mxu0
    %2507 = vmatprep.mubr.f32.mxu0 0.0
    %2508 = vmatmul.mubr.f32.gmra.mrb[0].mxu0 %v2406
    %v2509 = vpop.f32.mrb[0].mxu0
    %v2510 = vadd.f32 0.0, %v2509
    %v2511 = vpop.f32.mrb[0].mxu0
    %2512 = vdwg.mxu0
    %v2513 = vmul.f32 %v2475, %v1860
    %v2514 = vmul.f32 %v2480, %v1861
    %v2515 = vmul.f32 %v2485, %v1862
    %v2516 = vmul.f32 %v2490, %v1863
    %v2517 = vmul.f32 %v2495, %v1864
    %v2518 = vmul.f32 %v2500, %v1865
    %v2519 = vmul.f32 %v2505, %v1866
    %v2520 = vmul.f32 %v2510, %v1867
    %v2521 = vadd.f32 %v2513, %v2515
    %v2522 = vadd.f32 %v2514, %v2516
    %v2523 = vadd.f32 %v2521, %v2517
    %v2524 = vadd.f32 %v2522, %v2518
    %v2525 = vadd.f32 %v2523, %v2519
    %v2526 = vadd.f32 %v2524, %v2520
    %v2527 = vld [vmem:[%s127] sm:$0xff]
    %v2528 = vld [vmem:[%s127 + $0x8] sm:$0xff]
    %2529 = vmatprep.subr.mxu0 0.0
    %2530 = vmatpush1.msra.mxu0 %v2527
    %2531 = vmatprep.subr.mxu0 0.0
    %2532 = vmatpush1.msra.mxu0 %v2528
    %2533 = vmatprep.subr.mxu0 0.0
    %2534 = vmatpush1.msra.mxu0 0.0
    %2535 = vmatprep.subr.mxu0 0.0
    %2536 = vmatpush1.msra.mxu0 0.0
    %2537 = vmatprep.subr.mxu0 0.0
    %2538 = vmatpush1.msra.mxu0 0.0
    %2539 = vmatprep.subr.mxu0 0.0
    %2540 = vmatpush1.msra.mxu0 0.0
    %2541 = vmatprep.subr.mxu0 0.0
    %2542 = vmatpush1.msra.mxu0 0.0
    %2543 = vmatprep.subr.mxu0 0.0
    %2544 = vmatpush1.msra.mxu0 0.0
    %2545 = vmatprep.subr.mxu0 0.0
    %2546 = vmatpush1.msra.mxu0 0.0
    %2547 = vmatprep.subr.mxu0 0.0
    %2548 = vmatpush1.msra.mxu0 0.0
    %2549 = vmatprep.subr.mxu0 0.0
    %2550 = vmatpush1.msra.mxu0 0.0
    %2551 = vmatprep.subr.mxu0 0.0
    %2552 = vmatpush1.msra.mxu0 0.0
    %2553 = vmatprep.subr.mxu0 0.0
    %2554 = vmatpush1.msra.mxu0 0.0
    %2555 = vmatprep.subr.mxu0 0.0
    %2556 = vmatpush1.msra.mxu0 0.0
    %2557 = vmatprep.subr.mxu0 0.0
    %2558 = vmatpush1.msra.mxu0 0.0
    %2559 = vmatprep.subr.mxu0 0.0
    %2560 = vmatpush1.msra.mxu0 0.0
    %2561 = vmatprep.subr.mxu0 0.0
    %2562 = vmatpush1.msra.mxu0 0.0
    %2563 = vmatprep.subr.mxu0 0.0
    %2564 = vmatpush1.msra.mxu0 0.0
    %2565 = vmatprep.subr.mxu0 0.0
    %2566 = vmatpush1.msra.mxu0 0.0
    %2567 = vmatprep.subr.mxu0 0.0
    %2568 = vmatpush1.msra.mxu0 0.0
    %2569 = vmatprep.subr.mxu0 0.0
    %2570 = vmatpush1.msra.mxu0 0.0
    %2571 = vmatprep.subr.mxu0 0.0
    %2572 = vmatpush1.msra.mxu0 0.0
    %2573 = vmatprep.subr.mxu0 0.0
    %2574 = vmatpush1.msra.mxu0 0.0
    %2575 = vmatprep.subr.mxu0 0.0
    %2576 = vmatpush1.msra.mxu0 0.0
    %2577 = vmatprep.subr.mxu0 0.0
    %2578 = vmatpush1.msra.mxu0 0.0
    %2579 = vmatprep.subr.mxu0 0.0
    %2580 = vmatpush1.msra.mxu0 0.0
    %2581 = vmatprep.subr.mxu0 0.0
    %2582 = vmatpush1.msra.mxu0 0.0
    %2583 = vmatprep.subr.mxu0 0.0
    %2584 = vmatpush1.msra.mxu0 0.0
    %2585 = vmatprep.subr.mxu0 0.0
    %2586 = vmatpush1.msra.mxu0 0.0
    %2587 = vmatprep.subr.mxu0 0.0
    %2588 = vmatpush1.msra.mxu0 0.0
    %2589 = vmatprep.subr.mxu0 0.0
    %2590 = vmatpush1.msra.mxu0 0.0
    %2591 = vmatprep.subr.mxu0 0.0
    %2592 = vmatpush1.msra.mxu0 0.0
    %2593 = vmatprep.mubr.f32.mxu0 0.0
    %2594 = vmatmul.mubr.f32.gmra.mrb[0].mxu0 %v2385
    %v2595 = vpop.f32.mrb[0].mxu0
    %v2596 = vadd.f32 0.0, %v2595
    %v2597 = vpop.f32.mrb[0].mxu0
    %2598 = vmatprep.mubr.f32.mxu0 0.0
    %2599 = vmatmul.mubr.f32.gmra.mrb[0].mxu0 %v2388
    %v2600 = vpop.f32.mrb[0].mxu0
    %v2601 = vadd.f32 0.0, %v2600
    %v2602 = vpop.f32.mrb[0].mxu0
    %2603 = vmatprep.mubr.f32.mxu0 0.0
    %2604 = vmatmul.mubr.f32.gmra.mrb[0].mxu0 %v2391
    %v2605 = vpop.f32.mrb[0].mxu0
    %v2606 = vadd.f32 0.0, %v2605
    %v2607 = vpop.f32.mrb[0].mxu0
    %2608 = vmatprep.mubr.f32.mxu0 0.0
    %2609 = vmatmul.mubr.f32.gmra.mrb[0].mxu0 %v2394
    %v2610 = vpop.f32.mrb[0].mxu0
    %v2611 = vadd.f32 0.0, %v2610
    %v2612 = vpop.f32.mrb[0].mxu0
    %2613 = vmatprep.mubr.f32.mxu0 0.0
    %2614 = vmatmul.mubr.f32.gmra.mrb[0].mxu0 %v2397
    %v2615 = vpop.f32.mrb[0].mxu0
    %v2616 = vadd.f32 0.0, %v2615
    %v2617 = vpop.f32.mrb[0].mxu0
    %2618 = vmatprep.mubr.f32.mxu0 0.0
    %2619 = vmatmul.mubr.f32.gmra.mrb[0].mxu0 %v2400
    %v2620 = vpop.f32.mrb[0].mxu0
    %v2621 = vadd.f32 0.0, %v2620
    %v2622 = vpop.f32.mrb[0].mxu0
    %2623 = vmatprep.mubr.f32.mxu0 0.0
    %2624 = vmatmul.mubr.f32.gmra.mrb[0].mxu0 %v2403
    %v2625 = vpop.f32.mrb[0].mxu0
    %v2626 = vadd.f32 0.0, %v2625
    %v2627 = vpop.f32.mrb[0].mxu0
    %2628 = vmatprep.mubr.f32.mxu0 0.0
    %2629 = vmatmul.mubr.f32.gmra.mrb[0].mxu0 %v2406
    %v2630 = vpop.f32.mrb[0].mxu0
    %v2631 = vadd.f32 0.0, %v2630
    %v2632 = vpop.f32.mrb[0].mxu0
    %2633 = vdwg.mxu0
    %v2634 = vld [vmem:[%s123] sm:$0xff]
    %v2635 = vld [vmem:[%s123 + $0x8] sm:$0xff]
    %v2636 = vld [vmem:[%s123 + $0x10] sm:$0xff]
    %v2637 = vld [vmem:[%s123 + $0x18] sm:$0xff]
    %v2638 = vld [vmem:[%s123 + $0x20] sm:$0xff]
    %v2639 = vld [vmem:[%s123 + $0x28] sm:$0xff]
    %v2640 = vld [vmem:[%s123 + $0x30] sm:$0xff]
    %v2641 = vld [vmem:[%s123 + $0x38] sm:$0xff]
    %v2642 = vmul.f32 %v2596, %v2634
    %v2643 = vmul.f32 %v2601, %v2635
    %v2644 = vmul.f32 %v2606, %v2636
    %v2645 = vmul.f32 %v2611, %v2637
    %v2646 = vmul.f32 %v2616, %v2638
    %v2647 = vmul.f32 %v2621, %v2639
    %v2648 = vmul.f32 %v2626, %v2640
    %v2649 = vmul.f32 %v2631, %v2641
    %v2650 = vld [vmem:[%s21] sm:$0xff]
    %v2651 = vld [vmem:[%s21 + $0x8] sm:$0xff]
    %v2652 = vld [vmem:[%s21 + $0x10] sm:$0xff]
    %v2653 = vld [vmem:[%s21 + $0x18] sm:$0xff]
    %v2654 = vld [vmem:[%s21 + $0x20] sm:$0xff]
    %v2655 = vld [vmem:[%s21 + $0x28] sm:$0xff]
    %v2656 = vld [vmem:[%s21 + $0x30] sm:$0xff]
    %v2657 = vld [vmem:[%s21 + $0x38] sm:$0xff]
    %v2658 = vld [vmem:[%s21 + $0x40] sm:$0xff]
    %v2659 = vld [vmem:[%s21 + $0x48] sm:$0xff]
    %v2660 = vld [vmem:[%s21 + $0x50] sm:$0xff]
    %v2661 = vld [vmem:[%s21 + $0x58] sm:$0xff]
    %v2662 = vld [vmem:[%s21 + $0x60] sm:$0xff]
    %v2663 = vld [vmem:[%s21 + $0x68] sm:$0xff]
    %v2664 = vld [vmem:[%s21 + $0x70] sm:$0xff]
    %v2665 = vld [vmem:[%s21 + $0x78] sm:$0xff]
    %2666 = vmatprep.subr.mxu0 0.0
    %2667 = vmatpush1.msra.mxu0 %v2650
    %2668 = vmatprep.subr.mxu0 0.0
    %2669 = vmatpush1.msra.mxu0 %v2651
    %2670 = vmatprep.subr.mxu0 0.0
    %2671 = vmatpush1.msra.mxu0 %v2652
    %2672 = vmatprep.subr.mxu0 0.0
    %2673 = vmatpush1.msra.mxu0 %v2653
    %2674 = vmatprep.subr.mxu0 0.0
    %2675 = vmatpush1.msra.mxu0 %v2654
    %2676 = vmatprep.subr.mxu0 0.0
    %2677 = vmatpush1.msra.mxu0 %v2655
    %2678 = vmatprep.subr.mxu0 0.0
    %2679 = vmatpush1.msra.mxu0 %v2656
    %2680 = vmatprep.subr.mxu0 0.0
    %2681 = vmatpush1.msra.mxu0 %v2657
    %2682 = vmatprep.subr.mxu0 0.0
    %2683 = vmatpush1.msra.mxu0 %v2658
    %2684 = vmatprep.subr.mxu0 0.0
    %2685 = vmatpush1.msra.mxu0 %v2659
    %2686 = vmatprep.subr.mxu0 0.0
    %2687 = vmatpush1.msra.mxu0 %v2660
    %2688 = vmatprep.subr.mxu0 0.0
    %2689 = vmatpush1.msra.mxu0 %v2661
    %2690 = vmatprep.subr.mxu0 0.0
    %2691 = vmatpush1.msra.mxu0 %v2662
    %2692 = vmatprep.subr.mxu0 0.0
    %2693 = vmatpush1.msra.mxu0 %v2663
    %2694 = vmatprep.subr.mxu0 0.0
    %2695 = vmatpush1.msra.mxu0 %v2664
    %2696 = vmatprep.subr.mxu0 0.0
    %2697 = vmatpush1.msra.mxu0 %v2665
    %2698 = vmatprep.subr.mxu0 0.0
    %2699 = vmatpush1.msra.mxu0 0.0
    %2700 = vmatprep.subr.mxu0 0.0
    %2701 = vmatpush1.msra.mxu0 0.0
    %2702 = vmatprep.subr.mxu0 0.0
    %2703 = vmatpush1.msra.mxu0 0.0
    %2704 = vmatprep.subr.mxu0 0.0
    %2705 = vmatpush1.msra.mxu0 0.0
    %2706 = vmatprep.subr.mxu0 0.0
    %2707 = vmatpush1.msra.mxu0 0.0
    %2708 = vmatprep.subr.mxu0 0.0
    %2709 = vmatpush1.msra.mxu0 0.0
    %2710 = vmatprep.subr.mxu0 0.0
    %2711 = vmatpush1.msra.mxu0 0.0
    %2712 = vmatprep.subr.mxu0 0.0
    %2713 = vmatpush1.msra.mxu0 0.0
    %2714 = vmatprep.subr.mxu0 0.0
    %2715 = vmatpush1.msra.mxu0 0.0
    %2716 = vmatprep.subr.mxu0 0.0
    %2717 = vmatpush1.msra.mxu0 0.0
    %2718 = vmatprep.subr.mxu0 0.0
    %2719 = vmatpush1.msra.mxu0 0.0
    %2720 = vmatprep.subr.mxu0 0.0
    %2721 = vmatpush1.msra.mxu0 0.0
    %2722 = vmatprep.subr.mxu0 0.0
    %2723 = vmatpush1.msra.mxu0 0.0
    %2724 = vmatprep.subr.mxu0 0.0
    %2725 = vmatpush1.msra.mxu0 0.0
    %2726 = vmatprep.subr.mxu0 0.0
    %2727 = vmatpush1.msra.mxu0 0.0
    %2728 = vmatprep.subr.mxu0 0.0
    %2729 = vmatpush1.msra.mxu0 0.0
    %2730 = vmatprep.mubr.f32.mxu0 0.0
    %2731 = vmatmul.mubr.f32.gmra.mrb[0].mxu0 %v2642
    %v2732 = vpop.f32.mrb[0].mxu0
    %v2733 = vadd.f32 0.0, %v2732
    %v2734 = vpop.f32.mrb[0].mxu0
    %2735 = vmatprep.mubr.f32.mxu0 0.0
    %2736 = vmatmul.mubr.f32.gmra.mrb[0].mxu0 %v2643
    %v2737 = vpop.f32.mrb[0].mxu0
    %v2738 = vadd.f32 0.0, %v2737
    %v2739 = vpop.f32.mrb[0].mxu0
    %2740 = vmatprep.mubr.f32.mxu0 0.0
    %2741 = vmatmul.mubr.f32.gmra.mrb[0].mxu0 %v2644
    %v2742 = vpop.f32.mrb[0].mxu0
    %v2743 = vadd.f32 0.0, %v2742
    %v2744 = vpop.f32.mrb[0].mxu0
    %2745 = vmatprep.mubr.f32.mxu0 0.0
    %2746 = vmatmul.mubr.f32.gmra.mrb[0].mxu0 %v2645
    %v2747 = vpop.f32.mrb[0].mxu0
    %v2748 = vadd.f32 0.0, %v2747
    %v2749 = vpop.f32.mrb[0].mxu0
    %2750 = vmatprep.mubr.f32.mxu0 0.0
    %2751 = vmatmul.mubr.f32.gmra.mrb[0].mxu0 %v2646
    %v2752 = vpop.f32.mrb[0].mxu0
    %v2753 = vadd.f32 0.0, %v2752
    %v2754 = vpop.f32.mrb[0].mxu0
    %2755 = vmatprep.mubr.f32.mxu0 0.0
    %2756 = vmatmul.mubr.f32.gmra.mrb[0].mxu0 %v2647
    %v2757 = vpop.f32.mrb[0].mxu0
    %v2758 = vadd.f32 0.0, %v2757
    %v2759 = vpop.f32.mrb[0].mxu0
    %2760 = vmatprep.mubr.f32.mxu0 0.0
    %2761 = vmatmul.mubr.f32.gmra.mrb[0].mxu0 %v2648
    %v2762 = vpop.f32.mrb[0].mxu0
    %v2763 = vadd.f32 0.0, %v2762
    %v2764 = vpop.f32.mrb[0].mxu0
    %2765 = vmatprep.mubr.f32.mxu0 0.0
    %2766 = vmatmul.mubr.f32.gmra.mrb[0].mxu0 %v2649
    %v2767 = vpop.f32.mrb[0].mxu0
    %v2768 = vadd.f32 0.0, %v2767
    %v2769 = vpop.f32.mrb[0].mxu0
    %2770 = vdwg.mxu0
    %v2771 = vmul.f32 %v2733, %v1860
    %v2772 = vmul.f32 %v2738, %v1861
    %v2773 = vmul.f32 %v2743, %v1862
    %v2774 = vmul.f32 %v2748, %v1863
    %v2775 = vmul.f32 %v2753, %v1864
    %v2776 = vmul.f32 %v2758, %v1865
    %v2777 = vmul.f32 %v2763, %v1866
    %v2778 = vmul.f32 %v2768, %v1867
    %v2779 = vadd.f32 %v2771, %v2773
    %v2780 = vadd.f32 %v2772, %v2774
    %v2781 = vadd.f32 %v2779, %v2775
    %v2782 = vadd.f32 %v2780, %v2776
    %v2783 = vadd.f32 %v2781, %v2777
    %v2784 = vadd.f32 %v2782, %v2778
    %v2785 = vadd.f32 %v2525, %v2783
    %v2786 = vadd.f32 %v2526, %v2784
    %v2787 = vld [vmem:[%s25] sm:$0xff]
    %v2788 = vld [vmem:[%s25 + $0x8] sm:$0xff]
    %v2789 = vld [vmem:[%s25 + $0x10] sm:$0xff]
    %v2790 = vld [vmem:[%s25 + $0x18] sm:$0xff]
    %v2791 = vld [vmem:[%s15] sm:$0x1]
    %v2793 = vlaneseq
    %v2794 = vshrl.u32 %v2793, 7
    %v2795 = vsub.s32 0, %v2794
    %v2796 = vrot.slane %v2791, %v2795
    %v2799 = vsel %vm522, %v2785, 0
    %v2802 = vsel %vm522, %v2786, 0
    %2804 = vmatprep.subr.mxu0 0.0
    %2805 = vmatpush1.msra.mxu0 %v2787
    %2806 = vmatprep.subr.mxu0 0.0
    %2807 = vmatpush1.msra.mxu0 %v2788
    %2808 = vmatprep.subr.mxu0 0.0
    %2809 = vmatpush1.msra.mxu0 %v2789
    %2810 = vmatprep.subr.mxu0 0.0
    %2811 = vmatpush1.msra.mxu0 %v2790
    %2812 = vmatprep.subr.mxu0 0.0
    %2813 = vmatpush1.msra.mxu0 0.0
    %2814 = vmatprep.subr.mxu0 0.0
    %2815 = vmatpush1.msra.mxu0 0.0
    %2816 = vmatprep.subr.mxu0 0.0
    %2817 = vmatpush1.msra.mxu0 0.0
    %2818 = vmatprep.subr.mxu0 0.0
    %2819 = vmatpush1.msra.mxu0 0.0
    %2820 = vmatprep.subr.mxu0 0.0
    %2821 = vmatpush1.msra.mxu0 0.0
    %2822 = vmatprep.subr.mxu0 0.0
    %2823 = vmatpush1.msra.mxu0 0.0
    %2824 = vmatprep.subr.mxu0 0.0
    %2825 = vmatpush1.msra.mxu0 0.0
    %2826 = vmatprep.subr.mxu0 0.0
    %2827 = vmatpush1.msra.mxu0 0.0
    %2828 = vmatprep.subr.mxu0 0.0
    %2829 = vmatpush1.msra.mxu0 0.0
    %2830 = vmatprep.subr.mxu0 0.0
    %2831 = vmatpush1.msra.mxu0 0.0
    %2832 = vmatprep.subr.mxu0 0.0
    %2833 = vmatpush1.msra.mxu0 0.0
    %2834 = vmatprep.subr.mxu0 0.0
    %2835 = vmatpush1.msra.mxu0 0.0
    %2836 = vmatprep.subr.mxu0 0.0
    %2837 = vmatpush1.msra.mxu0 0.0
    %2838 = vmatprep.subr.mxu0 0.0
    %2839 = vmatpush1.msra.mxu0 0.0
    %2840 = vmatprep.subr.mxu0 0.0
    %2841 = vmatpush1.msra.mxu0 0.0
    %2842 = vmatprep.subr.mxu0 0.0
    %2843 = vmatpush1.msra.mxu0 0.0
    %2844 = vmatprep.subr.mxu0 0.0
    %2845 = vmatpush1.msra.mxu0 0.0
    %2846 = vmatprep.subr.mxu0 0.0
    %2847 = vmatpush1.msra.mxu0 0.0
    %2848 = vmatprep.subr.mxu0 0.0
    %2849 = vmatpush1.msra.mxu0 0.0
    %2850 = vmatprep.subr.mxu0 0.0
    %2851 = vmatpush1.msra.mxu0 0.0
    %2852 = vmatprep.subr.mxu0 0.0
    %2853 = vmatpush1.msra.mxu0 0.0
    %2854 = vmatprep.subr.mxu0 0.0
    %2855 = vmatpush1.msra.mxu0 0.0
    %2856 = vmatprep.subr.mxu0 0.0
    %2857 = vmatpush1.msra.mxu0 0.0
    %2858 = vmatprep.subr.mxu0 0.0
    %2859 = vmatpush1.msra.mxu0 0.0
    %2860 = vmatprep.subr.mxu0 0.0
    %2861 = vmatpush1.msra.mxu0 0.0
    %2862 = vmatprep.subr.mxu0 0.0
    %2863 = vmatpush1.msra.mxu0 0.0
    %2864 = vmatprep.subr.mxu0 0.0
    %2865 = vmatpush1.msra.mxu0 0.0
    %2866 = vmatprep.subr.mxu0 0.0
    %2867 = vmatpush1.msra.mxu0 0.0
    %2868 = vmatprep.mubr.f32.mxu0 0.0
    %2869 = vmatmul.mubr.f32.gmra.mrb[0].mxu0 %v2799
    %v2870 = vpop.f32.mrb[0].mxu0
    %v2871 = vadd.f32 %v2796, %v2870
    %v2872 = vpop.f32.mrb[0].mxu0
    %2873 = vmatprep.mubr.f32.mxu0 0.0
    %2874 = vmatmul.mubr.f32.gmra.mrb[0].mxu0 %v2802
    %v2875 = vpop.f32.mrb[0].mxu0
    %v2876 = vadd.f32 %v2796, %v2875
    %v2877 = vpop.f32.mrb[0].mxu0
    %2878 = vdwg.mxu0
    %v2879 = vadd.f32 %v2871, %v1674
    %v2880 = vadd.f32 %v2876, %v1675
    %v2881 = vsel %vm522, %v2879, 0.0
    %2882 = vadd.xlane.f32.xlu0 %v2881
    %v2883 = vpop.xlane.xlu0 %2882
    %v2884 = vsel %vm522, %v2880, 0.0
    %2885 = vadd.xlane.f32.xlu0 %v2884
    %v2886 = vpop.xlane.xlu0 %2885
    %v2887 = vmul.f32 %v2883, %v1637
    %v2888 = vmul.f32 %v2886, %v1637
    %v2889 = vsub.f32 %v2879, %v2887
    %v2890 = vsub.f32 %v2880, %v2888
    %v2891 = vmul.f32 %v2889, %v2889
    %v2892 = vmul.f32 %v2890, %v2890
    %v2893 = vsel %vm522, %v2891, 0.0
    %2894 = vadd.xlane.f32.xlu0 %v2893
    %v2895 = vpop.xlane.xlu0 %2894
    %v2896 = vsel %vm522, %v2892, 0.0
    %2897 = vadd.xlane.f32.xlu0 %v2896
    %v2898 = vpop.xlane.xlu0 %2897
    %v2899 = vmul.f32 %v2895, %v1637
    %v2900 = vmul.f32 %v2898, %v1637
    %v2901 = vadd.f32 %v2899, 1e-05
    %v2902 = vadd.f32 %v2900, 1e-05
    %v2903 = vrsqrt.pop %v2901
    %v2904 = vrsqrt.pop %v2902
    %v2905 = vmul.f32 %v2889, %v2903
    %v2906 = vmul.f32 %v2890, %v2904
    %v2907 = vld [vmem:[#allocation7] sm:$0x1]
    %v2909 = vlaneseq
    %v2910 = vshrl.u32 %v2909, 7
    %v2911 = vsub.s32 0, %v2910
    %v2912 = vrot.slane %v2907, %v2911
    %v2914 = vmul.f32 %v2905, %v2912
    %v2915 = vmul.f32 %v2906, %v2912
    %v2916 = vld [vmem:[#allocation6] sm:$0x1]
    %v2918 = vlaneseq
    %v2919 = vshrl.u32 %v2918, 7
    %v2920 = vsub.s32 0, %v2919
    %v2921 = vrot.slane %v2916, %v2920
    %v2923 = vadd.f32 %v2914, %v2921
    %v2924 = vadd.f32 %v2915, %v2921
    %v2925 = vld [vmem:[%s33] sm:$0xff]
    %v2926 = vld [vmem:[%s33 + $0x8] sm:$0xff]
    %v2927 = vld [vmem:[%s33 + $0x10] sm:$0xff]
    %v2928 = vld [vmem:[%s33 + $0x18] sm:$0xff]
    %v2929 = vld [vmem:[%s29] sm:$0x1]
    %v2931 = vlaneseq
    %v2932 = vshrl.u32 %v2931, 7
    %v2933 = vsub.s32 0, %v2932
    %v2934 = vrot.slane %v2929, %v2933
    %v2937 = vsel %vm522, %v2923, 0
    %v2940 = vsel %vm522, %v2924, 0
    %2942 = vmatprep.subr.mxu0 0.0
    %2943 = vmatpush1.msra.mxu0 %v2925
    %2944 = vmatprep.subr.mxu0 0.0
    %2945 = vmatpush1.msra.mxu0 %v2926
    %2946 = vmatprep.subr.mxu0 0.0
    %2947 = vmatpush1.msra.mxu0 %v2927
    %2948 = vmatprep.subr.mxu0 0.0
    %2949 = vmatpush1.msra.mxu0 %v2928
    %2950 = vmatprep.subr.mxu0 0.0
    %2951 = vmatpush1.msra.mxu0 0.0
    %2952 = vmatprep.subr.mxu0 0.0
    %2953 = vmatpush1.msra.mxu0 0.0
    %2954 = vmatprep.subr.mxu0 0.0
    %2955 = vmatpush1.msra.mxu0 0.0
    %2956 = vmatprep.subr.mxu0 0.0
    %2957 = vmatpush1.msra.mxu0 0.0
    %2958 = vmatprep.subr.mxu0 0.0
    %2959 = vmatpush1.msra.mxu0 0.0
    %2960 = vmatprep.subr.mxu0 0.0
    %2961 = vmatpush1.msra.mxu0 0.0
    %2962 = vmatprep.subr.mxu0 0.0
    %2963 = vmatpush1.msra.mxu0 0.0
    %2964 = vmatprep.subr.mxu0 0.0
    %2965 = vmatpush1.msra.mxu0 0.0
    %2966 = vmatprep.subr.mxu0 0.0
    %2967 = vmatpush1.msra.mxu0 0.0
    %2968 = vmatprep.subr.mxu0 0.0
    %2969 = vmatpush1.msra.mxu0 0.0
    %2970 = vmatprep.subr.mxu0 0.0
    %2971 = vmatpush1.msra.mxu0 0.0
    %2972 = vmatprep.subr.mxu0 0.0
    %2973 = vmatpush1.msra.mxu0 0.0
    %2974 = vmatprep.subr.mxu0 0.0
    %2975 = vmatpush1.msra.mxu0 0.0
    %2976 = vmatprep.subr.mxu0 0.0
    %2977 = vmatpush1.msra.mxu0 0.0
    %2978 = vmatprep.subr.mxu0 0.0
    %2979 = vmatpush1.msra.mxu0 0.0
    %2980 = vmatprep.subr.mxu0 0.0
    %2981 = vmatpush1.msra.mxu0 0.0
    %2982 = vmatprep.subr.mxu0 0.0
    %2983 = vmatpush1.msra.mxu0 0.0
    %2984 = vmatprep.subr.mxu0 0.0
    %2985 = vmatpush1.msra.mxu0 0.0
    %2986 = vmatprep.subr.mxu0 0.0
    %2987 = vmatpush1.msra.mxu0 0.0
    %2988 = vmatprep.subr.mxu0 0.0
    %2989 = vmatpush1.msra.mxu0 0.0
    %2990 = vmatprep.subr.mxu0 0.0
    %2991 = vmatpush1.msra.mxu0 0.0
    %2992 = vmatprep.subr.mxu0 0.0
    %2993 = vmatpush1.msra.mxu0 0.0
    %2994 = vmatprep.subr.mxu0 0.0
    %2995 = vmatpush1.msra.mxu0 0.0
    %2996 = vmatprep.subr.mxu0 0.0
    %2997 = vmatpush1.msra.mxu0 0.0
    %2998 = vmatprep.subr.mxu0 0.0
    %2999 = vmatpush1.msra.mxu0 0.0
    %3000 = vmatprep.subr.mxu0 0.0
    %3001 = vmatpush1.msra.mxu0 0.0
    %3002 = vmatprep.subr.mxu0 0.0
    %3003 = vmatpush1.msra.mxu0 0.0
    %3004 = vmatprep.subr.mxu0 0.0
    %3005 = vmatpush1.msra.mxu0 0.0
    %3006 = vmatprep.mubr.f32.mxu0 0.0
    %3007 = vmatmul.mubr.f32.gmra.mrb[0].mxu0 %v2937
    %v3008 = vpop.f32.mrb[0].mxu0
    %v3009 = vadd.f32 %v2934, %v3008
    %v3010 = vpop.f32.mrb[0].mxu0
    %3011 = vmatprep.mubr.f32.mxu0 0.0
    %3012 = vmatmul.mubr.f32.gmra.mrb[0].mxu0 %v2940
    %v3013 = vpop.f32.mrb[0].mxu0
    %v3014 = vadd.f32 %v2934, %v3013
    %v3015 = vpop.f32.mrb[0].mxu0
    %3016 = vdwg.mxu0
    %v3017 = vmax.f32 %v3009, 0.0
    %v3018 = vmax.f32 %v3014, 0.0
    %v3019 = vld [vmem:[%s35] sm:$0xff]
    %v3020 = vld [vmem:[%s35 + $0x8] sm:$0xff]
    %v3021 = vld [vmem:[%s35 + $0x10] sm:$0xff]
    %v3022 = vld [vmem:[%s35 + $0x18] sm:$0xff]
    %v3023 = vld [vmem:[%s35 + $0x20] sm:$0xff]
    %v3024 = vld [vmem:[%s35 + $0x28] sm:$0xff]
    %v3025 = vld [vmem:[%s35 + $0x30] sm:$0xff]
    %v3026 = vld [vmem:[%s35 + $0x38] sm:$0xff]
    %v3027 = vld [vmem:[%s31] sm:$0x1]
    %v3029 = vlaneseq
    %v3030 = vshrl.u32 %v3029, 7
    %v3031 = vsub.s32 0, %v3030
    %v3032 = vrot.slane %v3027, %v3031
    %vm3034 = vcmask 523264
    %v3036 = vsel %vm3034, %v3017, 0
    %v3039 = vsel %vm3034, %v3018, 0
    %3041 = vmatprep.subr.mxu0 0.0
    %3042 = vmatpush1.msra.mxu0 %v3019
    %3043 = vmatprep.subr.mxu0 0.0
    %3044 = vmatpush1.msra.mxu0 %v3020
    %3045 = vmatprep.subr.mxu0 0.0
    %3046 = vmatpush1.msra.mxu0 %v3021
    %3047 = vmatprep.subr.mxu0 0.0
    %3048 = vmatpush1.msra.mxu0 %v3022
    %3049 = vmatprep.subr.mxu0 0.0
    %3050 = vmatpush1.msra.mxu0 %v3023
    %3051 = vmatprep.subr.mxu0 0.0
    %3052 = vmatpush1.msra.mxu0 %v3024
    %3053 = vmatprep.subr.mxu0 0.0
    %3054 = vmatpush1.msra.mxu0 %v3025
    %3055 = vmatprep.subr.mxu0 0.0
    %3056 = vmatpush1.msra.mxu0 %v3026
    %3057 = vmatprep.subr.mxu0 0.0
    %3058 = vmatpush1.msra.mxu0 0.0
    %3059 = vmatprep.subr.mxu0 0.0
    %3060 = vmatpush1.msra.mxu0 0.0
    %3061 = vmatprep.subr.mxu0 0.0
    %3062 = vmatpush1.msra.mxu0 0.0
    %3063 = vmatprep.subr.mxu0 0.0
    %3064 = vmatpush1.msra.mxu0 0.0
    %3065 = vmatprep.subr.mxu0 0.0
    %3066 = vmatpush1.msra.mxu0 0.0
    %3067 = vmatprep.subr.mxu0 0.0
    %3068 = vmatpush1.msra.mxu0 0.0
    %3069 = vmatprep.subr.mxu0 0.0
    %3070 = vmatpush1.msra.mxu0 0.0
    %3071 = vmatprep.subr.mxu0 0.0
    %3072 = vmatpush1.msra.mxu0 0.0
    %3073 = vmatprep.subr.mxu0 0.0
    %3074 = vmatpush1.msra.mxu0 0.0
    %3075 = vmatprep.subr.mxu0 0.0
    %3076 = vmatpush1.msra.mxu0 0.0
    %3077 = vmatprep.subr.mxu0 0.0
    %3078 = vmatpush1.msra.mxu0 0.0
    %3079 = vmatprep.subr.mxu0 0.0
    %3080 = vmatpush1.msra.mxu0 0.0
    %3081 = vmatprep.subr.mxu0 0.0
    %3082 = vmatpush1.msra.mxu0 0.0
    %3083 = vmatprep.subr.mxu0 0.0
    %3084 = vmatpush1.msra.mxu0 0.0
    %3085 = vmatprep.subr.mxu0 0.0
    %3086 = vmatpush1.msra.mxu0 0.0
    %3087 = vmatprep.subr.mxu0 0.0
    %3088 = vmatpush1.msra.mxu0 0.0
    %3089 = vmatprep.subr.mxu0 0.0
    %3090 = vmatpush1.msra.mxu0 0.0
    %3091 = vmatprep.subr.mxu0 0.0
    %3092 = vmatpush1.msra.mxu0 0.0
    %3093 = vmatprep.subr.mxu0 0.0
    %3094 = vmatpush1.msra.mxu0 0.0
    %3095 = vmatprep.subr.mxu0 0.0
    %3096 = vmatpush1.msra.mxu0 0.0
    %3097 = vmatprep.subr.mxu0 0.0
    %3098 = vmatpush1.msra.mxu0 0.0
    %3099 = vmatprep.subr.mxu0 0.0
    %3100 = vmatpush1.msra.mxu0 0.0
    %3101 = vmatprep.subr.mxu0 0.0
    %3102 = vmatpush1.msra.mxu0 0.0
    %3103 = vmatprep.subr.mxu0 0.0
    %3104 = vmatpush1.msra.mxu0 0.0
    %3105 = vmatprep.mubr.f32.mxu0 0.0
    %3106 = vmatmul.mubr.f32.gmra.mrb[0].mxu0 %v3036
    %v3107 = vpop.f32.mrb[0].mxu0
    %v3108 = vadd.f32 %v3032, %v3107
    %v3109 = vpop.f32.mrb[0].mxu0
    %3110 = vmatprep.mubr.f32.mxu0 0.0
    %3111 = vmatmul.mubr.f32.gmra.mrb[0].mxu0 %v3039
    %v3112 = vpop.f32.mrb[0].mxu0
    %v3113 = vadd.f32 %v3032, %v3112
    %v3114 = vpop.f32.mrb[0].mxu0
    %3115 = vdwg.mxu0
    %v3116 = vadd.f32 %v3108, %v2923
    %v3117 = vadd.f32 %v3113, %v2924
    %v3118 = vsel %vm522, %v3116, 0.0
    %3119 = vadd.xlane.f32.xlu0 %v3118
    %v3120 = vpop.xlane.xlu0 %3119
    %v3121 = vsel %vm522, %v3117, 0.0
    %3122 = vadd.xlane.f32.xlu0 %v3121
    %v3123 = vpop.xlane.xlu0 %3122
    %v3124 = vmul.f32 %v3120, %v1637
    %v3125 = vmul.f32 %v3123, %v1637
    %v3126 = vsub.f32 %v3116, %v3124
    %v3127 = vsub.f32 %v3117, %v3125
    %v3128 = vmul.f32 %v3126, %v3126
    %v3129 = vmul.f32 %v3127, %v3127
    %v3130 = vsel %vm522, %v3128, 0.0
    %3131 = vadd.xlane.f32.xlu0 %v3130
    %v3132 = vpop.xlane.xlu0 %3131
    %v3133 = vsel %vm522, %v3129, 0.0
    %3134 = vadd.xlane.f32.xlu0 %v3133
    %v3135 = vpop.xlane.xlu0 %3134
    %v3136 = vmul.f32 %v3132, %v1637
    %v3137 = vmul.f32 %v3135, %v1637
    %v3138 = vadd.f32 %v3136, 1e-05
    %v3139 = vadd.f32 %v3137, 1e-05
    %v3140 = vrsqrt.pop %v3138
    %v3141 = vrsqrt.pop %v3139
    %v3142 = vmul.f32 %v3126, %v3140
    %v3143 = vmul.f32 %v3127, %v3141
    %v3144 = vld [vmem:[#allocation10] sm:$0x1]
    %v3146 = vlaneseq
    %v3147 = vshrl.u32 %v3146, 7
    %v3148 = vsub.s32 0, %v3147
    %v3149 = vrot.slane %v3144, %v3148
    %v3151 = vmul.f32 %v3142, %v3149
    %v3152 = vmul.f32 %v3143, %v3149
    %v3153 = vld [vmem:[#allocation9] sm:$0x1]
    %v3155 = vlaneseq
    %v3156 = vshrl.u32 %v3155, 7
    %v3157 = vsub.s32 0, %v3156
    %v3158 = vrot.slane %v3153, %v3157
    %v3160 = vadd.f32 %v3151, %v3158
    %v3161 = vadd.f32 %v3152, %v3158
    %v3162 = vld [vmem:[%s107] sm:$0xff]
    %v3163 = vld [vmem:[%s107 + $0x8] sm:$0xff]
    %v3164 = vld [vmem:[%s107 + $0x10] sm:$0xff]
    %v3165 = vld [vmem:[%s107 + $0x18] sm:$0xff]
    %v3166 = vld [vmem:[#allocation33] sm:$0x1]
    %v3168 = vlaneseq
    %v3169 = vshrl.u32 %v3168, 7
    %v3170 = vsub.s32 0, %v3169
    %v3171 = vrot.slane %v3166, %v3170
    %v3174 = vsel %vm522, %v3160, 0
    %v3177 = vsel %vm522, %v3161, 0
    %3179 = vmatprep.subr.mxu0 0.0
    %3180 = vmatpush1.msra.mxu0 %v3162
    %3181 = vmatprep.subr.mxu0 0.0
    %3182 = vmatpush1.msra.mxu0 %v3163
    %3183 = vmatprep.subr.mxu0 0.0
    %3184 = vmatpush1.msra.mxu0 %v3164
    %3185 = vmatprep.subr.mxu0 0.0
    %3186 = vmatpush1.msra.mxu0 %v3165
    %3187 = vmatprep.subr.mxu0 0.0
    %3188 = vmatpush1.msra.mxu0 0.0
    %3189 = vmatprep.subr.mxu0 0.0
    %3190 = vmatpush1.msra.mxu0 0.0
    %3191 = vmatprep.subr.mxu0 0.0
    %3192 = vmatpush1.msra.mxu0 0.0
    %3193 = vmatprep.subr.mxu0 0.0
    %3194 = vmatpush1.msra.mxu0 0.0
    %3195 = vmatprep.subr.mxu0 0.0
    %3196 = vmatpush1.msra.mxu0 0.0
    %3197 = vmatprep.subr.mxu0 0.0
    %3198 = vmatpush1.msra.mxu0 0.0
    %3199 = vmatprep.subr.mxu0 0.0
    %3200 = vmatpush1.msra.mxu0 0.0
    %3201 = vmatprep.subr.mxu0 0.0
    %3202 = vmatpush1.msra.mxu0 0.0
    %3203 = vmatprep.subr.mxu0 0.0
    %3204 = vmatpush1.msra.mxu0 0.0
    %3205 = vmatprep.subr.mxu0 0.0
    %3206 = vmatpush1.msra.mxu0 0.0
    %3207 = vmatprep.subr.mxu0 0.0
    %3208 = vmatpush1.msra.mxu0 0.0
    %3209 = vmatprep.subr.mxu0 0.0
    %3210 = vmatpush1.msra.mxu0 0.0
    %3211 = vmatprep.subr.mxu0 0.0
    %3212 = vmatpush1.msra.mxu0 0.0
    %3213 = vmatprep.subr.mxu0 0.0
    %3214 = vmatpush1.msra.mxu0 0.0
    %3215 = vmatprep.subr.mxu0 0.0
    %3216 = vmatpush1.msra.mxu0 0.0
    %3217 = vmatprep.subr.mxu0 0.0
    %3218 = vmatpush1.msra.mxu0 0.0
    %3219 = vmatprep.subr.mxu0 0.0
    %3220 = vmatpush1.msra.mxu0 0.0
    %3221 = vmatprep.subr.mxu0 0.0
    %3222 = vmatpush1.msra.mxu0 0.0
    %3223 = vmatprep.subr.mxu0 0.0
    %3224 = vmatpush1.msra.mxu0 0.0
    %3225 = vmatprep.subr.mxu0 0.0
    %3226 = vmatpush1.msra.mxu0 0.0
    %3227 = vmatprep.subr.mxu0 0.0
    %3228 = vmatpush1.msra.mxu0 0.0
    %3229 = vmatprep.subr.mxu0 0.0
    %3230 = vmatpush1.msra.mxu0 0.0
    %3231 = vmatprep.subr.mxu0 0.0
    %3232 = vmatpush1.msra.mxu0 0.0
    %3233 = vmatprep.subr.mxu0 0.0
    %3234 = vmatpush1.msra.mxu0 0.0
    %3235 = vmatprep.subr.mxu0 0.0
    %3236 = vmatpush1.msra.mxu0 0.0
    %3237 = vmatprep.subr.mxu0 0.0
    %3238 = vmatpush1.msra.mxu0 0.0
    %3239 = vmatprep.subr.mxu0 0.0
    %3240 = vmatpush1.msra.mxu0 0.0
    %3241 = vmatprep.subr.mxu0 0.0
    %3242 = vmatpush1.msra.mxu0 0.0
    %3243 = vmatprep.mubr.f32.mxu0 0.0
    %3244 = vmatmul.mubr.f32.gmra.mrb[0].mxu0 %v3174
    %v3245 = vpop.f32.mrb[0].mxu0
    %v3246 = vadd.f32 %v3171, %v3245
    %v3247 = vpop.f32.mrb[0].mxu0
    %3248 = vmatprep.mubr.f32.mxu0 0.0
    %3249 = vmatmul.mubr.f32.gmra.mrb[0].mxu0 %v3177
    %v3250 = vpop.f32.mrb[0].mxu0
    %v3251 = vadd.f32 %v3171, %v3250
    %v3252 = vpop.f32.mrb[0].mxu0
    %3253 = vdwg.mxu0
    %v3254 = vmul.f32 %v3246, %v604
    %v3255 = vmul.f32 %v3251, %v605
    %v3256 = vmul.f32 %v3246, %v606
    %v3257 = vmul.f32 %v3251, %v607
    %v3258 = vmul.f32 %v3246, %v608
    %v3259 = vmul.f32 %v3251, %v609
    %v3260 = vmul.f32 %v3246, %v610
    %v3261 = vmul.f32 %v3251, %v611
    %v3262 = vld [vmem:[%s101] sm:$0xff]
    %v3263 = vld [vmem:[%s101 + $0x8] sm:$0xff]
    %v3264 = vld [vmem:[%s101 + $0x10] sm:$0xff]
    %v3265 = vld [vmem:[%s101 + $0x18] sm:$0xff]
    %v3267 = vsel %vm522, %v3254, 0
    %v3270 = vsel %vm522, %v3255, 0
    %v3273 = vsel %vm522, %v3256, 0
    %v3276 = vsel %vm522, %v3257, 0
    %v3279 = vsel %vm522, %v3258, 0
    %v3282 = vsel %vm522, %v3259, 0
    %v3285 = vsel %vm522, %v3260, 0
    %v3288 = vsel %vm522, %v3261, 0
    %3290 = vmatprep.subr.mxu0 0.0
    %3291 = vmatpush1.msra.mxu0 %v3262
    %3292 = vmatprep.subr.mxu0 0.0
    %3293 = vmatpush1.msra.mxu0 %v3263
    %3294 = vmatprep.subr.mxu0 0.0
    %3295 = vmatpush1.msra.mxu0 %v3264
    %3296 = vmatprep.subr.mxu0 0.0
    %3297 = vmatpush1.msra.mxu0 %v3265
    %3298 = vmatprep.subr.mxu0 0.0
    %3299 = vmatpush1.msra.mxu0 0.0
    %3300 = vmatprep.subr.mxu0 0.0
    %3301 = vmatpush1.msra.mxu0 0.0
    %3302 = vmatprep.subr.mxu0 0.0
    %3303 = vmatpush1.msra.mxu0 0.0
    %3304 = vmatprep.subr.mxu0 0.0
    %3305 = vmatpush1.msra.mxu0 0.0
    %3306 = vmatprep.subr.mxu0 0.0
    %3307 = vmatpush1.msra.mxu0 0.0
    %3308 = vmatprep.subr.mxu0 0.0
    %3309 = vmatpush1.msra.mxu0 0.0
    %3310 = vmatprep.subr.mxu0 0.0
    %3311 = vmatpush1.msra.mxu0 0.0
    %3312 = vmatprep.subr.mxu0 0.0
    %3313 = vmatpush1.msra.mxu0 0.0
    %3314 = vmatprep.subr.mxu0 0.0
    %3315 = vmatpush1.msra.mxu0 0.0
    %3316 = vmatprep.subr.mxu0 0.0
    %3317 = vmatpush1.msra.mxu0 0.0
    %3318 = vmatprep.subr.mxu0 0.0
    %3319 = vmatpush1.msra.mxu0 0.0
    %3320 = vmatprep.subr.mxu0 0.0
    %3321 = vmatpush1.msra.mxu0 0.0
    %3322 = vmatprep.subr.mxu0 0.0
    %3323 = vmatpush1.msra.mxu0 0.0
    %3324 = vmatprep.subr.mxu0 0.0
    %3325 = vmatpush1.msra.mxu0 0.0
    %3326 = vmatprep.subr.mxu0 0.0
    %3327 = vmatpush1.msra.mxu0 0.0
    %3328 = vmatprep.subr.mxu0 0.0
    %3329 = vmatpush1.msra.mxu0 0.0
    %3330 = vmatprep.subr.mxu0 0.0
    %3331 = vmatpush1.msra.mxu0 0.0
    %3332 = vmatprep.subr.mxu0 0.0
    %3333 = vmatpush1.msra.mxu0 0.0
    %3334 = vmatprep.subr.mxu0 0.0
    %3335 = vmatpush1.msra.mxu0 0.0
    %3336 = vmatprep.subr.mxu0 0.0
    %3337 = vmatpush1.msra.mxu0 0.0
    %3338 = vmatprep.subr.mxu0 0.0
    %3339 = vmatpush1.msra.mxu0 0.0
    %3340 = vmatprep.subr.mxu0 0.0
    %3341 = vmatpush1.msra.mxu0 0.0
    %3342 = vmatprep.subr.mxu0 0.0
    %3343 = vmatpush1.msra.mxu0 0.0
    %3344 = vmatprep.subr.mxu0 0.0
    %3345 = vmatpush1.msra.mxu0 0.0
    %3346 = vmatprep.subr.mxu0 0.0
    %3347 = vmatpush1.msra.mxu0 0.0
    %3348 = vmatprep.subr.mxu0 0.0
    %3349 = vmatpush1.msra.mxu0 0.0
    %3350 = vmatprep.subr.mxu0 0.0
    %3351 = vmatpush1.msra.mxu0 0.0
    %3352 = vmatprep.subr.mxu0 0.0
    %3353 = vmatpush1.msra.mxu0 0.0
    %3354 = vmatprep.mubr.f32.mxu0 0.0
    %3355 = vmatmul.mubr.f32.gmra.mrb[0].mxu0 %v3267
    %v3356 = vpop.f32.mrb[0].mxu0
    %v3357 = vadd.f32 0.0, %v3356
    %v3358 = vpop.f32.mrb[0].mxu0
    %3359 = vmatprep.mubr.f32.mxu0 0.0
    %3360 = vmatmul.mubr.f32.gmra.mrb[0].mxu0 %v3270
    %v3361 = vpop.f32.mrb[0].mxu0
    %v3362 = vadd.f32 0.0, %v3361
    %v3363 = vpop.f32.mrb[0].mxu0
    %3364 = vmatprep.mubr.f32.mxu0 0.0
    %3365 = vmatmul.mubr.f32.gmra.mrb[0].mxu0 %v3273
    %v3366 = vpop.f32.mrb[0].mxu0
    %v3367 = vadd.f32 0.0, %v3366
    %v3368 = vpop.f32.mrb[0].mxu0
    %3369 = vmatprep.mubr.f32.mxu0 0.0
    %3370 = vmatmul.mubr.f32.gmra.mrb[0].mxu0 %v3276
    %v3371 = vpop.f32.mrb[0].mxu0
    %v3372 = vadd.f32 0.0, %v3371
    %v3373 = vpop.f32.mrb[0].mxu0
    %3374 = vmatprep.mubr.f32.mxu0 0.0
    %3375 = vmatmul.mubr.f32.gmra.mrb[0].mxu0 %v3279
    %v3376 = vpop.f32.mrb[0].mxu0
    %v3377 = vadd.f32 0.0, %v3376
    %v3378 = vpop.f32.mrb[0].mxu0
    %3379 = vmatprep.mubr.f32.mxu0 0.0
    %3380 = vmatmul.mubr.f32.gmra.mrb[0].mxu0 %v3282
    %v3381 = vpop.f32.mrb[0].mxu0
    %v3382 = vadd.f32 0.0, %v3381
    %v3383 = vpop.f32.mrb[0].mxu0
    %3384 = vmatprep.mubr.f32.mxu0 0.0
    %3385 = vmatmul.mubr.f32.gmra.mrb[0].mxu0 %v3285
    %v3386 = vpop.f32.mrb[0].mxu0
    %v3387 = vadd.f32 0.0, %v3386
    %v3388 = vpop.f32.mrb[0].mxu0
    %3389 = vmatprep.mubr.f32.mxu0 0.0
    %3390 = vmatmul.mubr.f32.gmra.mrb[0].mxu0 %v3288
    %v3391 = vpop.f32.mrb[0].mxu0
    %v3392 = vadd.f32 0.0, %v3391
    %v3393 = vpop.f32.mrb[0].mxu0
    %3394 = vdwg.mxu0
    %v3395 = vmul.f32 %v3357, %v753
    %v3396 = vmul.f32 %v3362, %v754
    %v3397 = vmul.f32 %v3367, %v755
    %v3398 = vmul.f32 %v3372, %v756
    %v3399 = vmul.f32 %v3377, %v757
    %v3400 = vmul.f32 %v3382, %v758
    %v3401 = vmul.f32 %v3387, %v759
    %v3402 = vmul.f32 %v3392, %v760
    %v3404 = vsel %vm778, %v3395, 0
    %v3407 = vsel %vm778, %v3396, 0
    %v3410 = vsel %vm778, %v3397, 0
    %v3413 = vsel %vm778, %v3398, 0
    %v3416 = vsel %vm778, %v3399, 0
    %v3419 = vsel %vm778, %v3400, 0
    %v3422 = vsel %vm778, %v3401, 0
    %v3425 = vsel %vm778, %v3402, 0
    %3427 = vmatprep.subr.mxu0 0.0
    %3428 = vmatpush1.msra.mxu0 %v769
    %3429 = vmatprep.subr.mxu0 0.0
    %3430 = vmatpush1.msra.mxu0 %v770
    %3431 = vmatprep.subr.mxu0 0.0
    %3432 = vmatpush1.msra.mxu0 %v771
    %3433 = vmatprep.subr.mxu0 0.0
    %3434 = vmatpush1.msra.mxu0 %v772
    %3435 = vmatprep.subr.mxu0 0.0
    %3436 = vmatpush1.msra.mxu0 %v773
    %3437 = vmatprep.subr.mxu0 0.0
    %3438 = vmatpush1.msra.mxu0 %v774
    %3439 = vmatprep.subr.mxu0 0.0
    %3440 = vmatpush1.msra.mxu0 %v775
    %3441 = vmatprep.subr.mxu0 0.0
    %3442 = vmatpush1.msra.mxu0 %v776
    %3443 = vmatprep.subr.mxu0 0.0
    %3444 = vmatpush1.msra.mxu0 %v777
    %3445 = vmatprep.subr.mxu0 0.0
    %3446 = vmatpush1.msra.mxu0 0.0
    %3447 = vmatprep.subr.mxu0 0.0
    %3448 = vmatpush1.msra.mxu0 0.0
    %3449 = vmatprep.subr.mxu0 0.0
    %3450 = vmatpush1.msra.mxu0 0.0
    %3451 = vmatprep.subr.mxu0 0.0
    %3452 = vmatpush1.msra.mxu0 0.0
    %3453 = vmatprep.subr.mxu0 0.0
    %3454 = vmatpush1.msra.mxu0 0.0
    %3455 = vmatprep.subr.mxu0 0.0
    %3456 = vmatpush1.msra.mxu0 0.0
    %3457 = vmatprep.subr.mxu0 0.0
    %3458 = vmatpush1.msra.mxu0 0.0
    %3459 = vmatprep.subr.mxu0 0.0
    %3460 = vmatpush1.msra.mxu0 0.0
    %3461 = vmatprep.subr.mxu0 0.0
    %3462 = vmatpush1.msra.mxu0 0.0
    %3463 = vmatprep.subr.mxu0 0.0
    %3464 = vmatpush1.msra.mxu0 0.0
    %3465 = vmatprep.subr.mxu0 0.0
    %3466 = vmatpush1.msra.mxu0 0.0
    %3467 = vmatprep.subr.mxu0 0.0
    %3468 = vmatpush1.msra.mxu0 0.0
    %3469 = vmatprep.subr.mxu0 0.0
    %3470 = vmatpush1.msra.mxu0 0.0
    %3471 = vmatprep.subr.mxu0 0.0
    %3472 = vmatpush1.msra.mxu0 0.0
    %3473 = vmatprep.subr.mxu0 0.0
    %3474 = vmatpush1.msra.mxu0 0.0
    %3475 = vmatprep.subr.mxu0 0.0
    %3476 = vmatpush1.msra.mxu0 0.0
    %3477 = vmatprep.subr.mxu0 0.0
    %3478 = vmatpush1.msra.mxu0 0.0
    %3479 = vmatprep.subr.mxu0 0.0
    %3480 = vmatpush1.msra.mxu0 0.0
    %3481 = vmatprep.subr.mxu0 0.0
    %3482 = vmatpush1.msra.mxu0 0.0
    %3483 = vmatprep.subr.mxu0 0.0
    %3484 = vmatpush1.msra.mxu0 0.0
    %3485 = vmatprep.subr.mxu0 0.0
    %3486 = vmatpush1.msra.mxu0 0.0
    %3487 = vmatprep.subr.mxu0 0.0
    %3488 = vmatpush1.msra.mxu0 0.0
    %3489 = vmatprep.subr.mxu0 0.0
    %3490 = vmatpush1.msra.mxu0 0.0
    %3491 = vmatprep.mubr.f32.mxu0 0.0
    %3492 = vmatmul.mubr.f32.gmra.mrb[0].mxu0 %v3404
    %v3493 = vpop.f32.mrb[0].mxu0
    %v3494 = vadd.f32 0.0, %v3493
    %v3495 = vpop.f32.mrb[0].mxu0
    %3496 = vmatprep.mubr.f32.mxu0 0.0
    %3497 = vmatmul.mubr.f32.gmra.mrb[0].mxu0 %v3407
    %v3498 = vpop.f32.mrb[0].mxu0
    %v3499 = vadd.f32 0.0, %v3498
    %v3500 = vpop.f32.mrb[0].mxu0
    %3501 = vmatprep.mubr.f32.mxu0 0.0
    %3502 = vmatmul.mubr.f32.gmra.mrb[0].mxu0 %v3410
    %v3503 = vpop.f32.mrb[0].mxu0
    %v3504 = vadd.f32 0.0, %v3503
    %v3505 = vpop.f32.mrb[0].mxu0
    %3506 = vmatprep.mubr.f32.mxu0 0.0
    %3507 = vmatmul.mubr.f32.gmra.mrb[0].mxu0 %v3413
    %v3508 = vpop.f32.mrb[0].mxu0
    %v3509 = vadd.f32 0.0, %v3508
    %v3510 = vpop.f32.mrb[0].mxu0
    %3511 = vmatprep.mubr.f32.mxu0 0.0
    %3512 = vmatmul.mubr.f32.gmra.mrb[0].mxu0 %v3416
    %v3513 = vpop.f32.mrb[0].mxu0
    %v3514 = vadd.f32 0.0, %v3513
    %v3515 = vpop.f32.mrb[0].mxu0
    %3516 = vmatprep.mubr.f32.mxu0 0.0
    %3517 = vmatmul.mubr.f32.gmra.mrb[0].mxu0 %v3419
    %v3518 = vpop.f32.mrb[0].mxu0
    %v3519 = vadd.f32 0.0, %v3518
    %v3520 = vpop.f32.mrb[0].mxu0
    %3521 = vmatprep.mubr.f32.mxu0 0.0
    %3522 = vmatmul.mubr.f32.gmra.mrb[0].mxu0 %v3422
    %v3523 = vpop.f32.mrb[0].mxu0
    %v3524 = vadd.f32 0.0, %v3523
    %v3525 = vpop.f32.mrb[0].mxu0
    %3526 = vmatprep.mubr.f32.mxu0 0.0
    %3527 = vmatmul.mubr.f32.gmra.mrb[0].mxu0 %v3425
    %v3528 = vpop.f32.mrb[0].mxu0
    %v3529 = vadd.f32 0.0, %v3528
    %v3530 = vpop.f32.mrb[0].mxu0
    %3531 = vdwg.mxu0
    %3534 = vrot.lane.b32.xlu0 %v3246, 96
    %v3535 = vpop.permute.xlu0 %3534
    %3536 = vrot.lane.b32.xlu0 %v3251, 96
    %v3537 = vpop.permute.xlu0 %3536
    %v3538 = vsel %vm522, %v3535, 0
    %v3540 = vsel %vm522, %v3537, 0
    %3542 = vmatprep.subr.mxu0 0.0
    %3543 = vmatpush1.xpose.msra.mxu0 %v3538
    %3544 = vmatprep.subr.mxu0 0.0
    %3545 = vmatpush1.xpose.msra.mxu0 %v3540
    %3546 = vmatprep.subr.mxu0 0.0
    %3547 = vmatpush1.xpose.msra.mxu0 0.0
    %3548 = vmatprep.subr.mxu0 0.0
    %3549 = vmatpush1.xpose.msra.mxu0 0.0
    %3550 = vmatprep.subr.mxu0 0.0
    %3551 = vmatpush1.xpose.msra.mxu0 0.0
    %3552 = vmatprep.subr.mxu0 0.0
    %3553 = vmatpush1.xpose.msra.mxu0 0.0
    %3554 = vmatprep.subr.mxu0 0.0
    %3555 = vmatpush1.xpose.msra.mxu0 0.0
    %3556 = vmatprep.subr.mxu0 0.0
    %3557 = vmatpush1.xpose.msra.mxu0 0.0
    %3558 = vmatprep.subr.mxu0 0.0
    %3559 = vmatpush1.xpose.msra.mxu0 0.0
    %3560 = vmatprep.subr.mxu0 0.0
    %3561 = vmatpush1.xpose.msra.mxu0 0.0
    %3562 = vmatprep.subr.mxu0 0.0
    %3563 = vmatpush1.xpose.msra.mxu0 0.0
    %3564 = vmatprep.subr.mxu0 0.0
    %3565 = vmatpush1.xpose.msra.mxu0 0.0
    %3566 = vmatprep.subr.mxu0 0.0
    %3567 = vmatpush1.xpose.msra.mxu0 0.0
    %3568 = vmatprep.subr.mxu0 0.0
    %3569 = vmatpush1.xpose.msra.mxu0 0.0
    %3570 = vmatprep.subr.mxu0 0.0
    %3571 = vmatpush1.xpose.msra.mxu0 0.0
    %3572 = vmatprep.subr.mxu0 0.0
    %3573 = vmatpush1.xpose.msra.mxu0 0.0
    %3574 = vmatprep.subr.mxu0 0.0
    %3575 = vmatpush1.xpose.msra.mxu0 0.0
    %3576 = vmatprep.subr.mxu0 0.0
    %3577 = vmatpush1.xpose.msra.mxu0 0.0
    %3578 = vmatprep.subr.mxu0 0.0
    %3579 = vmatpush1.xpose.msra.mxu0 0.0
    %3580 = vmatprep.subr.mxu0 0.0
    %3581 = vmatpush1.xpose.msra.mxu0 0.0
    %3582 = vmatprep.subr.mxu0 0.0
    %3583 = vmatpush1.xpose.msra.mxu0 0.0
    %3584 = vmatprep.subr.mxu0 0.0
    %3585 = vmatpush1.xpose.msra.mxu0 0.0
    %3586 = vmatprep.subr.mxu0 0.0
    %3587 = vmatpush1.xpose.msra.mxu0 0.0
    %3588 = vmatprep.subr.mxu0 0.0
    %3589 = vmatpush1.xpose.msra.mxu0 0.0
    %3590 = vmatprep.subr.mxu0 0.0
    %3591 = vmatpush1.xpose.msra.mxu0 0.0
    %3592 = vmatprep.subr.mxu0 0.0
    %3593 = vmatpush1.xpose.msra.mxu0 0.0
    %3594 = vmatprep.subr.mxu0 0.0
    %3595 = vmatpush1.xpose.msra.mxu0 0.0
    %3596 = vmatprep.subr.mxu0 0.0
    %3597 = vmatpush1.xpose.msra.mxu0 0.0
    %3598 = vmatprep.subr.mxu0 0.0
    %3599 = vmatpush1.xpose.msra.mxu0 0.0
    %3600 = vmatprep.subr.mxu0 0.0
    %3601 = vmatpush1.xpose.msra.mxu0 0.0
    %3602 = vmatprep.subr.mxu0 0.0
    %3603 = vmatpush1.xpose.msra.mxu0 0.0
    %3604 = vmatprep.subr.mxu0 0.0
    %3605 = vmatpush1.xpose.msra.mxu0 0.0
    %3606 = vmatprep.mubr.f32.mxu0 0.0
    %3607 = vmatmul.mubr.f32.gmra.mrb[0].mxu0 %v3267
    %v3608 = vpop.f32.mrb[0].mxu0
    %v3609 = vadd.f32 %v3494, %v3608
    %v3610 = vpop.f32.mrb[0].mxu0
    %3611 = vmatprep.mubr.f32.mxu0 0.0
    %3612 = vmatmul.mubr.f32.gmra.mrb[0].mxu0 %v3270
    %v3613 = vpop.f32.mrb[0].mxu0
    %v3614 = vadd.f32 %v3499, %v3613
    %v3615 = vpop.f32.mrb[0].mxu0
    %3616 = vmatprep.mubr.f32.mxu0 0.0
    %3617 = vmatmul.mubr.f32.gmra.mrb[0].mxu0 %v3273
    %v3618 = vpop.f32.mrb[0].mxu0
    %v3619 = vadd.f32 %v3504, %v3618
    %v3620 = vpop.f32.mrb[0].mxu0
    %3621 = vmatprep.mubr.f32.mxu0 0.0
    %3622 = vmatmul.mubr.f32.gmra.mrb[0].mxu0 %v3276
    %v3623 = vpop.f32.mrb[0].mxu0
    %v3624 = vadd.f32 %v3509, %v3623
    %v3625 = vpop.f32.mrb[0].mxu0
    %3626 = vmatprep.mubr.f32.mxu0 0.0
    %3627 = vmatmul.mubr.f32.gmra.mrb[0].mxu0 %v3279
    %v3628 = vpop.f32.mrb[0].mxu0
    %v3629 = vadd.f32 %v3514, %v3628
    %v3630 = vpop.f32.mrb[0].mxu0
    %3631 = vmatprep.mubr.f32.mxu0 0.0
    %3632 = vmatmul.mubr.f32.gmra.mrb[0].mxu0 %v3282
    %v3633 = vpop.f32.mrb[0].mxu0
    %v3634 = vadd.f32 %v3519, %v3633
    %v3635 = vpop.f32.mrb[0].mxu0
    %3636 = vmatprep.mubr.f32.mxu0 0.0
    %3637 = vmatmul.mubr.f32.gmra.mrb[0].mxu0 %v3285
    %v3638 = vpop.f32.mrb[0].mxu0
    %v3639 = vadd.f32 %v3524, %v3638
    %v3640 = vpop.f32.mrb[0].mxu0
    %3641 = vmatprep.mubr.f32.mxu0 0.0
    %3642 = vmatmul.mubr.f32.gmra.mrb[0].mxu0 %v3288
    %v3643 = vpop.f32.mrb[0].mxu0
    %v3644 = vadd.f32 %v3529, %v3643
    %v3645 = vpop.f32.mrb[0].mxu0
    %3646 = vdwg.mxu0
    %v3647 = vadd.f32 %v3609, %v1023
    %v3648 = vadd.f32 %v3614, %v1024
    %v3649 = vadd.f32 %v3619, %v1025
    %v3650 = vadd.f32 %v3624, %v1026
    %v3651 = vadd.f32 %v3629, %v1027
    %v3652 = vadd.f32 %v3634, %v1028
    %v3653 = vadd.f32 %v3639, %v1029
    %v3654 = vadd.f32 %v3644, %v1030
    %v3655 = vsel %vm1039, %v3647, -inf
    %3656 = vmax.xlane.f32.xlu0 %v3655
    %v3657 = vpop.xlane.xlu0 %3656
    %v3658 = vsel %vm1039, %v3648, -inf
    %3659 = vmax.xlane.f32.xlu0 %v3658
    %v3660 = vpop.xlane.xlu0 %3659
    %v3661 = vsel %vm1039, %v3649, -inf
    %3662 = vmax.xlane.f32.xlu0 %v3661
    %v3663 = vpop.xlane.xlu0 %3662
    %v3664 = vsel %vm1039, %v3650, -inf
    %3665 = vmax.xlane.f32.xlu0 %v3664
    %v3666 = vpop.xlane.xlu0 %3665
    %v3667 = vsel %vm1039, %v3651, -inf
    %3668 = vmax.xlane.f32.xlu0 %v3667
    %v3669 = vpop.xlane.xlu0 %3668
    %v3670 = vsel %vm1039, %v3652, -inf
    %3671 = vmax.xlane.f32.xlu0 %v3670
    %v3672 = vpop.xlane.xlu0 %3671
    %v3673 = vsel %vm1039, %v3653, -inf
    %3674 = vmax.xlane.f32.xlu0 %v3673
    %v3675 = vpop.xlane.xlu0 %3674
    %v3676 = vsel %vm1039, %v3654, -inf
    %3677 = vmax.xlane.f32.xlu0 %v3676
    %v3678 = vpop.xlane.xlu0 %3677
    %v3679 = vsub.f32 %v3647, %v3657
    %v3680 = vsub.f32 %v3648, %v3660
    %v3681 = vsub.f32 %v3649, %v3663
    %v3682 = vsub.f32 %v3650, %v3666
    %v3683 = vsub.f32 %v3651, %v3669
    %v3684 = vsub.f32 %v3652, %v3672
    %v3685 = vsub.f32 %v3653, %v3675
    %v3686 = vsub.f32 %v3654, %v3678
    %v3687 = vmul.f32 %v3679, 1.442695
    %v3688 = vpow.pop %v3687
    %v3689 = vmul.f32 %v3680, 1.442695
    %v3690 = vpow.pop %v3689
    %v3691 = vmul.f32 %v3681, 1.442695
    %v3692 = vpow.pop %v3691
    %v3693 = vmul.f32 %v3682, 1.442695
    %v3694 = vpow.pop %v3693
    %v3695 = vmul.f32 %v3683, 1.442695
    %v3696 = vpow.pop %v3695
    %v3697 = vmul.f32 %v3684, 1.442695
    %v3698 = vpow.pop %v3697
    %v3699 = vmul.f32 %v3685, 1.442695
    %v3700 = vpow.pop %v3699
    %v3701 = vmul.f32 %v3686, 1.442695
    %v3702 = vpow.pop %v3701
    %v3703 = vsel %vm1039, %v3688, 0.0
    %3704 = vadd.xlane.f32.xlu0 %v3703
    %v3705 = vpop.xlane.xlu0 %3704
    %v3706 = vsel %vm1039, %v3690, 0.0
    %3707 = vadd.xlane.f32.xlu0 %v3706
    %v3708 = vpop.xlane.xlu0 %3707
    %v3709 = vsel %vm1039, %v3692, 0.0
    %3710 = vadd.xlane.f32.xlu0 %v3709
    %v3711 = vpop.xlane.xlu0 %3710
    %v3712 = vsel %vm1039, %v3694, 0.0
    %3713 = vadd.xlane.f32.xlu0 %v3712
    %v3714 = vpop.xlane.xlu0 %3713
    %v3715 = vsel %vm1039, %v3696, 0.0
    %3716 = vadd.xlane.f32.xlu0 %v3715
    %v3717 = vpop.xlane.xlu0 %3716
    %v3718 = vsel %vm1039, %v3698, 0.0
    %3719 = vadd.xlane.f32.xlu0 %v3718
    %v3720 = vpop.xlane.xlu0 %3719
    %v3721 = vsel %vm1039, %v3700, 0.0
    %3722 = vadd.xlane.f32.xlu0 %v3721
    %v3723 = vpop.xlane.xlu0 %3722
    %v3724 = vsel %vm1039, %v3702, 0.0
    %3725 = vadd.xlane.f32.xlu0 %v3724
    %v3726 = vpop.xlane.xlu0 %3725
    %v3727 = vrcp.pop %v3705
    %v3728 = vrcp.pop %v3708
    %v3729 = vrcp.pop %v3711
    %v3730 = vrcp.pop %v3714
    %v3731 = vrcp.pop %v3717
    %v3732 = vrcp.pop %v3720
    %v3733 = vrcp.pop %v3723
    %v3734 = vrcp.pop %v3726
    %v3735 = vmul.f32 %v3688, %v3727
    %v3736 = vmul.f32 %v3690, %v3728
    %v3737 = vmul.f32 %v3692, %v3729
    %v3738 = vmul.f32 %v3694, %v3730
    %v3739 = vmul.f32 %v3696, %v3731
    %v3740 = vmul.f32 %v3698, %v3732
    %v3741 = vmul.f32 %v3700, %v3733
    %v3742 = vmul.f32 %v3702, %v3734
    %3743 = vrot.lane.b32.xlu0 %v3246, 64
    %v3744 = vpop.permute.xlu0 %3743
    %3745 = vrot.lane.b32.xlu0 %v3251, 64
    %v3746 = vpop.permute.xlu0 %3745
    %v3750 = vsel %vm1039, %v3735, 0
    %v3753 = vsel %vm1039, %v3736, 0
    %v3756 = vsel %vm1039, %v3737, 0
    %v3759 = vsel %vm1039, %v3738, 0
    %v3762 = vsel %vm1039, %v3739, 0
    %v3765 = vsel %vm1039, %v3740, 0
    %v3768 = vsel %vm1039, %v3741, 0
    %v3771 = vsel %vm1039, %v3742, 0
    %3773 = vmatprep.subr.mxu0 0.0
    %3774 = vmatpush1.msra.mxu0 %v3744
    %3775 = vmatprep.subr.mxu0 0.0
    %3776 = vmatpush1.msra.mxu0 %v3746
    %3777 = vmatprep.subr.mxu0 0.0
    %3778 = vmatpush1.msra.mxu0 0.0
    %3779 = vmatprep.subr.mxu0 0.0
    %3780 = vmatpush1.msra.mxu0 0.0
    %3781 = vmatprep.subr.mxu0 0.0
    %3782 = vmatpush1.msra.mxu0 0.0
    %3783 = vmatprep.subr.mxu0 0.0
    %3784 = vmatpush1.msra.mxu0 0.0
    %3785 = vmatprep.subr.mxu0 0.0
    %3786 = vmatpush1.msra.mxu0 0.0
    %3787 = vmatprep.subr.mxu0 0.0
    %3788 = vmatpush1.msra.mxu0 0.0
    %3789 = vmatprep.subr.mxu0 0.0
    %3790 = vmatpush1.msra.mxu0 0.0
    %3791 = vmatprep.subr.mxu0 0.0
    %3792 = vmatpush1.msra.mxu0 0.0
    %3793 = vmatprep.subr.mxu0 0.0
    %3794 = vmatpush1.msra.mxu0 0.0
    %3795 = vmatprep.subr.mxu0 0.0
    %3796 = vmatpush1.msra.mxu0 0.0
    %3797 = vmatprep.subr.mxu0 0.0
    %3798 = vmatpush1.msra.mxu0 0.0
    %3799 = vmatprep.subr.mxu0 0.0
    %3800 = vmatpush1.msra.mxu0 0.0
    %3801 = vmatprep.subr.mxu0 0.0
    %3802 = vmatpush1.msra.mxu0 0.0
    %3803 = vmatprep.subr.mxu0 0.0
    %3804 = vmatpush1.msra.mxu0 0.0
    %3805 = vmatprep.subr.mxu0 0.0
    %3806 = vmatpush1.msra.mxu0 0.0
    %3807 = vmatprep.subr.mxu0 0.0
    %3808 = vmatpush1.msra.mxu0 0.0
    %3809 = vmatprep.subr.mxu0 0.0
    %3810 = vmatpush1.msra.mxu0 0.0
    %3811 = vmatprep.subr.mxu0 0.0
    %3812 = vmatpush1.msra.mxu0 0.0
    %3813 = vmatprep.subr.mxu0 0.0
    %3814 = vmatpush1.msra.mxu0 0.0
    %3815 = vmatprep.subr.mxu0 0.0
    %3816 = vmatpush1.msra.mxu0 0.0
    %3817 = vmatprep.subr.mxu0 0.0
    %3818 = vmatpush1.msra.mxu0 0.0
    %3819 = vmatprep.subr.mxu0 0.0
    %3820 = vmatpush1.msra.mxu0 0.0
    %3821 = vmatprep.subr.mxu0 0.0
    %3822 = vmatpush1.msra.mxu0 0.0
    %3823 = vmatprep.subr.mxu0 0.0
    %3824 = vmatpush1.msra.mxu0 0.0
    %3825 = vmatprep.subr.mxu0 0.0
    %3826 = vmatpush1.msra.mxu0 0.0
    %3827 = vmatprep.subr.mxu0 0.0
    %3828 = vmatpush1.msra.mxu0 0.0
    %3829 = vmatprep.subr.mxu0 0.0
    %3830 = vmatpush1.msra.mxu0 0.0
    %3831 = vmatprep.subr.mxu0 0.0
    %3832 = vmatpush1.msra.mxu0 0.0
    %3833 = vmatprep.subr.mxu0 0.0
    %3834 = vmatpush1.msra.mxu0 0.0
    %3835 = vmatprep.subr.mxu0 0.0
    %3836 = vmatpush1.msra.mxu0 0.0
    %3837 = vmatprep.mubr.f32.mxu0 0.0
    %3838 = vmatmul.mubr.f32.gmra.mrb[0].mxu0 %v3750
    %v3839 = vpop.f32.mrb[0].mxu0
    %v3840 = vadd.f32 0.0, %v3839
    %v3841 = vpop.f32.mrb[0].mxu0
    %3842 = vmatprep.mubr.f32.mxu0 0.0
    %3843 = vmatmul.mubr.f32.gmra.mrb[0].mxu0 %v3753
    %v3844 = vpop.f32.mrb[0].mxu0
    %v3845 = vadd.f32 0.0, %v3844
    %v3846 = vpop.f32.mrb[0].mxu0
    %3847 = vmatprep.mubr.f32.mxu0 0.0
    %3848 = vmatmul.mubr.f32.gmra.mrb[0].mxu0 %v3756
    %v3849 = vpop.f32.mrb[0].mxu0
    %v3850 = vadd.f32 0.0, %v3849
    %v3851 = vpop.f32.mrb[0].mxu0
    %3852 = vmatprep.mubr.f32.mxu0 0.0
    %3853 = vmatmul.mubr.f32.gmra.mrb[0].mxu0 %v3759
    %v3854 = vpop.f32.mrb[0].mxu0
    %v3855 = vadd.f32 0.0, %v3854
    %v3856 = vpop.f32.mrb[0].mxu0
    %3857 = vmatprep.mubr.f32.mxu0 0.0
    %3858 = vmatmul.mubr.f32.gmra.mrb[0].mxu0 %v3762
    %v3859 = vpop.f32.mrb[0].mxu0
    %v3860 = vadd.f32 0.0, %v3859
    %v3861 = vpop.f32.mrb[0].mxu0
    %3862 = vmatprep.mubr.f32.mxu0 0.0
    %3863 = vmatmul.mubr.f32.gmra.mrb[0].mxu0 %v3765
    %v3864 = vpop.f32.mrb[0].mxu0
    %v3865 = vadd.f32 0.0, %v3864
    %v3866 = vpop.f32.mrb[0].mxu0
    %3867 = vmatprep.mubr.f32.mxu0 0.0
    %3868 = vmatmul.mubr.f32.gmra.mrb[0].mxu0 %v3768
    %v3869 = vpop.f32.mrb[0].mxu0
    %v3870 = vadd.f32 0.0, %v3869
    %v3871 = vpop.f32.mrb[0].mxu0
    %3872 = vmatprep.mubr.f32.mxu0 0.0
    %3873 = vmatmul.mubr.f32.gmra.mrb[0].mxu0 %v3771
    %v3874 = vpop.f32.mrb[0].mxu0
    %v3875 = vadd.f32 0.0, %v3874
    %v3876 = vpop.f32.mrb[0].mxu0
    %3877 = vdwg.mxu0
    %v3878 = vmul.f32 %v3840, %v604
    %v3879 = vmul.f32 %v3845, %v605
    %v3880 = vmul.f32 %v3850, %v606
    %v3881 = vmul.f32 %v3855, %v607
    %v3882 = vmul.f32 %v3860, %v608
    %v3883 = vmul.f32 %v3865, %v609
    %v3884 = vmul.f32 %v3870, %v610
    %v3885 = vmul.f32 %v3875, %v611
    %v3886 = vadd.f32 %v3878, %v3880
    %v3887 = vadd.f32 %v3879, %v3881
    %v3888 = vadd.f32 %v3886, %v3882
    %v3889 = vadd.f32 %v3887, %v3883
    %v3890 = vadd.f32 %v3888, %v3884
    %v3891 = vadd.f32 %v3889, %v3885
    %3892 = vmatprep.subr.mxu0 0.0
    %3893 = vmatpush1.msra.mxu0 %v1277
    %3894 = vmatprep.subr.mxu0 0.0
    %3895 = vmatpush1.msra.mxu0 %v1278
    %3896 = vmatprep.subr.mxu0 0.0
    %3897 = vmatpush1.msra.mxu0 0.0
    %3898 = vmatprep.subr.mxu0 0.0
    %3899 = vmatpush1.msra.mxu0 0.0
    %3900 = vmatprep.subr.mxu0 0.0
    %3901 = vmatpush1.msra.mxu0 0.0
    %3902 = vmatprep.subr.mxu0 0.0
    %3903 = vmatpush1.msra.mxu0 0.0
    %3904 = vmatprep.subr.mxu0 0.0
    %3905 = vmatpush1.msra.mxu0 0.0
    %3906 = vmatprep.subr.mxu0 0.0
    %3907 = vmatpush1.msra.mxu0 0.0
    %3908 = vmatprep.subr.mxu0 0.0
    %3909 = vmatpush1.msra.mxu0 0.0
    %3910 = vmatprep.subr.mxu0 0.0
    %3911 = vmatpush1.msra.mxu0 0.0
    %3912 = vmatprep.subr.mxu0 0.0
    %3913 = vmatpush1.msra.mxu0 0.0
    %3914 = vmatprep.subr.mxu0 0.0
    %3915 = vmatpush1.msra.mxu0 0.0
    %3916 = vmatprep.subr.mxu0 0.0
    %3917 = vmatpush1.msra.mxu0 0.0
    %3918 = vmatprep.subr.mxu0 0.0
    %3919 = vmatpush1.msra.mxu0 0.0
    %3920 = vmatprep.subr.mxu0 0.0
    %3921 = vmatpush1.msra.mxu0 0.0
    %3922 = vmatprep.subr.mxu0 0.0
    %3923 = vmatpush1.msra.mxu0 0.0
    %3924 = vmatprep.subr.mxu0 0.0
    %3925 = vmatpush1.msra.mxu0 0.0
    %3926 = vmatprep.subr.mxu0 0.0
    %3927 = vmatpush1.msra.mxu0 0.0
    %3928 = vmatprep.subr.mxu0 0.0
    %3929 = vmatpush1.msra.mxu0 0.0
    %3930 = vmatprep.subr.mxu0 0.0
    %3931 = vmatpush1.msra.mxu0 0.0
    %3932 = vmatprep.subr.mxu0 0.0
    %3933 = vmatpush1.msra.mxu0 0.0
    %3934 = vmatprep.subr.mxu0 0.0
    %3935 = vmatpush1.msra.mxu0 0.0
    %3936 = vmatprep.subr.mxu0 0.0
    %3937 = vmatpush1.msra.mxu0 0.0
    %3938 = vmatprep.subr.mxu0 0.0
    %3939 = vmatpush1.msra.mxu0 0.0
    %3940 = vmatprep.subr.mxu0 0.0
    %3941 = vmatpush1.msra.mxu0 0.0
    %3942 = vmatprep.subr.mxu0 0.0
    %3943 = vmatpush1.msra.mxu0 0.0
    %3944 = vmatprep.subr.mxu0 0.0
    %3945 = vmatpush1.msra.mxu0 0.0
    %3946 = vmatprep.subr.mxu0 0.0
    %3947 = vmatpush1.msra.mxu0 0.0
    %3948 = vmatprep.subr.mxu0 0.0
    %3949 = vmatpush1.msra.mxu0 0.0
    %3950 = vmatprep.subr.mxu0 0.0
    %3951 = vmatpush1.msra.mxu0 0.0
    %3952 = vmatprep.subr.mxu0 0.0
    %3953 = vmatpush1.msra.mxu0 0.0
    %3954 = vmatprep.subr.mxu0 0.0
    %3955 = vmatpush1.msra.mxu0 0.0
    %3956 = vmatprep.mubr.f32.mxu0 0.0
    %3957 = vmatmul.mubr.f32.gmra.mrb[0].mxu0 %v3750
    %v3958 = vpop.f32.mrb[0].mxu0
    %v3959 = vadd.f32 0.0, %v3958
    %v3960 = vpop.f32.mrb[0].mxu0
    %3961 = vmatprep.mubr.f32.mxu0 0.0
    %3962 = vmatmul.mubr.f32.gmra.mrb[0].mxu0 %v3753
    %v3963 = vpop.f32.mrb[0].mxu0
    %v3964 = vadd.f32 0.0, %v3963
    %v3965 = vpop.f32.mrb[0].mxu0
    %3966 = vmatprep.mubr.f32.mxu0 0.0
    %3967 = vmatmul.mubr.f32.gmra.mrb[0].mxu0 %v3756
    %v3968 = vpop.f32.mrb[0].mxu0
    %v3969 = vadd.f32 0.0, %v3968
    %v3970 = vpop.f32.mrb[0].mxu0
    %3971 = vmatprep.mubr.f32.mxu0 0.0
    %3972 = vmatmul.mubr.f32.gmra.mrb[0].mxu0 %v3759
    %v3973 = vpop.f32.mrb[0].mxu0
    %v3974 = vadd.f32 0.0, %v3973
    %v3975 = vpop.f32.mrb[0].mxu0
    %3976 = vmatprep.mubr.f32.mxu0 0.0
    %3977 = vmatmul.mubr.f32.gmra.mrb[0].mxu0 %v3762
    %v3978 = vpop.f32.mrb[0].mxu0
    %v3979 = vadd.f32 0.0, %v3978
    %v3980 = vpop.f32.mrb[0].mxu0
    %3981 = vmatprep.mubr.f32.mxu0 0.0
    %3982 = vmatmul.mubr.f32.gmra.mrb[0].mxu0 %v3765
    %v3983 = vpop.f32.mrb[0].mxu0
    %v3984 = vadd.f32 0.0, %v3983
    %v3985 = vpop.f32.mrb[0].mxu0
    %3986 = vmatprep.mubr.f32.mxu0 0.0
    %3987 = vmatmul.mubr.f32.gmra.mrb[0].mxu0 %v3768
    %v3988 = vpop.f32.mrb[0].mxu0
    %v3989 = vadd.f32 0.0, %v3988
    %v3990 = vpop.f32.mrb[0].mxu0
    %3991 = vmatprep.mubr.f32.mxu0 0.0
    %3992 = vmatmul.mubr.f32.gmra.mrb[0].mxu0 %v3771
    %v3993 = vpop.f32.mrb[0].mxu0
    %v3994 = vadd.f32 0.0, %v3993
    %v3995 = vpop.f32.mrb[0].mxu0
    %3996 = vdwg.mxu0
    %v3997 = vmul.f32 %v3959, %v1384
    %v3998 = vmul.f32 %v3964, %v1385
    %v3999 = vmul.f32 %v3969, %v1386
    %v4000 = vmul.f32 %v3974, %v1387
    %v4001 = vmul.f32 %v3979, %v1388
    %v4002 = vmul.f32 %v3984, %v1389
    %v4003 = vmul.f32 %v3989, %v1390
    %v4004 = vmul.f32 %v3994, %v1391
    %v4005 = vld [vmem:[%s103] sm:$0xff]
    %v4006 = vld [vmem:[%s103 + $0x8] sm:$0xff]
    %v4007 = vld [vmem:[%s103 + $0x10] sm:$0xff]
    %v4008 = vld [vmem:[%s103 + $0x18] sm:$0xff]
    %v4009 = vld [vmem:[%s103 + $0x20] sm:$0xff]
    %v4010 = vld [vmem:[%s103 + $0x28] sm:$0xff]
    %v4011 = vld [vmem:[%s103 + $0x30] sm:$0xff]
    %v4012 = vld [vmem:[%s103 + $0x38] sm:$0xff]
    %v4013 = vld [vmem:[%s103 + $0x40] sm:$0xff]
    %v4014 = vld [vmem:[%s103 + $0x48] sm:$0xff]
    %v4015 = vld [vmem:[%s103 + $0x50] sm:$0xff]
    %v4016 = vld [vmem:[%s103 + $0x58] sm:$0xff]
    %v4017 = vld [vmem:[%s103 + $0x60] sm:$0xff]
    %v4018 = vld [vmem:[%s103 + $0x68] sm:$0xff]
    %v4019 = vld [vmem:[%s103 + $0x70] sm:$0xff]
    %v4020 = vld [vmem:[%s103 + $0x78] sm:$0xff]
    %4021 = vmatprep.subr.mxu0 0.0
    %4022 = vmatpush1.msra.mxu0 %v4005
    %4023 = vmatprep.subr.mxu0 0.0
    %4024 = vmatpush1.msra.mxu0 %v4006
    %4025 = vmatprep.subr.mxu0 0.0
    %4026 = vmatpush1.msra.mxu0 %v4007
    %4027 = vmatprep.subr.mxu0 0.0
    %4028 = vmatpush1.msra.mxu0 %v4008
    %4029 = vmatprep.subr.mxu0 0.0
    %4030 = vmatpush1.msra.mxu0 %v4009
    %4031 = vmatprep.subr.mxu0 0.0
    %4032 = vmatpush1.msra.mxu0 %v4010
    %4033 = vmatprep.subr.mxu0 0.0
    %4034 = vmatpush1.msra.mxu0 %v4011
    %4035 = vmatprep.subr.mxu0 0.0
    %4036 = vmatpush1.msra.mxu0 %v4012
    %4037 = vmatprep.subr.mxu0 0.0
    %4038 = vmatpush1.msra.mxu0 %v4013
    %4039 = vmatprep.subr.mxu0 0.0
    %4040 = vmatpush1.msra.mxu0 %v4014
    %4041 = vmatprep.subr.mxu0 0.0
    %4042 = vmatpush1.msra.mxu0 %v4015
    %4043 = vmatprep.subr.mxu0 0.0
    %4044 = vmatpush1.msra.mxu0 %v4016
    %4045 = vmatprep.subr.mxu0 0.0
    %4046 = vmatpush1.msra.mxu0 %v4017
    %4047 = vmatprep.subr.mxu0 0.0
    %4048 = vmatpush1.msra.mxu0 %v4018
    %4049 = vmatprep.subr.mxu0 0.0
    %4050 = vmatpush1.msra.mxu0 %v4019
    %4051 = vmatprep.subr.mxu0 0.0
    %4052 = vmatpush1.msra.mxu0 %v4020
    %4053 = vmatprep.subr.mxu0 0.0
    %4054 = vmatpush1.msra.mxu0 0.0
    %4055 = vmatprep.subr.mxu0 0.0
    %4056 = vmatpush1.msra.mxu0 0.0
    %4057 = vmatprep.subr.mxu0 0.0
    %4058 = vmatpush1.msra.mxu0 0.0
    %4059 = vmatprep.subr.mxu0 0.0
    %4060 = vmatpush1.msra.mxu0 0.0
    %4061 = vmatprep.subr.mxu0 0.0
    %4062 = vmatpush1.msra.mxu0 0.0
    %4063 = vmatprep.subr.mxu0 0.0
    %4064 = vmatpush1.msra.mxu0 0.0
    %4065 = vmatprep.subr.mxu0 0.0
    %4066 = vmatpush1.msra.mxu0 0.0
    %4067 = vmatprep.subr.mxu0 0.0
    %4068 = vmatpush1.msra.mxu0 0.0
    %4069 = vmatprep.subr.mxu0 0.0
    %4070 = vmatpush1.msra.mxu0 0.0
    %4071 = vmatprep.subr.mxu0 0.0
    %4072 = vmatpush1.msra.mxu0 0.0
    %4073 = vmatprep.subr.mxu0 0.0
    %4074 = vmatpush1.msra.mxu0 0.0
    %4075 = vmatprep.subr.mxu0 0.0
    %4076 = vmatpush1.msra.mxu0 0.0
    %4077 = vmatprep.subr.mxu0 0.0
    %4078 = vmatpush1.msra.mxu0 0.0
    %4079 = vmatprep.subr.mxu0 0.0
    %4080 = vmatpush1.msra.mxu0 0.0
    %4081 = vmatprep.subr.mxu0 0.0
    %4082 = vmatpush1.msra.mxu0 0.0
    %4083 = vmatprep.subr.mxu0 0.0
    %4084 = vmatpush1.msra.mxu0 0.0
    %4085 = vmatprep.mubr.f32.mxu0 0.0
    %4086 = vmatmul.mubr.f32.gmra.mrb[0].mxu0 %v3997
    %v4087 = vpop.f32.mrb[0].mxu0
    %v4088 = vadd.f32 0.0, %v4087
    %v4089 = vpop.f32.mrb[0].mxu0
    %4090 = vmatprep.mubr.f32.mxu0 0.0
    %4091 = vmatmul.mubr.f32.gmra.mrb[0].mxu0 %v3998
    %v4092 = vpop.f32.mrb[0].mxu0
    %v4093 = vadd.f32 0.0, %v4092
    %v4094 = vpop.f32.mrb[0].mxu0
    %4095 = vmatprep.mubr.f32.mxu0 0.0
    %4096 = vmatmul.mubr.f32.gmra.mrb[0].mxu0 %v3999
    %v4097 = vpop.f32.mrb[0].mxu0
    %v4098 = vadd.f32 0.0, %v4097
    %v4099 = vpop.f32.mrb[0].mxu0
    %4100 = vmatprep.mubr.f32.mxu0 0.0
    %4101 = vmatmul.mubr.f32.gmra.mrb[0].mxu0 %v4000
    %v4102 = vpop.f32.mrb[0].mxu0
    %v4103 = vadd.f32 0.0, %v4102
    %v4104 = vpop.f32.mrb[0].mxu0
    %4105 = vmatprep.mubr.f32.mxu0 0.0
    %4106 = vmatmul.mubr.f32.gmra.mrb[0].mxu0 %v4001
    %v4107 = vpop.f32.mrb[0].mxu0
    %v4108 = vadd.f32 0.0, %v4107
    %v4109 = vpop.f32.mrb[0].mxu0
    %4110 = vmatprep.mubr.f32.mxu0 0.0
    %4111 = vmatmul.mubr.f32.gmra.mrb[0].mxu0 %v4002
    %v4112 = vpop.f32.mrb[0].mxu0
    %v4113 = vadd.f32 0.0, %v4112
    %v4114 = vpop.f32.mrb[0].mxu0
    %4115 = vmatprep.mubr.f32.mxu0 0.0
    %4116 = vmatmul.mubr.f32.gmra.mrb[0].mxu0 %v4003
    %v4117 = vpop.f32.mrb[0].mxu0
    %v4118 = vadd.f32 0.0, %v4117
    %v4119 = vpop.f32.mrb[0].mxu0
    %4120 = vmatprep.mubr.f32.mxu0 0.0
    %4121 = vmatmul.mubr.f32.gmra.mrb[0].mxu0 %v4004
    %v4122 = vpop.f32.mrb[0].mxu0
    %v4123 = vadd.f32 0.0, %v4122
    %v4124 = vpop.f32.mrb[0].mxu0
    %4125 = vdwg.mxu0
    %v4126 = vmul.f32 %v4088, %v604
    %v4127 = vmul.f32 %v4093, %v605
    %v4128 = vmul.f32 %v4098, %v606
    %v4129 = vmul.f32 %v4103, %v607
    %v4130 = vmul.f32 %v4108, %v608
    %v4131 = vmul.f32 %v4113, %v609
    %v4132 = vmul.f32 %v4118, %v610
    %v4133 = vmul.f32 %v4123, %v611
    %v4134 = vadd.f32 %v4126, %v4128
    %v4135 = vadd.f32 %v4127, %v4129
    %v4136 = vadd.f32 %v4134, %v4130
    %v4137 = vadd.f32 %v4135, %v4131
    %v4138 = vadd.f32 %v4136, %v4132
    %v4139 = vadd.f32 %v4137, %v4133
    %v4140 = vadd.f32 %v3890, %v4138
    %v4141 = vadd.f32 %v3891, %v4139
    %v4142 = vld [vmem:[%s105] sm:$0xff]
    %v4143 = vld [vmem:[%s105 + $0x8] sm:$0xff]
    %v4144 = vld [vmem:[%s105 + $0x10] sm:$0xff]
    %v4145 = vld [vmem:[%s105 + $0x18] sm:$0xff]
    %v4146 = vld [vmem:[#allocation31] sm:$0x1]
    %v4148 = vlaneseq
    %v4149 = vshrl.u32 %v4148, 7
    %v4150 = vsub.s32 0, %v4149
    %v4151 = vrot.slane %v4146, %v4150
    %v4154 = vsel %vm522, %v4140, 0
    %v4157 = vsel %vm522, %v4141, 0
    %4159 = vmatprep.subr.mxu0 0.0
    %4160 = vmatpush1.msra.mxu0 %v4142
    %4161 = vmatprep.subr.mxu0 0.0
    %4162 = vmatpush1.msra.mxu0 %v4143
    %4163 = vmatprep.subr.mxu0 0.0
    %4164 = vmatpush1.msra.mxu0 %v4144
    %4165 = vmatprep.subr.mxu0 0.0
    %4166 = vmatpush1.msra.mxu0 %v4145
    %4167 = vmatprep.subr.mxu0 0.0
    %4168 = vmatpush1.msra.mxu0 0.0
    %4169 = vmatprep.subr.mxu0 0.0
    %4170 = vmatpush1.msra.mxu0 0.0
    %4171 = vmatprep.subr.mxu0 0.0
    %4172 = vmatpush1.msra.mxu0 0.0
    %4173 = vmatprep.subr.mxu0 0.0
    %4174 = vmatpush1.msra.mxu0 0.0
    %4175 = vmatprep.subr.mxu0 0.0
    %4176 = vmatpush1.msra.mxu0 0.0
    %4177 = vmatprep.subr.mxu0 0.0
    %4178 = vmatpush1.msra.mxu0 0.0
    %4179 = vmatprep.subr.mxu0 0.0
    %4180 = vmatpush1.msra.mxu0 0.0
    %4181 = vmatprep.subr.mxu0 0.0
    %4182 = vmatpush1.msra.mxu0 0.0
    %4183 = vmatprep.subr.mxu0 0.0
    %4184 = vmatpush1.msra.mxu0 0.0
    %4185 = vmatprep.subr.mxu0 0.0
    %4186 = vmatpush1.msra.mxu0 0.0
    %4187 = vmatprep.subr.mxu0 0.0
    %4188 = vmatpush1.msra.mxu0 0.0
    %4189 = vmatprep.subr.mxu0 0.0
    %4190 = vmatpush1.msra.mxu0 0.0
    %4191 = vmatprep.subr.mxu0 0.0
    %4192 = vmatpush1.msra.mxu0 0.0
    %4193 = vmatprep.subr.mxu0 0.0
    %4194 = vmatpush1.msra.mxu0 0.0
    %4195 = vmatprep.subr.mxu0 0.0
    %4196 = vmatpush1.msra.mxu0 0.0
    %4197 = vmatprep.subr.mxu0 0.0
    %4198 = vmatpush1.msra.mxu0 0.0
    %4199 = vmatprep.subr.mxu0 0.0
    %4200 = vmatpush1.msra.mxu0 0.0
    %4201 = vmatprep.subr.mxu0 0.0
    %4202 = vmatpush1.msra.mxu0 0.0
    %4203 = vmatprep.subr.mxu0 0.0
    %4204 = vmatpush1.msra.mxu0 0.0
    %4205 = vmatprep.subr.mxu0 0.0
    %4206 = vmatpush1.msra.mxu0 0.0
    %4207 = vmatprep.subr.mxu0 0.0
    %4208 = vmatpush1.msra.mxu0 0.0
    %4209 = vmatprep.subr.mxu0 0.0
    %4210 = vmatpush1.msra.mxu0 0.0
    %4211 = vmatprep.subr.mxu0 0.0
    %4212 = vmatpush1.msra.mxu0 0.0
    %4213 = vmatprep.subr.mxu0 0.0
    %4214 = vmatpush1.msra.mxu0 0.0
    %4215 = vmatprep.subr.mxu0 0.0
    %4216 = vmatpush1.msra.mxu0 0.0
    %4217 = vmatprep.subr.mxu0 0.0
    %4218 = vmatpush1.msra.mxu0 0.0
    %4219 = vmatprep.subr.mxu0 0.0
    %4220 = vmatpush1.msra.mxu0 0.0
    %4221 = vmatprep.subr.mxu0 0.0
    %4222 = vmatpush1.msra.mxu0 0.0
    %4223 = vmatprep.mubr.f32.mxu0 0.0
    %4224 = vmatmul.mubr.f32.gmra.mrb[0].mxu0 %v4154
    %v4225 = vpop.f32.mrb[0].mxu0
    %v4226 = vadd.f32 %v4151, %v4225
    %v4227 = vpop.f32.mrb[0].mxu0
    %4228 = vmatprep.mubr.f32.mxu0 0.0
    %4229 = vmatmul.mubr.f32.gmra.mrb[0].mxu0 %v4157
    %v4230 = vpop.f32.mrb[0].mxu0
    %v4231 = vadd.f32 %v4151, %v4230
    %v4232 = vpop.f32.mrb[0].mxu0
    %4233 = vdwg.mxu0
    %v4234 = vadd.f32 %v4226, %v3160
    %v4235 = vadd.f32 %v4231, %v3161
    %v4236 = vsel %vm522, %v4234, 0.0
    %4237 = vadd.xlane.f32.xlu0 %v4236
    %v4238 = vpop.xlane.xlu0 %4237
    %v4239 = vsel %vm522, %v4235, 0.0
    %4240 = vadd.xlane.f32.xlu0 %v4239
    %v4241 = vpop.xlane.xlu0 %4240
    %v4242 = vmul.f32 %v4238, %v1637
    %v4243 = vmul.f32 %v4241, %v1637
    %v4244 = vsub.f32 %v4234, %v4242
    %v4245 = vsub.f32 %v4235, %v4243
    %v4246 = vmul.f32 %v4244, %v4244
    %v4247 = vmul.f32 %v4245, %v4245
    %v4248 = vsel %vm522, %v4246, 0.0
    %4249 = vadd.xlane.f32.xlu0 %v4248
    %v4250 = vpop.xlane.xlu0 %4249
    %v4251 = vsel %vm522, %v4247, 0.0
    %4252 = vadd.xlane.f32.xlu0 %v4251
    %v4253 = vpop.xlane.xlu0 %4252
    %v4254 = vmul.f32 %v4250, %v1637
    %v4255 = vmul.f32 %v4253, %v1637
    %v4256 = vadd.f32 %v4254, 1e-05
    %v4257 = vadd.f32 %v4255, 1e-05
    %v4258 = vrsqrt.pop %v4256
    %v4259 = vrsqrt.pop %v4257
    %v4260 = vmul.f32 %v4244, %v4258
    %v4261 = vmul.f32 %v4245, %v4259
    %v4262 = vld [vmem:[#allocation24] sm:$0x1]
    %v4264 = vlaneseq
    %v4265 = vshrl.u32 %v4264, 7
    %v4266 = vsub.s32 0, %v4265
    %v4267 = vrot.slane %v4262, %v4266
    %v4269 = vmul.f32 %v4260, %v4267
    %v4270 = vmul.f32 %v4261, %v4267
    %v4271 = vld [vmem:[#allocation22] sm:$0x1]
    %v4273 = vlaneseq
    %v4274 = vshrl.u32 %v4273, 7
    %v4275 = vsub.s32 0, %v4274
    %v4276 = vrot.slane %v4271, %v4275
    %v4278 = vadd.f32 %v4269, %v4276
    %v4279 = vadd.f32 %v4270, %v4276
    %v4280 = vld [vmem:[%s75] sm:$0xff]
    %v4281 = vld [vmem:[%s75 + $0x8] sm:$0xff]
    %v4282 = vld [vmem:[%s75 + $0x10] sm:$0xff]
    %v4283 = vld [vmem:[%s75 + $0x18] sm:$0xff]
    %v4284 = vld [vmem:[#allocation18] sm:$0x1]
    %v4286 = vlaneseq
    %v4287 = vshrl.u32 %v4286, 7
    %v4288 = vsub.s32 0, %v4287
    %v4289 = vrot.slane %v4284, %v4288
    %v4292 = vsel %vm522, %v4278, 0
    %v4295 = vsel %vm522, %v4279, 0
    %4297 = vmatprep.subr.mxu0 0.0
    %4298 = vmatpush1.msra.mxu0 %v4280
    %4299 = vmatprep.subr.mxu0 0.0
    %4300 = vmatpush1.msra.mxu0 %v4281
    %4301 = vmatprep.subr.mxu0 0.0
    %4302 = vmatpush1.msra.mxu0 %v4282
    %4303 = vmatprep.subr.mxu0 0.0
    %4304 = vmatpush1.msra.mxu0 %v4283
    %4305 = vmatprep.subr.mxu0 0.0
    %4306 = vmatpush1.msra.mxu0 0.0
    %4307 = vmatprep.subr.mxu0 0.0
    %4308 = vmatpush1.msra.mxu0 0.0
    %4309 = vmatprep.subr.mxu0 0.0
    %4310 = vmatpush1.msra.mxu0 0.0
    %4311 = vmatprep.subr.mxu0 0.0
    %4312 = vmatpush1.msra.mxu0 0.0
    %4313 = vmatprep.subr.mxu0 0.0
    %4314 = vmatpush1.msra.mxu0 0.0
    %4315 = vmatprep.subr.mxu0 0.0
    %4316 = vmatpush1.msra.mxu0 0.0
    %4317 = vmatprep.subr.mxu0 0.0
    %4318 = vmatpush1.msra.mxu0 0.0
    %4319 = vmatprep.subr.mxu0 0.0
    %4320 = vmatpush1.msra.mxu0 0.0
    %4321 = vmatprep.subr.mxu0 0.0
    %4322 = vmatpush1.msra.mxu0 0.0
    %4323 = vmatprep.subr.mxu0 0.0
    %4324 = vmatpush1.msra.mxu0 0.0
    %4325 = vmatprep.subr.mxu0 0.0
    %4326 = vmatpush1.msra.mxu0 0.0
    %4327 = vmatprep.subr.mxu0 0.0
    %4328 = vmatpush1.msra.mxu0 0.0
    %4329 = vmatprep.subr.mxu0 0.0
    %4330 = vmatpush1.msra.mxu0 0.0
    %4331 = vmatprep.subr.mxu0 0.0
    %4332 = vmatpush1.msra.mxu0 0.0
    %4333 = vmatprep.subr.mxu0 0.0
    %4334 = vmatpush1.msra.mxu0 0.0
    %4335 = vmatprep.subr.mxu0 0.0
    %4336 = vmatpush1.msra.mxu0 0.0
    %4337 = vmatprep.subr.mxu0 0.0
    %4338 = vmatpush1.msra.mxu0 0.0
    %4339 = vmatprep.subr.mxu0 0.0
    %4340 = vmatpush1.msra.mxu0 0.0
    %4341 = vmatprep.subr.mxu0 0.0
    %4342 = vmatpush1.msra.mxu0 0.0
    %4343 = vmatprep.subr.mxu0 0.0
    %4344 = vmatpush1.msra.mxu0 0.0
    %4345 = vmatprep.subr.mxu0 0.0
    %4346 = vmatpush1.msra.mxu0 0.0
    %4347 = vmatprep.subr.mxu0 0.0
    %4348 = vmatpush1.msra.mxu0 0.0
    %4349 = vmatprep.subr.mxu0 0.0
    %4350 = vmatpush1.msra.mxu0 0.0
    %4351 = vmatprep.subr.mxu0 0.0
    %4352 = vmatpush1.msra.mxu0 0.0
    %4353 = vmatprep.subr.mxu0 0.0
    %4354 = vmatpush1.msra.mxu0 0.0
    %4355 = vmatprep.subr.mxu0 0.0
    %4356 = vmatpush1.msra.mxu0 0.0
    %4357 = vmatprep.subr.mxu0 0.0
    %4358 = vmatpush1.msra.mxu0 0.0
    %4359 = vmatprep.subr.mxu0 0.0
    %4360 = vmatpush1.msra.mxu0 0.0
    %4361 = vmatprep.mubr.f32.mxu0 0.0
    %4362 = vmatmul.mubr.f32.gmra.mrb[0].mxu0 %v4292
    %v4363 = vpop.f32.mrb[0].mxu0
    %v4364 = vadd.f32 %v4289, %v4363
    %v4365 = vpop.f32.mrb[0].mxu0
    %4366 = vmatprep.mubr.f32.mxu0 0.0
    %4367 = vmatmul.mubr.f32.gmra.mrb[0].mxu0 %v4295
    %v4368 = vpop.f32.mrb[0].mxu0
    %v4369 = vadd.f32 %v4289, %v4368
    %v4370 = vpop.f32.mrb[0].mxu0
    %4371 = vdwg.mxu0
    %v4372 = vld [vmem:[%s71] sm:$0xff]
    %v4373 = vld [vmem:[%s71 + $0x8] sm:$0xff]
    %v4374 = vld [vmem:[%s71 + $0x10] sm:$0xff]
    %v4375 = vld [vmem:[%s71 + $0x18] sm:$0xff]
    %v4376 = vld [vmem:[#allocation15] sm:$0x1]
    %v4378 = vlaneseq
    %v4379 = vshrl.u32 %v4378, 7
    %v4380 = vsub.s32 0, %v4379
    %v4381 = vrot.slane %v4376, %v4380
    %4383 = vmatprep.subr.mxu0 0.0
    %4384 = vmatpush1.msra.mxu0 %v4372
    %4385 = vmatprep.subr.mxu0 0.0
    %4386 = vmatpush1.msra.mxu0 %v4373
    %4387 = vmatprep.subr.mxu0 0.0
    %4388 = vmatpush1.msra.mxu0 %v4374
    %4389 = vmatprep.subr.mxu0 0.0
    %4390 = vmatpush1.msra.mxu0 %v4375
    %4391 = vmatprep.subr.mxu0 0.0
    %4392 = vmatpush1.msra.mxu0 0.0
    %4393 = vmatprep.subr.mxu0 0.0
    %4394 = vmatpush1.msra.mxu0 0.0
    %4395 = vmatprep.subr.mxu0 0.0
    %4396 = vmatpush1.msra.mxu0 0.0
    %4397 = vmatprep.subr.mxu0 0.0
    %4398 = vmatpush1.msra.mxu0 0.0
    %4399 = vmatprep.subr.mxu0 0.0
    %4400 = vmatpush1.msra.mxu0 0.0
    %4401 = vmatprep.subr.mxu0 0.0
    %4402 = vmatpush1.msra.mxu0 0.0
    %4403 = vmatprep.subr.mxu0 0.0
    %4404 = vmatpush1.msra.mxu0 0.0
    %4405 = vmatprep.subr.mxu0 0.0
    %4406 = vmatpush1.msra.mxu0 0.0
    %4407 = vmatprep.subr.mxu0 0.0
    %4408 = vmatpush1.msra.mxu0 0.0
    %4409 = vmatprep.subr.mxu0 0.0
    %4410 = vmatpush1.msra.mxu0 0.0
    %4411 = vmatprep.subr.mxu0 0.0
    %4412 = vmatpush1.msra.mxu0 0.0
    %4413 = vmatprep.subr.mxu0 0.0
    %4414 = vmatpush1.msra.mxu0 0.0
    %4415 = vmatprep.subr.mxu0 0.0
    %4416 = vmatpush1.msra.mxu0 0.0
    %4417 = vmatprep.subr.mxu0 0.0
    %4418 = vmatpush1.msra.mxu0 0.0
    %4419 = vmatprep.subr.mxu0 0.0
    %4420 = vmatpush1.msra.mxu0 0.0
    %4421 = vmatprep.subr.mxu0 0.0
    %4422 = vmatpush1.msra.mxu0 0.0
    %4423 = vmatprep.subr.mxu0 0.0
    %4424 = vmatpush1.msra.mxu0 0.0
    %4425 = vmatprep.subr.mxu0 0.0
    %4426 = vmatpush1.msra.mxu0 0.0
    %4427 = vmatprep.subr.mxu0 0.0
    %4428 = vmatpush1.msra.mxu0 0.0
    %4429 = vmatprep.subr.mxu0 0.0
    %4430 = vmatpush1.msra.mxu0 0.0
    %4431 = vmatprep.subr.mxu0 0.0
    %4432 = vmatpush1.msra.mxu0 0.0
    %4433 = vmatprep.subr.mxu0 0.0
    %4434 = vmatpush1.msra.mxu0 0.0
    %4435 = vmatprep.subr.mxu0 0.0
    %4436 = vmatpush1.msra.mxu0 0.0
    %4437 = vmatprep.subr.mxu0 0.0
    %4438 = vmatpush1.msra.mxu0 0.0
    %4439 = vmatprep.subr.mxu0 0.0
    %4440 = vmatpush1.msra.mxu0 0.0
    %4441 = vmatprep.subr.mxu0 0.0
    %4442 = vmatpush1.msra.mxu0 0.0
    %4443 = vmatprep.subr.mxu0 0.0
    %4444 = vmatpush1.msra.mxu0 0.0
    %4445 = vmatprep.subr.mxu0 0.0
    %4446 = vmatpush1.msra.mxu0 0.0
    %4447 = vmatprep.mubr.f32.mxu0 0.0
    %4448 = vmatmul.mubr.f32.gmra.mrb[0].mxu0 %v1780
    %v4449 = vpop.f32.mrb[0].mxu0
    %v4450 = vadd.f32 %v4381, %v4449
    %v4451 = vpop.f32.mrb[0].mxu0
    %4452 = vmatprep.mubr.f32.mxu0 0.0
    %4453 = vmatmul.mubr.f32.gmra.mrb[0].mxu0 %v1783
    %v4454 = vpop.f32.mrb[0].mxu0
    %v4455 = vadd.f32 %v4381, %v4454
    %v4456 = vpop.f32.mrb[0].mxu0
    %4457 = vdwg.mxu0
    %v4458 = vmul.f32 %v4364, %v1860
    %v4459 = vmul.f32 %v4369, %v1861
    %v4460 = vmul.f32 %v4364, %v1862
    %v4461 = vmul.f32 %v4369, %v1863
    %v4462 = vmul.f32 %v4364, %v1864
    %v4463 = vmul.f32 %v4369, %v1865
    %v4464 = vmul.f32 %v4364, %v1866
    %v4465 = vmul.f32 %v4369, %v1867
    %v4466 = vld [vmem:[%s67] sm:$0xff]
    %v4467 = vld [vmem:[%s67 + $0x8] sm:$0xff]
    %v4468 = vld [vmem:[%s67 + $0x10] sm:$0xff]
    %v4469 = vld [vmem:[%s67 + $0x18] sm:$0xff]
    %v4471 = vsel %vm522, %v4458, 0
    %v4474 = vsel %vm522, %v4459, 0
    %v4477 = vsel %vm522, %v4460, 0
    %v4480 = vsel %vm522, %v4461, 0
    %v4483 = vsel %vm522, %v4462, 0
    %v4486 = vsel %vm522, %v4463, 0
    %v4489 = vsel %vm522, %v4464, 0
    %v4492 = vsel %vm522, %v4465, 0
    %4494 = vmatprep.subr.mxu0 0.0
    %4495 = vmatpush1.msra.mxu0 %v4466
    %4496 = vmatprep.subr.mxu0 0.0
    %4497 = vmatpush1.msra.mxu0 %v4467
    %4498 = vmatprep.subr.mxu0 0.0
    %4499 = vmatpush1.msra.mxu0 %v4468
    %4500 = vmatprep.subr.mxu0 0.0
    %4501 = vmatpush1.msra.mxu0 %v4469
    %4502 = vmatprep.subr.mxu0 0.0
    %4503 = vmatpush1.msra.mxu0 0.0
    %4504 = vmatprep.subr.mxu0 0.0
    %4505 = vmatpush1.msra.mxu0 0.0
    %4506 = vmatprep.subr.mxu0 0.0
    %4507 = vmatpush1.msra.mxu0 0.0
    %4508 = vmatprep.subr.mxu0 0.0
    %4509 = vmatpush1.msra.mxu0 0.0
    %4510 = vmatprep.subr.mxu0 0.0
    %4511 = vmatpush1.msra.mxu0 0.0
    %4512 = vmatprep.subr.mxu0 0.0
    %4513 = vmatpush1.msra.mxu0 0.0
    %4514 = vmatprep.subr.mxu0 0.0
    %4515 = vmatpush1.msra.mxu0 0.0
    %4516 = vmatprep.subr.mxu0 0.0
    %4517 = vmatpush1.msra.mxu0 0.0
    %4518 = vmatprep.subr.mxu0 0.0
    %4519 = vmatpush1.msra.mxu0 0.0
    %4520 = vmatprep.subr.mxu0 0.0
    %4521 = vmatpush1.msra.mxu0 0.0
    %4522 = vmatprep.subr.mxu0 0.0
    %4523 = vmatpush1.msra.mxu0 0.0
    %4524 = vmatprep.subr.mxu0 0.0
    %4525 = vmatpush1.msra.mxu0 0.0
    %4526 = vmatprep.subr.mxu0 0.0
    %4527 = vmatpush1.msra.mxu0 0.0
    %4528 = vmatprep.subr.mxu0 0.0
    %4529 = vmatpush1.msra.mxu0 0.0
    %4530 = vmatprep.subr.mxu0 0.0
    %4531 = vmatpush1.msra.mxu0 0.0
    %4532 = vmatprep.subr.mxu0 0.0
    %4533 = vmatpush1.msra.mxu0 0.0
    %4534 = vmatprep.subr.mxu0 0.0
    %4535 = vmatpush1.msra.mxu0 0.0
    %4536 = vmatprep.subr.mxu0 0.0
    %4537 = vmatpush1.msra.mxu0 0.0
    %4538 = vmatprep.subr.mxu0 0.0
    %4539 = vmatpush1.msra.mxu0 0.0
    %4540 = vmatprep.subr.mxu0 0.0
    %4541 = vmatpush1.msra.mxu0 0.0
    %4542 = vmatprep.subr.mxu0 0.0
    %4543 = vmatpush1.msra.mxu0 0.0
    %4544 = vmatprep.subr.mxu0 0.0
    %4545 = vmatpush1.msra.mxu0 0.0
    %4546 = vmatprep.subr.mxu0 0.0
    %4547 = vmatpush1.msra.mxu0 0.0
    %4548 = vmatprep.subr.mxu0 0.0
    %4549 = vmatpush1.msra.mxu0 0.0
    %4550 = vmatprep.subr.mxu0 0.0
    %4551 = vmatpush1.msra.mxu0 0.0
    %4552 = vmatprep.subr.mxu0 0.0
    %4553 = vmatpush1.msra.mxu0 0.0
    %4554 = vmatprep.subr.mxu0 0.0
    %4555 = vmatpush1.msra.mxu0 0.0
    %4556 = vmatprep.subr.mxu0 0.0
    %4557 = vmatpush1.msra.mxu0 0.0
    %4558 = vmatprep.mubr.f32.mxu0 0.0
    %4559 = vmatmul.mubr.f32.gmra.mrb[0].mxu0 %v4471
    %v4560 = vpop.f32.mrb[0].mxu0
    %v4561 = vadd.f32 0.0, %v4560
    %v4562 = vpop.f32.mrb[0].mxu0
    %4563 = vmatprep.mubr.f32.mxu0 0.0
    %4564 = vmatmul.mubr.f32.gmra.mrb[0].mxu0 %v4474
    %v4565 = vpop.f32.mrb[0].mxu0
    %v4566 = vadd.f32 0.0, %v4565
    %v4567 = vpop.f32.mrb[0].mxu0
    %4568 = vmatprep.mubr.f32.mxu0 0.0
    %4569 = vmatmul.mubr.f32.gmra.mrb[0].mxu0 %v4477
    %v4570 = vpop.f32.mrb[0].mxu0
    %v4571 = vadd.f32 0.0, %v4570
    %v4572 = vpop.f32.mrb[0].mxu0
    %4573 = vmatprep.mubr.f32.mxu0 0.0
    %4574 = vmatmul.mubr.f32.gmra.mrb[0].mxu0 %v4480
    %v4575 = vpop.f32.mrb[0].mxu0
    %v4576 = vadd.f32 0.0, %v4575
    %v4577 = vpop.f32.mrb[0].mxu0
    %4578 = vmatprep.mubr.f32.mxu0 0.0
    %4579 = vmatmul.mubr.f32.gmra.mrb[0].mxu0 %v4483
    %v4580 = vpop.f32.mrb[0].mxu0
    %v4581 = vadd.f32 0.0, %v4580
    %v4582 = vpop.f32.mrb[0].mxu0
    %4583 = vmatprep.mubr.f32.mxu0 0.0
    %4584 = vmatmul.mubr.f32.gmra.mrb[0].mxu0 %v4486
    %v4585 = vpop.f32.mrb[0].mxu0
    %v4586 = vadd.f32 0.0, %v4585
    %v4587 = vpop.f32.mrb[0].mxu0
    %4588 = vmatprep.mubr.f32.mxu0 0.0
    %4589 = vmatmul.mubr.f32.gmra.mrb[0].mxu0 %v4489
    %v4590 = vpop.f32.mrb[0].mxu0
    %v4591 = vadd.f32 0.0, %v4590
    %v4592 = vpop.f32.mrb[0].mxu0
    %4593 = vmatprep.mubr.f32.mxu0 0.0
    %4594 = vmatmul.mubr.f32.gmra.mrb[0].mxu0 %v4492
    %v4595 = vpop.f32.mrb[0].mxu0
    %v4596 = vadd.f32 0.0, %v4595
    %v4597 = vpop.f32.mrb[0].mxu0
    %4598 = vdwg.mxu0
    %v4599 = vmul.f32 %v4561, %v2009
    %v4600 = vmul.f32 %v4566, %v2010
    %v4601 = vmul.f32 %v4571, %v2011
    %v4602 = vmul.f32 %v4576, %v2012
    %v4603 = vmul.f32 %v4581, %v2013
    %v4604 = vmul.f32 %v4586, %v2014
    %v4605 = vmul.f32 %v4591, %v2015
    %v4606 = vmul.f32 %v4596, %v2016
    %v4608 = vsel %vm778, %v4599, 0
    %v4611 = vsel %vm778, %v4600, 0
    %v4614 = vsel %vm778, %v4601, 0
    %v4617 = vsel %vm778, %v4602, 0
    %v4620 = vsel %vm778, %v4603, 0
    %v4623 = vsel %vm778, %v4604, 0
    %v4626 = vsel %vm778, %v4605, 0
    %v4629 = vsel %vm778, %v4606, 0
    %4631 = vmatprep.subr.mxu0 0.0
    %4632 = vmatpush1.msra.mxu0 %v2025
    %4633 = vmatprep.subr.mxu0 0.0
    %4634 = vmatpush1.msra.mxu0 %v2026
    %4635 = vmatprep.subr.mxu0 0.0
    %4636 = vmatpush1.msra.mxu0 %v2027
    %4637 = vmatprep.subr.mxu0 0.0
    %4638 = vmatpush1.msra.mxu0 %v2028
    %4639 = vmatprep.subr.mxu0 0.0
    %4640 = vmatpush1.msra.mxu0 %v2029
    %4641 = vmatprep.subr.mxu0 0.0
    %4642 = vmatpush1.msra.mxu0 %v2030
    %4643 = vmatprep.subr.mxu0 0.0
    %4644 = vmatpush1.msra.mxu0 %v2031
    %4645 = vmatprep.subr.mxu0 0.0
    %4646 = vmatpush1.msra.mxu0 %v2032
    %4647 = vmatprep.subr.mxu0 0.0
    %4648 = vmatpush1.msra.mxu0 %v2033
    %4649 = vmatprep.subr.mxu0 0.0
    %4650 = vmatpush1.msra.mxu0 0.0
    %4651 = vmatprep.subr.mxu0 0.0
    %4652 = vmatpush1.msra.mxu0 0.0
    %4653 = vmatprep.subr.mxu0 0.0
    %4654 = vmatpush1.msra.mxu0 0.0
    %4655 = vmatprep.subr.mxu0 0.0
    %4656 = vmatpush1.msra.mxu0 0.0
    %4657 = vmatprep.subr.mxu0 0.0
    %4658 = vmatpush1.msra.mxu0 0.0
    %4659 = vmatprep.subr.mxu0 0.0
    %4660 = vmatpush1.msra.mxu0 0.0
    %4661 = vmatprep.subr.mxu0 0.0
    %4662 = vmatpush1.msra.mxu0 0.0
    %4663 = vmatprep.subr.mxu0 0.0
    %4664 = vmatpush1.msra.mxu0 0.0
    %4665 = vmatprep.subr.mxu0 0.0
    %4666 = vmatpush1.msra.mxu0 0.0
    %4667 = vmatprep.subr.mxu0 0.0
    %4668 = vmatpush1.msra.mxu0 0.0
    %4669 = vmatprep.subr.mxu0 0.0
    %4670 = vmatpush1.msra.mxu0 0.0
    %4671 = vmatprep.subr.mxu0 0.0
    %4672 = vmatpush1.msra.mxu0 0.0
    %4673 = vmatprep.subr.mxu0 0.0
    %4674 = vmatpush1.msra.mxu0 0.0
    %4675 = vmatprep.subr.mxu0 0.0
    %4676 = vmatpush1.msra.mxu0 0.0
    %4677 = vmatprep.subr.mxu0 0.0
    %4678 = vmatpush1.msra.mxu0 0.0
    %4679 = vmatprep.subr.mxu0 0.0
    %4680 = vmatpush1.msra.mxu0 0.0
    %4681 = vmatprep.subr.mxu0 0.0
    %4682 = vmatpush1.msra.mxu0 0.0
    %4683 = vmatprep.subr.mxu0 0.0
    %4684 = vmatpush1.msra.mxu0 0.0
    %4685 = vmatprep.subr.mxu0 0.0
    %4686 = vmatpush1.msra.mxu0 0.0
    %4687 = vmatprep.subr.mxu0 0.0
    %4688 = vmatpush1.msra.mxu0 0.0
    %4689 = vmatprep.subr.mxu0 0.0
    %4690 = vmatpush1.msra.mxu0 0.0
    %4691 = vmatprep.subr.mxu0 0.0
    %4692 = vmatpush1.msra.mxu0 0.0
    %4693 = vmatprep.subr.mxu0 0.0
    %4694 = vmatpush1.msra.mxu0 0.0
    %4695 = vmatprep.mubr.f32.mxu0 0.0
    %4696 = vmatmul.mubr.f32.gmra.mrb[0].mxu0 %v4608
    %v4697 = vpop.f32.mrb[0].mxu0
    %v4698 = vadd.f32 0.0, %v4697
    %v4699 = vpop.f32.mrb[0].mxu0
    %4700 = vmatprep.mubr.f32.mxu0 0.0
    %4701 = vmatmul.mubr.f32.gmra.mrb[0].mxu0 %v4611
    %v4702 = vpop.f32.mrb[0].mxu0
    %v4703 = vadd.f32 0.0, %v4702
    %v4704 = vpop.f32.mrb[0].mxu0
    %4705 = vmatprep.mubr.f32.mxu0 0.0
    %4706 = vmatmul.mubr.f32.gmra.mrb[0].mxu0 %v4614
    %v4707 = vpop.f32.mrb[0].mxu0
    %v4708 = vadd.f32 0.0, %v4707
    %v4709 = vpop.f32.mrb[0].mxu0
    %4710 = vmatprep.mubr.f32.mxu0 0.0
    %4711 = vmatmul.mubr.f32.gmra.mrb[0].mxu0 %v4617
    %v4712 = vpop.f32.mrb[0].mxu0
    %v4713 = vadd.f32 0.0, %v4712
    %v4714 = vpop.f32.mrb[0].mxu0
    %4715 = vmatprep.mubr.f32.mxu0 0.0
    %4716 = vmatmul.mubr.f32.gmra.mrb[0].mxu0 %v4620
    %v4717 = vpop.f32.mrb[0].mxu0
    %v4718 = vadd.f32 0.0, %v4717
    %v4719 = vpop.f32.mrb[0].mxu0
    %4720 = vmatprep.mubr.f32.mxu0 0.0
    %4721 = vmatmul.mubr.f32.gmra.mrb[0].mxu0 %v4623
    %v4722 = vpop.f32.mrb[0].mxu0
    %v4723 = vadd.f32 0.0, %v4722
    %v4724 = vpop.f32.mrb[0].mxu0
    %4725 = vmatprep.mubr.f32.mxu0 0.0
    %4726 = vmatmul.mubr.f32.gmra.mrb[0].mxu0 %v4626
    %v4727 = vpop.f32.mrb[0].mxu0
    %v4728 = vadd.f32 0.0, %v4727
    %v4729 = vpop.f32.mrb[0].mxu0
    %4730 = vmatprep.mubr.f32.mxu0 0.0
    %4731 = vmatmul.mubr.f32.gmra.mrb[0].mxu0 %v4629
    %v4732 = vpop.f32.mrb[0].mxu0
    %v4733 = vadd.f32 0.0, %v4732
    %v4734 = vpop.f32.mrb[0].mxu0
    %4735 = vdwg.mxu0
    %v4737 = vsel %vm522, %v4450, 0
    %v4740 = vsel %vm522, %v4455, 0
    %4742 = vmatprep.subr.mxu0 0.0
    %4743 = vmatpush1.xpose.msra.mxu0 %v4737
    %4744 = vmatprep.subr.mxu0 0.0
    %4745 = vmatpush1.xpose.msra.mxu0 %v4740
    %4746 = vmatprep.subr.mxu0 0.0
    %4747 = vmatpush1.xpose.msra.mxu0 0.0
    %4748 = vmatprep.subr.mxu0 0.0
    %4749 = vmatpush1.xpose.msra.mxu0 0.0
    %4750 = vmatprep.subr.mxu0 0.0
    %4751 = vmatpush1.xpose.msra.mxu0 0.0
    %4752 = vmatprep.subr.mxu0 0.0
    %4753 = vmatpush1.xpose.msra.mxu0 0.0
    %4754 = vmatprep.subr.mxu0 0.0
    %4755 = vmatpush1.xpose.msra.mxu0 0.0
    %4756 = vmatprep.subr.mxu0 0.0
    %4757 = vmatpush1.xpose.msra.mxu0 0.0
    %4758 = vmatprep.subr.mxu0 0.0
    %4759 = vmatpush1.xpose.msra.mxu0 0.0
    %4760 = vmatprep.subr.mxu0 0.0
    %4761 = vmatpush1.xpose.msra.mxu0 0.0
    %4762 = vmatprep.subr.mxu0 0.0
    %4763 = vmatpush1.xpose.msra.mxu0 0.0
    %4764 = vmatprep.subr.mxu0 0.0
    %4765 = vmatpush1.xpose.msra.mxu0 0.0
    %4766 = vmatprep.subr.mxu0 0.0
    %4767 = vmatpush1.xpose.msra.mxu0 0.0
    %4768 = vmatprep.subr.mxu0 0.0
    %4769 = vmatpush1.xpose.msra.mxu0 0.0
    %4770 = vmatprep.subr.mxu0 0.0
    %4771 = vmatpush1.xpose.msra.mxu0 0.0
    %4772 = vmatprep.subr.mxu0 0.0
    %4773 = vmatpush1.xpose.msra.mxu0 0.0
    %4774 = vmatprep.subr.mxu0 0.0
    %4775 = vmatpush1.xpose.msra.mxu0 0.0
    %4776 = vmatprep.subr.mxu0 0.0
    %4777 = vmatpush1.xpose.msra.mxu0 0.0
    %4778 = vmatprep.subr.mxu0 0.0
    %4779 = vmatpush1.xpose.msra.mxu0 0.0
    %4780 = vmatprep.subr.mxu0 0.0
    %4781 = vmatpush1.xpose.msra.mxu0 0.0
    %4782 = vmatprep.subr.mxu0 0.0
    %4783 = vmatpush1.xpose.msra.mxu0 0.0
    %4784 = vmatprep.subr.mxu0 0.0
    %4785 = vmatpush1.xpose.msra.mxu0 0.0
    %4786 = vmatprep.subr.mxu0 0.0
    %4787 = vmatpush1.xpose.msra.mxu0 0.0
    %4788 = vmatprep.subr.mxu0 0.0
    %4789 = vmatpush1.xpose.msra.mxu0 0.0
    %4790 = vmatprep.subr.mxu0 0.0
    %4791 = vmatpush1.xpose.msra.mxu0 0.0
    %4792 = vmatprep.subr.mxu0 0.0
    %4793 = vmatpush1.xpose.msra.mxu0 0.0
    %4794 = vmatprep.subr.mxu0 0.0
    %4795 = vmatpush1.xpose.msra.mxu0 0.0
    %4796 = vmatprep.subr.mxu0 0.0
    %4797 = vmatpush1.xpose.msra.mxu0 0.0
    %4798 = vmatprep.subr.mxu0 0.0
    %4799 = vmatpush1.xpose.msra.mxu0 0.0
    %4800 = vmatprep.subr.mxu0 0.0
    %4801 = vmatpush1.xpose.msra.mxu0 0.0
    %4802 = vmatprep.subr.mxu0 0.0
    %4803 = vmatpush1.xpose.msra.mxu0 0.0
    %4804 = vmatprep.subr.mxu0 0.0
    %4805 = vmatpush1.xpose.msra.mxu0 0.0
    %4806 = vmatprep.mubr.f32.mxu0 0.0
    %4807 = vmatmul.mubr.f32.gmra.mrb[0].mxu0 %v4471
    %v4808 = vpop.f32.mrb[0].mxu0
    %v4809 = vadd.f32 %v4698, %v4808
    %v4810 = vpop.f32.mrb[0].mxu0
    %4811 = vmatprep.mubr.f32.mxu0 0.0
    %4812 = vmatmul.mubr.f32.gmra.mrb[0].mxu0 %v4474
    %v4813 = vpop.f32.mrb[0].mxu0
    %v4814 = vadd.f32 %v4703, %v4813
    %v4815 = vpop.f32.mrb[0].mxu0
    %4816 = vmatprep.mubr.f32.mxu0 0.0
    %4817 = vmatmul.mubr.f32.gmra.mrb[0].mxu0 %v4477
    %v4818 = vpop.f32.mrb[0].mxu0
    %v4819 = vadd.f32 %v4708, %v4818
    %v4820 = vpop.f32.mrb[0].mxu0
    %4821 = vmatprep.mubr.f32.mxu0 0.0
    %4822 = vmatmul.mubr.f32.gmra.mrb[0].mxu0 %v4480
    %v4823 = vpop.f32.mrb[0].mxu0
    %v4824 = vadd.f32 %v4713, %v4823
    %v4825 = vpop.f32.mrb[0].mxu0
    %4826 = vmatprep.mubr.f32.mxu0 0.0
    %4827 = vmatmul.mubr.f32.gmra.mrb[0].mxu0 %v4483
    %v4828 = vpop.f32.mrb[0].mxu0
    %v4829 = vadd.f32 %v4718, %v4828
    %v4830 = vpop.f32.mrb[0].mxu0
    %4831 = vmatprep.mubr.f32.mxu0 0.0
    %4832 = vmatmul.mubr.f32.gmra.mrb[0].mxu0 %v4486
    %v4833 = vpop.f32.mrb[0].mxu0
    %v4834 = vadd.f32 %v4723, %v4833
    %v4835 = vpop.f32.mrb[0].mxu0
    %4836 = vmatprep.mubr.f32.mxu0 0.0
    %4837 = vmatmul.mubr.f32.gmra.mrb[0].mxu0 %v4489
    %v4838 = vpop.f32.mrb[0].mxu0
    %v4839 = vadd.f32 %v4728, %v4838
    %v4840 = vpop.f32.mrb[0].mxu0
    %4841 = vmatprep.mubr.f32.mxu0 0.0
    %4842 = vmatmul.mubr.f32.gmra.mrb[0].mxu0 %v4492
    %v4843 = vpop.f32.mrb[0].mxu0
    %v4844 = vadd.f32 %v4733, %v4843
    %v4845 = vpop.f32.mrb[0].mxu0
    %4846 = vdwg.mxu0
    %v4847 = vadd.f32 %v4809, %v2274
    %v4848 = vadd.f32 %v4814, %v2275
    %v4849 = vadd.f32 %v4819, %v2276
    %v4850 = vadd.f32 %v4824, %v2277
    %v4851 = vadd.f32 %v4829, %v2278
    %v4852 = vadd.f32 %v4834, %v2279
    %v4853 = vadd.f32 %v4839, %v2280
    %v4854 = vadd.f32 %v4844, %v2281
    %v4855 = vsel %vm1039, %v4847, -inf
    %4856 = vmax.xlane.f32.xlu0 %v4855
    %v4857 = vpop.xlane.xlu0 %4856
    %v4858 = vsel %vm1039, %v4848, -inf
    %4859 = vmax.xlane.f32.xlu0 %v4858
    %v4860 = vpop.xlane.xlu0 %4859
    %v4861 = vsel %vm1039, %v4849, -inf
    %4862 = vmax.xlane.f32.xlu0 %v4861
    %v4863 = vpop.xlane.xlu0 %4862
    %v4864 = vsel %vm1039, %v4850, -inf
    %4865 = vmax.xlane.f32.xlu0 %v4864
    %v4866 = vpop.xlane.xlu0 %4865
    %v4867 = vsel %vm1039, %v4851, -inf
    %4868 = vmax.xlane.f32.xlu0 %v4867
    %v4869 = vpop.xlane.xlu0 %4868
    %v4870 = vsel %vm1039, %v4852, -inf
    %4871 = vmax.xlane.f32.xlu0 %v4870
    %v4872 = vpop.xlane.xlu0 %4871
    %v4873 = vsel %vm1039, %v4853, -inf
    %4874 = vmax.xlane.f32.xlu0 %v4873
    %v4875 = vpop.xlane.xlu0 %4874
    %v4876 = vsel %vm1039, %v4854, -inf
    %4877 = vmax.xlane.f32.xlu0 %v4876
    %v4878 = vpop.xlane.xlu0 %4877
    %v4879 = vsub.f32 %v4847, %v4857
    %v4880 = vsub.f32 %v4848, %v4860
    %v4881 = vsub.f32 %v4849, %v4863
    %v4882 = vsub.f32 %v4850, %v4866
    %v4883 = vsub.f32 %v4851, %v4869
    %v4884 = vsub.f32 %v4852, %v4872
    %v4885 = vsub.f32 %v4853, %v4875
    %v4886 = vsub.f32 %v4854, %v4878
    %v4887 = vmul.f32 %v4879, 1.442695
    %v4888 = vpow.pop %v4887
    %v4889 = vmul.f32 %v4880, 1.442695
    %v4890 = vpow.pop %v4889
    %v4891 = vmul.f32 %v4881, 1.442695
    %v4892 = vpow.pop %v4891
    %v4893 = vmul.f32 %v4882, 1.442695
    %v4894 = vpow.pop %v4893
    %v4895 = vmul.f32 %v4883, 1.442695
    %v4896 = vpow.pop %v4895
    %v4897 = vmul.f32 %v4884, 1.442695
    %v4898 = vpow.pop %v4897
    %v4899 = vmul.f32 %v4885, 1.442695
    %v4900 = vpow.pop %v4899
    %v4901 = vmul.f32 %v4886, 1.442695
    %v4902 = vpow.pop %v4901
    %v4903 = vsel %vm1039, %v4888, 0.0
    %4904 = vadd.xlane.f32.xlu0 %v4903
    %v4905 = vpop.xlane.xlu0 %4904
    %v4906 = vsel %vm1039, %v4890, 0.0
    %4907 = vadd.xlane.f32.xlu0 %v4906
    %v4908 = vpop.xlane.xlu0 %4907
    %v4909 = vsel %vm1039, %v4892, 0.0
    %4910 = vadd.xlane.f32.xlu0 %v4909
    %v4911 = vpop.xlane.xlu0 %4910
    %v4912 = vsel %vm1039, %v4894, 0.0
    %4913 = vadd.xlane.f32.xlu0 %v4912
    %v4914 = vpop.xlane.xlu0 %4913
    %v4915 = vsel %vm1039, %v4896, 0.0
    %4916 = vadd.xlane.f32.xlu0 %v4915
    %v4917 = vpop.xlane.xlu0 %4916
    %v4918 = vsel %vm1039, %v4898, 0.0
    %4919 = vadd.xlane.f32.xlu0 %v4918
    %v4920 = vpop.xlane.xlu0 %4919
    %v4921 = vsel %vm1039, %v4900, 0.0
    %4922 = vadd.xlane.f32.xlu0 %v4921
    %v4923 = vpop.xlane.xlu0 %4922
    %v4924 = vsel %vm1039, %v4902, 0.0
    %4925 = vadd.xlane.f32.xlu0 %v4924
    %v4926 = vpop.xlane.xlu0 %4925
    %v4927 = vrcp.pop %v4905
    %v4928 = vrcp.pop %v4908
    %v4929 = vrcp.pop %v4911
    %v4930 = vrcp.pop %v4914
    %v4931 = vrcp.pop %v4917
    %v4932 = vrcp.pop %v4920
    %v4933 = vrcp.pop %v4923
    %v4934 = vrcp.pop %v4926
    %v4935 = vmul.f32 %v4888, %v4927
    %v4936 = vmul.f32 %v4890, %v4928
    %v4937 = vmul.f32 %v4892, %v4929
    %v4938 = vmul.f32 %v4894, %v4930
    %v4939 = vmul.f32 %v4896, %v4931
    %v4940 = vmul.f32 %v4898, %v4932
    %v4941 = vmul.f32 %v4900, %v4933
    %v4942 = vmul.f32 %v4902, %v4934
    %4943 = vrot.lane.b32.xlu0 %v4450, 96
    %v4944 = vpop.permute.xlu0 %4943
    %4945 = vrot.lane.b32.xlu0 %v4455, 96
    %v4946 = vpop.permute.xlu0 %4945
    %v4950 = vsel %vm1039, %v4935, 0
    %v4953 = vsel %vm1039, %v4936, 0
    %v4956 = vsel %vm1039, %v4937, 0
    %v4959 = vsel %vm1039, %v4938, 0
    %v4962 = vsel %vm1039, %v4939, 0
    %v4965 = vsel %vm1039, %v4940, 0
    %v4968 = vsel %vm1039, %v4941, 0
    %v4971 = vsel %vm1039, %v4942, 0
    %4973 = vmatprep.subr.mxu0 0.0
    %4974 = vmatpush1.msra.mxu0 %v4944
    %4975 = vmatprep.subr.mxu0 0.0
    %4976 = vmatpush1.msra.mxu0 %v4946
    %4977 = vmatprep.subr.mxu0 0.0
    %4978 = vmatpush1.msra.mxu0 0.0
    %4979 = vmatprep.subr.mxu0 0.0
    %4980 = vmatpush1.msra.mxu0 0.0
    %4981 = vmatprep.subr.mxu0 0.0
    %4982 = vmatpush1.msra.mxu0 0.0
    %4983 = vmatprep.subr.mxu0 0.0
    %4984 = vmatpush1.msra.mxu0 0.0
    %4985 = vmatprep.subr.mxu0 0.0
    %4986 = vmatpush1.msra.mxu0 0.0
    %4987 = vmatprep.subr.mxu0 0.0
    %4988 = vmatpush1.msra.mxu0 0.0
    %4989 = vmatprep.subr.mxu0 0.0
    %4990 = vmatpush1.msra.mxu0 0.0
    %4991 = vmatprep.subr.mxu0 0.0
    %4992 = vmatpush1.msra.mxu0 0.0
    %4993 = vmatprep.subr.mxu0 0.0
    %4994 = vmatpush1.msra.mxu0 0.0
    %4995 = vmatprep.subr.mxu0 0.0
    %4996 = vmatpush1.msra.mxu0 0.0
    %4997 = vmatprep.subr.mxu0 0.0
    %4998 = vmatpush1.msra.mxu0 0.0
    %4999 = vmatprep.subr.mxu0 0.0
    %5000 = vmatpush1.msra.mxu0 0.0
    %5001 = vmatprep.subr.mxu0 0.0
    %5002 = vmatpush1.msra.mxu0 0.0
    %5003 = vmatprep.subr.mxu0 0.0
    %5004 = vmatpush1.msra.mxu0 0.0
    %5005 = vmatprep.subr.mxu0 0.0
    %5006 = vmatpush1.msra.mxu0 0.0
    %5007 = vmatprep.subr.mxu0 0.0
    %5008 = vmatpush1.msra.mxu0 0.0
    %5009 = vmatprep.subr.mxu0 0.0
    %5010 = vmatpush1.msra.mxu0 0.0
    %5011 = vmatprep.subr.mxu0 0.0
    %5012 = vmatpush1.msra.mxu0 0.0
    %5013 = vmatprep.subr.mxu0 0.0
    %5014 = vmatpush1.msra.mxu0 0.0
    %5015 = vmatprep.subr.mxu0 0.0
    %5016 = vmatpush1.msra.mxu0 0.0
    %5017 = vmatprep.subr.mxu0 0.0
    %5018 = vmatpush1.msra.mxu0 0.0
    %5019 = vmatprep.subr.mxu0 0.0
    %5020 = vmatpush1.msra.mxu0 0.0
    %5021 = vmatprep.subr.mxu0 0.0
    %5022 = vmatpush1.msra.mxu0 0.0
    %5023 = vmatprep.subr.mxu0 0.0
    %5024 = vmatpush1.msra.mxu0 0.0
    %5025 = vmatprep.subr.mxu0 0.0
    %5026 = vmatpush1.msra.mxu0 0.0
    %5027 = vmatprep.subr.mxu0 0.0
    %5028 = vmatpush1.msra.mxu0 0.0
    %5029 = vmatprep.subr.mxu0 0.0
    %5030 = vmatpush1.msra.mxu0 0.0
    %5031 = vmatprep.subr.mxu0 0.0
    %5032 = vmatpush1.msra.mxu0 0.0
    %5033 = vmatprep.subr.mxu0 0.0
    %5034 = vmatpush1.msra.mxu0 0.0
    %5035 = vmatprep.subr.mxu0 0.0
    %5036 = vmatpush1.msra.mxu0 0.0
    %5037 = vmatprep.mubr.f32.mxu0 0.0
    %5038 = vmatmul.mubr.f32.gmra.mrb[0].mxu0 %v4950
    %v5039 = vpop.f32.mrb[0].mxu0
    %v5040 = vadd.f32 0.0, %v5039
    %v5041 = vpop.f32.mrb[0].mxu0
    %5042 = vmatprep.mubr.f32.mxu0 0.0
    %5043 = vmatmul.mubr.f32.gmra.mrb[0].mxu0 %v4953
    %v5044 = vpop.f32.mrb[0].mxu0
    %v5045 = vadd.f32 0.0, %v5044
    %v5046 = vpop.f32.mrb[0].mxu0
    %5047 = vmatprep.mubr.f32.mxu0 0.0
    %5048 = vmatmul.mubr.f32.gmra.mrb[0].mxu0 %v4956
    %v5049 = vpop.f32.mrb[0].mxu0
    %v5050 = vadd.f32 0.0, %v5049
    %v5051 = vpop.f32.mrb[0].mxu0
    %5052 = vmatprep.mubr.f32.mxu0 0.0
    %5053 = vmatmul.mubr.f32.gmra.mrb[0].mxu0 %v4959
    %v5054 = vpop.f32.mrb[0].mxu0
    %v5055 = vadd.f32 0.0, %v5054
    %v5056 = vpop.f32.mrb[0].mxu0
    %5057 = vmatprep.mubr.f32.mxu0 0.0
    %5058 = vmatmul.mubr.f32.gmra.mrb[0].mxu0 %v4962
    %v5059 = vpop.f32.mrb[0].mxu0
    %v5060 = vadd.f32 0.0, %v5059
    %v5061 = vpop.f32.mrb[0].mxu0
    %5062 = vmatprep.mubr.f32.mxu0 0.0
    %5063 = vmatmul.mubr.f32.gmra.mrb[0].mxu0 %v4965
    %v5064 = vpop.f32.mrb[0].mxu0
    %v5065 = vadd.f32 0.0, %v5064
    %v5066 = vpop.f32.mrb[0].mxu0
    %5067 = vmatprep.mubr.f32.mxu0 0.0
    %5068 = vmatmul.mubr.f32.gmra.mrb[0].mxu0 %v4968
    %v5069 = vpop.f32.mrb[0].mxu0
    %v5070 = vadd.f32 0.0, %v5069
    %v5071 = vpop.f32.mrb[0].mxu0
    %5072 = vmatprep.mubr.f32.mxu0 0.0
    %5073 = vmatmul.mubr.f32.gmra.mrb[0].mxu0 %v4971
    %v5074 = vpop.f32.mrb[0].mxu0
    %v5075 = vadd.f32 0.0, %v5074
    %v5076 = vpop.f32.mrb[0].mxu0
    %5077 = vdwg.mxu0
    %v5078 = vmul.f32 %v5040, %v1860
    %v5079 = vmul.f32 %v5045, %v1861
    %v5080 = vmul.f32 %v5050, %v1862
    %v5081 = vmul.f32 %v5055, %v1863
    %v5082 = vmul.f32 %v5060, %v1864
    %v5083 = vmul.f32 %v5065, %v1865
    %v5084 = vmul.f32 %v5070, %v1866
    %v5085 = vmul.f32 %v5075, %v1867
    %v5086 = vadd.f32 %v5078, %v5080
    %v5087 = vadd.f32 %v5079, %v5081
    %v5088 = vadd.f32 %v5086, %v5082
    %v5089 = vadd.f32 %v5087, %v5083
    %v5090 = vadd.f32 %v5088, %v5084
    %v5091 = vadd.f32 %v5089, %v5085
    %5092 = vmatprep.subr.mxu0 0.0
    %5093 = vmatpush1.msra.mxu0 %v2527
    %5094 = vmatprep.subr.mxu0 0.0
    %5095 = vmatpush1.msra.mxu0 %v2528
    %5096 = vmatprep.subr.mxu0 0.0
    %5097 = vmatpush1.msra.mxu0 0.0
    %5098 = vmatprep.subr.mxu0 0.0
    %5099 = vmatpush1.msra.mxu0 0.0
    %5100 = vmatprep.subr.mxu0 0.0
    %5101 = vmatpush1.msra.mxu0 0.0
    %5102 = vmatprep.subr.mxu0 0.0
    %5103 = vmatpush1.msra.mxu0 0.0
    %5104 = vmatprep.subr.mxu0 0.0
    %5105 = vmatpush1.msra.mxu0 0.0
    %5106 = vmatprep.subr.mxu0 0.0
    %5107 = vmatpush1.msra.mxu0 0.0
    %5108 = vmatprep.subr.mxu0 0.0
    %5109 = vmatpush1.msra.mxu0 0.0
    %5110 = vmatprep.subr.mxu0 0.0
    %5111 = vmatpush1.msra.mxu0 0.0
    %5112 = vmatprep.subr.mxu0 0.0
    %5113 = vmatpush1.msra.mxu0 0.0
    %5114 = vmatprep.subr.mxu0 0.0
    %5115 = vmatpush1.msra.mxu0 0.0
    %5116 = vmatprep.subr.mxu0 0.0
    %5117 = vmatpush1.msra.mxu0 0.0
    %5118 = vmatprep.subr.mxu0 0.0
    %5119 = vmatpush1.msra.mxu0 0.0
    %5120 = vmatprep.subr.mxu0 0.0
    %5121 = vmatpush1.msra.mxu0 0.0
    %5122 = vmatprep.subr.mxu0 0.0
    %5123 = vmatpush1.msra.mxu0 0.0
    %5124 = vmatprep.subr.mxu0 0.0
    %5125 = vmatpush1.msra.mxu0 0.0
    %5126 = vmatprep.subr.mxu0 0.0
    %5127 = vmatpush1.msra.mxu0 0.0
    %5128 = vmatprep.subr.mxu0 0.0
    %5129 = vmatpush1.msra.mxu0 0.0
    %5130 = vmatprep.subr.mxu0 0.0
    %5131 = vmatpush1.msra.mxu0 0.0
    %5132 = vmatprep.subr.mxu0 0.0
    %5133 = vmatpush1.msra.mxu0 0.0
    %5134 = vmatprep.subr.mxu0 0.0
    %5135 = vmatpush1.msra.mxu0 0.0
    %5136 = vmatprep.subr.mxu0 0.0
    %5137 = vmatpush1.msra.mxu0 0.0
    %5138 = vmatprep.subr.mxu0 0.0
    %5139 = vmatpush1.msra.mxu0 0.0
    %5140 = vmatprep.subr.mxu0 0.0
    %5141 = vmatpush1.msra.mxu0 0.0
    %5142 = vmatprep.subr.mxu0 0.0
    %5143 = vmatpush1.msra.mxu0 0.0
    %5144 = vmatprep.subr.mxu0 0.0
    %5145 = vmatpush1.msra.mxu0 0.0
    %5146 = vmatprep.subr.mxu0 0.0
    %5147 = vmatpush1.msra.mxu0 0.0
    %5148 = vmatprep.subr.mxu0 0.0
    %5149 = vmatpush1.msra.mxu0 0.0
    %5150 = vmatprep.subr.mxu0 0.0
    %5151 = vmatpush1.msra.mxu0 0.0
    %5152 = vmatprep.subr.mxu0 0.0
    %5153 = vmatpush1.msra.mxu0 0.0
    %5154 = vmatprep.subr.mxu0 0.0
    %5155 = vmatpush1.msra.mxu0 0.0
    %5156 = vmatprep.mubr.f32.mxu0 0.0
    %5157 = vmatmul.mubr.f32.gmra.mrb[0].mxu0 %v4950
    %v5158 = vpop.f32.mrb[0].mxu0
    %v5159 = vadd.f32 0.0, %v5158
    %v5160 = vpop.f32.mrb[0].mxu0
    %5161 = vmatprep.mubr.f32.mxu0 0.0
    %5162 = vmatmul.mubr.f32.gmra.mrb[0].mxu0 %v4953
    %v5163 = vpop.f32.mrb[0].mxu0
    %v5164 = vadd.f32 0.0, %v5163
    %v5165 = vpop.f32.mrb[0].mxu0
    %5166 = vmatprep.mubr.f32.mxu0 0.0
    %5167 = vmatmul.mubr.f32.gmra.mrb[0].mxu0 %v4956
    %v5168 = vpop.f32.mrb[0].mxu0
    %v5169 = vadd.f32 0.0, %v5168
    %v5170 = vpop.f32.mrb[0].mxu0
    %5171 = vmatprep.mubr.f32.mxu0 0.0
    %5172 = vmatmul.mubr.f32.gmra.mrb[0].mxu0 %v4959
    %v5173 = vpop.f32.mrb[0].mxu0
    %v5174 = vadd.f32 0.0, %v5173
    %v5175 = vpop.f32.mrb[0].mxu0
    %5176 = vmatprep.mubr.f32.mxu0 0.0
    %5177 = vmatmul.mubr.f32.gmra.mrb[0].mxu0 %v4962
    %v5178 = vpop.f32.mrb[0].mxu0
    %v5179 = vadd.f32 0.0, %v5178
    %v5180 = vpop.f32.mrb[0].mxu0
    %5181 = vmatprep.mubr.f32.mxu0 0.0
    %5182 = vmatmul.mubr.f32.gmra.mrb[0].mxu0 %v4965
    %v5183 = vpop.f32.mrb[0].mxu0
    %v5184 = vadd.f32 0.0, %v5183
    %v5185 = vpop.f32.mrb[0].mxu0
    %5186 = vmatprep.mubr.f32.mxu0 0.0
    %5187 = vmatmul.mubr.f32.gmra.mrb[0].mxu0 %v4968
    %v5188 = vpop.f32.mrb[0].mxu0
    %v5189 = vadd.f32 0.0, %v5188
    %v5190 = vpop.f32.mrb[0].mxu0
    %5191 = vmatprep.mubr.f32.mxu0 0.0
    %5192 = vmatmul.mubr.f32.gmra.mrb[0].mxu0 %v4971
    %v5193 = vpop.f32.mrb[0].mxu0
    %v5194 = vadd.f32 0.0, %v5193
    %v5195 = vpop.f32.mrb[0].mxu0
    %5196 = vdwg.mxu0
    %v5197 = vmul.f32 %v5159, %v2634
    %v5198 = vmul.f32 %v5164, %v2635
    %v5199 = vmul.f32 %v5169, %v2636
    %v5200 = vmul.f32 %v5174, %v2637
    %v5201 = vmul.f32 %v5179, %v2638
    %v5202 = vmul.f32 %v5184, %v2639
    %v5203 = vmul.f32 %v5189, %v2640
    %v5204 = vmul.f32 %v5194, %v2641
    %v5205 = vld [vmem:[%s69] sm:$0xff]
    %v5206 = vld [vmem:[%s69 + $0x8] sm:$0xff]
    %v5207 = vld [vmem:[%s69 + $0x10] sm:$0xff]
    %v5208 = vld [vmem:[%s69 + $0x18] sm:$0xff]
    %v5209 = vld [vmem:[%s69 + $0x20] sm:$0xff]
    %v5210 = vld [vmem:[%s69 + $0x28] sm:$0xff]
    %v5211 = vld [vmem:[%s69 + $0x30] sm:$0xff]
    %v5212 = vld [vmem:[%s69 + $0x38] sm:$0xff]
    %v5213 = vld [vmem:[%s69 + $0x40] sm:$0xff]
    %v5214 = vld [vmem:[%s69 + $0x48] sm:$0xff]
    %v5215 = vld [vmem:[%s69 + $0x50] sm:$0xff]
    %v5216 = vld [vmem:[%s69 + $0x58] sm:$0xff]
    %v5217 = vld [vmem:[%s69 + $0x60] sm:$0xff]
    %v5218 = vld [vmem:[%s69 + $0x68] sm:$0xff]
    %v5219 = vld [vmem:[%s69 + $0x70] sm:$0xff]
    %v5220 = vld [vmem:[%s69 + $0x78] sm:$0xff]
    %5221 = vmatprep.subr.mxu0 0.0
    %5222 = vmatpush1.msra.mxu0 %v5205
    %5223 = vmatprep.subr.mxu0 0.0
    %5224 = vmatpush1.msra.mxu0 %v5206
    %5225 = vmatprep.subr.mxu0 0.0
    %5226 = vmatpush1.msra.mxu0 %v5207
    %5227 = vmatprep.subr.mxu0 0.0
    %5228 = vmatpush1.msra.mxu0 %v5208
    %5229 = vmatprep.subr.mxu0 0.0
    %5230 = vmatpush1.msra.mxu0 %v5209
    %5231 = vmatprep.subr.mxu0 0.0
    %5232 = vmatpush1.msra.mxu0 %v5210
    %5233 = vmatprep.subr.mxu0 0.0
    %5234 = vmatpush1.msra.mxu0 %v5211
    %5235 = vmatprep.subr.mxu0 0.0
    %5236 = vmatpush1.msra.mxu0 %v5212
    %5237 = vmatprep.subr.mxu0 0.0
    %5238 = vmatpush1.msra.mxu0 %v5213
    %5239 = vmatprep.subr.mxu0 0.0
    %5240 = vmatpush1.msra.mxu0 %v5214
    %5241 = vmatprep.subr.mxu0 0.0
    %5242 = vmatpush1.msra.mxu0 %v5215
    %5243 = vmatprep.subr.mxu0 0.0
    %5244 = vmatpush1.msra.mxu0 %v5216
    %5245 = vmatprep.subr.mxu0 0.0
    %5246 = vmatpush1.msra.mxu0 %v5217
    %5247 = vmatprep.subr.mxu0 0.0
    %5248 = vmatpush1.msra.mxu0 %v5218
    %5249 = vmatprep.subr.mxu0 0.0
    %5250 = vmatpush1.msra.mxu0 %v5219
    %5251 = vmatprep.subr.mxu0 0.0
    %5252 = vmatpush1.msra.mxu0 %v5220
    %5253 = vmatprep.subr.mxu0 0.0
    %5254 = vmatpush1.msra.mxu0 0.0
    %5255 = vmatprep.subr.mxu0 0.0
    %5256 = vmatpush1.msra.mxu0 0.0
    %5257 = vmatprep.subr.mxu0 0.0
    %5258 = vmatpush1.msra.mxu0 0.0
    %5259 = vmatprep.subr.mxu0 0.0
    %5260 = vmatpush1.msra.mxu0 0.0
    %5261 = vmatprep.subr.mxu0 0.0
    %5262 = vmatpush1.msra.mxu0 0.0
    %5263 = vmatprep.subr.mxu0 0.0
    %5264 = vmatpush1.msra.mxu0 0.0
    %5265 = vmatprep.subr.mxu0 0.0
    %5266 = vmatpush1.msra.mxu0 0.0
    %5267 = vmatprep.subr.mxu0 0.0
    %5268 = vmatpush1.msra.mxu0 0.0
    %5269 = vmatprep.subr.mxu0 0.0
    %5270 = vmatpush1.msra.mxu0 0.0
    %5271 = vmatprep.subr.mxu0 0.0
    %5272 = vmatpush1.msra.mxu0 0.0
    %5273 = vmatprep.subr.mxu0 0.0
    %5274 = vmatpush1.msra.mxu0 0.0
    %5275 = vmatprep.subr.mxu0 0.0
    %5276 = vmatpush1.msra.mxu0 0.0
    %5277 = vmatprep.subr.mxu0 0.0
    %5278 = vmatpush1.msra.mxu0 0.0
    %5279 = vmatprep.subr.mxu0 0.0
    %5280 = vmatpush1.msra.mxu0 0.0
    %5281 = vmatprep.subr.mxu0 0.0
    %5282 = vmatpush1.msra.mxu0 0.0
    %5283 = vmatprep.subr.mxu0 0.0
    %5284 = vmatpush1.msra.mxu0 0.0
    %5285 = vmatprep.mubr.f32.mxu0 0.0
    %5286 = vmatmul.mubr.f32.gmra.mrb[0].mxu0 %v5197
    %v5287 = vpop.f32.mrb[0].mxu0
    %v5288 = vadd.f32 0.0, %v5287
    %v5289 = vpop.f32.mrb[0].mxu0
    %5290 = vmatprep.mubr.f32.mxu0 0.0
    %5291 = vmatmul.mubr.f32.gmra.mrb[0].mxu0 %v5198
    %v5292 = vpop.f32.mrb[0].mxu0
    %v5293 = vadd.f32 0.0, %v5292
    %v5294 = vpop.f32.mrb[0].mxu0
    %5295 = vmatprep.mubr.f32.mxu0 0.0
    %5296 = vmatmul.mubr.f32.gmra.mrb[0].mxu0 %v5199
    %v5297 = vpop.f32.mrb[0].mxu0
    %v5298 = vadd.f32 0.0, %v5297
    %v5299 = vpop.f32.mrb[0].mxu0
    %5300 = vmatprep.mubr.f32.mxu0 0.0
    %5301 = vmatmul.mubr.f32.gmra.mrb[0].mxu0 %v5200
    %v5302 = vpop.f32.mrb[0].mxu0
    %v5303 = vadd.f32 0.0, %v5302
    %v5304 = vpop.f32.mrb[0].mxu0
    %5305 = vmatprep.mubr.f32.mxu0 0.0
    %5306 = vmatmul.mubr.f32.gmra.mrb[0].mxu0 %v5201
    %v5307 = vpop.f32.mrb[0].mxu0
    %v5308 = vadd.f32 0.0, %v5307
    %v5309 = vpop.f32.mrb[0].mxu0
    %5310 = vmatprep.mubr.f32.mxu0 0.0
    %5311 = vmatmul.mubr.f32.gmra.mrb[0].mxu0 %v5202
    %v5312 = vpop.f32.mrb[0].mxu0
    %v5313 = vadd.f32 0.0, %v5312
    %v5314 = vpop.f32.mrb[0].mxu0
    %5315 = vmatprep.mubr.f32.mxu0 0.0
    %5316 = vmatmul.mubr.f32.gmra.mrb[0].mxu0 %v5203
    %v5317 = vpop.f32.mrb[0].mxu0
    %v5318 = vadd.f32 0.0, %v5317
    %v5319 = vpop.f32.mrb[0].mxu0
    %5320 = vmatprep.mubr.f32.mxu0 0.0
    %5321 = vmatmul.mubr.f32.gmra.mrb[0].mxu0 %v5204
    %v5322 = vpop.f32.mrb[0].mxu0
    %v5323 = vadd.f32 0.0, %v5322
    %v5324 = vpop.f32.mrb[0].mxu0
    %5325 = vdwg.mxu0
    %v5326 = vmul.f32 %v5288, %v1860
    %v5327 = vmul.f32 %v5293, %v1861
    %v5328 = vmul.f32 %v5298, %v1862
    %v5329 = vmul.f32 %v5303, %v1863
    %v5330 = vmul.f32 %v5308, %v1864
    %v5331 = vmul.f32 %v5313, %v1865
    %v5332 = vmul.f32 %v5318, %v1866
    %v5333 = vmul.f32 %v5323, %v1867
    %v5334 = vadd.f32 %v5326, %v5328
    %v5335 = vadd.f32 %v5327, %v5329
    %v5336 = vadd.f32 %v5334, %v5330
    %v5337 = vadd.f32 %v5335, %v5331
    %v5338 = vadd.f32 %v5336, %v5332
    %v5339 = vadd.f32 %v5337, %v5333
    %5340 = vst.msk [vmem:[%s131] sm:$0xff] %vm522, %v5090
    %5341 = vst.msk [vmem:[%s131 + $0x8] sm:$0xff] %vm522, %v5091
    %v5342 = vadd.f32 %v5090, %v5338
    %v5343 = vadd.f32 %v5091, %v5339
    %v5344 = vld [vmem:[%s73] sm:$0xff]
    %v5345 = vld [vmem:[%s73 + $0x8] sm:$0xff]
    %v5346 = vld [vmem:[%s73 + $0x10] sm:$0xff]
    %v5347 = vld [vmem:[%s73 + $0x18] sm:$0xff]
    %v5348 = vld [vmem:[#allocation16] sm:$0x1]
    %v5350 = vlaneseq
    %v5351 = vshrl.u32 %v5350, 7
    %v5352 = vsub.s32 0, %v5351
    %v5353 = vrot.slane %v5348, %v5352
    %v5356 = vsel %vm522, %v5342, 0
    %v5359 = vsel %vm522, %v5343, 0
    %5361 = vmatprep.subr.mxu0 0.0
    %5362 = vmatpush1.msra.mxu0 %v5344
    %5363 = vmatprep.subr.mxu0 0.0
    %5364 = vmatpush1.msra.mxu0 %v5345
    %5365 = vmatprep.subr.mxu0 0.0
    %5366 = vmatpush1.msra.mxu0 %v5346
    %5367 = vmatprep.subr.mxu0 0.0
    %5368 = vmatpush1.msra.mxu0 %v5347
    %5369 = vmatprep.subr.mxu0 0.0
    %5370 = vmatpush1.msra.mxu0 0.0
    %5371 = vmatprep.subr.mxu0 0.0
    %5372 = vmatpush1.msra.mxu0 0.0
    %5373 = vmatprep.subr.mxu0 0.0
    %5374 = vmatpush1.msra.mxu0 0.0
    %5375 = vmatprep.subr.mxu0 0.0
    %5376 = vmatpush1.msra.mxu0 0.0
    %5377 = vmatprep.subr.mxu0 0.0
    %5378 = vmatpush1.msra.mxu0 0.0
    %5379 = vmatprep.subr.mxu0 0.0
    %5380 = vmatpush1.msra.mxu0 0.0
    %5381 = vmatprep.subr.mxu0 0.0
    %5382 = vmatpush1.msra.mxu0 0.0
    %5383 = vmatprep.subr.mxu0 0.0
    %5384 = vmatpush1.msra.mxu0 0.0
    %5385 = vmatprep.subr.mxu0 0.0
    %5386 = vmatpush1.msra.mxu0 0.0
    %5387 = vmatprep.subr.mxu0 0.0
    %5388 = vmatpush1.msra.mxu0 0.0
    %5389 = vmatprep.subr.mxu0 0.0
    %5390 = vmatpush1.msra.mxu0 0.0
    %5391 = vmatprep.subr.mxu0 0.0
    %5392 = vmatpush1.msra.mxu0 0.0
    %5393 = vmatprep.subr.mxu0 0.0
    %5394 = vmatpush1.msra.mxu0 0.0
    %5395 = vmatprep.subr.mxu0 0.0
    %5396 = vmatpush1.msra.mxu0 0.0
    %5397 = vmatprep.subr.mxu0 0.0
    %5398 = vmatpush1.msra.mxu0 0.0
    %5399 = vmatprep.subr.mxu0 0.0
    %5400 = vmatpush1.msra.mxu0 0.0
    %5401 = vmatprep.subr.mxu0 0.0
    %5402 = vmatpush1.msra.mxu0 0.0
    %5403 = vmatprep.subr.mxu0 0.0
    %5404 = vmatpush1.msra.mxu0 0.0
    %5405 = vmatprep.subr.mxu0 0.0
    %5406 = vmatpush1.msra.mxu0 0.0
    %5407 = vmatprep.subr.mxu0 0.0
    %5408 = vmatpush1.msra.mxu0 0.0
    %5409 = vmatprep.subr.mxu0 0.0
    %5410 = vmatpush1.msra.mxu0 0.0
    %5411 = vmatprep.subr.mxu0 0.0
    %5412 = vmatpush1.msra.mxu0 0.0
    %5413 = vmatprep.subr.mxu0 0.0
    %5414 = vmatpush1.msra.mxu0 0.0
    %5415 = vmatprep.subr.mxu0 0.0
    %5416 = vmatpush1.msra.mxu0 0.0
    %5417 = vmatprep.subr.mxu0 0.0
    %5418 = vmatpush1.msra.mxu0 0.0
    %5419 = vmatprep.subr.mxu0 0.0
    %5420 = vmatpush1.msra.mxu0 0.0
    %5421 = vmatprep.subr.mxu0 0.0
    %5422 = vmatpush1.msra.mxu0 0.0
    %5423 = vmatprep.subr.mxu0 0.0
    %5424 = vmatpush1.msra.mxu0 0.0
    %5425 = vmatprep.mubr.f32.mxu0 0.0
    %5426 = vmatmul.mubr.f32.gmra.mrb[0].mxu0 %v5356
    %v5427 = vpop.f32.mrb[0].mxu0
    %v5428 = vadd.f32 %v5353, %v5427
    %v5429 = vpop.f32.mrb[0].mxu0
    %5430 = vmatprep.mubr.f32.mxu0 0.0
    %5431 = vmatmul.mubr.f32.gmra.mrb[0].mxu0 %v5359
    %v5432 = vpop.f32.mrb[0].mxu0
    %v5433 = vadd.f32 %v5353, %v5432
    %v5434 = vpop.f32.mrb[0].mxu0
    %5435 = vdwg.mxu0
    %v5436 = vadd.f32 %v5428, %v4278
    %v5437 = vadd.f32 %v5433, %v4279
    %v5438 = vsel %vm522, %v5436, 0.0
    %5439 = vadd.xlane.f32.xlu0 %v5438
    %v5440 = vpop.xlane.xlu0 %5439
    %v5441 = vsel %vm522, %v5437, 0.0
    %5442 = vadd.xlane.f32.xlu0 %v5441
    %v5443 = vpop.xlane.xlu0 %5442
    %v5444 = vmul.f32 %v5440, %v1637
    %v5445 = vmul.f32 %v5443, %v1637
    %v5446 = vsub.f32 %v5436, %v5444
    %v5447 = vsub.f32 %v5437, %v5445
    %v5448 = vmul.f32 %v5446, %v5446
    %v5449 = vmul.f32 %v5447, %v5447
    %v5450 = vsel %vm522, %v5448, 0.0
    %5451 = vadd.xlane.f32.xlu0 %v5450
    %v5452 = vpop.xlane.xlu0 %5451
    %v5453 = vsel %vm522, %v5449, 0.0
    %5454 = vadd.xlane.f32.xlu0 %v5453
    %v5455 = vpop.xlane.xlu0 %5454
    %v5456 = vmul.f32 %v5452, %v1637
    %v5457 = vmul.f32 %v5455, %v1637
    %v5458 = vadd.f32 %v5456, 1e-05
    %v5459 = vadd.f32 %v5457, 1e-05
    %v5460 = vrsqrt.pop %v5458
    %v5461 = vrsqrt.pop %v5459
    %v5462 = vmul.f32 %v5446, %v5460
    %v5463 = vmul.f32 %v5447, %v5461
    %v5464 = vld [vmem:[#allocation27] sm:$0x1]
    %v5466 = vlaneseq
    %v5467 = vshrl.u32 %v5466, 7
    %v5468 = vsub.s32 0, %v5467
    %v5469 = vrot.slane %v5464, %v5468
    %v5471 = vmul.f32 %v5462, %v5469
    %v5472 = vmul.f32 %v5463, %v5469
    %v5473 = vld [vmem:[#allocation25] sm:$0x1]
    %v5475 = vlaneseq
    %v5476 = vshrl.u32 %v5475, 7
    %v5477 = vsub.s32 0, %v5476
    %v5478 = vrot.slane %v5473, %v5477
    %v5480 = vadd.f32 %v5471, %v5478
    %v5481 = vadd.f32 %v5472, %v5478
    %v5482 = vld [vmem:[%s81] sm:$0xff]
    %v5483 = vld [vmem:[%s81 + $0x8] sm:$0xff]
    %v5484 = vld [vmem:[%s81 + $0x10] sm:$0xff]
    %v5485 = vld [vmem:[%s81 + $0x18] sm:$0xff]
    %v5486 = vld [vmem:[#allocation19] sm:$0x1]
    %v5488 = vlaneseq
    %v5489 = vshrl.u32 %v5488, 7
    %v5490 = vsub.s32 0, %v5489
    %v5491 = vrot.slane %v5486, %v5490
    %v5494 = vsel %vm522, %v5480, 0
    %v5497 = vsel %vm522, %v5481, 0
    %5499 = vmatprep.subr.mxu0 0.0
    %5500 = vmatpush1.msra.mxu0 %v5482
    %5501 = vmatprep.subr.mxu0 0.0
    %5502 = vmatpush1.msra.mxu0 %v5483
    %5503 = vmatprep.subr.mxu0 0.0
    %5504 = vmatpush1.msra.mxu0 %v5484
    %5505 = vmatprep.subr.mxu0 0.0
    %5506 = vmatpush1.msra.mxu0 %v5485
    %5507 = vmatprep.subr.mxu0 0.0
    %5508 = vmatpush1.msra.mxu0 0.0
    %5509 = vmatprep.subr.mxu0 0.0
    %5510 = vmatpush1.msra.mxu0 0.0
    %5511 = vmatprep.subr.mxu0 0.0
    %5512 = vmatpush1.msra.mxu0 0.0
    %5513 = vmatprep.subr.mxu0 0.0
    %5514 = vmatpush1.msra.mxu0 0.0
    %5515 = vmatprep.subr.mxu0 0.0
    %5516 = vmatpush1.msra.mxu0 0.0
    %5517 = vmatprep.subr.mxu0 0.0
    %5518 = vmatpush1.msra.mxu0 0.0
    %5519 = vmatprep.subr.mxu0 0.0
    %5520 = vmatpush1.msra.mxu0 0.0
    %5521 = vmatprep.subr.mxu0 0.0
    %5522 = vmatpush1.msra.mxu0 0.0
    %5523 = vmatprep.subr.mxu0 0.0
    %5524 = vmatpush1.msra.mxu0 0.0
    %5525 = vmatprep.subr.mxu0 0.0
    %5526 = vmatpush1.msra.mxu0 0.0
    %5527 = vmatprep.subr.mxu0 0.0
    %5528 = vmatpush1.msra.mxu0 0.0
    %5529 = vmatprep.subr.mxu0 0.0
    %5530 = vmatpush1.msra.mxu0 0.0
    %5531 = vmatprep.subr.mxu0 0.0
    %5532 = vmatpush1.msra.mxu0 0.0
    %5533 = vmatprep.subr.mxu0 0.0
    %5534 = vmatpush1.msra.mxu0 0.0
    %5535 = vmatprep.subr.mxu0 0.0
    %5536 = vmatpush1.msra.mxu0 0.0
    %5537 = vmatprep.subr.mxu0 0.0
    %5538 = vmatpush1.msra.mxu0 0.0
    %5539 = vmatprep.subr.mxu0 0.0
    %5540 = vmatpush1.msra.mxu0 0.0
    %5541 = vmatprep.subr.mxu0 0.0
    %5542 = vmatpush1.msra.mxu0 0.0
    %5543 = vmatprep.subr.mxu0 0.0
    %5544 = vmatpush1.msra.mxu0 0.0
    %5545 = vmatprep.subr.mxu0 0.0
    %5546 = vmatpush1.msra.mxu0 0.0
    %5547 = vmatprep.subr.mxu0 0.0
    %5548 = vmatpush1.msra.mxu0 0.0
    %5549 = vmatprep.subr.mxu0 0.0
    %5550 = vmatpush1.msra.mxu0 0.0
    %5551 = vmatprep.subr.mxu0 0.0
    %5552 = vmatpush1.msra.mxu0 0.0
    %5553 = vmatprep.subr.mxu0 0.0
    %5554 = vmatpush1.msra.mxu0 0.0
    %5555 = vmatprep.subr.mxu0 0.0
    %5556 = vmatpush1.msra.mxu0 0.0
    %5557 = vmatprep.subr.mxu0 0.0
    %5558 = vmatpush1.msra.mxu0 0.0
    %5559 = vmatprep.subr.mxu0 0.0
    %5560 = vmatpush1.msra.mxu0 0.0
    %5561 = vmatprep.subr.mxu0 0.0
    %5562 = vmatpush1.msra.mxu0 0.0
    %5563 = vmatprep.mubr.f32.mxu0 0.0
    %5564 = vmatmul.mubr.f32.gmra.mrb[0].mxu0 %v5494
    %v5565 = vpop.f32.mrb[0].mxu0
    %v5566 = vadd.f32 %v5491, %v5565
    %v5567 = vpop.f32.mrb[0].mxu0
    %5568 = vmatprep.mubr.f32.mxu0 0.0
    %5569 = vmatmul.mubr.f32.gmra.mrb[0].mxu0 %v5497
    %v5570 = vpop.f32.mrb[0].mxu0
    %v5571 = vadd.f32 %v5491, %v5570
    %v5572 = vpop.f32.mrb[0].mxu0
    %5573 = vdwg.mxu0
    %v5574 = vmax.f32 %v5566, 0.0
    %v5575 = vmax.f32 %v5571, 0.0
    %v5576 = vld [vmem:[%s83] sm:$0xff]
    %v5577 = vld [vmem:[%s83 + $0x8] sm:$0xff]
    %v5578 = vld [vmem:[%s83 + $0x10] sm:$0xff]
    %v5579 = vld [vmem:[%s83 + $0x18] sm:$0xff]
    %v5580 = vld [vmem:[%s83 + $0x20] sm:$0xff]
    %v5581 = vld [vmem:[%s83 + $0x28] sm:$0xff]
    %v5582 = vld [vmem:[%s83 + $0x30] sm:$0xff]
    %v5583 = vld [vmem:[%s83 + $0x38] sm:$0xff]
    %v5584 = vld [vmem:[#allocation21] sm:$0x1]
    %v5586 = vlaneseq
    %v5587 = vshrl.u32 %v5586, 7
    %v5588 = vsub.s32 0, %v5587
    %v5589 = vrot.slane %v5584, %v5588
    %v5592 = vsel %vm3034, %v5574, 0
    %v5595 = vsel %vm3034, %v5575, 0
    %5597 = vmatprep.subr.mxu0 0.0
    %5598 = vmatpush1.msra.mxu0 %v5576
    %5599 = vmatprep.subr.mxu0 0.0
    %5600 = vmatpush1.msra.mxu0 %v5577
    %5601 = vmatprep.subr.mxu0 0.0
    %5602 = vmatpush1.msra.mxu0 %v5578
    %5603 = vmatprep.subr.mxu0 0.0
    %5604 = vmatpush1.msra.mxu0 %v5579
    %5605 = vmatprep.subr.mxu0 0.0
    %5606 = vmatpush1.msra.mxu0 %v5580
    %5607 = vmatprep.subr.mxu0 0.0
    %5608 = vmatpush1.msra.mxu0 %v5581
    %5609 = vmatprep.subr.mxu0 0.0
    %5610 = vmatpush1.msra.mxu0 %v5582
    %5611 = vmatprep.subr.mxu0 0.0
    %5612 = vmatpush1.msra.mxu0 %v5583
    %5613 = vmatprep.subr.mxu0 0.0
    %5614 = vmatpush1.msra.mxu0 0.0
    %5615 = vmatprep.subr.mxu0 0.0
    %5616 = vmatpush1.msra.mxu0 0.0
    %5617 = vmatprep.subr.mxu0 0.0
    %5618 = vmatpush1.msra.mxu0 0.0
    %5619 = vmatprep.subr.mxu0 0.0
    %5620 = vmatpush1.msra.mxu0 0.0
    %5621 = vmatprep.subr.mxu0 0.0
    %5622 = vmatpush1.msra.mxu0 0.0
    %5623 = vmatprep.subr.mxu0 0.0
    %5624 = vmatpush1.msra.mxu0 0.0
    %5625 = vmatprep.subr.mxu0 0.0
    %5626 = vmatpush1.msra.mxu0 0.0
    %5627 = vmatprep.subr.mxu0 0.0
    %5628 = vmatpush1.msra.mxu0 0.0
    %5629 = vmatprep.subr.mxu0 0.0
    %5630 = vmatpush1.msra.mxu0 0.0
    %5631 = vmatprep.subr.mxu0 0.0
    %5632 = vmatpush1.msra.mxu0 0.0
    %5633 = vmatprep.subr.mxu0 0.0
    %5634 = vmatpush1.msra.mxu0 0.0
    %5635 = vmatprep.subr.mxu0 0.0
    %5636 = vmatpush1.msra.mxu0 0.0
    %5637 = vmatprep.subr.mxu0 0.0
    %5638 = vmatpush1.msra.mxu0 0.0
    %5639 = vmatprep.subr.mxu0 0.0
    %5640 = vmatpush1.msra.mxu0 0.0
    %5641 = vmatprep.subr.mxu0 0.0
    %5642 = vmatpush1.msra.mxu0 0.0
    %5643 = vmatprep.subr.mxu0 0.0
    %5644 = vmatpush1.msra.mxu0 0.0
    %5645 = vmatprep.subr.mxu0 0.0
    %5646 = vmatpush1.msra.mxu0 0.0
    %5647 = vmatprep.subr.mxu0 0.0
    %5648 = vmatpush1.msra.mxu0 0.0
    %5649 = vmatprep.subr.mxu0 0.0
    %5650 = vmatpush1.msra.mxu0 0.0
    %5651 = vmatprep.subr.mxu0 0.0
    %5652 = vmatpush1.msra.mxu0 0.0
    %5653 = vmatprep.subr.mxu0 0.0
    %5654 = vmatpush1.msra.mxu0 0.0
    %5655 = vmatprep.subr.mxu0 0.0
    %5656 = vmatpush1.msra.mxu0 0.0
    %5657 = vmatprep.subr.mxu0 0.0
    %5658 = vmatpush1.msra.mxu0 0.0
    %5659 = vmatprep.subr.mxu0 0.0
    %5660 = vmatpush1.msra.mxu0 0.0
    %5661 = vmatprep.mubr.f32.mxu0 0.0
    %5662 = vmatmul.mubr.f32.gmra.mrb[0].mxu0 %v5592
    %v5663 = vpop.f32.mrb[0].mxu0
    %v5664 = vadd.f32 %v5589, %v5663
    %v5665 = vpop.f32.mrb[0].mxu0
    %5666 = vmatprep.mubr.f32.mxu0 0.0
    %5667 = vmatmul.mubr.f32.gmra.mrb[0].mxu0 %v5595
    %v5668 = vpop.f32.mrb[0].mxu0
    %v5669 = vadd.f32 %v5589, %v5668
    %v5670 = vpop.f32.mrb[0].mxu0
    %5671 = vdwg.mxu0
    %v5672 = vadd.f32 %v5664, %v5480
    %v5673 = vadd.f32 %v5669, %v5481
    %v5674 = vsel %vm522, %v5672, 0.0
    %5675 = vadd.xlane.f32.xlu0 %v5674
    %v5676 = vpop.xlane.xlu0 %5675
    %v5677 = vsel %vm522, %v5673, 0.0
    %5678 = vadd.xlane.f32.xlu0 %v5677
    %v5679 = vpop.xlane.xlu0 %5678
    %v5680 = vmul.f32 %v5676, %v1637
    %v5681 = vmul.f32 %v5679, %v1637
    %v5682 = vsub.f32 %v5672, %v5680
    %v5683 = vsub.f32 %v5673, %v5681
    %v5684 = vmul.f32 %v5682, %v5682
    %v5685 = vmul.f32 %v5683, %v5683
    %v5686 = vsel %vm522, %v5684, 0.0
    %5687 = vadd.xlane.f32.xlu0 %v5686
    %v5688 = vpop.xlane.xlu0 %5687
    %v5689 = vsel %vm522, %v5685, 0.0
    %5690 = vadd.xlane.f32.xlu0 %v5689
    %v5691 = vpop.xlane.xlu0 %5690
    %v5692 = vmul.f32 %v5688, %v1637
    %v5693 = vmul.f32 %v5691, %v1637
    %v5694 = vadd.f32 %v5692, 1e-05
    %v5695 = vadd.f32 %v5693, 1e-05
    %v5696 = vrsqrt.pop %v5694
    %v5697 = vrsqrt.pop %v5695
    %v5698 = vmul.f32 %v5682, %v5696
    %v5699 = vmul.f32 %v5683, %v5697
    %v5700 = vld [vmem:[#allocation30] sm:$0x1]
    %v5702 = vlaneseq
    %v5703 = vshrl.u32 %v5702, 7
    %v5704 = vsub.s32 0, %v5703
    %v5705 = vrot.slane %v5700, %v5704
    %v5707 = vmul.f32 %v5698, %v5705
    %v5708 = vmul.f32 %v5699, %v5705
    %v5709 = vld [vmem:[#allocation28] sm:$0x1]
    %v5711 = vlaneseq
    %v5712 = vshrl.u32 %v5711, 7
    %v5713 = vsub.s32 0, %v5712
    %v5714 = vrot.slane %v5709, %v5713
    %v5716 = vadd.f32 %v5707, %v5714
    %v5717 = vadd.f32 %v5708, %v5714
    %v5718 = vld [vmem:[%s11] sm:$0xff]
    %v5719 = vld [vmem:[%s11 + $0x8] sm:$0xff]
    %v5720 = vld [vmem:[%s11 + $0x10] sm:$0xff]
    %v5721 = vld [vmem:[%s11 + $0x18] sm:$0xff]
    %v5722 = vld [vmem:[%s9] sm:$0x1]
    %v5724 = vlaneseq
    %v5725 = vshrl.u32 %v5724, 7
    %v5726 = vsub.s32 0, %v5725
    %v5727 = vrot.slane %v5722, %v5726
    %v5730 = vsel %vm522, %v5716, 0
    %v5733 = vsel %vm522, %v5717, 0
    %5735 = vmatprep.subr.mxu0 0.0
    %5736 = vmatpush1.msra.mxu0 %v5718
    %5737 = vmatprep.subr.mxu0 0.0
    %5738 = vmatpush1.msra.mxu0 %v5719
    %5739 = vmatprep.subr.mxu0 0.0
    %5740 = vmatpush1.msra.mxu0 %v5720
    %5741 = vmatprep.subr.mxu0 0.0
    %5742 = vmatpush1.msra.mxu0 %v5721
    %5743 = vmatprep.subr.mxu0 0.0
    %5744 = vmatpush1.msra.mxu0 0.0
    %5745 = vmatprep.subr.mxu0 0.0
    %5746 = vmatpush1.msra.mxu0 0.0
    %5747 = vmatprep.subr.mxu0 0.0
    %5748 = vmatpush1.msra.mxu0 0.0
    %5749 = vmatprep.subr.mxu0 0.0
    %5750 = vmatpush1.msra.mxu0 0.0
    %5751 = vmatprep.subr.mxu0 0.0
    %5752 = vmatpush1.msra.mxu0 0.0
    %5753 = vmatprep.subr.mxu0 0.0
    %5754 = vmatpush1.msra.mxu0 0.0
    %5755 = vmatprep.subr.mxu0 0.0
    %5756 = vmatpush1.msra.mxu0 0.0
    %5757 = vmatprep.subr.mxu0 0.0
    %5758 = vmatpush1.msra.mxu0 0.0
    %5759 = vmatprep.subr.mxu0 0.0
    %5760 = vmatpush1.msra.mxu0 0.0
    %5761 = vmatprep.subr.mxu0 0.0
    %5762 = vmatpush1.msra.mxu0 0.0
    %5763 = vmatprep.subr.mxu0 0.0
    %5764 = vmatpush1.msra.mxu0 0.0
    %5765 = vmatprep.subr.mxu0 0.0
    %5766 = vmatpush1.msra.mxu0 0.0
    %5767 = vmatprep.subr.mxu0 0.0
    %5768 = vmatpush1.msra.mxu0 0.0
    %5769 = vmatprep.subr.mxu0 0.0
    %5770 = vmatpush1.msra.mxu0 0.0
    %5771 = vmatprep.subr.mxu0 0.0
    %5772 = vmatpush1.msra.mxu0 0.0
    %5773 = vmatprep.subr.mxu0 0.0
    %5774 = vmatpush1.msra.mxu0 0.0
    %5775 = vmatprep.subr.mxu0 0.0
    %5776 = vmatpush1.msra.mxu0 0.0
    %5777 = vmatprep.subr.mxu0 0.0
    %5778 = vmatpush1.msra.mxu0 0.0
    %5779 = vmatprep.subr.mxu0 0.0
    %5780 = vmatpush1.msra.mxu0 0.0
    %5781 = vmatprep.subr.mxu0 0.0
    %5782 = vmatpush1.msra.mxu0 0.0
    %5783 = vmatprep.subr.mxu0 0.0
    %5784 = vmatpush1.msra.mxu0 0.0
    %5785 = vmatprep.subr.mxu0 0.0
    %5786 = vmatpush1.msra.mxu0 0.0
    %5787 = vmatprep.subr.mxu0 0.0
    %5788 = vmatpush1.msra.mxu0 0.0
    %5789 = vmatprep.subr.mxu0 0.0
    %5790 = vmatpush1.msra.mxu0 0.0
    %5791 = vmatprep.subr.mxu0 0.0
    %5792 = vmatpush1.msra.mxu0 0.0
    %5793 = vmatprep.subr.mxu0 0.0
    %5794 = vmatpush1.msra.mxu0 0.0
    %5795 = vmatprep.subr.mxu0 0.0
    %5796 = vmatpush1.msra.mxu0 0.0
    %5797 = vmatprep.subr.mxu0 0.0
    %5798 = vmatpush1.msra.mxu0 0.0
    %5799 = vmatprep.mubr.f32.mxu0 0.0
    %5800 = vmatmul.mubr.f32.gmra.mrb[0].mxu0 %v5730
    %v5801 = vpop.f32.mrb[0].mxu0
    %v5802 = vadd.f32 %v5727, %v5801
    %v5803 = vpop.f32.mrb[0].mxu0
    %5804 = vmatprep.mubr.f32.mxu0 0.0
    %5805 = vmatmul.mubr.f32.gmra.mrb[0].mxu0 %v5733
    %v5806 = vpop.f32.mrb[0].mxu0
    %v5807 = vadd.f32 %v5727, %v5806
    %v5808 = vpop.f32.mrb[0].mxu0
    %5809 = vdwg.mxu0
    %5810 = vst.msk [vmem:[%s129] sm:$0xff] %vm3034, %v5802
    %5811 = vst.msk [vmem:[%s129 + $0x8] sm:$0xff] %vm3034, %v5807
    // Predicated region
    $region342: #{decoder_forward.1} parent=1 // pred_check
      _
    $region343: #{decoder_forward.1} parent=1 // pred_check_branch
      %5813 = sbr.rel (0) target = $region345
    $region344: #{decoder_forward.1} parent=1 // pred_region
      _
    $region345: #{decoder_forward.1} parent=1 // pred_fallthru
      _
    // Predicated region
    $region346: #{decoder_forward.1} parent=1 // pred_check
      _
    $region347: #{decoder_forward.1} parent=1 // pred_check_branch
      %5815 = sbr.rel (0) target = $region349
    $region348: #{decoder_forward.1} parent=1 // pred_region
      _
    $region349: #{decoder_forward.1} parent=1 // pred_fallthru
      _
    // Predicated region
    $region350: #{decoder_forward.1} parent=1 // pred_check
      _
    $region351: #{decoder_forward.1} parent=1 // pred_check_branch
      %5817 = sbr.rel (0) target = $region353
    $region352: #{decoder_forward.1} parent=1 // pred_region
      _
    $region353: #{decoder_forward.1} parent=1 // pred_fallthru
      _
    // Predicated region
    $region354: #{decoder_forward.1} parent=1 // pred_check
      _
    $region355: #{decoder_forward.1} parent=1 // pred_check_branch
      %5819 = sbr.rel (0) target = $region357
    $region356: #{decoder_forward.1} parent=1 // pred_region
      _
    $region357: #{decoder_forward.1} parent=1 // pred_fallthru
      _
    %5820 = vsyncpa [#allocation3], 1
    %5821 = vsyncpa [#allocation5], 1
    %5822 = vsyncpa [#allocation8], 1
    %5823 = vsyncpa [#allocation11], 1
    %5824 = vsyncpa [#allocation14], 1
    %5825 = vsyncpa [#allocation17], 1
    %5826 = vsyncpa [#allocation20], 1
    %5827 = vsyncpa [#allocation23], 1
    %5828 = vsyncpa [#allocation26], 1
    %5829 = vsyncpa [#allocation29], 1
    %5830 = vsyncpa [#allocation32], 1

</llo_original>
